<compile_context>
chip_gen: v5e
topology: v5e:2x2
jax: 0.10.0
libtpu: 0.0.40
codegen_flags: <defaults>
</compile_context>

<pallas_src>
import functools

import jax
import jax.numpy as jnp
from jax.experimental import pallas as pl
from jax.experimental.pallas import tpu as pltpu


def _round_up(x, m):
    return (x + m - 1) // m * m


# ----------------------------------------------------------------------------
# Fused wavefront decoder kernel.
# PyTorch GRU gate order (r, z, n):
#   r = sigmoid(x Wir + bir + h Whr + bhr)
#   z = sigmoid(x Wiz + biz + h Whz + bhz)
#   n = tanh  (x Win + bin + r * (h Whn + bhn))
#   h' = (1 - z) * n + z * h
# b_ih (+ b_hr, b_hz) are pre-folded into one "outer" bias per layer; only
# b_hn is applied inside the r* term.
# Padding invariant: padded hidden lanes [H:Hp] stay 0 (zero weight rows/cols,
# zero bias, zero initial h), and padded batch rows are sliced off in the wrapper.
# ----------------------------------------------------------------------------
def _make_decoder_kernel(L, S, Bp, Hp, Op):
    GH3 = 3 * Hp
    gh_col = [l * GH3 for l in range(L)]                   # gh columns, fed by h[l]
    gi_col = [None] + [(L + l - 1) * GH3 for l in range(1, L)]  # gi cols, fed by h[l-1]
    lin_col = (2 * L - 1) * GH3                            # linear columns, fed by h[L-1]

    def kernel(*refs):
        i = 0
        x_ref = refs[i]; i += 1                            # (S*Bp, Din)      f32
        h0_ref = refs[i]; i += 1                           # (L, Bp, Hp)      f32
        wih0_ref = refs[i]; i += 1                         # (Din, 3*Hp)      bf16
        wbig_ref = refs[i]; i += 1                         # (L*Hp, ncols)    bf16
        bi_refs = refs[i:i + L]; i += L                    # each (1, 3*Hp)   f32
        bhn_refs = refs[i:i + L]; i += L                   # each (1, Hp)     f32
        blin_ref = refs[i]; i += 1                         # (1, Op)          f32
        out_ref = refs[i]; i += 1                          # (S*Bp, Op)       f32
        hT_ref = refs[i]; i += 1                           # (L, Bp, Hp)      f32
        gi_scr = refs[i]; i += 1                           # (S*Bp, 3*Hp)     f32 scratch

        # Hoisted layer-0 input projection for ALL timesteps (one MXU matmul),
        # bias (b_ih0 + folded b_hr0/b_hz0) included.  Stored to VMEM scratch so
        # it is not pinned in vregs across the wave loop.
        gi_scr[...] = (
            jnp.dot(x_ref[...].astype(jnp.bfloat16), wih0_ref[...],
                    preferred_element_type=jnp.float32)
            + bi_refs[0][...])

        # Hoisted bias broadcasts (JAX does not CSE broadcast_in_dim).
        bhn_b = [jnp.broadcast_to(bhn_refs[l][...], (Bp, Hp)) for l in range(L)]
        bi_b = [None] + [jnp.broadcast_to(bi_refs[l][...], (Bp, GH3))
                         for l in range(1, L)]
        blin_b = jnp.broadcast_to(blin_ref[...], (Bp, Op))

        # Per-layer hidden states kept live (1 f32 vreg each).
        h = [h0_ref[l].astype(jnp.float32) for l in range(L)]

        # Wavefront: wave w updates layer l at time t = w - l; the fused Linear
        # (extra columns of wbig, fed by h[L-1]) emits time t = w - L.
        for w in range(S + L):
            h_cat = jnp.concatenate(h, axis=-1).astype(jnp.bfloat16)   # (Bp, L*Hp)
            gcat = jnp.dot(h_cat, wbig_ref[...],
                           preferred_element_type=jnp.float32)          # (Bp, ncols)

            # Fused Linear consumer (reads start-of-wave h[L-1] = time w-L).
            t_lin = w - L
            if 0 <= t_lin < S:
                out = gcat[:, lin_col:lin_col + Op] + blin_b
                out_ref[pl.ds(t_lin * Bp, Bp), :] = out.astype(out_ref.dtype)

            # Layer updates.
            for l in range(L):
                t = w - l
                if not (0 <= t < S):
                    continue
                if l == 0:
                    gi = gi_scr[pl.ds(t * Bp, Bp), :]                  # bias folded
                else:
                    gi = gcat[:, gi_col[l]:gi_col[l] + GH3] + bi_b[l]
                gh = gcat[:, gh_col[l]:gh_col[l] + GH3]
                r = jax.nn.sigmoid(gi[:, 0:Hp] + gh[:, 0:Hp])
                z = jax.nn.sigmoid(gi[:, Hp:2 * Hp] + gh[:, Hp:2 * Hp])
                n = jnp.tanh(gi[:, 2 * Hp:3 * Hp]
                             + r * (gh[:, 2 * Hp:3 * Hp] + bhn_b[l]))
                h[l] = (1.0 - z) * n + z * h[l]

        for l in range(L):
            hT_ref[l] = h[l].astype(hT_ref.dtype)

    return kernel


# ----------------------------------------------------------------------------
# Weight padding / folding (PyTorch layout -> lane-aligned, transposed)
# ----------------------------------------------------------------------------
def _pad_gru_weights(w_ih, w_hh, b_ih, b_hh, H, Hp, din, din_p):
    """w_ih:(3H,din)  w_hh:(3H,H)  b_ih/b_hh:(3H,)  -> padded transposed blocks."""
    wih_t = jnp.zeros((din_p, 3 * Hp), jnp.float32)
    whh_t = jnp.zeros((Hp, 3 * Hp), jnp.float32)
    bi = jnp.zeros((1, 3 * Hp), jnp.float32)
    for g in range(3):
        wih_t = wih_t.at[:din, g * Hp:g * Hp + H].set(
            jnp.transpose(w_ih[g * H:(g + 1) * H, :]))
        whh_t = whh_t.at[:H, g * Hp:g * Hp + H].set(
            jnp.transpose(w_hh[g * H:(g + 1) * H, :]))
        bfold = b_ih[g * H:(g + 1) * H]
        if g < 2:   # fold b_hr, b_hz into the outer bias
            bfold = bfold + b_hh[g * H:(g + 1) * H]
        bi = bi.at[0, g * Hp:g * Hp + H].set(bfold)
    bhn = jnp.zeros((1, Hp), jnp.float32).at[0, :H].set(b_hh[2 * H:3 * H])
    return wih_t, whh_t, bi, bhn


# ----------------------------------------------------------------------------
# DecoderRNN forward (eval mode): GRU(num_layers) -> dropout(identity) -> Linear
# ----------------------------------------------------------------------------
def decoder_rnn_forward(params, encoded_input, hidden):
    """encoded_input: (B, S, hidden_size); hidden: (num_layers, B, 30*output_size).

    Returns (decoded_output (B, S, output_size), hidden (num_layers, B, 30*output_size)).
    """
    B, S, Din = encoded_input.shape
    L, _, H = hidden.shape
    Hp = _round_up(H, 128)
    Bp = _round_up(max(B, 8), 8)          # full sublane tile per timestep
    w_lin, b_lin = params["linear"]
    O = w_lin.shape[0]
    Op = _round_up(O, 128)
    GH3 = 3 * Hp

    # time-major, batch padded to Bp: row index = t*Bp + b
    x_tb = jnp.transpose(encoded_input, (1, 0, 2)).astype(jnp.float32)   # (S,B,Din)
    x_tb = jnp.pad(x_tb, ((0, 0), (0, Bp - B), (0, 0)))
    x2d = x_tb.reshape(S * Bp, Din)

    # zero-padded initial hidden (padded lanes/rows must start at zero)
    h0p = jnp.zeros((L, Bp, Hp), jnp.float32).at[:, :B, :H].set(
        hidden.astype(jnp.float32))

    # per-layer padded/folded weights
    wihs, whhs, bis, bhns = [], [], [], []
    for l in range(L):
        w_ih, w_hh, b_ih, b_hh = params["gru"][l]
        din = w_ih.shape[1]
        din_p = din if l == 0 else Hp
        wih_t, whh_t, bi, bhn = _pad_gru_weights(
            w_ih, w_hh, b_ih, b_hh, H, Hp, din, din_p)
        wihs.append(wih_t); whhs.append(whh_t); bis.append(bi); bhns.append(bhn)

    # Fused block weight:
    #   rows  : h_cat = [h_0 | ... | h_{L-1}]                       (L*Hp)
    #   cols  : [gh_0 .. gh_{L-1} | gi_1 .. gi_{L-1} | linear]      ((2L-1)*3Hp + Op)
    ncols = (2 * L - 1) * GH3 + Op
    wbig = jnp.zeros((L * Hp, ncols), jnp.float32)
    for l in range(L):
        wbig = wbig.at[l * Hp:(l + 1) * Hp, l * GH3:(l + 1) * GH3].set(whhs[l])
    for l in range(1, L):
        wbig = wbig.at[(l - 1) * Hp:l * Hp,
                       (L + l - 1) * GH3:(L + l) * GH3].set(wihs[l])
    lin_col = (2 * L - 1) * GH3
    wlin_t = jnp.zeros((Hp, Op), jnp.float32).at[:H, :O].set(jnp.transpose(w_lin))
    wbig = wbig.at[(L - 1) * Hp:L * Hp, lin_col:lin_col + Op].set(wlin_t)

    # bf16 matmul operands (f32 accumulation inside the kernel)
    wbig = wbig.astype(jnp.bfloat16)
    wih0 = wihs[0].astype(jnp.bfloat16)
    din0 = wihs[0].shape[0]
    blin_p = jnp.zeros((1, Op), jnp.float32).at[0, :O].set(b_lin)

    args = [x2d, h0p, wih0, wbig] + bis + bhns + [blin_p]
    in_specs = (
        [pl.BlockSpec((S * Bp, Din), lambda i: (0, 0)),
         pl.BlockSpec((L, Bp, Hp), lambda i: (0, 0, 0)),
         pl.BlockSpec((din0, GH3), lambda i: (0, 0)),
         pl.BlockSpec((L * Hp, ncols), lambda i: (0, 0))]
        + [pl.BlockSpec((1, GH3), lambda i: (0, 0)) for _ in range(L)]
        + [pl.BlockSpec((1, Hp), lambda i: (0, 0)) for _ in range(L)]
        + [pl.BlockSpec((1, Op), lambda i: (0, 0))]
    )
    out_specs = [pl.BlockSpec((S * Bp, Op), lambda i: (0, 0)),
                 pl.BlockSpec((L, Bp, Hp), lambda i: (0, 0, 0))]
    out_shape = (jax.ShapeDtypeStruct((S * Bp, Op), jnp.float32),
                 jax.ShapeDtypeStruct((L, Bp, Hp), jnp.float32))

    kernel = _make_decoder_kernel(L, S, Bp, Hp, Op)
    out2d, hTp = pl.pallas_call(
        kernel,
        out_shape=out_shape,
        grid_spec=pltpu.PrefetchScalarGridSpec(
            num_scalar_prefetch=0,
            grid=(1,),                       # single grid step, everything VMEM-resident
            in_specs=in_specs,
            out_specs=out_specs,
            scratch_shapes=[pltpu.VMEM((S * Bp, GH3), jnp.float32)]),
        compiler_params=pltpu.CompilerParams(
            dimension_semantics=("arbitrary",)),
    )(*args)

    out = out2d.reshape(S, Bp, Op)[:, :B, :O]
    out = jnp.transpose(out, (1, 0, 2)).astype(encoded_input.dtype)
    new_hidden = hTp[:, :B, :H].astype(hidden.dtype)
    return out, new_hidden


# ----------------------------------------------------------------------------
# Pure-JAX reference (for validation)
# ----------------------------------------------------------------------------
def _ref_forward(params, encoded_input, hidden):
    num_layers = hidden.shape[0]
    x = encoded_input
    hs = []
    for l in range(num_layers):
        w_ih, w_hh, b_ih, b_hh = params["gru"][l]
        H = w_hh.shape[1]

        def step(h, x_t, w_ih=w_ih, w_hh=w_hh, b_ih=b_ih, b_hh=b_hh, H=H):
            gi = jnp.dot(x_t, w_ih.T, preferred_element_type=jnp.float32) + b_ih
            gh = jnp.dot(h, w_hh.T, preferred_element_type=jnp.float32) + b_hh
            r = jax.nn.sigmoid(gi[:, :H] + gh[:, :H])
            z = jax.nn.sigmoid(gi[:, H:2 * H] + gh[:, H:2 * H])
            n = jnp.tanh(gi[:, 2 * H:] + r * gh[:, 2 * H:])
            h_new = (1.0 - z) * n + z * h
            return h_new, h_new

        hT, y = jax.lax.scan(step, hidden[l], jnp.transpose(x, (1, 0, 2)))
        x = jnp.transpose(y, (1, 0, 2))
        hs.append(hT)
    w_lin, b_lin = params["linear"]
    out = jnp.dot(x, w_lin.T, preferred_element_type=jnp.float32) + b_lin
    return out, jnp.stack(hs, axis=0)


# ----------------------------------------------------------------------------
# Deterministic parameter init (matches nn.GRU / nn.Linear shapes)
# ----------------------------------------------------------------------------
def init_params(key, hidden_size, output_size, num_layers):
    Hg = output_size * 30
    params = {"gru": []}
    bound = 1.0 / jnp.sqrt(Hg)
    for l in range(num_layers):
        din = hidden_size if l == 0 else Hg
        key, k1, k2, k3, k4 = jax.random.split(key, 5)
        w_ih = jax.random.uniform(k1, (3 * Hg, din), jnp.float32, -bound, bound)
        w_hh = jax.random.uniform(k2, (3 * Hg, Hg), jnp.float32, -bound, bound)
        b_ih = jax.random.uniform(k3, (3 * Hg,), jnp.float32, -bound, bound)
        b_hh = jax.random.uniform(k4, (3 * Hg,), jnp.float32, -bound, bound)
        params["gru"].append((w_ih, w_hh, b_ih, b_hh))
    key, k1, k2 = jax.random.split(key, 3)
    lb = 1.0 / jnp.sqrt(Hg)
    w_lin = jax.random.uniform(k1, (output_size, Hg), jnp.float32, -lb, lb)
    b_lin = jax.random.uniform(k2, (output_size,), jnp.float32, -lb, lb)
    params["linear"] = (w_lin, b_lin)
    return params


if __name__ == "__main__":
    hidden_size = 32     # GRU input size
    output_size = 4      # linear output size; GRU hidden = 4 * 30 = 120
    num_layers = 2
    B, S = 2, 8
    Hg = output_size * 30

    key = jax.random.PRNGKey(0)
    kp, kx, kh = jax.random.split(key, 3)
    params = init_params(kp, hidden_size, output_size, num_layers)
    encoded_input = jax.random.normal(kx, (B, S, hidden_size), jnp.float32)
    hidden = jax.random.normal(kh, (num_layers, B, Hg), jnp.float32)

    fwd = jax.jit(functools.partial(decoder_rnn_forward, params))
    out, new_hidden = fwd(encoded_input, hidden)
    jax.block_until_ready((out, new_hidden))

    # sanity check against pure-JAX f32 reference (kernel uses bf16 MXU operands)
    ref_out, ref_hidden = _ref_forward(params, encoded_input, hidden)
    assert out.shape == (B, S, output_size)
    assert new_hidden.shape == (num_layers, B, Hg)
    assert jnp.allclose(out, ref_out, atol=2e-2, rtol=2e-2)
    assert jnp.allclose(new_hidden, ref_hidden, atol=2e-2, rtol=2e-2)

    print("KERNEL_OK")
</pallas_src>

<mosaic_0001>
module attributes {stable_mosaic.version = 11 : i64} {
  func.func @kernel(%arg0: i32, %arg1: memref<64x32xf32, #tpu.memory_space<vmem>>, %arg2: memref<2x8x128xf32, #tpu.memory_space<vmem>>, %arg3: memref<32x384xbf16, #tpu.memory_space<vmem>>, %arg4: memref<256x1280xbf16, #tpu.memory_space<vmem>>, %arg5: memref<1x384xf32, #tpu.memory_space<vmem>>, %arg6: memref<1x384xf32, #tpu.memory_space<vmem>>, %arg7: memref<1x128xf32, #tpu.memory_space<vmem>>, %arg8: memref<1x128xf32, #tpu.memory_space<vmem>>, %arg9: memref<1x128xf32, #tpu.memory_space<vmem>>, %arg10: memref<64x128xf32, #tpu.memory_space<vmem>>, %arg11: memref<2x8x128xf32, #tpu.memory_space<vmem>>, %arg12: memref<64x384xf32, #tpu.memory_space<vmem>>) attributes {dimension_semantics = [#tpu.dimension_semantics<arbitrary>], iteration_bounds = array<i64: 1>, scalar_prefetch = 0 : i64, scratch_operands = 1 : i64, tpu.core_type = #tpu.core_type<tc>, window_params = [{pipeline_mode = #tpu.pipeline_mode<synchronous>, transform_indices = @transform_0, window_bounds = array<i64: 64, 32>}, {pipeline_mode = #tpu.pipeline_mode<synchronous>, transform_indices = @transform_1, window_bounds = array<i64: 2, 8, 128>}, {pipeline_mode = #tpu.pipeline_mode<synchronous>, transform_indices = @transform_2, window_bounds = array<i64: 32, 384>}, {pipeline_mode = #tpu.pipeline_mode<synchronous>, transform_indices = @transform_3, window_bounds = array<i64: 256, 1280>}, {pipeline_mode = #tpu.pipeline_mode<synchronous>, transform_indices = @transform_4, window_bounds = array<i64: 1, 384>}, {pipeline_mode = #tpu.pipeline_mode<synchronous>, transform_indices = @transform_5, window_bounds = array<i64: 1, 384>}, {pipeline_mode = #tpu.pipeline_mode<synchronous>, transform_indices = @transform_6, window_bounds = array<i64: 1, 128>}, {pipeline_mode = #tpu.pipeline_mode<synchronous>, transform_indices = @transform_7, window_bounds = array<i64: 1, 128>}, {pipeline_mode = #tpu.pipeline_mode<synchronous>, transform_indices = @transform_8, window_bounds = array<i64: 1, 128>}, {pipeline_mode = #tpu.pipeline_mode<synchronous>, transform_indices = @transform_9, window_bounds = array<i64: 64, 128>}, {pipeline_mode = #tpu.pipeline_mode<synchronous>, transform_indices = @transform_10, window_bounds = array<i64: 2, 8, 128>}]} {
    %c0 = arith.constant 0 : index
    %c0_0 = arith.constant 0 : index
    %0 = vector.load %arg1[%c0, %c0_0] : memref<64x32xf32, #tpu.memory_space<vmem>>, vector<64x32xf32>
    %1 = arith.truncf %0 : vector<64x32xf32> to vector<64x32xbf16>
    %c0_1 = arith.constant 0 : index
    %c0_2 = arith.constant 0 : index
    %2 = vector.load %arg3[%c0_1, %c0_2] : memref<32x384xbf16, #tpu.memory_space<vmem>>, vector<32x384xbf16>
    %cst = arith.constant dense<0.000000e+00> : vector<64x384xf32>
    %3 = tpu.matmul %1, %2, %cst {dimension_numbers = #tpu.dot_dimension_numbers<[1], [0], [0], [1], [0, 0, 1, 1], [], []>} : vector<64x32xbf16>, vector<32x384xbf16>, vector<64x384xf32> -> vector<64x384xf32>
    %c0_3 = arith.constant 0 : index
    %c0_4 = arith.constant 0 : index
    %4 = vector.load %arg5[%c0_3, %c0_4] : memref<1x384xf32, #tpu.memory_space<vmem>>, vector<1x384xf32>
    %5 = vector.broadcast %4 : vector<1x384xf32> to vector<64x384xf32>
    %6 = arith.addf %3, %5 : vector<64x384xf32>
    %c0_5 = arith.constant 0 : index
    %c0_6 = arith.constant 0 : index
    %7 = vector.load %arg12[%c0_5, %c0_6] : memref<64x384xf32, #tpu.memory_space<vmem>>, vector<64x384xf32>
    tpu.vector_store %arg12[%c0_5, %c0_6], %6 {strides = array<i32>} : memref<64x384xf32, #tpu.memory_space<vmem>>, vector<64x384xf32>,
    %c0_7 = arith.constant 0 : index
    %c0_8 = arith.constant 0 : index
    %8 = vector.load %arg7[%c0_7, %c0_8] : memref<1x128xf32, #tpu.memory_space<vmem>>, vector<1x128xf32>
    %9 = vector.shape_cast %8 : vector<1x128xf32> to vector<1x128xf32>
    %10 = vector.broadcast %9 : vector<1x128xf32> to vector<8x128xf32>
    %c0_9 = arith.constant 0 : index
    %c0_10 = arith.constant 0 : index
    %11 = vector.load %arg8[%c0_9, %c0_10] : memref<1x128xf32, #tpu.memory_space<vmem>>, vector<1x128xf32>
    %12 = vector.shape_cast %11 : vector<1x128xf32> to vector<1x128xf32>
    %13 = vector.broadcast %12 : vector<1x128xf32> to vector<8x128xf32>
    %c0_11 = arith.constant 0 : index
    %c0_12 = arith.constant 0 : index
    %14 = vector.load %arg6[%c0_11, %c0_12] : memref<1x384xf32, #tpu.memory_space<vmem>>, vector<1x384xf32>
    %15 = vector.shape_cast %14 : vector<1x384xf32> to vector<1x384xf32>
    %16 = vector.broadcast %15 : vector<1x384xf32> to vector<8x384xf32>
    %c0_13 = arith.constant 0 : index
    %c0_14 = arith.constant 0 : index
    %17 = vector.load %arg9[%c0_13, %c0_14] : memref<1x128xf32, #tpu.memory_space<vmem>>, vector<1x128xf32>
    %18 = vector.shape_cast %17 : vector<1x128xf32> to vector<1x128xf32>
    %19 = vector.broadcast %18 : vector<1x128xf32> to vector<8x128xf32>
    %c0_15 = arith.constant 0 : index
    %c0_16 = arith.constant 0 : index
    %c0_17 = arith.constant 0 : index
    %20 = vector.load %arg2[%c0_15, %c0_16, %c0_17] : memref<2x8x128xf32, #tpu.memory_space<vmem>>, vector<1x8x128xf32>
    %21 = vector.shape_cast %20 : vector<1x8x128xf32> to vector<8x128xf32>
    %c1 = arith.constant 1 : index
    %c0_18 = arith.constant 0 : index
    %c0_19 = arith.constant 0 : index
    %22 = vector.load %arg2[%c1, %c0_18, %c0_19] : memref<2x8x128xf32, #tpu.memory_space<vmem>>, vector<1x8x128xf32>
    %23 = vector.shape_cast %22 : vector<1x8x128xf32> to vector<8x128xf32>
    %24 = tpu.concatenate %21, %23 in 1 : vector<8x128xf32>, vector<8x128xf32> -> vector<8x256xf32>
    %25 = arith.truncf %24 : vector<8x256xf32> to vector<8x256xbf16>
    %c0_20 = arith.constant 0 : index
    %c0_21 = arith.constant 0 : index
    %26 = vector.load %arg4[%c0_20, %c0_21] : memref<256x1280xbf16, #tpu.memory_space<vmem>>, vector<256x1280xbf16>
    %cst_22 = arith.constant dense<0.000000e+00> : vector<8x1280xf32>
    %27 = tpu.matmul %25, %26, %cst_22 {dimension_numbers = #tpu.dot_dimension_numbers<[1], [0], [0], [1], [0, 0, 1, 1], [], []>} : vector<8x256xbf16>, vector<256x1280xbf16>, vector<8x1280xf32> -> vector<8x1280xf32>
    %c0_23 = arith.constant 0 : index
    %c0_24 = arith.constant 0 : index
    %28 = vector.load %arg12[%c0_23, %c0_24] : memref<64x384xf32, #tpu.memory_space<vmem>>, vector<8x384xf32>
    %29 = vector.extract_strided_slice %27 {offsets = [0, 0], sizes = [8, 384], strides = [1, 1]} : vector<8x1280xf32> to vector<8x384xf32>
    %30 = vector.extract_strided_slice %28 {offsets = [0, 0], sizes = [8, 128], strides = [1, 1]} : vector<8x384xf32> to vector<8x128xf32>
    %31 = vector.extract_strided_slice %29 {offsets = [0, 0], sizes = [8, 128], strides = [1, 1]} : vector<8x384xf32> to vector<8x128xf32>
    %32 = arith.addf %30, %31 : vector<8x128xf32>
    %33 = arith.negf %32 : vector<8x128xf32>
    %34 = math.exp %33 : vector<8x128xf32>
    %cst_25 = arith.constant 1.000000e+00 : f32
    %35 = vector.broadcast %cst_25 : f32 to vector<8x128xf32>
    %36 = arith.addf %35, %34 : vector<8x128xf32>
    %37 = arith.divf %35, %36 : vector<8x128xf32>
    %38 = vector.extract_strided_slice %28 {offsets = [0, 128], sizes = [8, 128], strides = [1, 1]} : vector<8x384xf32> to vector<8x128xf32>
    %39 = vector.extract_strided_slice %29 {offsets = [0, 128], sizes = [8, 128], strides = [1, 1]} : vector<8x384xf32> to vector<8x128xf32>
    %40 = arith.addf %38, %39 : vector<8x128xf32>
    %41 = arith.negf %40 : vector<8x128xf32>
    %42 = math.exp %41 : vector<8x128xf32>
    %cst_26 = arith.constant 1.000000e+00 : f32
    %43 = vector.broadcast %cst_26 : f32 to vector<8x128xf32>
    %44 = arith.addf %43, %42 : vector<8x128xf32>
    %45 = arith.divf %43, %44 : vector<8x128xf32>
    %46 = vector.extract_strided_slice %28 {offsets = [0, 256], sizes = [8, 128], strides = [1, 1]} : vector<8x384xf32> to vector<8x128xf32>
    %47 = vector.extract_strided_slice %29 {offsets = [0, 256], sizes = [8, 128], strides = [1, 1]} : vector<8x384xf32> to vector<8x128xf32>
    %48 = arith.addf %47, %10 : vector<8x128xf32>
    %49 = arith.mulf %37, %48 : vector<8x128xf32>
    %50 = arith.addf %46, %49 : vector<8x128xf32>
    %51 = math.tanh %50 : vector<8x128xf32>
    %cst_27 = arith.constant 1.000000e+00 : f32
    %52 = vector.broadcast %cst_27 : f32 to vector<8x128xf32>
    %53 = arith.subf %52, %45 : vector<8x128xf32>
    %54 = arith.mulf %53, %51 : vector<8x128xf32>
    %55 = arith.mulf %45, %21 : vector<8x128xf32>
    %56 = arith.addf %54, %55 : vector<8x128xf32>
    %57 = tpu.concatenate %56, %23 in 1 : vector<8x128xf32>, vector<8x128xf32> -> vector<8x256xf32>
    %58 = arith.truncf %57 : vector<8x256xf32> to vector<8x256xbf16>
    %c0_28 = arith.constant 0 : index
    %c0_29 = arith.constant 0 : index
    %59 = vector.load %arg4[%c0_28, %c0_29] : memref<256x1280xbf16, #tpu.memory_space<vmem>>, vector<256x1280xbf16>
    %cst_30 = arith.constant dense<0.000000e+00> : vector<8x1280xf32>
    %60 = tpu.matmul %58, %59, %cst_30 {dimension_numbers = #tpu.dot_dimension_numbers<[1], [0], [0], [1], [0, 0, 1, 1], [], []>} : vector<8x256xbf16>, vector<256x1280xbf16>, vector<8x1280xf32> -> vector<8x1280xf32>
    %c8 = arith.constant 8 : index
    %c0_31 = arith.constant 0 : index
    %61 = vector.load %arg12[%c8, %c0_31] : memref<64x384xf32, #tpu.memory_space<vmem>>, vector<8x384xf32>
    %62 = vector.extract_strided_slice %60 {offsets = [0, 0], sizes = [8, 384], strides = [1, 1]} : vector<8x1280xf32> to vector<8x384xf32>
    %63 = vector.extract_strided_slice %61 {offsets = [0, 0], sizes = [8, 128], strides = [1, 1]} : vector<8x384xf32> to vector<8x128xf32>
    %64 = vector.extract_strided_slice %62 {offsets = [0, 0], sizes = [8, 128], strides = [1, 1]} : vector<8x384xf32> to vector<8x128xf32>
    %65 = arith.addf %63, %64 : vector<8x128xf32>
    %66 = arith.negf %65 : vector<8x128xf32>
    %67 = math.exp %66 : vector<8x128xf32>
    %cst_32 = arith.constant 1.000000e+00 : f32
    %68 = vector.broadcast %cst_32 : f32 to vector<8x128xf32>
    %69 = arith.addf %68, %67 : vector<8x128xf32>
    %70 = arith.divf %68, %69 : vector<8x128xf32>
    %71 = vector.extract_strided_slice %61 {offsets = [0, 128], sizes = [8, 128], strides = [1, 1]} : vector<8x384xf32> to vector<8x128xf32>
    %72 = vector.extract_strided_slice %62 {offsets = [0, 128], sizes = [8, 128], strides = [1, 1]} : vector<8x384xf32> to vector<8x128xf32>
    %73 = arith.addf %71, %72 : vector<8x128xf32>
    %74 = arith.negf %73 : vector<8x128xf32>
    %75 = math.exp %74 : vector<8x128xf32>
    %cst_33 = arith.constant 1.000000e+00 : f32
    %76 = vector.broadcast %cst_33 : f32 to vector<8x128xf32>
    %77 = arith.addf %76, %75 : vector<8x128xf32>
    %78 = arith.divf %76, %77 : vector<8x128xf32>
    %79 = vector.extract_strided_slice %61 {offsets = [0, 256], sizes = [8, 128], strides = [1, 1]} : vector<8x384xf32> to vector<8x128xf32>
    %80 = vector.extract_strided_slice %62 {offsets = [0, 256], sizes = [8, 128], strides = [1, 1]} : vector<8x384xf32> to vector<8x128xf32>
    %81 = arith.addf %80, %10 : vector<8x128xf32>
    %82 = arith.mulf %70, %81 : vector<8x128xf32>
    %83 = arith.addf %79, %82 : vector<8x128xf32>
    %84 = math.tanh %83 : vector<8x128xf32>
    %cst_34 = arith.constant 1.000000e+00 : f32
    %85 = vector.broadcast %cst_34 : f32 to vector<8x128xf32>
    %86 = arith.subf %85, %78 : vector<8x128xf32>
    %87 = arith.mulf %86, %84 : vector<8x128xf32>
    %88 = arith.mulf %78, %56 : vector<8x128xf32>
    %89 = arith.addf %87, %88 : vector<8x128xf32>
    %90 = vector.extract_strided_slice %60 {offsets = [0, 768], sizes = [8, 384], strides = [1, 1]} : vector<8x1280xf32> to vector<8x384xf32>
    %91 = arith.addf %90, %16 : vector<8x384xf32>
    %92 = vector.extract_strided_slice %60 {offsets = [0, 384], sizes = [8, 384], strides = [1, 1]} : vector<8x1280xf32> to vector<8x384xf32>
    %93 = vector.extract_strided_slice %91 {offsets = [0, 0], sizes = [8, 128], strides = [1, 1]} : vector<8x384xf32> to vector<8x128xf32>
    %94 = vector.extract_strided_slice %92 {offsets = [0, 0], sizes = [8, 128], strides = [1, 1]} : vector<8x384xf32> to vector<8x128xf32>
    %95 = arith.addf %93, %94 : vector<8x128xf32>
    %96 = arith.negf %95 : vector<8x128xf32>
    %97 = math.exp %96 : vector<8x128xf32>
    %cst_35 = arith.constant 1.000000e+00 : f32
    %98 = vector.broadcast %cst_35 : f32 to vector<8x128xf32>
    %99 = arith.addf %98, %97 : vector<8x128xf32>
    %100 = arith.divf %98, %99 : vector<8x128xf32>
    %101 = vector.extract_strided_slice %91 {offsets = [0, 128], sizes = [8, 128], strides = [1, 1]} : vector<8x384xf32> to vector<8x128xf32>
    %102 = vector.extract_strided_slice %92 {offsets = [0, 128], sizes = [8, 128], strides = [1, 1]} : vector<8x384xf32> to vector<8x128xf32>
    %103 = arith.addf %101, %102 : vector<8x128xf32>
    %104 = arith.negf %103 : vector<8x128xf32>
    %105 = math.exp %104 : vector<8x128xf32>
    %cst_36 = arith.constant 1.000000e+00 : f32
    %106 = vector.broadcast %cst_36 : f32 to vector<8x128xf32>
    %107 = arith.addf %106, %105 : vector<8x128xf32>
    %108 = arith.divf %106, %107 : vector<8x128xf32>
    %109 = vector.extract_strided_slice %91 {offsets = [0, 256], sizes = [8, 128], strides = [1, 1]} : vector<8x384xf32> to vector<8x128xf32>
    %110 = vector.extract_strided_slice %92 {offsets = [0, 256], sizes = [8, 128], strides = [1, 1]} : vector<8x384xf32> to vector<8x128xf32>
    %111 = arith.addf %110, %13 : vector<8x128xf32>
    %112 = arith.mulf %100, %111 : vector<8x128xf32>
    %113 = arith.addf %109, %112 : vector<8x128xf32>
    %114 = math.tanh %113 : vector<8x128xf32>
    %cst_37 = arith.constant 1.000000e+00 : f32
    %115 = vector.broadcast %cst_37 : f32 to vector<8x128xf32>
    %116 = arith.subf %115, %108 : vector<8x128xf32>
    %117 = arith.mulf %116, %114 : vector<8x128xf32>
    %118 = arith.mulf %108, %23 : vector<8x128xf32>
    %119 = arith.addf %117, %118 : vector<8x128xf32>
    %120 = tpu.concatenate %89, %119 in 1 : vector<8x128xf32>, vector<8x128xf32> -> vector<8x256xf32>
    %121 = arith.truncf %120 : vector<8x256xf32> to vector<8x256xbf16>
    %c0_38 = arith.constant 0 : index
    %c0_39 = arith.constant 0 : index
    %122 = vector.load %arg4[%c0_38, %c0_39] : memref<256x1280xbf16, #tpu.memory_space<vmem>>, vector<256x1280xbf16>
    %cst_40 = arith.constant dense<0.000000e+00> : vector<8x1280xf32>
    %123 = tpu.matmul %121, %122, %cst_40 {dimension_numbers = #tpu.dot_dimension_numbers<[1], [0], [0], [1], [0, 0, 1, 1], [], []>} : vector<8x256xbf16>, vector<256x1280xbf16>, vector<8x1280xf32> -> vector<8x1280xf32>
    %124 = vector.extract_strided_slice %123 {offsets = [0, 1152], sizes = [8, 128], strides = [1, 1]} : vector<8x1280xf32> to vector<8x128xf32>
    %125 = arith.addf %124, %19 : vector<8x128xf32>
    %c0_41 = arith.constant 0 : index
    %c0_42 = arith.constant 0 : index
    %126 = vector.load %arg10[%c0_41, %c0_42] : memref<64x128xf32, #tpu.memory_space<vmem>>, vector<8x128xf32>
    tpu.vector_store %arg10[%c0_41, %c0_42], %125 {strides = array<i32>} : memref<64x128xf32, #tpu.memory_space<vmem>>, vector<8x128xf32>,
    %c16 = arith.constant 16 : index
    %c0_43 = arith.constant 0 : index
    %127 = vector.load %arg12[%c16, %c0_43] : memref<64x384xf32, #tpu.memory_space<vmem>>, vector<8x384xf32>
    %128 = vector.extract_strided_slice %123 {offsets = [0, 0], sizes = [8, 384], strides = [1, 1]} : vector<8x1280xf32> to vector<8x384xf32>
    %129 = vector.extract_strided_slice %127 {offsets = [0, 0], sizes = [8, 128], strides = [1, 1]} : vector<8x384xf32> to vector<8x128xf32>
    %130 = vector.extract_strided_slice %128 {offsets = [0, 0], sizes = [8, 128], strides = [1, 1]} : vector<8x384xf32> to vector<8x128xf32>
    %131 = arith.addf %129, %130 : vector<8x128xf32>
    %132 = arith.negf %131 : vector<8x128xf32>
    %133 = math.exp %132 : vector<8x128xf32>
    %cst_44 = arith.constant 1.000000e+00 : f32
    %134 = vector.broadcast %cst_44 : f32 to vector<8x128xf32>
    %135 = arith.addf %134, %133 : vector<8x128xf32>
    %136 = arith.divf %134, %135 : vector<8x128xf32>
    %137 = vector.extract_strided_slice %127 {offsets = [0, 128], sizes = [8, 128], strides = [1, 1]} : vector<8x384xf32> to vector<8x128xf32>
    %138 = vector.extract_strided_slice %128 {offsets = [0, 128], sizes = [8, 128], strides = [1, 1]} : vector<8x384xf32> to vector<8x128xf32>
    %139 = arith.addf %137, %138 : vector<8x128xf32>
    %140 = arith.negf %139 : vector<8x128xf32>
    %141 = math.exp %140 : vector<8x128xf32>
    %cst_45 = arith.constant 1.000000e+00 : f32
    %142 = vector.broadcast %cst_45 : f32 to vector<8x128xf32>
    %143 = arith.addf %142, %141 : vector<8x128xf32>
    %144 = arith.divf %142, %143 : vector<8x128xf32>
    %145 = vector.extract_strided_slice %127 {offsets = [0, 256], sizes = [8, 128], strides = [1, 1]} : vector<8x384xf32> to vector<8x128xf32>
    %146 = vector.extract_strided_slice %128 {offsets = [0, 256], sizes = [8, 128], strides = [1, 1]} : vector<8x384xf32> to vector<8x128xf32>
    %147 = arith.addf %146, %10 : vector<8x128xf32>
    %148 = arith.mulf %136, %147 : vector<8x128xf32>
    %149 = arith.addf %145, %148 : vector<8x128xf32>
    %150 = math.tanh %149 : vector<8x128xf32>
    %cst_46 = arith.constant 1.000000e+00 : f32
    %151 = vector.broadcast %cst_46 : f32 to vector<8x128xf32>
    %152 = arith.subf %151, %144 : vector<8x128xf32>
    %153 = arith.mulf %152, %150 : vector<8x128xf32>
    %154 = arith.mulf %144, %89 : vector<8x128xf32>
    %155 = arith.addf %153, %154 : vector<8x128xf32>
    %156 = vector.extract_strided_slice %123 {offsets = [0, 768], sizes = [8, 384], strides = [1, 1]} : vector<8x1280xf32> to vector<8x384xf32>
    %157 = arith.addf %156, %16 : vector<8x384xf32>
    %158 = vector.extract_strided_slice %123 {offsets = [0, 384], sizes = [8, 384], strides = [1, 1]} : vector<8x1280xf32> to vector<8x384xf32>
    %159 = vector.extract_strided_slice %157 {offsets = [0, 0], sizes = [8, 128], strides = [1, 1]} : vector<8x384xf32> to vector<8x128xf32>
    %160 = vector.extract_strided_slice %158 {offsets = [0, 0], sizes = [8, 128], strides = [1, 1]} : vector<8x384xf32> to vector<8x128xf32>
    %161 = arith.addf %159, %160 : vector<8x128xf32>
    %162 = arith.negf %161 : vector<8x128xf32>
    %163 = math.exp %162 : vector<8x128xf32>
    %cst_47 = arith.constant 1.000000e+00 : f32
    %164 = vector.broadcast %cst_47 : f32 to vector<8x128xf32>
    %165 = arith.addf %164, %163 : vector<8x128xf32>
    %166 = arith.divf %164, %165 : vector<8x128xf32>
    %167 = vector.extract_strided_slice %157 {offsets = [0, 128], sizes = [8, 128], strides = [1, 1]} : vector<8x384xf32> to vector<8x128xf32>
    %168 = vector.extract_strided_slice %158 {offsets = [0, 128], sizes = [8, 128], strides = [1, 1]} : vector<8x384xf32> to vector<8x128xf32>
    %169 = arith.addf %167, %168 : vector<8x128xf32>
    %170 = arith.negf %169 : vector<8x128xf32>
    %171 = math.exp %170 : vector<8x128xf32>
    %cst_48 = arith.constant 1.000000e+00 : f32
    %172 = vector.broadcast %cst_48 : f32 to vector<8x128xf32>
    %173 = arith.addf %172, %171 : vector<8x128xf32>
    %174 = arith.divf %172, %173 : vector<8x128xf32>
    %175 = vector.extract_strided_slice %157 {offsets = [0, 256], sizes = [8, 128], strides = [1, 1]} : vector<8x384xf32> to vector<8x128xf32>
    %176 = vector.extract_strided_slice %158 {offsets = [0, 256], sizes = [8, 128], strides = [1, 1]} : vector<8x384xf32> to vector<8x128xf32>
    %177 = arith.addf %176, %13 : vector<8x128xf32>
    %178 = arith.mulf %166, %177 : vector<8x128xf32>
    %179 = arith.addf %175, %178 : vector<8x128xf32>
    %180 = math.tanh %179 : vector<8x128xf32>
    %cst_49 = arith.constant 1.000000e+00 : f32
    %181 = vector.broadcast %cst_49 : f32 to vector<8x128xf32>
    %182 = arith.subf %181, %174 : vector<8x128xf32>
    %183 = arith.mulf %182, %180 : vector<8x128xf32>
    %184 = arith.mulf %174, %119 : vector<8x128xf32>
    %185 = arith.addf %183, %184 : vector<8x128xf32>
    %186 = tpu.concatenate %155, %185 in 1 : vector<8x128xf32>, vector<8x128xf32> -> vector<8x256xf32>
    %187 = arith.truncf %186 : vector<8x256xf32> to vector<8x256xbf16>
    %c0_50 = arith.constant 0 : index
    %c0_51 = arith.constant 0 : index
    %188 = vector.load %arg4[%c0_50, %c0_51] : memref<256x1280xbf16, #tpu.memory_space<vmem>>, vector<256x1280xbf16>
    %cst_52 = arith.constant dense<0.000000e+00> : vector<8x1280xf32>
    %189 = tpu.matmul %187, %188, %cst_52 {dimension_numbers = #tpu.dot_dimension_numbers<[1], [0], [0], [1], [0, 0, 1, 1], [], []>} : vector<8x256xbf16>, vector<256x1280xbf16>, vector<8x1280xf32> -> vector<8x1280xf32>
    %190 = vector.extract_strided_slice %189 {offsets = [0, 1152], sizes = [8, 128], strides = [1, 1]} : vector<8x1280xf32> to vector<8x128xf32>
    %191 = arith.addf %190, %19 : vector<8x128xf32>
    %c8_53 = arith.constant 8 : index
    %c0_54 = arith.constant 0 : index
    %192 = vector.load %arg10[%c8_53, %c0_54] : memref<64x128xf32, #tpu.memory_space<vmem>>, vector<8x128xf32>
    tpu.vector_store %arg10[%c8_53, %c0_54], %191 {strides = array<i32>} : memref<64x128xf32, #tpu.memory_space<vmem>>, vector<8x128xf32>,
    %c24 = arith.constant 24 : index
    %c0_55 = arith.constant 0 : index
    %193 = vector.load %arg12[%c24, %c0_55] : memref<64x384xf32, #tpu.memory_space<vmem>>, vector<8x384xf32>
    %194 = vector.extract_strided_slice %189 {offsets = [0, 0], sizes = [8, 384], strides = [1, 1]} : vector<8x1280xf32> to vector<8x384xf32>
    %195 = vector.extract_strided_slice %193 {offsets = [0, 0], sizes = [8, 128], strides = [1, 1]} : vector<8x384xf32> to vector<8x128xf32>
    %196 = vector.extract_strided_slice %194 {offsets = [0, 0], sizes = [8, 128], strides = [1, 1]} : vector<8x384xf32> to vector<8x128xf32>
    %197 = arith.addf %195, %196 : vector<8x128xf32>
    %198 = arith.negf %197 : vector<8x128xf32>
    %199 = math.exp %198 : vector<8x128xf32>
    %cst_56 = arith.constant 1.000000e+00 : f32
    %200 = vector.broadcast %cst_56 : f32 to vector<8x128xf32>
    %201 = arith.addf %200, %199 : vector<8x128xf32>
    %202 = arith.divf %200, %201 : vector<8x128xf32>
    %203 = vector.extract_strided_slice %193 {offsets = [0, 128], sizes = [8, 128], strides = [1, 1]} : vector<8x384xf32> to vector<8x128xf32>
    %204 = vector.extract_strided_slice %194 {offsets = [0, 128], sizes = [8, 128], strides = [1, 1]} : vector<8x384xf32> to vector<8x128xf32>
    %205 = arith.addf %203, %204 : vector<8x128xf32>
    %206 = arith.negf %205 : vector<8x128xf32>
    %207 = math.exp %206 : vector<8x128xf32>
    %cst_57 = arith.constant 1.000000e+00 : f32
    %208 = vector.broadcast %cst_57 : f32 to vector<8x128xf32>
    %209 = arith.addf %208, %207 : vector<8x128xf32>
    %210 = arith.divf %208, %209 : vector<8x128xf32>
    %211 = vector.extract_strided_slice %193 {offsets = [0, 256], sizes = [8, 128], strides = [1, 1]} : vector<8x384xf32> to vector<8x128xf32>
    %212 = vector.extract_strided_slice %194 {offsets = [0, 256], sizes = [8, 128], strides = [1, 1]} : vector<8x384xf32> to vector<8x128xf32>
    %213 = arith.addf %212, %10 : vector<8x128xf32>
    %214 = arith.mulf %202, %213 : vector<8x128xf32>
    %215 = arith.addf %211, %214 : vector<8x128xf32>
    %216 = math.tanh %215 : vector<8x128xf32>
    %cst_58 = arith.constant 1.000000e+00 : f32
    %217 = vector.broadcast %cst_58 : f32 to vector<8x128xf32>
    %218 = arith.subf %217, %210 : vector<8x128xf32>
    %219 = arith.mulf %218, %216 : vector<8x128xf32>
    %220 = arith.mulf %210, %155 : vector<8x128xf32>
    %221 = arith.addf %219, %220 : vector<8x128xf32>
    %222 = vector.extract_strided_slice %189 {offsets = [0, 768], sizes = [8, 384], strides = [1, 1]} : vector<8x1280xf32> to vector<8x384xf32>
    %223 = arith.addf %222, %16 : vector<8x384xf32>
    %224 = vector.extract_strided_slice %189 {offsets = [0, 384], sizes = [8, 384], strides = [1, 1]} : vector<8x1280xf32> to vector<8x384xf32>
    %225 = vector.extract_strided_slice %223 {offsets = [0, 0], sizes = [8, 128], strides = [1, 1]} : vector<8x384xf32> to vector<8x128xf32>
    %226 = vector.extract_strided_slice %224 {offsets = [0, 0], sizes = [8, 128], strides = [1, 1]} : vector<8x384xf32> to vector<8x128xf32>
    %227 = arith.addf %225, %226 : vector<8x128xf32>
    %228 = arith.negf %227 : vector<8x128xf32>
    %229 = math.exp %228 : vector<8x128xf32>
    %cst_59 = arith.constant 1.000000e+00 : f32
    %230 = vector.broadcast %cst_59 : f32 to vector<8x128xf32>
    %231 = arith.addf %230, %229 : vector<8x128xf32>
    %232 = arith.divf %230, %231 : vector<8x128xf32>
    %233 = vector.extract_strided_slice %223 {offsets = [0, 128], sizes = [8, 128], strides = [1, 1]} : vector<8x384xf32> to vector<8x128xf32>
    %234 = vector.extract_strided_slice %224 {offsets = [0, 128], sizes = [8, 128], strides = [1, 1]} : vector<8x384xf32> to vector<8x128xf32>
    %235 = arith.addf %233, %234 : vector<8x128xf32>
    %236 = arith.negf %235 : vector<8x128xf32>
    %237 = math.exp %236 : vector<8x128xf32>
    %cst_60 = arith.constant 1.000000e+00 : f32
    %238 = vector.broadcast %cst_60 : f32 to vector<8x128xf32>
    %239 = arith.addf %238, %237 : vector<8x128xf32>
    %240 = arith.divf %238, %239 : vector<8x128xf32>
    %241 = vector.extract_strided_slice %223 {offsets = [0, 256], sizes = [8, 128], strides = [1, 1]} : vector<8x384xf32> to vector<8x128xf32>
    %242 = vector.extract_strided_slice %224 {offsets = [0, 256], sizes = [8, 128], strides = [1, 1]} : vector<8x384xf32> to vector<8x128xf32>
    %243 = arith.addf %242, %13 : vector<8x128xf32>
    %244 = arith.mulf %232, %243 : vector<8x128xf32>
    %245 = arith.addf %241, %244 : vector<8x128xf32>
    %246 = math.tanh %245 : vector<8x128xf32>
    %cst_61 = arith.constant 1.000000e+00 : f32
    %247 = vector.broadcast %cst_61 : f32 to vector<8x128xf32>
    %248 = arith.subf %247, %240 : vector<8x128xf32>
    %249 = arith.mulf %248, %246 : vector<8x128xf32>
    %250 = arith.mulf %240, %185 : vector<8x128xf32>
    %251 = arith.addf %249, %250 : vector<8x128xf32>
    %252 = tpu.concatenate %221, %251 in 1 : vector<8x128xf32>, vector<8x128xf32> -> vector<8x256xf32>
    %253 = arith.truncf %252 : vector<8x256xf32> to vector<8x256xbf16>
    %c0_62 = arith.constant 0 : index
    %c0_63 = arith.constant 0 : index
    %254 = vector.load %arg4[%c0_62, %c0_63] : memref<256x1280xbf16, #tpu.memory_space<vmem>>, vector<256x1280xbf16>
    %cst_64 = arith.constant dense<0.000000e+00> : vector<8x1280xf32>
    %255 = tpu.matmul %253, %254, %cst_64 {dimension_numbers = #tpu.dot_dimension_numbers<[1], [0], [0], [1], [0, 0, 1, 1], [], []>} : vector<8x256xbf16>, vector<256x1280xbf16>, vector<8x1280xf32> -> vector<8x1280xf32>
    %256 = vector.extract_strided_slice %255 {offsets = [0, 1152], sizes = [8, 128], strides = [1, 1]} : vector<8x1280xf32> to vector<8x128xf32>
    %257 = arith.addf %256, %19 : vector<8x128xf32>
    %c16_65 = arith.constant 16 : index
    %c0_66 = arith.constant 0 : index
    %258 = vector.load %arg10[%c16_65, %c0_66] : memref<64x128xf32, #tpu.memory_space<vmem>>, vector<8x128xf32>
    tpu.vector_store %arg10[%c16_65, %c0_66], %257 {strides = array<i32>} : memref<64x128xf32, #tpu.memory_space<vmem>>, vector<8x128xf32>,
    %c32 = arith.constant 32 : index
    %c0_67 = arith.constant 0 : index
    %259 = vector.load %arg12[%c32, %c0_67] : memref<64x384xf32, #tpu.memory_space<vmem>>, vector<8x384xf32>
    %260 = vector.extract_strided_slice %255 {offsets = [0, 0], sizes = [8, 384], strides = [1, 1]} : vector<8x1280xf32> to vector<8x384xf32>
    %261 = vector.extract_strided_slice %259 {offsets = [0, 0], sizes = [8, 128], strides = [1, 1]} : vector<8x384xf32> to vector<8x128xf32>
    %262 = vector.extract_strided_slice %260 {offsets = [0, 0], sizes = [8, 128], strides = [1, 1]} : vector<8x384xf32> to vector<8x128xf32>
    %263 = arith.addf %261, %262 : vector<8x128xf32>
    %264 = arith.negf %263 : vector<8x128xf32>
    %265 = math.exp %264 : vector<8x128xf32>
    %cst_68 = arith.constant 1.000000e+00 : f32
    %266 = vector.broadcast %cst_68 : f32 to vector<8x128xf32>
    %267 = arith.addf %266, %265 : vector<8x128xf32>
    %268 = arith.divf %266, %267 : vector<8x128xf32>
    %269 = vector.extract_strided_slice %259 {offsets = [0, 128], sizes = [8, 128], strides = [1, 1]} : vector<8x384xf32> to vector<8x128xf32>
    %270 = vector.extract_strided_slice %260 {offsets = [0, 128], sizes = [8, 128], strides = [1, 1]} : vector<8x384xf32> to vector<8x128xf32>
    %271 = arith.addf %269, %270 : vector<8x128xf32>
    %272 = arith.negf %271 : vector<8x128xf32>
    %273 = math.exp %272 : vector<8x128xf32>
    %cst_69 = arith.constant 1.000000e+00 : f32
    %274 = vector.broadcast %cst_69 : f32 to vector<8x128xf32>
    %275 = arith.addf %274, %273 : vector<8x128xf32>
    %276 = arith.divf %274, %275 : vector<8x128xf32>
    %277 = vector.extract_strided_slice %259 {offsets = [0, 256], sizes = [8, 128], strides = [1, 1]} : vector<8x384xf32> to vector<8x128xf32>
    %278 = vector.extract_strided_slice %260 {offsets = [0, 256], sizes = [8, 128], strides = [1, 1]} : vector<8x384xf32> to vector<8x128xf32>
    %279 = arith.addf %278, %10 : vector<8x128xf32>
    %280 = arith.mulf %268, %279 : vector<8x128xf32>
    %281 = arith.addf %277, %280 : vector<8x128xf32>
    %282 = math.tanh %281 : vector<8x128xf32>
    %cst_70 = arith.constant 1.000000e+00 : f32
    %283 = vector.broadcast %cst_70 : f32 to vector<8x128xf32>
    %284 = arith.subf %283, %276 : vector<8x128xf32>
    %285 = arith.mulf %284, %282 : vector<8x128xf32>
    %286 = arith.mulf %276, %221 : vector<8x128xf32>
    %287 = arith.addf %285, %286 : vector<8x128xf32>
    %288 = vector.extract_strided_slice %255 {offsets = [0, 768], sizes = [8, 384], strides = [1, 1]} : vector<8x1280xf32> to vector<8x384xf32>
    %289 = arith.addf %288, %16 : vector<8x384xf32>
    %290 = vector.extract_strided_slice %255 {offsets = [0, 384], sizes = [8, 384], strides = [1, 1]} : vector<8x1280xf32> to vector<8x384xf32>
    %291 = vector.extract_strided_slice %289 {offsets = [0, 0], sizes = [8, 128], strides = [1, 1]} : vector<8x384xf32> to vector<8x128xf32>
    %292 = vector.extract_strided_slice %290 {offsets = [0, 0], sizes = [8, 128], strides = [1, 1]} : vector<8x384xf32> to vector<8x128xf32>
    %293 = arith.addf %291, %292 : vector<8x128xf32>
    %294 = arith.negf %293 : vector<8x128xf32>
    %295 = math.exp %294 : vector<8x128xf32>
    %cst_71 = arith.constant 1.000000e+00 : f32
    %296 = vector.broadcast %cst_71 : f32 to vector<8x128xf32>
    %297 = arith.addf %296, %295 : vector<8x128xf32>
    %298 = arith.divf %296, %297 : vector<8x128xf32>
    %299 = vector.extract_strided_slice %289 {offsets = [0, 128], sizes = [8, 128], strides = [1, 1]} : vector<8x384xf32> to vector<8x128xf32>
    %300 = vector.extract_strided_slice %290 {offsets = [0, 128], sizes = [8, 128], strides = [1, 1]} : vector<8x384xf32> to vector<8x128xf32>
    %301 = arith.addf %299, %300 : vector<8x128xf32>
    %302 = arith.negf %301 : vector<8x128xf32>
    %303 = math.exp %302 : vector<8x128xf32>
    %cst_72 = arith.constant 1.000000e+00 : f32
    %304 = vector.broadcast %cst_72 : f32 to vector<8x128xf32>
    %305 = arith.addf %304, %303 : vector<8x128xf32>
    %306 = arith.divf %304, %305 : vector<8x128xf32>
    %307 = vector.extract_strided_slice %289 {offsets = [0, 256], sizes = [8, 128], strides = [1, 1]} : vector<8x384xf32> to vector<8x128xf32>
    %308 = vector.extract_strided_slice %290 {offsets = [0, 256], sizes = [8, 128], strides = [1, 1]} : vector<8x384xf32> to vector<8x128xf32>
    %309 = arith.addf %308, %13 : vector<8x128xf32>
    %310 = arith.mulf %298, %309 : vector<8x128xf32>
    %311 = arith.addf %307, %310 : vector<8x128xf32>
    %312 = math.tanh %311 : vector<8x128xf32>
    %cst_73 = arith.constant 1.000000e+00 : f32
    %313 = vector.broadcast %cst_73 : f32 to vector<8x128xf32>
    %314 = arith.subf %313, %306 : vector<8x128xf32>
    %315 = arith.mulf %314, %312 : vector<8x128xf32>
    %316 = arith.mulf %306, %251 : vector<8x128xf32>
    %317 = arith.addf %315, %316 : vector<8x128xf32>
    %318 = tpu.concatenate %287, %317 in 1 : vector<8x128xf32>, vector<8x128xf32> -> vector<8x256xf32>
    %319 = arith.truncf %318 : vector<8x256xf32> to vector<8x256xbf16>
    %c0_74 = arith.constant 0 : index
    %c0_75 = arith.constant 0 : index
    %320 = vector.load %arg4[%c0_74, %c0_75] : memref<256x1280xbf16, #tpu.memory_space<vmem>>, vector<256x1280xbf16>
    %cst_76 = arith.constant dense<0.000000e+00> : vector<8x1280xf32>
    %321 = tpu.matmul %319, %320, %cst_76 {dimension_numbers = #tpu.dot_dimension_numbers<[1], [0], [0], [1], [0, 0, 1, 1], [], []>} : vector<8x256xbf16>, vector<256x1280xbf16>, vector<8x1280xf32> -> vector<8x1280xf32>
    %322 = vector.extract_strided_slice %321 {offsets = [0, 1152], sizes = [8, 128], strides = [1, 1]} : vector<8x1280xf32> to vector<8x128xf32>
    %323 = arith.addf %322, %19 : vector<8x128xf32>
    %c24_77 = arith.constant 24 : index
    %c0_78 = arith.constant 0 : index
    %324 = vector.load %arg10[%c24_77, %c0_78] : memref<64x128xf32, #tpu.memory_space<vmem>>, vector<8x128xf32>
    tpu.vector_store %arg10[%c24_77, %c0_78], %323 {strides = array<i32>} : memref<64x128xf32, #tpu.memory_space<vmem>>, vector<8x128xf32>,
    %c40 = arith.constant 40 : index
    %c0_79 = arith.constant 0 : index
    %325 = vector.load %arg12[%c40, %c0_79] : memref<64x384xf32, #tpu.memory_space<vmem>>, vector<8x384xf32>
    %326 = vector.extract_strided_slice %321 {offsets = [0, 0], sizes = [8, 384], strides = [1, 1]} : vector<8x1280xf32> to vector<8x384xf32>
    %327 = vector.extract_strided_slice %325 {offsets = [0, 0], sizes = [8, 128], strides = [1, 1]} : vector<8x384xf32> to vector<8x128xf32>
    %328 = vector.extract_strided_slice %326 {offsets = [0, 0], sizes = [8, 128], strides = [1, 1]} : vector<8x384xf32> to vector<8x128xf32>
    %329 = arith.addf %327, %328 : vector<8x128xf32>
    %330 = arith.negf %329 : vector<8x128xf32>
    %331 = math.exp %330 : vector<8x128xf32>
    %cst_80 = arith.constant 1.000000e+00 : f32
    %332 = vector.broadcast %cst_80 : f32 to vector<8x128xf32>
    %333 = arith.addf %332, %331 : vector<8x128xf32>
    %334 = arith.divf %332, %333 : vector<8x128xf32>
    %335 = vector.extract_strided_slice %325 {offsets = [0, 128], sizes = [8, 128], strides = [1, 1]} : vector<8x384xf32> to vector<8x128xf32>
    %336 = vector.extract_strided_slice %326 {offsets = [0, 128], sizes = [8, 128], strides = [1, 1]} : vector<8x384xf32> to vector<8x128xf32>
    %337 = arith.addf %335, %336 : vector<8x128xf32>
    %338 = arith.negf %337 : vector<8x128xf32>
    %339 = math.exp %338 : vector<8x128xf32>
    %cst_81 = arith.constant 1.000000e+00 : f32
    %340 = vector.broadcast %cst_81 : f32 to vector<8x128xf32>
    %341 = arith.addf %340, %339 : vector<8x128xf32>
    %342 = arith.divf %340, %341 : vector<8x128xf32>
    %343 = vector.extract_strided_slice %325 {offsets = [0, 256], sizes = [8, 128], strides = [1, 1]} : vector<8x384xf32> to vector<8x128xf32>
    %344 = vector.extract_strided_slice %326 {offsets = [0, 256], sizes = [8, 128], strides = [1, 1]} : vector<8x384xf32> to vector<8x128xf32>
    %345 = arith.addf %344, %10 : vector<8x128xf32>
    %346 = arith.mulf %334, %345 : vector<8x128xf32>
    %347 = arith.addf %343, %346 : vector<8x128xf32>
    %348 = math.tanh %347 : vector<8x128xf32>
    %cst_82 = arith.constant 1.000000e+00 : f32
    %349 = vector.broadcast %cst_82 : f32 to vector<8x128xf32>
    %350 = arith.subf %349, %342 : vector<8x128xf32>
    %351 = arith.mulf %350, %348 : vector<8x128xf32>
    %352 = arith.mulf %342, %287 : vector<8x128xf32>
    %353 = arith.addf %351, %352 : vector<8x128xf32>
    %354 = vector.extract_strided_slice %321 {offsets = [0, 768], sizes = [8, 384], strides = [1, 1]} : vector<8x1280xf32> to vector<8x384xf32>
    %355 = arith.addf %354, %16 : vector<8x384xf32>
    %356 = vector.extract_strided_slice %321 {offsets = [0, 384], sizes = [8, 384], strides = [1, 1]} : vector<8x1280xf32> to vector<8x384xf32>
    %357 = vector.extract_strided_slice %355 {offsets = [0, 0], sizes = [8, 128], strides = [1, 1]} : vector<8x384xf32> to vector<8x128xf32>
    %358 = vector.extract_strided_slice %356 {offsets = [0, 0], sizes = [8, 128], strides = [1, 1]} : vector<8x384xf32> to vector<8x128xf32>
    %359 = arith.addf %357, %358 : vector<8x128xf32>
    %360 = arith.negf %359 : vector<8x128xf32>
    %361 = math.exp %360 : vector<8x128xf32>
    %cst_83 = arith.constant 1.000000e+00 : f32
    %362 = vector.broadcast %cst_83 : f32 to vector<8x128xf32>
    %363 = arith.addf %362, %361 : vector<8x128xf32>
    %364 = arith.divf %362, %363 : vector<8x128xf32>
    %365 = vector.extract_strided_slice %355 {offsets = [0, 128], sizes = [8, 128], strides = [1, 1]} : vector<8x384xf32> to vector<8x128xf32>
    %366 = vector.extract_strided_slice %356 {offsets = [0, 128], sizes = [8, 128], strides = [1, 1]} : vector<8x384xf32> to vector<8x128xf32>
    %367 = arith.addf %365, %366 : vector<8x128xf32>
    %368 = arith.negf %367 : vector<8x128xf32>
    %369 = math.exp %368 : vector<8x128xf32>
    %cst_84 = arith.constant 1.000000e+00 : f32
    %370 = vector.broadcast %cst_84 : f32 to vector<8x128xf32>
    %371 = arith.addf %370, %369 : vector<8x128xf32>
    %372 = arith.divf %370, %371 : vector<8x128xf32>
    %373 = vector.extract_strided_slice %355 {offsets = [0, 256], sizes = [8, 128], strides = [1, 1]} : vector<8x384xf32> to vector<8x128xf32>
    %374 = vector.extract_strided_slice %356 {offsets = [0, 256], sizes = [8, 128], strides = [1, 1]} : vector<8x384xf32> to vector<8x128xf32>
    %375 = arith.addf %374, %13 : vector<8x128xf32>
    %376 = arith.mulf %364, %375 : vector<8x128xf32>
    %377 = arith.addf %373, %376 : vector<8x128xf32>
    %378 = math.tanh %377 : vector<8x128xf32>
    %cst_85 = arith.constant 1.000000e+00 : f32
    %379 = vector.broadcast %cst_85 : f32 to vector<8x128xf32>
    %380 = arith.subf %379, %372 : vector<8x128xf32>
    %381 = arith.mulf %380, %378 : vector<8x128xf32>
    %382 = arith.mulf %372, %317 : vector<8x128xf32>
    %383 = arith.addf %381, %382 : vector<8x128xf32>
    %384 = tpu.concatenate %353, %383 in 1 : vector<8x128xf32>, vector<8x128xf32> -> vector<8x256xf32>
    %385 = arith.truncf %384 : vector<8x256xf32> to vector<8x256xbf16>
    %c0_86 = arith.constant 0 : index
    %c0_87 = arith.constant 0 : index
    %386 = vector.load %arg4[%c0_86, %c0_87] : memref<256x1280xbf16, #tpu.memory_space<vmem>>, vector<256x1280xbf16>
    %cst_88 = arith.constant dense<0.000000e+00> : vector<8x1280xf32>
    %387 = tpu.matmul %385, %386, %cst_88 {dimension_numbers = #tpu.dot_dimension_numbers<[1], [0], [0], [1], [0, 0, 1, 1], [], []>} : vector<8x256xbf16>, vector<256x1280xbf16>, vector<8x1280xf32> -> vector<8x1280xf32>
    %388 = vector.extract_strided_slice %387 {offsets = [0, 1152], sizes = [8, 128], strides = [1, 1]} : vector<8x1280xf32> to vector<8x128xf32>
    %389 = arith.addf %388, %19 : vector<8x128xf32>
    %c32_89 = arith.constant 32 : index
    %c0_90 = arith.constant 0 : index
    %390 = vector.load %arg10[%c32_89, %c0_90] : memref<64x128xf32, #tpu.memory_space<vmem>>, vector<8x128xf32>
    tpu.vector_store %arg10[%c32_89, %c0_90], %389 {strides = array<i32>} : memref<64x128xf32, #tpu.memory_space<vmem>>, vector<8x128xf32>,
    %c48 = arith.constant 48 : index
    %c0_91 = arith.constant 0 : index
    %391 = vector.load %arg12[%c48, %c0_91] : memref<64x384xf32, #tpu.memory_space<vmem>>, vector<8x384xf32>
    %392 = vector.extract_strided_slice %387 {offsets = [0, 0], sizes = [8, 384], strides = [1, 1]} : vector<8x1280xf32> to vector<8x384xf32>
    %393 = vector.extract_strided_slice %391 {offsets = [0, 0], sizes = [8, 128], strides = [1, 1]} : vector<8x384xf32> to vector<8x128xf32>
    %394 = vector.extract_strided_slice %392 {offsets = [0, 0], sizes = [8, 128], strides = [1, 1]} : vector<8x384xf32> to vector<8x128xf32>
    %395 = arith.addf %393, %394 : vector<8x128xf32>
    %396 = arith.negf %395 : vector<8x128xf32>
    %397 = math.exp %396 : vector<8x128xf32>
    %cst_92 = arith.constant 1.000000e+00 : f32
    %398 = vector.broadcast %cst_92 : f32 to vector<8x128xf32>
    %399 = arith.addf %398, %397 : vector<8x128xf32>
    %400 = arith.divf %398, %399 : vector<8x128xf32>
    %401 = vector.extract_strided_slice %391 {offsets = [0, 128], sizes = [8, 128], strides = [1, 1]} : vector<8x384xf32> to vector<8x128xf32>
    %402 = vector.extract_strided_slice %392 {offsets = [0, 128], sizes = [8, 128], strides = [1, 1]} : vector<8x384xf32> to vector<8x128xf32>
    %403 = arith.addf %401, %402 : vector<8x128xf32>
    %404 = arith.negf %403 : vector<8x128xf32>
    %405 = math.exp %404 : vector<8x128xf32>
    %cst_93 = arith.constant 1.000000e+00 : f32
    %406 = vector.broadcast %cst_93 : f32 to vector<8x128xf32>
    %407 = arith.addf %406, %405 : vector<8x128xf32>
    %408 = arith.divf %406, %407 : vector<8x128xf32>
    %409 = vector.extract_strided_slice %391 {offsets = [0, 256], sizes = [8, 128], strides = [1, 1]} : vector<8x384xf32> to vector<8x128xf32>
    %410 = vector.extract_strided_slice %392 {offsets = [0, 256], sizes = [8, 128], strides = [1, 1]} : vector<8x384xf32> to vector<8x128xf32>
    %411 = arith.addf %410, %10 : vector<8x128xf32>
    %412 = arith.mulf %400, %411 : vector<8x128xf32>
    %413 = arith.addf %409, %412 : vector<8x128xf32>
    %414 = math.tanh %413 : vector<8x128xf32>
    %cst_94 = arith.constant 1.000000e+00 : f32
    %415 = vector.broadcast %cst_94 : f32 to vector<8x128xf32>
    %416 = arith.subf %415, %408 : vector<8x128xf32>
    %417 = arith.mulf %416, %414 : vector<8x128xf32>
    %418 = arith.mulf %408, %353 : vector<8x128xf32>
    %419 = arith.addf %417, %418 : vector<8x128xf32>
    %420 = vector.extract_strided_slice %387 {offsets = [0, 768], sizes = [8, 384], strides = [1, 1]} : vector<8x1280xf32> to vector<8x384xf32>
    %421 = arith.addf %420, %16 : vector<8x384xf32>
    %422 = vector.extract_strided_slice %387 {offsets = [0, 384], sizes = [8, 384], strides = [1, 1]} : vector<8x1280xf32> to vector<8x384xf32>
    %423 = vector.extract_strided_slice %421 {offsets = [0, 0], sizes = [8, 128], strides = [1, 1]} : vector<8x384xf32> to vector<8x128xf32>
    %424 = vector.extract_strided_slice %422 {offsets = [0, 0], sizes = [8, 128], strides = [1, 1]} : vector<8x384xf32> to vector<8x128xf32>
    %425 = arith.addf %423, %424 : vector<8x128xf32>
    %426 = arith.negf %425 : vector<8x128xf32>
    %427 = math.exp %426 : vector<8x128xf32>
    %cst_95 = arith.constant 1.000000e+00 : f32
    %428 = vector.broadcast %cst_95 : f32 to vector<8x128xf32>
    %429 = arith.addf %428, %427 : vector<8x128xf32>
    %430 = arith.divf %428, %429 : vector<8x128xf32>
    %431 = vector.extract_strided_slice %421 {offsets = [0, 128], sizes = [8, 128], strides = [1, 1]} : vector<8x384xf32> to vector<8x128xf32>
    %432 = vector.extract_strided_slice %422 {offsets = [0, 128], sizes = [8, 128], strides = [1, 1]} : vector<8x384xf32> to vector<8x128xf32>
    %433 = arith.addf %431, %432 : vector<8x128xf32>
    %434 = arith.negf %433 : vector<8x128xf32>
    %435 = math.exp %434 : vector<8x128xf32>
    %cst_96 = arith.constant 1.000000e+00 : f32
    %436 = vector.broadcast %cst_96 : f32 to vector<8x128xf32>
    %437 = arith.addf %436, %435 : vector<8x128xf32>
    %438 = arith.divf %436, %437 : vector<8x128xf32>
    %439 = vector.extract_strided_slice %421 {offsets = [0, 256], sizes = [8, 128], strides = [1, 1]} : vector<8x384xf32> to vector<8x128xf32>
    %440 = vector.extract_strided_slice %422 {offsets = [0, 256], sizes = [8, 128], strides = [1, 1]} : vector<8x384xf32> to vector<8x128xf32>
    %441 = arith.addf %440, %13 : vector<8x128xf32>
    %442 = arith.mulf %430, %441 : vector<8x128xf32>
    %443 = arith.addf %439, %442 : vector<8x128xf32>
    %444 = math.tanh %443 : vector<8x128xf32>
    %cst_97 = arith.constant 1.000000e+00 : f32
    %445 = vector.broadcast %cst_97 : f32 to vector<8x128xf32>
    %446 = arith.subf %445, %438 : vector<8x128xf32>
    %447 = arith.mulf %446, %444 : vector<8x128xf32>
    %448 = arith.mulf %438, %383 : vector<8x128xf32>
    %449 = arith.addf %447, %448 : vector<8x128xf32>
    %450 = tpu.concatenate %419, %449 in 1 : vector<8x128xf32>, vector<8x128xf32> -> vector<8x256xf32>
    %451 = arith.truncf %450 : vector<8x256xf32> to vector<8x256xbf16>
    %c0_98 = arith.constant 0 : index
    %c0_99 = arith.constant 0 : index
    %452 = vector.load %arg4[%c0_98, %c0_99] : memref<256x1280xbf16, #tpu.memory_space<vmem>>, vector<256x1280xbf16>
    %cst_100 = arith.constant dense<0.000000e+00> : vector<8x1280xf32>
    %453 = tpu.matmul %451, %452, %cst_100 {dimension_numbers = #tpu.dot_dimension_numbers<[1], [0], [0], [1], [0, 0, 1, 1], [], []>} : vector<8x256xbf16>, vector<256x1280xbf16>, vector<8x1280xf32> -> vector<8x1280xf32>
    %454 = vector.extract_strided_slice %453 {offsets = [0, 1152], sizes = [8, 128], strides = [1, 1]} : vector<8x1280xf32> to vector<8x128xf32>
    %455 = arith.addf %454, %19 : vector<8x128xf32>
    %c40_101 = arith.constant 40 : index
    %c0_102 = arith.constant 0 : index
    %456 = vector.load %arg10[%c40_101, %c0_102] : memref<64x128xf32, #tpu.memory_space<vmem>>, vector<8x128xf32>
    tpu.vector_store %arg10[%c40_101, %c0_102], %455 {strides = array<i32>} : memref<64x128xf32, #tpu.memory_space<vmem>>, vector<8x128xf32>,
    %c56 = arith.constant 56 : index
    %c0_103 = arith.constant 0 : index
    %457 = vector.load %arg12[%c56, %c0_103] : memref<64x384xf32, #tpu.memory_space<vmem>>, vector<8x384xf32>
    %458 = vector.extract_strided_slice %453 {offsets = [0, 0], sizes = [8, 384], strides = [1, 1]} : vector<8x1280xf32> to vector<8x384xf32>
    %459 = vector.extract_strided_slice %457 {offsets = [0, 0], sizes = [8, 128], strides = [1, 1]} : vector<8x384xf32> to vector<8x128xf32>
    %460 = vector.extract_strided_slice %458 {offsets = [0, 0], sizes = [8, 128], strides = [1, 1]} : vector<8x384xf32> to vector<8x128xf32>
    %461 = arith.addf %459, %460 : vector<8x128xf32>
    %462 = arith.negf %461 : vector<8x128xf32>
    %463 = math.exp %462 : vector<8x128xf32>
    %cst_104 = arith.constant 1.000000e+00 : f32
    %464 = vector.broadcast %cst_104 : f32 to vector<8x128xf32>
    %465 = arith.addf %464, %463 : vector<8x128xf32>
    %466 = arith.divf %464, %465 : vector<8x128xf32>
    %467 = vector.extract_strided_slice %457 {offsets = [0, 128], sizes = [8, 128], strides = [1, 1]} : vector<8x384xf32> to vector<8x128xf32>
    %468 = vector.extract_strided_slice %458 {offsets = [0, 128], sizes = [8, 128], strides = [1, 1]} : vector<8x384xf32> to vector<8x128xf32>
    %469 = arith.addf %467, %468 : vector<8x128xf32>
    %470 = arith.negf %469 : vector<8x128xf32>
    %471 = math.exp %470 : vector<8x128xf32>
    %cst_105 = arith.constant 1.000000e+00 : f32
    %472 = vector.broadcast %cst_105 : f32 to vector<8x128xf32>
    %473 = arith.addf %472, %471 : vector<8x128xf32>
    %474 = arith.divf %472, %473 : vector<8x128xf32>
    %475 = vector.extract_strided_slice %457 {offsets = [0, 256], sizes = [8, 128], strides = [1, 1]} : vector<8x384xf32> to vector<8x128xf32>
    %476 = vector.extract_strided_slice %458 {offsets = [0, 256], sizes = [8, 128], strides = [1, 1]} : vector<8x384xf32> to vector<8x128xf32>
    %477 = arith.addf %476, %10 : vector<8x128xf32>
    %478 = arith.mulf %466, %477 : vector<8x128xf32>
    %479 = arith.addf %475, %478 : vector<8x128xf32>
    %480 = math.tanh %479 : vector<8x128xf32>
    %cst_106 = arith.constant 1.000000e+00 : f32
    %481 = vector.broadcast %cst_106 : f32 to vector<8x128xf32>
    %482 = arith.subf %481, %474 : vector<8x128xf32>
    %483 = arith.mulf %482, %480 : vector<8x128xf32>
    %484 = arith.mulf %474, %419 : vector<8x128xf32>
    %485 = arith.addf %483, %484 : vector<8x128xf32>
    %486 = vector.extract_strided_slice %453 {offsets = [0, 768], sizes = [8, 384], strides = [1, 1]} : vector<8x1280xf32> to vector<8x384xf32>
    %487 = arith.addf %486, %16 : vector<8x384xf32>
    %488 = vector.extract_strided_slice %453 {offsets = [0, 384], sizes = [8, 384], strides = [1, 1]} : vector<8x1280xf32> to vector<8x384xf32>
    %489 = vector.extract_strided_slice %487 {offsets = [0, 0], sizes = [8, 128], strides = [1, 1]} : vector<8x384xf32> to vector<8x128xf32>
    %490 = vector.extract_strided_slice %488 {offsets = [0, 0], sizes = [8, 128], strides = [1, 1]} : vector<8x384xf32> to vector<8x128xf32>
    %491 = arith.addf %489, %490 : vector<8x128xf32>
    %492 = arith.negf %491 : vector<8x128xf32>
    %493 = math.exp %492 : vector<8x128xf32>
    %cst_107 = arith.constant 1.000000e+00 : f32
    %494 = vector.broadcast %cst_107 : f32 to vector<8x128xf32>
    %495 = arith.addf %494, %493 : vector<8x128xf32>
    %496 = arith.divf %494, %495 : vector<8x128xf32>
    %497 = vector.extract_strided_slice %487 {offsets = [0, 128], sizes = [8, 128], strides = [1, 1]} : vector<8x384xf32> to vector<8x128xf32>
    %498 = vector.extract_strided_slice %488 {offsets = [0, 128], sizes = [8, 128], strides = [1, 1]} : vector<8x384xf32> to vector<8x128xf32>
    %499 = arith.addf %497, %498 : vector<8x128xf32>
    %500 = arith.negf %499 : vector<8x128xf32>
    %501 = math.exp %500 : vector<8x128xf32>
    %cst_108 = arith.constant 1.000000e+00 : f32
    %502 = vector.broadcast %cst_108 : f32 to vector<8x128xf32>
    %503 = arith.addf %502, %501 : vector<8x128xf32>
    %504 = arith.divf %502, %503 : vector<8x128xf32>
    %505 = vector.extract_strided_slice %487 {offsets = [0, 256], sizes = [8, 128], strides = [1, 1]} : vector<8x384xf32> to vector<8x128xf32>
    %506 = vector.extract_strided_slice %488 {offsets = [0, 256], sizes = [8, 128], strides = [1, 1]} : vector<8x384xf32> to vector<8x128xf32>
    %507 = arith.addf %506, %13 : vector<8x128xf32>
    %508 = arith.mulf %496, %507 : vector<8x128xf32>
    %509 = arith.addf %505, %508 : vector<8x128xf32>
    %510 = math.tanh %509 : vector<8x128xf32>
    %cst_109 = arith.constant 1.000000e+00 : f32
    %511 = vector.broadcast %cst_109 : f32 to vector<8x128xf32>
    %512 = arith.subf %511, %504 : vector<8x128xf32>
    %513 = arith.mulf %512, %510 : vector<8x128xf32>
    %514 = arith.mulf %504, %449 : vector<8x128xf32>
    %515 = arith.addf %513, %514 : vector<8x128xf32>
    %516 = tpu.concatenate %485, %515 in 1 : vector<8x128xf32>, vector<8x128xf32> -> vector<8x256xf32>
    %517 = arith.truncf %516 : vector<8x256xf32> to vector<8x256xbf16>
    %c0_110 = arith.constant 0 : index
    %c0_111 = arith.constant 0 : index
    %518 = vector.load %arg4[%c0_110, %c0_111] : memref<256x1280xbf16, #tpu.memory_space<vmem>>, vector<256x1280xbf16>
    %cst_112 = arith.constant dense<0.000000e+00> : vector<8x1280xf32>
    %519 = tpu.matmul %517, %518, %cst_112 {dimension_numbers = #tpu.dot_dimension_numbers<[1], [0], [0], [1], [0, 0, 1, 1], [], []>} : vector<8x256xbf16>, vector<256x1280xbf16>, vector<8x1280xf32> -> vector<8x1280xf32>
    %520 = vector.extract_strided_slice %519 {offsets = [0, 1152], sizes = [8, 128], strides = [1, 1]} : vector<8x1280xf32> to vector<8x128xf32>
    %521 = arith.addf %520, %19 : vector<8x128xf32>
    %c48_113 = arith.constant 48 : index
    %c0_114 = arith.constant 0 : index
    %522 = vector.load %arg10[%c48_113, %c0_114] : memref<64x128xf32, #tpu.memory_space<vmem>>, vector<8x128xf32>
    tpu.vector_store %arg10[%c48_113, %c0_114], %521 {strides = array<i32>} : memref<64x128xf32, #tpu.memory_space<vmem>>, vector<8x128xf32>,
    %523 = vector.extract_strided_slice %519 {offsets = [0, 768], sizes = [8, 384], strides = [1, 1]} : vector<8x1280xf32> to vector<8x384xf32>
    %524 = arith.addf %523, %16 : vector<8x384xf32>
    %525 = vector.extract_strided_slice %519 {offsets = [0, 384], sizes = [8, 384], strides = [1, 1]} : vector<8x1280xf32> to vector<8x384xf32>
    %526 = vector.extract_strided_slice %524 {offsets = [0, 0], sizes = [8, 128], strides = [1, 1]} : vector<8x384xf32> to vector<8x128xf32>
    %527 = vector.extract_strided_slice %525 {offsets = [0, 0], sizes = [8, 128], strides = [1, 1]} : vector<8x384xf32> to vector<8x128xf32>
    %528 = arith.addf %526, %527 : vector<8x128xf32>
    %529 = arith.negf %528 : vector<8x128xf32>
    %530 = math.exp %529 : vector<8x128xf32>
    %cst_115 = arith.constant 1.000000e+00 : f32
    %531 = vector.broadcast %cst_115 : f32 to vector<8x128xf32>
    %532 = arith.addf %531, %530 : vector<8x128xf32>
    %533 = arith.divf %531, %532 : vector<8x128xf32>
    %534 = vector.extract_strided_slice %524 {offsets = [0, 128], sizes = [8, 128], strides = [1, 1]} : vector<8x384xf32> to vector<8x128xf32>
    %535 = vector.extract_strided_slice %525 {offsets = [0, 128], sizes = [8, 128], strides = [1, 1]} : vector<8x384xf32> to vector<8x128xf32>
    %536 = arith.addf %534, %535 : vector<8x128xf32>
    %537 = arith.negf %536 : vector<8x128xf32>
    %538 = math.exp %537 : vector<8x128xf32>
    %cst_116 = arith.constant 1.000000e+00 : f32
    %539 = vector.broadcast %cst_116 : f32 to vector<8x128xf32>
    %540 = arith.addf %539, %538 : vector<8x128xf32>
    %541 = arith.divf %539, %540 : vector<8x128xf32>
    %542 = vector.extract_strided_slice %524 {offsets = [0, 256], sizes = [8, 128], strides = [1, 1]} : vector<8x384xf32> to vector<8x128xf32>
    %543 = vector.extract_strided_slice %525 {offsets = [0, 256], sizes = [8, 128], strides = [1, 1]} : vector<8x384xf32> to vector<8x128xf32>
    %544 = arith.addf %543, %13 : vector<8x128xf32>
    %545 = arith.mulf %533, %544 : vector<8x128xf32>
    %546 = arith.addf %542, %545 : vector<8x128xf32>
    %547 = math.tanh %546 : vector<8x128xf32>
    %cst_117 = arith.constant 1.000000e+00 : f32
    %548 = vector.broadcast %cst_117 : f32 to vector<8x128xf32>
    %549 = arith.subf %548, %541 : vector<8x128xf32>
    %550 = arith.mulf %549, %547 : vector<8x128xf32>
    %551 = arith.mulf %541, %515 : vector<8x128xf32>
    %552 = arith.addf %550, %551 : vector<8x128xf32>
    %553 = tpu.concatenate %485, %552 in 1 : vector<8x128xf32>, vector<8x128xf32> -> vector<8x256xf32>
    %554 = arith.truncf %553 : vector<8x256xf32> to vector<8x256xbf16>
    %c0_118 = arith.constant 0 : index
    %c0_119 = arith.constant 0 : index
    %555 = vector.load %arg4[%c0_118, %c0_119] : memref<256x1280xbf16, #tpu.memory_space<vmem>>, vector<256x1280xbf16>
    %cst_120 = arith.constant dense<0.000000e+00> : vector<8x1280xf32>
    %556 = tpu.matmul %554, %555, %cst_120 {dimension_numbers = #tpu.dot_dimension_numbers<[1], [0], [0], [1], [0, 0, 1, 1], [], []>} : vector<8x256xbf16>, vector<256x1280xbf16>, vector<8x1280xf32> -> vector<8x1280xf32>
    %557 = vector.extract_strided_slice %556 {offsets = [0, 1152], sizes = [8, 128], strides = [1, 1]} : vector<8x1280xf32> to vector<8x128xf32>
    %558 = arith.addf %557, %19 : vector<8x128xf32>
    %c56_121 = arith.constant 56 : index
    %c0_122 = arith.constant 0 : index
    %559 = vector.load %arg10[%c56_121, %c0_122] : memref<64x128xf32, #tpu.memory_space<vmem>>, vector<8x128xf32>
    tpu.vector_store %arg10[%c56_121, %c0_122], %558 {strides = array<i32>} : memref<64x128xf32, #tpu.memory_space<vmem>>, vector<8x128xf32>,
    %c0_123 = arith.constant 0 : index
    %c0_124 = arith.constant 0 : index
    %c0_125 = arith.constant 0 : index
    %560 = vector.load %arg11[%c0_123, %c0_124, %c0_125] : memref<2x8x128xf32, #tpu.memory_space<vmem>>, vector<1x8x128xf32>
    %561 = vector.shape_cast %560 : vector<1x8x128xf32> to vector<8x128xf32>
    %562 = vector.shape_cast %485 : vector<8x128xf32> to vector<1x8x128xf32>
    tpu.vector_store %arg11[%c0_123, %c0_124, %c0_125], %562 {strides = array<i32>} : memref<2x8x128xf32, #tpu.memory_space<vmem>>, vector<1x8x128xf32>,
    %c1_126 = arith.constant 1 : index
    %c0_127 = arith.constant 0 : index
    %c0_128 = arith.constant 0 : index
    %563 = vector.load %arg11[%c1_126, %c0_127, %c0_128] : memref<2x8x128xf32, #tpu.memory_space<vmem>>, vector<1x8x128xf32>
    %564 = vector.shape_cast %563 : vector<1x8x128xf32> to vector<8x128xf32>
    %565 = vector.shape_cast %552 : vector<8x128xf32> to vector<1x8x128xf32>
    tpu.vector_store %arg11[%c1_126, %c0_127, %c0_128], %565 {strides = array<i32>} : memref<2x8x128xf32, #tpu.memory_space<vmem>>, vector<1x8x128xf32>,
    return
  }
  func.func @transform_0(%arg0: i32) -> (i32, i32) {
    %c0_i32 = arith.constant 0 : i32
    %c0_i32_0 = arith.constant 0 : i32
    %c0_i32_1 = arith.constant 0 : i32
    return %c0_i32, %c0_i32_0 : i32, i32
  }
  func.func @transform_1(%arg0: i32) -> (i32, i32, i32) {
    %c0_i32 = arith.constant 0 : i32
    %c0_i32_0 = arith.constant 0 : i32
    %c0_i32_1 = arith.constant 0 : i32
    %c0_i32_2 = arith.constant 0 : i32
    return %c0_i32, %c0_i32_0, %c0_i32_1 : i32, i32, i32
  }
  func.func @transform_2(%arg0: i32) -> (i32, i32) {
    %c0_i32 = arith.constant 0 : i32
    %c0_i32_0 = arith.constant 0 : i32
    %c0_i32_1 = arith.constant 0 : i32
    return %c0_i32, %c0_i32_0 : i32, i32
  }
  func.func @transform_3(%arg0: i32) -> (i32, i32) {
    %c0_i32 = arith.constant 0 : i32
    %c0_i32_0 = arith.constant 0 : i32
    %c0_i32_1 = arith.constant 0 : i32
    return %c0_i32, %c0_i32_0 : i32, i32
  }
  func.func @transform_4(%arg0: i32) -> (i32, i32) {
    %c0_i32 = arith.constant 0 : i32
    %c0_i32_0 = arith.constant 0 : i32
    %c0_i32_1 = arith.constant 0 : i32
    return %c0_i32, %c0_i32_0 : i32, i32
  }
  func.func @transform_5(%arg0: i32) -> (i32, i32) {
    %c0_i32 = arith.constant 0 : i32
    %c0_i32_0 = arith.constant 0 : i32
    %c0_i32_1 = arith.constant 0 : i32
    return %c0_i32, %c0_i32_0 : i32, i32
  }
  func.func @transform_6(%arg0: i32) -> (i32, i32) {
    %c0_i32 = arith.constant 0 : i32
    %c0_i32_0 = arith.constant 0 : i32
    %c0_i32_1 = arith.constant 0 : i32
    return %c0_i32, %c0_i32_0 : i32, i32
  }
  func.func @transform_7(%arg0: i32) -> (i32, i32) {
    %c0_i32 = arith.constant 0 : i32
    %c0_i32_0 = arith.constant 0 : i32
    %c0_i32_1 = arith.constant 0 : i32
    return %c0_i32, %c0_i32_0 : i32, i32
  }
  func.func @transform_8(%arg0: i32) -> (i32, i32) {
    %c0_i32 = arith.constant 0 : i32
    %c0_i32_0 = arith.constant 0 : i32
    %c0_i32_1 = arith.constant 0 : i32
    return %c0_i32, %c0_i32_0 : i32, i32
  }
  func.func @transform_9(%arg0: i32) -> (i32, i32) {
    %c0_i32 = arith.constant 0 : i32
    %c0_i32_0 = arith.constant 0 : i32
    %c0_i32_1 = arith.constant 0 : i32
    return %c0_i32, %c0_i32_0 : i32, i32
  }
  func.func @transform_10(%arg0: i32) -> (i32, i32, i32) {
    %c0_i32 = arith.constant 0 : i32
    %c0_i32_0 = arith.constant 0 : i32
    %c0_i32_1 = arith.constant 0 : i32
    %c0_i32_2 = arith.constant 0 : i32
    return %c0_i32, %c0_i32_0, %c0_i32_1 : i32, i32, i32
  }
}

</mosaic_0001>

<llo_original>
// kernel: decoder_rnn_forward.1
$region0: #{decoder_rnn_forward.1}
  #allocation0 [shape = 'u32[]', space=smem, size = 0x4, offset = 0x4, fixed_abs, tag = 'smem constant byte address 0x4 - core index']
  #allocation1 [shape = 'u32[72,128]{1,0:T(1,128)}', space=vmem, size = 0x9000, scoped, tag = 'internal scratch']
  #allocation2 [shape = 'f32[64,384]{1,0:T(8,128)}', space=vmem, size = 0x18000, scoped, tag = 'scratch operand']
  %s0 = inlined_call_operand.vmem [shape: f32[64,32], index: 0, kind: input, shape index: {}]
  %s1 = inlined_call_operand.vmem [shape: f32[2,8,128], index: 1, kind: input, shape index: {}]
  %s2 = inlined_call_operand.vmem [shape: bf16[32,384], index: 2, kind: input, shape index: {}]
  %s3 = inlined_call_operand.vmem [shape: bf16[256,1280], index: 3, kind: input, shape index: {}]
  %s4 = inlined_call_operand.vmem [shape: f32[1,384], index: 4, kind: input, shape index: {}]
  %s5 = inlined_call_operand.vmem [shape: f32[1,384], index: 5, kind: input, shape index: {}]
  %s6 = inlined_call_operand.vmem [shape: f32[1,128], index: 6, kind: input, shape index: {}]
  %s7 = inlined_call_operand.vmem [shape: f32[1,128], index: 7, kind: input, shape index: {}]
  %s8 = inlined_call_operand.vmem [shape: f32[1,128], index: 8, kind: input, shape index: {}]
  %s9 = inlined_call_operand.vmem [shape: f32[64,128], index: 9, kind: output, shape index: {0}]
  %s10 = inlined_call_operand.vmem [shape: f32[2,8,128], index: 10, kind: output, shape index: {1}]
  %11 = xla_tuple %s9, %s10
  %s12 = sld [smem:[#allocation0]]
  $region54: #{decoder_rnn_forward.1} parent=0
    _
  %s14 = ssub.s32 1, %s12
  %s15 = scalar_select 0, %s14, %s12
  // Predicated region
  $region2: #{decoder_rnn_forward.1} parent=0 // pred_check
    _
  $region3: #{decoder_rnn_forward.1} parent=0 // pred_check_branch
    %17 = sbr.rel (0) target = $region5
  $region4: #{decoder_rnn_forward.1} parent=0 // pred_region
    _
  $region5: #{decoder_rnn_forward.1} parent=0 // pred_fallthru
    _
  // Predicated region
  $region6: #{decoder_rnn_forward.1} parent=0 // pred_check
    _
  $region7: #{decoder_rnn_forward.1} parent=0 // pred_check_branch
    %19 = sbr.rel (0) target = $region9
  $region8: #{decoder_rnn_forward.1} parent=0 // pred_region
    _
  $region9: #{decoder_rnn_forward.1} parent=0 // pred_fallthru
    _
  // Predicated region
  $region10: #{decoder_rnn_forward.1} parent=0 // pred_check
    _
  $region11: #{decoder_rnn_forward.1} parent=0 // pred_check_branch
    %21 = sbr.rel (0) target = $region13
  $region12: #{decoder_rnn_forward.1} parent=0 // pred_region
    _
  $region13: #{decoder_rnn_forward.1} parent=0 // pred_fallthru
    _
  // Predicated region
  $region14: #{decoder_rnn_forward.1} parent=0 // pred_check
    _
  $region15: #{decoder_rnn_forward.1} parent=0 // pred_check_branch
    %23 = sbr.rel (0) target = $region17
  $region16: #{decoder_rnn_forward.1} parent=0 // pred_region
    _
  $region17: #{decoder_rnn_forward.1} parent=0 // pred_fallthru
    _
  // Predicated region
  $region18: #{decoder_rnn_forward.1} parent=0 // pred_check
    _
  $region19: #{decoder_rnn_forward.1} parent=0 // pred_check_branch
    %25 = sbr.rel (0) target = $region21
  $region20: #{decoder_rnn_forward.1} parent=0 // pred_region
    _
  $region21: #{decoder_rnn_forward.1} parent=0 // pred_fallthru
    _
  // Predicated region
  $region22: #{decoder_rnn_forward.1} parent=0 // pred_check
    _
  $region23: #{decoder_rnn_forward.1} parent=0 // pred_check_branch
    %27 = sbr.rel (0) target = $region25
  $region24: #{decoder_rnn_forward.1} parent=0 // pred_region
    _
  $region25: #{decoder_rnn_forward.1} parent=0 // pred_fallthru
    _
  // Predicated region
  $region26: #{decoder_rnn_forward.1} parent=0 // pred_check
    _
  $region27: #{decoder_rnn_forward.1} parent=0 // pred_check_branch
    %29 = sbr.rel (0) target = $region29
  $region28: #{decoder_rnn_forward.1} parent=0 // pred_region
    _
  $region29: #{decoder_rnn_forward.1} parent=0 // pred_fallthru
    _
  // Predicated region
  $region30: #{decoder_rnn_forward.1} parent=0 // pred_check
    _
  $region31: #{decoder_rnn_forward.1} parent=0 // pred_check_branch
    %31 = sbr.rel (0) target = $region33
  $region32: #{decoder_rnn_forward.1} parent=0 // pred_region
    _
  $region33: #{decoder_rnn_forward.1} parent=0 // pred_fallthru
    _
  // Predicated region
  $region34: #{decoder_rnn_forward.1} parent=0 // pred_check
    _
  $region35: #{decoder_rnn_forward.1} parent=0 // pred_check_branch
    %33 = sbr.rel (0) target = $region37
  $region36: #{decoder_rnn_forward.1} parent=0 // pred_region
    _
  $region37: #{decoder_rnn_forward.1} parent=0 // pred_fallthru
    _
  %v35 = vld [vmem:[%s0] sm:$0xff]
  %v36 = vld [vmem:[%s0 + $0x8] sm:$0xff]
  %v37 = vld [vmem:[%s0 + $0x10] sm:$0xff]
  %v38 = vld [vmem:[%s0 + $0x18] sm:$0xff]
  %v39 = vld [vmem:[%s0 + $0x20] sm:$0xff]
  %v40 = vld [vmem:[%s0 + $0x28] sm:$0xff]
  %v41 = vld [vmem:[%s0 + $0x30] sm:$0xff]
  %v42 = vld [vmem:[%s0 + $0x38] sm:$0xff]
  %v43 = vpack.c.bf16 %v36, %v35
  %v44 = vpack.c.bf16 %v38, %v37
  %v45 = vpack.c.bf16 %v40, %v39
  %v46 = vpack.c.bf16 %v42, %v41
  %v47 = vld [vmem:[%s2] sm:$0xff]
  %v48 = vld [vmem:[%s2 + $0x8] sm:$0xf]
  %v49 = vld [vmem:[%s2 + $0xc] sm:$0xff]
  %v50 = vld [vmem:[%s2 + $0x14] sm:$0xf]
  %v51 = vld [vmem:[%s2 + $0x18] sm:$0xff]
  %v52 = vld [vmem:[%s2 + $0x20] sm:$0xf]
  %v53 = vld [vmem:[%s2 + $0x24] sm:$0xff]
  %v54 = vld [vmem:[%s2 + $0x2c] sm:$0xf]
  %v55 = vld [vmem:[%s4] sm:$0x7]
  %v57 = vperm.slane %v55, 0
  %v58 = vperm.slane %v55, 1
  %v59 = vperm.slane %v55, 2
  %v71 = vunpack.c.l.b16 %v47
  %v72 = vunpack.c.h.b16 %v47
  %v73 = vunpack.c.l.b16 %v48
  %v74 = vunpack.c.l.b16 %v49
  %v75 = vunpack.c.h.b16 %v49
  %v76 = vunpack.c.l.b16 %v50
  %v77 = vunpack.c.l.b16 %v51
  %v78 = vunpack.c.h.b16 %v51
  %v79 = vunpack.c.l.b16 %v52
  %v80 = vunpack.c.l.b16 %v53
  %v81 = vunpack.c.h.b16 %v53
  %v82 = vunpack.c.l.b16 %v54
  %v83 = vpack.c.b16 %v74, %v71
  %v84 = vpack.c.b16 %v75, %v72
  %v85 = vpack.c.b16 %v76, %v73
  %v86 = vpack.c.b16 %v80, %v77
  %v87 = vpack.c.b16 %v81, %v78
  %v88 = vpack.c.b16 %v82, %v79
  %vm95 = vcmask 261120
  %v97 = vsel %vm95, %v43, 0
  %v100 = vsel %vm95, %v44, 0
  %v103 = vsel %vm95, %v45, 0
  %v106 = vsel %vm95, %v46, 0
  %108 = vmatpush.bf16.msra.mxu0 0
  %109 = vmatpush.bf16.msra.mxu0 0
  %110 = vmatpush.bf16.msra.mxu0 0
  %111 = vmatpush.bf16.msra.mxu0 0
  %112 = vmatpush.bf16.msra.mxu0 0
  %113 = vmatpush.bf16.msra.mxu0 0
  %114 = vmatpush.bf16.msra.mxu0 %v86
  %115 = vmatpush.bf16.msra.mxu0 %v83
  %116 = vmatmul.bf16.gmra.mxu0 %v97
  %v117 = vpop.f32.mrf.mxu0
  %v118 = vadd.f32 %v57, %v117
  %v119 = vpop.f32.mrf.mxu0
  %v120 = vadd.f32 %v57, %v119
  %121 = vmatmul.bf16.gmra.mxu0 %v100
  %v122 = vpop.f32.mrf.mxu0
  %v123 = vadd.f32 %v57, %v122
  %v124 = vpop.f32.mrf.mxu0
  %v125 = vadd.f32 %v57, %v124
  %126 = vmatmul.bf16.gmra.mxu0 %v103
  %v127 = vpop.f32.mrf.mxu0
  %v128 = vadd.f32 %v57, %v127
  %v129 = vpop.f32.mrf.mxu0
  %v130 = vadd.f32 %v57, %v129
  %131 = vmatmul.bf16.gmra.mxu0 %v106
  %v132 = vpop.f32.mrf.mxu0
  %v133 = vadd.f32 %v57, %v132
  %v134 = vpop.f32.mrf.mxu0
  %v135 = vadd.f32 %v57, %v134
  %136 = vdwg.mxu0
  %137 = vmatpush.bf16.msra.mxu0 0
  %138 = vmatpush.bf16.msra.mxu0 0
  %139 = vmatpush.bf16.msra.mxu0 0
  %140 = vmatpush.bf16.msra.mxu0 0
  %141 = vmatpush.bf16.msra.mxu0 0
  %142 = vmatpush.bf16.msra.mxu0 0
  %143 = vmatpush.bf16.msra.mxu0 %v87
  %144 = vmatpush.bf16.msra.mxu0 %v84
  %145 = vmatmul.bf16.gmra.mxu0 %v97
  %v146 = vpop.f32.mrf.mxu0
  %v147 = vadd.f32 %v58, %v146
  %v148 = vpop.f32.mrf.mxu0
  %v149 = vadd.f32 %v58, %v148
  %150 = vmatmul.bf16.gmra.mxu0 %v100
  %v151 = vpop.f32.mrf.mxu0
  %v152 = vadd.f32 %v58, %v151
  %v153 = vpop.f32.mrf.mxu0
  %v154 = vadd.f32 %v58, %v153
  %155 = vmatmul.bf16.gmra.mxu0 %v103
  %v156 = vpop.f32.mrf.mxu0
  %v157 = vadd.f32 %v58, %v156
  %v158 = vpop.f32.mrf.mxu0
  %v159 = vadd.f32 %v58, %v158
  %160 = vmatmul.bf16.gmra.mxu0 %v106
  %v161 = vpop.f32.mrf.mxu0
  %v162 = vadd.f32 %v58, %v161
  %v163 = vpop.f32.mrf.mxu0
  %v164 = vadd.f32 %v58, %v163
  %165 = vdwg.mxu0
  %166 = vmatpush.bf16.msra.mxu0 0
  %167 = vmatpush.bf16.msra.mxu0 0
  %168 = vmatpush.bf16.msra.mxu0 0
  %169 = vmatpush.bf16.msra.mxu0 0
  %170 = vmatpush.bf16.msra.mxu0 0
  %171 = vmatpush.bf16.msra.mxu0 0
  %172 = vmatpush.bf16.msra.mxu0 %v88
  %173 = vmatpush.bf16.msra.mxu0 %v85
  %174 = vmatmul.bf16.gmra.mxu0 %v97
  %v175 = vpop.f32.mrf.mxu0
  %v176 = vadd.f32 %v59, %v175
  %v177 = vpop.f32.mrf.mxu0
  %v178 = vadd.f32 %v59, %v177
  %179 = vmatmul.bf16.gmra.mxu0 %v100
  %v180 = vpop.f32.mrf.mxu0
  %v181 = vadd.f32 %v59, %v180
  %v182 = vpop.f32.mrf.mxu0
  %v183 = vadd.f32 %v59, %v182
  %184 = vmatmul.bf16.gmra.mxu0 %v103
  %v185 = vpop.f32.mrf.mxu0
  %v186 = vadd.f32 %v59, %v185
  %v187 = vpop.f32.mrf.mxu0
  %v188 = vadd.f32 %v59, %v187
  %189 = vmatmul.bf16.gmra.mxu0 %v106
  %v190 = vpop.f32.mrf.mxu0
  %v191 = vadd.f32 %v59, %v190
  %v192 = vpop.f32.mrf.mxu0
  %v193 = vadd.f32 %v59, %v192
  %194 = vdwg.mxu0
  %195 = vst [vmem:[#allocation2] sm:$0xff] %v118
  %196 = vst [vmem:[#allocation2 + $0x8] sm:$0xff] %v147
  %197 = vst [vmem:[#allocation2 + $0x10] sm:$0xff] %v176
  %198 = vst [vmem:[#allocation2 + $0x18] sm:$0xff] %v120
  %199 = vst [vmem:[#allocation2 + $0x20] sm:$0xff] %v149
  %200 = vst [vmem:[#allocation2 + $0x28] sm:$0xff] %v178
  %201 = vst [vmem:[#allocation2 + $0x30] sm:$0xff] %v123
  %202 = vst [vmem:[#allocation2 + $0x38] sm:$0xff] %v152
  %203 = vst [vmem:[#allocation2 + $0x40] sm:$0xff] %v181
  %204 = vst [vmem:[#allocation2 + $0x48] sm:$0xff] %v125
  %205 = vst [vmem:[#allocation2 + $0x50] sm:$0xff] %v154
  %206 = vst [vmem:[#allocation2 + $0x58] sm:$0xff] %v183
  %207 = vst [vmem:[#allocation2 + $0x60] sm:$0xff] %v128
  %208 = vst [vmem:[#allocation2 + $0x68] sm:$0xff] %v157
  %209 = vst [vmem:[#allocation2 + $0x70] sm:$0xff] %v186
  %210 = vst [vmem:[#allocation2 + $0x78] sm:$0xff] %v130
  %211 = vst [vmem:[#allocation2 + $0x80] sm:$0xff] %v159
  %212 = vst [vmem:[#allocation2 + $0x88] sm:$0xff] %v188
  %213 = vst [vmem:[#allocation2 + $0x90] sm:$0xff] %v133
  %214 = vst [vmem:[#allocation2 + $0x98] sm:$0xff] %v162
  %215 = vst [vmem:[#allocation2 + $0xa0] sm:$0xff] %v191
  %216 = vst [vmem:[#allocation2 + $0xa8] sm:$0xff] %v135
  %217 = vst [vmem:[#allocation2 + $0xb0] sm:$0xff] %v164
  %218 = vst [vmem:[#allocation2 + $0xb8] sm:$0xff] %v193
  %v219 = vld [vmem:[%s6] sm:$0x1]
  %v221 = vperm.slane %v219, 0
  %v223 = vld [vmem:[%s7] sm:$0x1]
  %v225 = vperm.slane %v223, 0
  %v227 = vld [vmem:[%s5] sm:$0x7]
  %v229 = vperm.slane %v227, 0
  %v230 = vperm.slane %v227, 1
  %v231 = vperm.slane %v227, 2
  %v235 = vld [vmem:[%s8] sm:$0x1]
  %v237 = vperm.slane %v235, 0
  %v239 = vld [vmem:[%s1] sm:$0xff]
  %s240 = scalar_lea.vmem %s1, 8
  %v241 = vld [vmem:[%s240] sm:$0xff]
  %v242 = vpack.c.bf16 %v239, %v239
  %v243 = vpack.c.bf16 %v241, %v241
  %v244 = vld [vmem:[%s3] sm:$0xff]
  %v245 = vld [vmem:[%s3 + $0x8] sm:$0xff]
  %v246 = vld [vmem:[%s3 + $0x10] sm:$0xff]
  %v247 = vld [vmem:[%s3 + $0x18] sm:$0xff]
  %v248 = vld [vmem:[%s3 + $0x20] sm:$0xff]
  %v249 = vld [vmem:[%s3 + $0x28] sm:$0xff]
  %v250 = vld [vmem:[%s3 + $0x30] sm:$0xff]
  %v251 = vld [vmem:[%s3 + $0x38] sm:$0xff]
  %v252 = vld [vmem:[%s3 + $0x40] sm:$0xff]
  %v253 = vld [vmem:[%s3 + $0x48] sm:$0xff]
  %v254 = vld [vmem:[%s3 + $0x50] sm:$0xff]
  %v255 = vld [vmem:[%s3 + $0x58] sm:$0xff]
  %v256 = vld [vmem:[%s3 + $0x60] sm:$0xff]
  %v257 = vld [vmem:[%s3 + $0x68] sm:$0xff]
  %v258 = vld [vmem:[%s3 + $0x70] sm:$0xff]
  %v259 = vld [vmem:[%s3 + $0x78] sm:$0xff]
  %v260 = vld [vmem:[%s3 + $0x80] sm:$0xff]
  %v261 = vld [vmem:[%s3 + $0x88] sm:$0xff]
  %v262 = vld [vmem:[%s3 + $0x90] sm:$0xff]
  %v263 = vld [vmem:[%s3 + $0x98] sm:$0xff]
  %v264 = vld [vmem:[%s3 + $0xa0] sm:$0xff]
  %v265 = vld [vmem:[%s3 + $0xa8] sm:$0xff]
  %v266 = vld [vmem:[%s3 + $0xb0] sm:$0xff]
  %v267 = vld [vmem:[%s3 + $0xb8] sm:$0xff]
  %v268 = vld [vmem:[%s3 + $0xc0] sm:$0xff]
  %v269 = vld [vmem:[%s3 + $0xc8] sm:$0xff]
  %v270 = vld [vmem:[%s3 + $0xd0] sm:$0xff]
  %v271 = vld [vmem:[%s3 + $0xd8] sm:$0xff]
  %v272 = vld [vmem:[%s3 + $0xe0] sm:$0xff]
  %v273 = vld [vmem:[%s3 + $0xe8] sm:$0xff]
  %v274 = vld [vmem:[%s3 + $0xf0] sm:$0xff]
  %v275 = vld [vmem:[%s3 + $0xf8] sm:$0xff]
  %v276 = vld [vmem:[%s3 + $0x100] sm:$0xff]
  %v277 = vld [vmem:[%s3 + $0x108] sm:$0xff]
  %v278 = vld [vmem:[%s3 + $0x110] sm:$0xff]
  %v279 = vld [vmem:[%s3 + $0x118] sm:$0xff]
  %v280 = vld [vmem:[%s3 + $0x120] sm:$0xff]
  %v281 = vld [vmem:[%s3 + $0x128] sm:$0xff]
  %v282 = vld [vmem:[%s3 + $0x130] sm:$0xff]
  %v283 = vld [vmem:[%s3 + $0x138] sm:$0xff]
  %v284 = vld [vmem:[%s3 + $0x140] sm:$0xff]
  %v285 = vld [vmem:[%s3 + $0x148] sm:$0xff]
  %v286 = vld [vmem:[%s3 + $0x150] sm:$0xff]
  %v287 = vld [vmem:[%s3 + $0x158] sm:$0xff]
  %v288 = vld [vmem:[%s3 + $0x160] sm:$0xff]
  %v289 = vld [vmem:[%s3 + $0x168] sm:$0xff]
  %v290 = vld [vmem:[%s3 + $0x170] sm:$0xff]
  %v291 = vld [vmem:[%s3 + $0x178] sm:$0xff]
  %v292 = vld [vmem:[%s3 + $0x180] sm:$0xff]
  %v293 = vld [vmem:[%s3 + $0x188] sm:$0xff]
  %v294 = vld [vmem:[%s3 + $0x190] sm:$0xff]
  %v295 = vld [vmem:[%s3 + $0x198] sm:$0xff]
  %v296 = vld [vmem:[%s3 + $0x1a0] sm:$0xff]
  %v297 = vld [vmem:[%s3 + $0x1a8] sm:$0xff]
  %v298 = vld [vmem:[%s3 + $0x1b0] sm:$0xff]
  %v299 = vld [vmem:[%s3 + $0x1b8] sm:$0xff]
  %v300 = vld [vmem:[%s3 + $0x1c0] sm:$0xff]
  %v301 = vld [vmem:[%s3 + $0x1c8] sm:$0xff]
  %v302 = vld [vmem:[%s3 + $0x1d0] sm:$0xff]
  %v303 = vld [vmem:[%s3 + $0x1d8] sm:$0xff]
  %v304 = vld [vmem:[%s3 + $0x1e0] sm:$0xff]
  %v305 = vld [vmem:[%s3 + $0x1e8] sm:$0xff]
  %v306 = vld [vmem:[%s3 + $0x1f0] sm:$0xff]
  %v307 = vld [vmem:[%s3 + $0x1f8] sm:$0xff]
  %v308 = vld [vmem:[%s3 + $0x200] sm:$0xff]
  %v309 = vld [vmem:[%s3 + $0x208] sm:$0xff]
  %v310 = vld [vmem:[%s3 + $0x210] sm:$0xff]
  %v311 = vld [vmem:[%s3 + $0x218] sm:$0xff]
  %v312 = vld [vmem:[%s3 + $0x220] sm:$0xff]
  %v313 = vld [vmem:[%s3 + $0x228] sm:$0xff]
  %v314 = vld [vmem:[%s3 + $0x230] sm:$0xff]
  %v315 = vld [vmem:[%s3 + $0x238] sm:$0xff]
  %v316 = vld [vmem:[%s3 + $0x240] sm:$0xff]
  %v317 = vld [vmem:[%s3 + $0x248] sm:$0xff]
  %v318 = vld [vmem:[%s3 + $0x250] sm:$0xff]
  %v319 = vld [vmem:[%s3 + $0x258] sm:$0xff]
  %v320 = vld [vmem:[%s3 + $0x260] sm:$0xff]
  %v321 = vld [vmem:[%s3 + $0x268] sm:$0xff]
  %v322 = vld [vmem:[%s3 + $0x270] sm:$0xff]
  %v323 = vld [vmem:[%s3 + $0x278] sm:$0xff]
  %v324 = vld [vmem:[%s3 + $0x280] sm:$0xff]
  %v325 = vld [vmem:[%s3 + $0x288] sm:$0xff]
  %v326 = vld [vmem:[%s3 + $0x290] sm:$0xff]
  %v327 = vld [vmem:[%s3 + $0x298] sm:$0xff]
  %v328 = vld [vmem:[%s3 + $0x2a0] sm:$0xff]
  %v329 = vld [vmem:[%s3 + $0x2a8] sm:$0xff]
  %v330 = vld [vmem:[%s3 + $0x2b0] sm:$0xff]
  %v331 = vld [vmem:[%s3 + $0x2b8] sm:$0xff]
  %v332 = vld [vmem:[%s3 + $0x2c0] sm:$0xff]
  %v333 = vld [vmem:[%s3 + $0x2c8] sm:$0xff]
  %v334 = vld [vmem:[%s3 + $0x2d0] sm:$0xff]
  %v335 = vld [vmem:[%s3 + $0x2d8] sm:$0xff]
  %v336 = vld [vmem:[%s3 + $0x2e0] sm:$0xff]
  %v337 = vld [vmem:[%s3 + $0x2e8] sm:$0xff]
  %v338 = vld [vmem:[%s3 + $0x2f0] sm:$0xff]
  %v339 = vld [vmem:[%s3 + $0x2f8] sm:$0xff]
  %v340 = vld [vmem:[%s3 + $0x300] sm:$0xff]
  %v341 = vld [vmem:[%s3 + $0x308] sm:$0xff]
  %v342 = vld [vmem:[%s3 + $0x310] sm:$0xff]
  %v343 = vld [vmem:[%s3 + $0x318] sm:$0xff]
  %v344 = vld [vmem:[%s3 + $0x320] sm:$0xff]
  %v345 = vld [vmem:[%s3 + $0x328] sm:$0xff]
  %v346 = vld [vmem:[%s3 + $0x330] sm:$0xff]
  %v347 = vld [vmem:[%s3 + $0x338] sm:$0xff]
  %v348 = vld [vmem:[%s3 + $0x340] sm:$0xff]
  %v349 = vld [vmem:[%s3 + $0x348] sm:$0xff]
  %v350 = vld [vmem:[%s3 + $0x350] sm:$0xff]
  %v351 = vld [vmem:[%s3 + $0x358] sm:$0xff]
  %v352 = vld [vmem:[%s3 + $0x360] sm:$0xff]
  %v353 = vld [vmem:[%s3 + $0x368] sm:$0xff]
  %v354 = vld [vmem:[%s3 + $0x370] sm:$0xff]
  %v355 = vld [vmem:[%s3 + $0x378] sm:$0xff]
  %v356 = vld [vmem:[%s3 + $0x380] sm:$0xff]
  %v357 = vld [vmem:[%s3 + $0x388] sm:$0xff]
  %v358 = vld [vmem:[%s3 + $0x390] sm:$0xff]
  %v359 = vld [vmem:[%s3 + $0x398] sm:$0xff]
  %v360 = vld [vmem:[%s3 + $0x3a0] sm:$0xff]
  %v361 = vld [vmem:[%s3 + $0x3a8] sm:$0xff]
  %v362 = vld [vmem:[%s3 + $0x3b0] sm:$0xff]
  %v363 = vld [vmem:[%s3 + $0x3b8] sm:$0xff]
  %v364 = vld [vmem:[%s3 + $0x3c0] sm:$0xff]
  %v365 = vld [vmem:[%s3 + $0x3c8] sm:$0xff]
  %v366 = vld [vmem:[%s3 + $0x3d0] sm:$0xff]
  %v367 = vld [vmem:[%s3 + $0x3d8] sm:$0xff]
  %v368 = vld [vmem:[%s3 + $0x3e0] sm:$0xff]
  %v369 = vld [vmem:[%s3 + $0x3e8] sm:$0xff]
  %v370 = vld [vmem:[%s3 + $0x3f0] sm:$0xff]
  %v371 = vld [vmem:[%s3 + $0x3f8] sm:$0xff]
  %v372 = vld [vmem:[%s3 + $0x400] sm:$0xff]
  %v373 = vld [vmem:[%s3 + $0x408] sm:$0xff]
  %v374 = vld [vmem:[%s3 + $0x410] sm:$0xff]
  %v375 = vld [vmem:[%s3 + $0x418] sm:$0xff]
  %v376 = vld [vmem:[%s3 + $0x420] sm:$0xff]
  %v377 = vld [vmem:[%s3 + $0x428] sm:$0xff]
  %v378 = vld [vmem:[%s3 + $0x430] sm:$0xff]
  %v379 = vld [vmem:[%s3 + $0x438] sm:$0xff]
  %v380 = vld [vmem:[%s3 + $0x440] sm:$0xff]
  %v381 = vld [vmem:[%s3 + $0x448] sm:$0xff]
  %v382 = vld [vmem:[%s3 + $0x450] sm:$0xff]
  %v383 = vld [vmem:[%s3 + $0x458] sm:$0xff]
  %v384 = vld [vmem:[%s3 + $0x460] sm:$0xff]
  %v385 = vld [vmem:[%s3 + $0x468] sm:$0xff]
  %v386 = vld [vmem:[%s3 + $0x470] sm:$0xff]
  %v387 = vld [vmem:[%s3 + $0x478] sm:$0xff]
  %v388 = vld [vmem:[%s3 + $0x480] sm:$0xff]
  %v389 = vld [vmem:[%s3 + $0x488] sm:$0xff]
  %v390 = vld [vmem:[%s3 + $0x490] sm:$0xff]
  %v391 = vld [vmem:[%s3 + $0x498] sm:$0xff]
  %v392 = vld [vmem:[%s3 + $0x4a0] sm:$0xff]
  %v393 = vld [vmem:[%s3 + $0x4a8] sm:$0xff]
  %v394 = vld [vmem:[%s3 + $0x4b0] sm:$0xff]
  %v395 = vld [vmem:[%s3 + $0x4b8] sm:$0xff]
  %v396 = vld [vmem:[%s3 + $0x4c0] sm:$0xff]
  %v397 = vld [vmem:[%s3 + $0x4c8] sm:$0xff]
  %v398 = vld [vmem:[%s3 + $0x4d0] sm:$0xff]
  %v399 = vld [vmem:[%s3 + $0x4d8] sm:$0xff]
  %v400 = vld [vmem:[%s3 + $0x4e0] sm:$0xff]
  %v401 = vld [vmem:[%s3 + $0x4e8] sm:$0xff]
  %v402 = vld [vmem:[%s3 + $0x4f0] sm:$0xff]
  %v403 = vld [vmem:[%s3 + $0x4f8] sm:$0xff]
  %v468 = vunpack.c.l.b16 %v244
  %v469 = vunpack.c.h.b16 %v244
  %v470 = vunpack.c.l.b16 %v245
  %v471 = vunpack.c.l.b16 %v249
  %v472 = vunpack.c.h.b16 %v249
  %v473 = vunpack.c.l.b16 %v250
  %v474 = vunpack.c.l.b16 %v254
  %v475 = vunpack.c.h.b16 %v254
  %v476 = vunpack.c.l.b16 %v255
  %v477 = vunpack.c.l.b16 %v259
  %v478 = vunpack.c.h.b16 %v259
  %v479 = vunpack.c.l.b16 %v260
  %v480 = vunpack.c.l.b16 %v264
  %v481 = vunpack.c.h.b16 %v264
  %v482 = vunpack.c.l.b16 %v265
  %v483 = vunpack.c.l.b16 %v269
  %v484 = vunpack.c.h.b16 %v269
  %v485 = vunpack.c.l.b16 %v270
  %v486 = vunpack.c.l.b16 %v274
  %v487 = vunpack.c.h.b16 %v274
  %v488 = vunpack.c.l.b16 %v275
  %v489 = vunpack.c.l.b16 %v279
  %v490 = vunpack.c.h.b16 %v279
  %v491 = vunpack.c.l.b16 %v280
  %v492 = vunpack.c.l.b16 %v284
  %v493 = vunpack.c.h.b16 %v284
  %v494 = vunpack.c.l.b16 %v285
  %v495 = vunpack.c.l.b16 %v289
  %v496 = vunpack.c.h.b16 %v289
  %v497 = vunpack.c.l.b16 %v290
  %v498 = vunpack.c.l.b16 %v294
  %v499 = vunpack.c.h.b16 %v294
  %v500 = vunpack.c.l.b16 %v295
  %v501 = vunpack.c.l.b16 %v299
  %v502 = vunpack.c.h.b16 %v299
  %v503 = vunpack.c.l.b16 %v300
  %v504 = vunpack.c.l.b16 %v304
  %v505 = vunpack.c.h.b16 %v304
  %v506 = vunpack.c.l.b16 %v305
  %v507 = vunpack.c.l.b16 %v309
  %v508 = vunpack.c.h.b16 %v309
  %v509 = vunpack.c.l.b16 %v310
  %v510 = vunpack.c.l.b16 %v314
  %v511 = vunpack.c.h.b16 %v314
  %v512 = vunpack.c.l.b16 %v315
  %v513 = vunpack.c.l.b16 %v319
  %v514 = vunpack.c.h.b16 %v319
  %v515 = vunpack.c.l.b16 %v320
  %v516 = vunpack.c.l.b16 %v324
  %v517 = vunpack.c.h.b16 %v324
  %v518 = vunpack.c.l.b16 %v325
  %v519 = vunpack.c.l.b16 %v329
  %v520 = vunpack.c.h.b16 %v329
  %v521 = vunpack.c.l.b16 %v330
  %v522 = vunpack.c.l.b16 %v334
  %v523 = vunpack.c.h.b16 %v334
  %v524 = vunpack.c.l.b16 %v335
  %v525 = vunpack.c.l.b16 %v339
  %v526 = vunpack.c.h.b16 %v339
  %v527 = vunpack.c.l.b16 %v340
  %v528 = vunpack.c.l.b16 %v344
  %v529 = vunpack.c.h.b16 %v344
  %v530 = vunpack.c.l.b16 %v345
  %v531 = vunpack.c.l.b16 %v349
  %v532 = vunpack.c.h.b16 %v349
  %v533 = vunpack.c.l.b16 %v350
  %v534 = vunpack.c.l.b16 %v354
  %v535 = vunpack.c.h.b16 %v354
  %v536 = vunpack.c.l.b16 %v355
  %v537 = vunpack.c.l.b16 %v359
  %v538 = vunpack.c.h.b16 %v359
  %v539 = vunpack.c.l.b16 %v360
  %v540 = vunpack.c.l.b16 %v364
  %v541 = vunpack.c.h.b16 %v364
  %v542 = vunpack.c.l.b16 %v365
  %v543 = vunpack.c.l.b16 %v369
  %v544 = vunpack.c.h.b16 %v369
  %v545 = vunpack.c.l.b16 %v370
  %v546 = vunpack.c.l.b16 %v374
  %v547 = vunpack.c.h.b16 %v374
  %v548 = vunpack.c.l.b16 %v375
  %v549 = vunpack.c.l.b16 %v379
  %v550 = vunpack.c.h.b16 %v379
  %v551 = vunpack.c.l.b16 %v380
  %v552 = vunpack.c.l.b16 %v384
  %v553 = vunpack.c.h.b16 %v384
  %v554 = vunpack.c.l.b16 %v385
  %v555 = vunpack.c.l.b16 %v389
  %v556 = vunpack.c.h.b16 %v389
  %v557 = vunpack.c.l.b16 %v390
  %v558 = vunpack.c.l.b16 %v394
  %v559 = vunpack.c.h.b16 %v394
  %v560 = vunpack.c.l.b16 %v395
  %v561 = vunpack.c.l.b16 %v399
  %v562 = vunpack.c.h.b16 %v399
  %v563 = vunpack.c.l.b16 %v400
  %v564 = vpack.c.b16 %v471, %v468
  %v565 = vpack.c.b16 %v472, %v469
  %v566 = vpack.c.b16 %v473, %v470
  %v567 = vpack.c.b16 %v477, %v474
  %v568 = vpack.c.b16 %v478, %v475
  %v569 = vpack.c.b16 %v479, %v476
  %v570 = vpack.c.b16 %v483, %v480
  %v571 = vpack.c.b16 %v484, %v481
  %v572 = vpack.c.b16 %v485, %v482
  %v573 = vpack.c.b16 %v489, %v486
  %v574 = vpack.c.b16 %v490, %v487
  %v575 = vpack.c.b16 %v491, %v488
  %v576 = vpack.c.b16 %v495, %v492
  %v577 = vpack.c.b16 %v496, %v493
  %v578 = vpack.c.b16 %v497, %v494
  %v579 = vpack.c.b16 %v501, %v498
  %v580 = vpack.c.b16 %v502, %v499
  %v581 = vpack.c.b16 %v503, %v500
  %v582 = vpack.c.b16 %v507, %v504
  %v583 = vpack.c.b16 %v508, %v505
  %v584 = vpack.c.b16 %v509, %v506
  %v585 = vpack.c.b16 %v513, %v510
  %v586 = vpack.c.b16 %v514, %v511
  %v587 = vpack.c.b16 %v515, %v512
  %v588 = vpack.c.b16 %v519, %v516
  %v589 = vpack.c.b16 %v520, %v517
  %v590 = vpack.c.b16 %v521, %v518
  %v591 = vpack.c.b16 %v525, %v522
  %v592 = vpack.c.b16 %v526, %v523
  %v593 = vpack.c.b16 %v527, %v524
  %v594 = vpack.c.b16 %v531, %v528
  %v595 = vpack.c.b16 %v532, %v529
  %v596 = vpack.c.b16 %v533, %v530
  %v597 = vpack.c.b16 %v537, %v534
  %v598 = vpack.c.b16 %v538, %v535
  %v599 = vpack.c.b16 %v539, %v536
  %v600 = vpack.c.b16 %v543, %v540
  %v601 = vpack.c.b16 %v544, %v541
  %v602 = vpack.c.b16 %v545, %v542
  %v603 = vpack.c.b16 %v549, %v546
  %v604 = vpack.c.b16 %v550, %v547
  %v605 = vpack.c.b16 %v551, %v548
  %v606 = vpack.c.b16 %v555, %v552
  %v607 = vpack.c.b16 %v556, %v553
  %v608 = vpack.c.b16 %v557, %v554
  %v609 = vpack.c.b16 %v561, %v558
  %v610 = vpack.c.b16 %v562, %v559
  %v611 = vpack.c.b16 %v563, %v560
  %660 = vmatpush.bf16.msra.mxu0 %v585
  %661 = vmatpush.bf16.msra.mxu0 %v582
  %662 = vmatpush.bf16.msra.mxu0 %v579
  %663 = vmatpush.bf16.msra.mxu0 %v576
  %664 = vmatpush.bf16.msra.mxu0 %v573
  %665 = vmatpush.bf16.msra.mxu0 %v570
  %666 = vmatpush.bf16.msra.mxu0 %v567
  %667 = vmatpush.bf16.msra.mxu0 %v564
  %668 = vmatmul.bf16.gmra.mxu0 %v242
  %v669 = vpop.f32.mrf.mxu0
  %v670 = vadd.f32 0.0, %v669
  %v671 = vpop.f32.mrf.mxu0
  %672 = vdwg.mxu0
  %673 = vmatpush.bf16.msra.mxu0 %v609
  %674 = vmatpush.bf16.msra.mxu0 %v606
  %675 = vmatpush.bf16.msra.mxu0 %v603
  %676 = vmatpush.bf16.msra.mxu0 %v600
  %677 = vmatpush.bf16.msra.mxu0 %v597
  %678 = vmatpush.bf16.msra.mxu0 %v594
  %679 = vmatpush.bf16.msra.mxu0 %v591
  %680 = vmatpush.bf16.msra.mxu0 %v588
  %681 = vmatmul.bf16.gmra.mxu0 %v243
  %v682 = vpop.f32.mrf.mxu0
  %v683 = vadd.f32 %v670, %v682
  %v684 = vpop.f32.mrf.mxu0
  %685 = vdwg.mxu0
  %686 = vmatpush.bf16.msra.mxu0 %v586
  %687 = vmatpush.bf16.msra.mxu0 %v583
  %688 = vmatpush.bf16.msra.mxu0 %v580
  %689 = vmatpush.bf16.msra.mxu0 %v577
  %690 = vmatpush.bf16.msra.mxu0 %v574
  %691 = vmatpush.bf16.msra.mxu0 %v571
  %692 = vmatpush.bf16.msra.mxu0 %v568
  %693 = vmatpush.bf16.msra.mxu0 %v565
  %694 = vmatmul.bf16.gmra.mxu0 %v242
  %v695 = vpop.f32.mrf.mxu0
  %v696 = vadd.f32 0.0, %v695
  %v697 = vpop.f32.mrf.mxu0
  %698 = vdwg.mxu0
  %699 = vmatpush.bf16.msra.mxu0 %v610
  %700 = vmatpush.bf16.msra.mxu0 %v607
  %701 = vmatpush.bf16.msra.mxu0 %v604
  %702 = vmatpush.bf16.msra.mxu0 %v601
  %703 = vmatpush.bf16.msra.mxu0 %v598
  %704 = vmatpush.bf16.msra.mxu0 %v595
  %705 = vmatpush.bf16.msra.mxu0 %v592
  %706 = vmatpush.bf16.msra.mxu0 %v589
  %707 = vmatmul.bf16.gmra.mxu0 %v243
  %v708 = vpop.f32.mrf.mxu0
  %v709 = vadd.f32 %v696, %v708
  %v710 = vpop.f32.mrf.mxu0
  %711 = vdwg.mxu0
  %712 = vmatpush.bf16.msra.mxu0 %v587
  %713 = vmatpush.bf16.msra.mxu0 %v584
  %714 = vmatpush.bf16.msra.mxu0 %v581
  %715 = vmatpush.bf16.msra.mxu0 %v578
  %716 = vmatpush.bf16.msra.mxu0 %v575
  %717 = vmatpush.bf16.msra.mxu0 %v572
  %718 = vmatpush.bf16.msra.mxu0 %v569
  %719 = vmatpush.bf16.msra.mxu0 %v566
  %720 = vmatmul.bf16.gmra.mxu0 %v242
  %v721 = vpop.f32.mrf.mxu0
  %v722 = vadd.f32 0.0, %v721
  %v723 = vpop.f32.mrf.mxu0
  %724 = vdwg.mxu0
  %725 = vmatpush.bf16.msra.mxu0 %v611
  %726 = vmatpush.bf16.msra.mxu0 %v608
  %727 = vmatpush.bf16.msra.mxu0 %v605
  %728 = vmatpush.bf16.msra.mxu0 %v602
  %729 = vmatpush.bf16.msra.mxu0 %v599
  %730 = vmatpush.bf16.msra.mxu0 %v596
  %731 = vmatpush.bf16.msra.mxu0 %v593
  %732 = vmatpush.bf16.msra.mxu0 %v590
  %733 = vmatmul.bf16.gmra.mxu0 %v243
  %v734 = vpop.f32.mrf.mxu0
  %v735 = vadd.f32 %v722, %v734
  %v736 = vpop.f32.mrf.mxu0
  %737 = vdwg.mxu0
  %v738 = vld [vmem:[#allocation2] sm:$0xff]
  %v739 = vld [vmem:[#allocation2 + $0x8] sm:$0xff]
  %v740 = vld [vmem:[#allocation2 + $0x10] sm:$0xff]
  %v741 = vadd.f32 %v738, %v683
  %v742 = vxor.u32 %v741, 2147483648
  %v743 = vmul.f32 %v742, 1.442695
  %v744 = vpow.pop %v743
  %v745 = vadd.f32 %v744, 1.0
  %v746 = vrcp.pop %v745
  %v747 = vmul.f32 %v745, %v746
  %v748 = vsub.f32 1.0, %v747
  %v749 = vmul.f32 %v746, %v748
  %v750 = vadd.f32 %v746, %v749
  %vm751 = vweird.f32 %v745
  %vm752 = vweird.f32 %v746
  %vm753 = vmor %vm751, %vm752
  %v754 = vsel %vm753, %v746, %v750
  %v755 = vand.u32 2147483647, %v745
  %vm756 = vcmp.eq.f32.partialorder %v755, 8.507059e+37
  %v757 = vand.u32 %v745, 2147483648
  %v758 = vor.u32 1.1754944e-38, %v757
  %v759 = vsel %vm756, %v758, %v754
  %v760 = vmul.f32 1.0, %v759
  %v761 = vadd.f32 %v739, %v709
  %v762 = vxor.u32 %v761, 2147483648
  %v763 = vmul.f32 %v762, 1.442695
  %v764 = vpow.pop %v763
  %v765 = vadd.f32 %v764, 1.0
  %v766 = vrcp.pop %v765
  %v767 = vmul.f32 %v765, %v766
  %v768 = vsub.f32 1.0, %v767
  %v769 = vmul.f32 %v766, %v768
  %v770 = vadd.f32 %v766, %v769
  %vm771 = vweird.f32 %v765
  %vm772 = vweird.f32 %v766
  %vm773 = vmor %vm771, %vm772
  %v774 = vsel %vm773, %v766, %v770
  %v775 = vand.u32 2147483647, %v765
  %vm776 = vcmp.eq.f32.partialorder %v775, 8.507059e+37
  %v777 = vand.u32 %v765, 2147483648
  %v778 = vor.u32 1.1754944e-38, %v777
  %v779 = vsel %vm776, %v778, %v774
  %v780 = vmul.f32 1.0, %v779
  %v781 = vadd.f32 %v735, %v221
  %v782 = vmul.f32 %v760, %v781
  %v783 = vadd.f32 %v740, %v782
  %v784 = vtanh.pop %v783
  %v785 = vsub.f32 1.0, %v780
  %v786 = vmul.f32 %v785, %v784
  %v787 = vmul.f32 %v780, %v239
  %v788 = vadd.f32 %v786, %v787
  %v789 = vpack.c.bf16 %v788, %v788
  %v886 = vunpack.c.h.b16 %v245
  %v887 = vunpack.c.l.b16 %v246
  %v888 = vunpack.c.h.b16 %v246
  %v889 = vunpack.c.l.b16 %v247
  %v890 = vunpack.c.h.b16 %v247
  %v891 = vunpack.c.l.b16 %v248
  %v892 = vunpack.c.h.b16 %v250
  %v893 = vunpack.c.l.b16 %v251
  %v894 = vunpack.c.h.b16 %v251
  %v895 = vunpack.c.l.b16 %v252
  %v896 = vunpack.c.h.b16 %v252
  %v897 = vunpack.c.l.b16 %v253
  %v898 = vunpack.c.h.b16 %v255
  %v899 = vunpack.c.l.b16 %v256
  %v900 = vunpack.c.h.b16 %v256
  %v901 = vunpack.c.l.b16 %v257
  %v902 = vunpack.c.h.b16 %v257
  %v903 = vunpack.c.l.b16 %v258
  %v904 = vunpack.c.h.b16 %v260
  %v905 = vunpack.c.l.b16 %v261
  %v906 = vunpack.c.h.b16 %v261
  %v907 = vunpack.c.l.b16 %v262
  %v908 = vunpack.c.h.b16 %v262
  %v909 = vunpack.c.l.b16 %v263
  %v910 = vunpack.c.h.b16 %v265
  %v911 = vunpack.c.l.b16 %v266
  %v912 = vunpack.c.h.b16 %v266
  %v913 = vunpack.c.l.b16 %v267
  %v914 = vunpack.c.h.b16 %v267
  %v915 = vunpack.c.l.b16 %v268
  %v916 = vunpack.c.h.b16 %v270
  %v917 = vunpack.c.l.b16 %v271
  %v918 = vunpack.c.h.b16 %v271
  %v919 = vunpack.c.l.b16 %v272
  %v920 = vunpack.c.h.b16 %v272
  %v921 = vunpack.c.l.b16 %v273
  %v922 = vunpack.c.h.b16 %v275
  %v923 = vunpack.c.l.b16 %v276
  %v924 = vunpack.c.h.b16 %v276
  %v925 = vunpack.c.l.b16 %v277
  %v926 = vunpack.c.h.b16 %v277
  %v927 = vunpack.c.l.b16 %v278
  %v928 = vunpack.c.h.b16 %v280
  %v929 = vunpack.c.l.b16 %v281
  %v930 = vunpack.c.h.b16 %v281
  %v931 = vunpack.c.l.b16 %v282
  %v932 = vunpack.c.h.b16 %v282
  %v933 = vunpack.c.l.b16 %v283
  %v934 = vunpack.c.h.b16 %v285
  %v935 = vunpack.c.l.b16 %v286
  %v936 = vunpack.c.h.b16 %v286
  %v937 = vunpack.c.l.b16 %v287
  %v938 = vunpack.c.h.b16 %v287
  %v939 = vunpack.c.l.b16 %v288
  %v940 = vunpack.c.h.b16 %v290
  %v941 = vunpack.c.l.b16 %v291
  %v942 = vunpack.c.h.b16 %v291
  %v943 = vunpack.c.l.b16 %v292
  %v944 = vunpack.c.h.b16 %v292
  %v945 = vunpack.c.l.b16 %v293
  %v946 = vunpack.c.h.b16 %v295
  %v947 = vunpack.c.l.b16 %v296
  %v948 = vunpack.c.h.b16 %v296
  %v949 = vunpack.c.l.b16 %v297
  %v950 = vunpack.c.h.b16 %v297
  %v951 = vunpack.c.l.b16 %v298
  %v952 = vunpack.c.h.b16 %v300
  %v953 = vunpack.c.l.b16 %v301
  %v954 = vunpack.c.h.b16 %v301
  %v955 = vunpack.c.l.b16 %v302
  %v956 = vunpack.c.h.b16 %v302
  %v957 = vunpack.c.l.b16 %v303
  %v958 = vunpack.c.h.b16 %v305
  %v959 = vunpack.c.l.b16 %v306
  %v960 = vunpack.c.h.b16 %v306
  %v961 = vunpack.c.l.b16 %v307
  %v962 = vunpack.c.h.b16 %v307
  %v963 = vunpack.c.l.b16 %v308
  %v964 = vunpack.c.h.b16 %v310
  %v965 = vunpack.c.l.b16 %v311
  %v966 = vunpack.c.h.b16 %v311
  %v967 = vunpack.c.l.b16 %v312
  %v968 = vunpack.c.h.b16 %v312
  %v969 = vunpack.c.l.b16 %v313
  %v970 = vunpack.c.h.b16 %v315
  %v971 = vunpack.c.l.b16 %v316
  %v972 = vunpack.c.h.b16 %v316
  %v973 = vunpack.c.l.b16 %v317
  %v974 = vunpack.c.h.b16 %v317
  %v975 = vunpack.c.l.b16 %v318
  %v976 = vunpack.c.h.b16 %v320
  %v977 = vunpack.c.l.b16 %v321
  %v978 = vunpack.c.h.b16 %v321
  %v979 = vunpack.c.l.b16 %v322
  %v980 = vunpack.c.h.b16 %v322
  %v981 = vunpack.c.l.b16 %v323
  %v982 = vunpack.c.h.b16 %v325
  %v983 = vunpack.c.l.b16 %v326
  %v984 = vunpack.c.h.b16 %v326
  %v985 = vunpack.c.l.b16 %v327
  %v986 = vunpack.c.h.b16 %v327
  %v987 = vunpack.c.l.b16 %v328
  %v988 = vunpack.c.h.b16 %v330
  %v989 = vunpack.c.l.b16 %v331
  %v990 = vunpack.c.h.b16 %v331
  %v991 = vunpack.c.l.b16 %v332
  %v992 = vunpack.c.h.b16 %v332
  %v993 = vunpack.c.l.b16 %v333
  %v994 = vunpack.c.h.b16 %v335
  %v995 = vunpack.c.l.b16 %v336
  %v996 = vunpack.c.h.b16 %v336
  %v997 = vunpack.c.l.b16 %v337
  %v998 = vunpack.c.h.b16 %v337
  %v999 = vunpack.c.l.b16 %v338
  %v1000 = vunpack.c.h.b16 %v340
  %v1001 = vunpack.c.l.b16 %v341
  %v1002 = vunpack.c.h.b16 %v341
  %v1003 = vunpack.c.l.b16 %v342
  %v1004 = vunpack.c.h.b16 %v342
  %v1005 = vunpack.c.l.b16 %v343
  %v1006 = vunpack.c.h.b16 %v345
  %v1007 = vunpack.c.l.b16 %v346
  %v1008 = vunpack.c.h.b16 %v346
  %v1009 = vunpack.c.l.b16 %v347
  %v1010 = vunpack.c.h.b16 %v347
  %v1011 = vunpack.c.l.b16 %v348
  %v1012 = vunpack.c.h.b16 %v350
  %v1013 = vunpack.c.l.b16 %v351
  %v1014 = vunpack.c.h.b16 %v351
  %v1015 = vunpack.c.l.b16 %v352
  %v1016 = vunpack.c.h.b16 %v352
  %v1017 = vunpack.c.l.b16 %v353
  %v1018 = vunpack.c.h.b16 %v355
  %v1019 = vunpack.c.l.b16 %v356
  %v1020 = vunpack.c.h.b16 %v356
  %v1021 = vunpack.c.l.b16 %v357
  %v1022 = vunpack.c.h.b16 %v357
  %v1023 = vunpack.c.l.b16 %v358
  %v1024 = vunpack.c.h.b16 %v360
  %v1025 = vunpack.c.l.b16 %v361
  %v1026 = vunpack.c.h.b16 %v361
  %v1027 = vunpack.c.l.b16 %v362
  %v1028 = vunpack.c.h.b16 %v362
  %v1029 = vunpack.c.l.b16 %v363
  %v1030 = vunpack.c.h.b16 %v365
  %v1031 = vunpack.c.l.b16 %v366
  %v1032 = vunpack.c.h.b16 %v366
  %v1033 = vunpack.c.l.b16 %v367
  %v1034 = vunpack.c.h.b16 %v367
  %v1035 = vunpack.c.l.b16 %v368
  %v1036 = vunpack.c.h.b16 %v370
  %v1037 = vunpack.c.l.b16 %v371
  %v1038 = vunpack.c.h.b16 %v371
  %v1039 = vunpack.c.l.b16 %v372
  %v1040 = vunpack.c.h.b16 %v372
  %v1041 = vunpack.c.l.b16 %v373
  %v1042 = vunpack.c.h.b16 %v375
  %v1043 = vunpack.c.l.b16 %v376
  %v1044 = vunpack.c.h.b16 %v376
  %v1045 = vunpack.c.l.b16 %v377
  %v1046 = vunpack.c.h.b16 %v377
  %v1047 = vunpack.c.l.b16 %v378
  %v1048 = vunpack.c.h.b16 %v380
  %v1049 = vunpack.c.l.b16 %v381
  %v1050 = vunpack.c.h.b16 %v381
  %v1051 = vunpack.c.l.b16 %v382
  %v1052 = vunpack.c.h.b16 %v382
  %v1053 = vunpack.c.l.b16 %v383
  %v1054 = vunpack.c.h.b16 %v385
  %v1055 = vunpack.c.l.b16 %v386
  %v1056 = vunpack.c.h.b16 %v386
  %v1057 = vunpack.c.l.b16 %v387
  %v1058 = vunpack.c.h.b16 %v387
  %v1059 = vunpack.c.l.b16 %v388
  %v1060 = vunpack.c.h.b16 %v390
  %v1061 = vunpack.c.l.b16 %v391
  %v1062 = vunpack.c.h.b16 %v391
  %v1063 = vunpack.c.l.b16 %v392
  %v1064 = vunpack.c.h.b16 %v392
  %v1065 = vunpack.c.l.b16 %v393
  %v1066 = vunpack.c.h.b16 %v395
  %v1067 = vunpack.c.l.b16 %v396
  %v1068 = vunpack.c.h.b16 %v396
  %v1069 = vunpack.c.l.b16 %v397
  %v1070 = vunpack.c.h.b16 %v397
  %v1071 = vunpack.c.l.b16 %v398
  %v1072 = vunpack.c.h.b16 %v400
  %v1073 = vunpack.c.l.b16 %v401
  %v1074 = vunpack.c.h.b16 %v401
  %v1075 = vunpack.c.l.b16 %v402
  %v1076 = vunpack.c.h.b16 %v402
  %v1077 = vunpack.c.l.b16 %v403
  %v1078 = vpack.c.b16 %v892, %v886
  %v1079 = vpack.c.b16 %v893, %v887
  %v1080 = vpack.c.b16 %v894, %v888
  %v1081 = vpack.c.b16 %v895, %v889
  %v1082 = vpack.c.b16 %v896, %v890
  %v1083 = vpack.c.b16 %v897, %v891
  %v1084 = vpack.c.b16 %v904, %v898
  %v1085 = vpack.c.b16 %v905, %v899
  %v1086 = vpack.c.b16 %v906, %v900
  %v1087 = vpack.c.b16 %v907, %v901
  %v1088 = vpack.c.b16 %v908, %v902
  %v1089 = vpack.c.b16 %v909, %v903
  %v1090 = vpack.c.b16 %v916, %v910
  %v1091 = vpack.c.b16 %v917, %v911
  %v1092 = vpack.c.b16 %v918, %v912
  %v1093 = vpack.c.b16 %v919, %v913
  %v1094 = vpack.c.b16 %v920, %v914
  %v1095 = vpack.c.b16 %v921, %v915
  %v1096 = vpack.c.b16 %v928, %v922
  %v1097 = vpack.c.b16 %v929, %v923
  %v1098 = vpack.c.b16 %v930, %v924
  %v1099 = vpack.c.b16 %v931, %v925
  %v1100 = vpack.c.b16 %v932, %v926
  %v1101 = vpack.c.b16 %v933, %v927
  %v1102 = vpack.c.b16 %v940, %v934
  %v1103 = vpack.c.b16 %v941, %v935
  %v1104 = vpack.c.b16 %v942, %v936
  %v1105 = vpack.c.b16 %v943, %v937
  %v1106 = vpack.c.b16 %v944, %v938
  %v1107 = vpack.c.b16 %v945, %v939
  %v1108 = vpack.c.b16 %v952, %v946
  %v1109 = vpack.c.b16 %v953, %v947
  %v1110 = vpack.c.b16 %v954, %v948
  %v1111 = vpack.c.b16 %v955, %v949
  %v1112 = vpack.c.b16 %v956, %v950
  %v1113 = vpack.c.b16 %v957, %v951
  %v1114 = vpack.c.b16 %v964, %v958
  %v1115 = vpack.c.b16 %v965, %v959
  %v1116 = vpack.c.b16 %v966, %v960
  %v1117 = vpack.c.b16 %v967, %v961
  %v1118 = vpack.c.b16 %v968, %v962
  %v1119 = vpack.c.b16 %v969, %v963
  %v1120 = vpack.c.b16 %v976, %v970
  %v1121 = vpack.c.b16 %v977, %v971
  %v1122 = vpack.c.b16 %v978, %v972
  %v1123 = vpack.c.b16 %v979, %v973
  %v1124 = vpack.c.b16 %v980, %v974
  %v1125 = vpack.c.b16 %v981, %v975
  %v1126 = vpack.c.b16 %v988, %v982
  %v1127 = vpack.c.b16 %v989, %v983
  %v1128 = vpack.c.b16 %v990, %v984
  %v1129 = vpack.c.b16 %v991, %v985
  %v1130 = vpack.c.b16 %v992, %v986
  %v1131 = vpack.c.b16 %v993, %v987
  %v1132 = vpack.c.b16 %v1000, %v994
  %v1133 = vpack.c.b16 %v1001, %v995
  %v1134 = vpack.c.b16 %v1002, %v996
  %v1135 = vpack.c.b16 %v1003, %v997
  %v1136 = vpack.c.b16 %v1004, %v998
  %v1137 = vpack.c.b16 %v1005, %v999
  %v1138 = vpack.c.b16 %v1012, %v1006
  %v1139 = vpack.c.b16 %v1013, %v1007
  %v1140 = vpack.c.b16 %v1014, %v1008
  %v1141 = vpack.c.b16 %v1015, %v1009
  %v1142 = vpack.c.b16 %v1016, %v1010
  %v1143 = vpack.c.b16 %v1017, %v1011
  %v1144 = vpack.c.b16 %v1024, %v1018
  %v1145 = vpack.c.b16 %v1025, %v1019
  %v1146 = vpack.c.b16 %v1026, %v1020
  %v1147 = vpack.c.b16 %v1027, %v1021
  %v1148 = vpack.c.b16 %v1028, %v1022
  %v1149 = vpack.c.b16 %v1029, %v1023
  %v1150 = vpack.c.b16 %v1036, %v1030
  %v1151 = vpack.c.b16 %v1037, %v1031
  %v1152 = vpack.c.b16 %v1038, %v1032
  %v1153 = vpack.c.b16 %v1039, %v1033
  %v1154 = vpack.c.b16 %v1040, %v1034
  %v1155 = vpack.c.b16 %v1041, %v1035
  %v1156 = vpack.c.b16 %v1048, %v1042
  %v1157 = vpack.c.b16 %v1049, %v1043
  %v1158 = vpack.c.b16 %v1050, %v1044
  %v1159 = vpack.c.b16 %v1051, %v1045
  %v1160 = vpack.c.b16 %v1052, %v1046
  %v1161 = vpack.c.b16 %v1053, %v1047
  %v1162 = vpack.c.b16 %v1060, %v1054
  %v1163 = vpack.c.b16 %v1061, %v1055
  %v1164 = vpack.c.b16 %v1062, %v1056
  %v1165 = vpack.c.b16 %v1063, %v1057
  %v1166 = vpack.c.b16 %v1064, %v1058
  %v1167 = vpack.c.b16 %v1065, %v1059
  %v1168 = vpack.c.b16 %v1072, %v1066
  %v1169 = vpack.c.b16 %v1073, %v1067
  %v1170 = vpack.c.b16 %v1074, %v1068
  %v1171 = vpack.c.b16 %v1075, %v1069
  %v1172 = vpack.c.b16 %v1076, %v1070
  %v1173 = vpack.c.b16 %v1077, %v1071
  %1270 = vmatpush.bf16.msra.mxu0 %v585
  %1271 = vmatpush.bf16.msra.mxu0 %v582
  %1272 = vmatpush.bf16.msra.mxu0 %v579
  %1273 = vmatpush.bf16.msra.mxu0 %v576
  %1274 = vmatpush.bf16.msra.mxu0 %v573
  %1275 = vmatpush.bf16.msra.mxu0 %v570
  %1276 = vmatpush.bf16.msra.mxu0 %v567
  %1277 = vmatpush.bf16.msra.mxu0 %v564
  %1278 = vmatmul.bf16.gmra.mxu0 %v789
  %v1279 = vpop.f32.mrf.mxu0
  %v1280 = vadd.f32 0.0, %v1279
  %v1281 = vpop.f32.mrf.mxu0
  %1282 = vdwg.mxu0
  %1283 = vmatpush.bf16.msra.mxu0 %v609
  %1284 = vmatpush.bf16.msra.mxu0 %v606
  %1285 = vmatpush.bf16.msra.mxu0 %v603
  %1286 = vmatpush.bf16.msra.mxu0 %v600
  %1287 = vmatpush.bf16.msra.mxu0 %v597
  %1288 = vmatpush.bf16.msra.mxu0 %v594
  %1289 = vmatpush.bf16.msra.mxu0 %v591
  %1290 = vmatpush.bf16.msra.mxu0 %v588
  %1291 = vmatmul.bf16.gmra.mxu0 %v243
  %v1292 = vpop.f32.mrf.mxu0
  %v1293 = vadd.f32 %v1280, %v1292
  %v1294 = vpop.f32.mrf.mxu0
  %1295 = vdwg.mxu0
  %1296 = vmatpush.bf16.msra.mxu0 %v586
  %1297 = vmatpush.bf16.msra.mxu0 %v583
  %1298 = vmatpush.bf16.msra.mxu0 %v580
  %1299 = vmatpush.bf16.msra.mxu0 %v577
  %1300 = vmatpush.bf16.msra.mxu0 %v574
  %1301 = vmatpush.bf16.msra.mxu0 %v571
  %1302 = vmatpush.bf16.msra.mxu0 %v568
  %1303 = vmatpush.bf16.msra.mxu0 %v565
  %1304 = vmatmul.bf16.gmra.mxu0 %v789
  %v1305 = vpop.f32.mrf.mxu0
  %v1306 = vadd.f32 0.0, %v1305
  %v1307 = vpop.f32.mrf.mxu0
  %1308 = vdwg.mxu0
  %1309 = vmatpush.bf16.msra.mxu0 %v610
  %1310 = vmatpush.bf16.msra.mxu0 %v607
  %1311 = vmatpush.bf16.msra.mxu0 %v604
  %1312 = vmatpush.bf16.msra.mxu0 %v601
  %1313 = vmatpush.bf16.msra.mxu0 %v598
  %1314 = vmatpush.bf16.msra.mxu0 %v595
  %1315 = vmatpush.bf16.msra.mxu0 %v592
  %1316 = vmatpush.bf16.msra.mxu0 %v589
  %1317 = vmatmul.bf16.gmra.mxu0 %v243
  %v1318 = vpop.f32.mrf.mxu0
  %v1319 = vadd.f32 %v1306, %v1318
  %v1320 = vpop.f32.mrf.mxu0
  %1321 = vdwg.mxu0
  %1322 = vmatpush.bf16.msra.mxu0 %v587
  %1323 = vmatpush.bf16.msra.mxu0 %v584
  %1324 = vmatpush.bf16.msra.mxu0 %v581
  %1325 = vmatpush.bf16.msra.mxu0 %v578
  %1326 = vmatpush.bf16.msra.mxu0 %v575
  %1327 = vmatpush.bf16.msra.mxu0 %v572
  %1328 = vmatpush.bf16.msra.mxu0 %v569
  %1329 = vmatpush.bf16.msra.mxu0 %v566
  %1330 = vmatmul.bf16.gmra.mxu0 %v789
  %v1331 = vpop.f32.mrf.mxu0
  %v1332 = vadd.f32 0.0, %v1331
  %v1333 = vpop.f32.mrf.mxu0
  %1334 = vdwg.mxu0
  %1335 = vmatpush.bf16.msra.mxu0 %v611
  %1336 = vmatpush.bf16.msra.mxu0 %v608
  %1337 = vmatpush.bf16.msra.mxu0 %v605
  %1338 = vmatpush.bf16.msra.mxu0 %v602
  %1339 = vmatpush.bf16.msra.mxu0 %v599
  %1340 = vmatpush.bf16.msra.mxu0 %v596
  %1341 = vmatpush.bf16.msra.mxu0 %v593
  %1342 = vmatpush.bf16.msra.mxu0 %v590
  %1343 = vmatmul.bf16.gmra.mxu0 %v243
  %v1344 = vpop.f32.mrf.mxu0
  %v1345 = vadd.f32 %v1332, %v1344
  %v1346 = vpop.f32.mrf.mxu0
  %1347 = vdwg.mxu0
  %1348 = vmatpush.bf16.msra.mxu0 %v1120
  %1349 = vmatpush.bf16.msra.mxu0 %v1114
  %1350 = vmatpush.bf16.msra.mxu0 %v1108
  %1351 = vmatpush.bf16.msra.mxu0 %v1102
  %1352 = vmatpush.bf16.msra.mxu0 %v1096
  %1353 = vmatpush.bf16.msra.mxu0 %v1090
  %1354 = vmatpush.bf16.msra.mxu0 %v1084
  %1355 = vmatpush.bf16.msra.mxu0 %v1078
  %1356 = vmatmul.bf16.gmra.mxu0 %v789
  %v1357 = vpop.f32.mrf.mxu0
  %v1358 = vadd.f32 0.0, %v1357
  %v1359 = vpop.f32.mrf.mxu0
  %1360 = vdwg.mxu0
  %1361 = vmatpush.bf16.msra.mxu0 %v1168
  %1362 = vmatpush.bf16.msra.mxu0 %v1162
  %1363 = vmatpush.bf16.msra.mxu0 %v1156
  %1364 = vmatpush.bf16.msra.mxu0 %v1150
  %1365 = vmatpush.bf16.msra.mxu0 %v1144
  %1366 = vmatpush.bf16.msra.mxu0 %v1138
  %1367 = vmatpush.bf16.msra.mxu0 %v1132
  %1368 = vmatpush.bf16.msra.mxu0 %v1126
  %1369 = vmatmul.bf16.gmra.mxu0 %v243
  %v1370 = vpop.f32.mrf.mxu0
  %v1371 = vadd.f32 %v1358, %v1370
  %v1372 = vpop.f32.mrf.mxu0
  %1373 = vdwg.mxu0
  %1374 = vmatpush.bf16.msra.mxu0 %v1121
  %1375 = vmatpush.bf16.msra.mxu0 %v1115
  %1376 = vmatpush.bf16.msra.mxu0 %v1109
  %1377 = vmatpush.bf16.msra.mxu0 %v1103
  %1378 = vmatpush.bf16.msra.mxu0 %v1097
  %1379 = vmatpush.bf16.msra.mxu0 %v1091
  %1380 = vmatpush.bf16.msra.mxu0 %v1085
  %1381 = vmatpush.bf16.msra.mxu0 %v1079
  %1382 = vmatmul.bf16.gmra.mxu0 %v789
  %v1383 = vpop.f32.mrf.mxu0
  %v1384 = vadd.f32 0.0, %v1383
  %v1385 = vpop.f32.mrf.mxu0
  %1386 = vdwg.mxu0
  %1387 = vmatpush.bf16.msra.mxu0 %v1169
  %1388 = vmatpush.bf16.msra.mxu0 %v1163
  %1389 = vmatpush.bf16.msra.mxu0 %v1157
  %1390 = vmatpush.bf16.msra.mxu0 %v1151
  %1391 = vmatpush.bf16.msra.mxu0 %v1145
  %1392 = vmatpush.bf16.msra.mxu0 %v1139
  %1393 = vmatpush.bf16.msra.mxu0 %v1133
  %1394 = vmatpush.bf16.msra.mxu0 %v1127
  %1395 = vmatmul.bf16.gmra.mxu0 %v243
  %v1396 = vpop.f32.mrf.mxu0
  %v1397 = vadd.f32 %v1384, %v1396
  %v1398 = vpop.f32.mrf.mxu0
  %1399 = vdwg.mxu0
  %1400 = vmatpush.bf16.msra.mxu0 %v1122
  %1401 = vmatpush.bf16.msra.mxu0 %v1116
  %1402 = vmatpush.bf16.msra.mxu0 %v1110
  %1403 = vmatpush.bf16.msra.mxu0 %v1104
  %1404 = vmatpush.bf16.msra.mxu0 %v1098
  %1405 = vmatpush.bf16.msra.mxu0 %v1092
  %1406 = vmatpush.bf16.msra.mxu0 %v1086
  %1407 = vmatpush.bf16.msra.mxu0 %v1080
  %1408 = vmatmul.bf16.gmra.mxu0 %v789
  %v1409 = vpop.f32.mrf.mxu0
  %v1410 = vadd.f32 0.0, %v1409
  %v1411 = vpop.f32.mrf.mxu0
  %1412 = vdwg.mxu0
  %1413 = vmatpush.bf16.msra.mxu0 %v1170
  %1414 = vmatpush.bf16.msra.mxu0 %v1164
  %1415 = vmatpush.bf16.msra.mxu0 %v1158
  %1416 = vmatpush.bf16.msra.mxu0 %v1152
  %1417 = vmatpush.bf16.msra.mxu0 %v1146
  %1418 = vmatpush.bf16.msra.mxu0 %v1140
  %1419 = vmatpush.bf16.msra.mxu0 %v1134
  %1420 = vmatpush.bf16.msra.mxu0 %v1128
  %1421 = vmatmul.bf16.gmra.mxu0 %v243
  %v1422 = vpop.f32.mrf.mxu0
  %v1423 = vadd.f32 %v1410, %v1422
  %v1424 = vpop.f32.mrf.mxu0
  %1425 = vdwg.mxu0
  %1426 = vmatpush.bf16.msra.mxu0 %v1123
  %1427 = vmatpush.bf16.msra.mxu0 %v1117
  %1428 = vmatpush.bf16.msra.mxu0 %v1111
  %1429 = vmatpush.bf16.msra.mxu0 %v1105
  %1430 = vmatpush.bf16.msra.mxu0 %v1099
  %1431 = vmatpush.bf16.msra.mxu0 %v1093
  %1432 = vmatpush.bf16.msra.mxu0 %v1087
  %1433 = vmatpush.bf16.msra.mxu0 %v1081
  %1434 = vmatmul.bf16.gmra.mxu0 %v789
  %v1435 = vpop.f32.mrf.mxu0
  %v1436 = vadd.f32 0.0, %v1435
  %v1437 = vpop.f32.mrf.mxu0
  %1438 = vdwg.mxu0
  %1439 = vmatpush.bf16.msra.mxu0 %v1171
  %1440 = vmatpush.bf16.msra.mxu0 %v1165
  %1441 = vmatpush.bf16.msra.mxu0 %v1159
  %1442 = vmatpush.bf16.msra.mxu0 %v1153
  %1443 = vmatpush.bf16.msra.mxu0 %v1147
  %1444 = vmatpush.bf16.msra.mxu0 %v1141
  %1445 = vmatpush.bf16.msra.mxu0 %v1135
  %1446 = vmatpush.bf16.msra.mxu0 %v1129
  %1447 = vmatmul.bf16.gmra.mxu0 %v243
  %v1448 = vpop.f32.mrf.mxu0
  %v1449 = vadd.f32 %v1436, %v1448
  %v1450 = vpop.f32.mrf.mxu0
  %1451 = vdwg.mxu0
  %1452 = vmatpush.bf16.msra.mxu0 %v1124
  %1453 = vmatpush.bf16.msra.mxu0 %v1118
  %1454 = vmatpush.bf16.msra.mxu0 %v1112
  %1455 = vmatpush.bf16.msra.mxu0 %v1106
  %1456 = vmatpush.bf16.msra.mxu0 %v1100
  %1457 = vmatpush.bf16.msra.mxu0 %v1094
  %1458 = vmatpush.bf16.msra.mxu0 %v1088
  %1459 = vmatpush.bf16.msra.mxu0 %v1082
  %1460 = vmatmul.bf16.gmra.mxu0 %v789
  %v1461 = vpop.f32.mrf.mxu0
  %v1462 = vadd.f32 0.0, %v1461
  %v1463 = vpop.f32.mrf.mxu0
  %1464 = vdwg.mxu0
  %1465 = vmatpush.bf16.msra.mxu0 %v1172
  %1466 = vmatpush.bf16.msra.mxu0 %v1166
  %1467 = vmatpush.bf16.msra.mxu0 %v1160
  %1468 = vmatpush.bf16.msra.mxu0 %v1154
  %1469 = vmatpush.bf16.msra.mxu0 %v1148
  %1470 = vmatpush.bf16.msra.mxu0 %v1142
  %1471 = vmatpush.bf16.msra.mxu0 %v1136
  %1472 = vmatpush.bf16.msra.mxu0 %v1130
  %1473 = vmatmul.bf16.gmra.mxu0 %v243
  %v1474 = vpop.f32.mrf.mxu0
  %v1475 = vadd.f32 %v1462, %v1474
  %v1476 = vpop.f32.mrf.mxu0
  %1477 = vdwg.mxu0
  %1478 = vmatpush.bf16.msra.mxu0 %v1125
  %1479 = vmatpush.bf16.msra.mxu0 %v1119
  %1480 = vmatpush.bf16.msra.mxu0 %v1113
  %1481 = vmatpush.bf16.msra.mxu0 %v1107
  %1482 = vmatpush.bf16.msra.mxu0 %v1101
  %1483 = vmatpush.bf16.msra.mxu0 %v1095
  %1484 = vmatpush.bf16.msra.mxu0 %v1089
  %1485 = vmatpush.bf16.msra.mxu0 %v1083
  %1486 = vmatmul.bf16.gmra.mxu0 %v789
  %v1487 = vpop.f32.mrf.mxu0
  %v1488 = vadd.f32 0.0, %v1487
  %v1489 = vpop.f32.mrf.mxu0
  %1490 = vdwg.mxu0
  %1491 = vmatpush.bf16.msra.mxu0 %v1173
  %1492 = vmatpush.bf16.msra.mxu0 %v1167
  %1493 = vmatpush.bf16.msra.mxu0 %v1161
  %1494 = vmatpush.bf16.msra.mxu0 %v1155
  %1495 = vmatpush.bf16.msra.mxu0 %v1149
  %1496 = vmatpush.bf16.msra.mxu0 %v1143
  %1497 = vmatpush.bf16.msra.mxu0 %v1137
  %1498 = vmatpush.bf16.msra.mxu0 %v1131
  %1499 = vmatmul.bf16.gmra.mxu0 %v243
  %v1500 = vpop.f32.mrf.mxu0
  %v1501 = vadd.f32 %v1488, %v1500
  %v1502 = vpop.f32.mrf.mxu0
  %1503 = vdwg.mxu0
  %v1504 = vld [vmem:[#allocation2 + $0x18] sm:$0xff]
  %v1505 = vld [vmem:[#allocation2 + $0x20] sm:$0xff]
  %v1506 = vld [vmem:[#allocation2 + $0x28] sm:$0xff]
  %v1507 = vadd.f32 %v1504, %v1293
  %v1508 = vxor.u32 %v1507, 2147483648
  %v1509 = vmul.f32 %v1508, 1.442695
  %v1510 = vpow.pop %v1509
  %v1511 = vadd.f32 %v1510, 1.0
  %v1512 = vrcp.pop %v1511
  %v1513 = vmul.f32 %v1511, %v1512
  %v1514 = vsub.f32 1.0, %v1513
  %v1515 = vmul.f32 %v1512, %v1514
  %v1516 = vadd.f32 %v1512, %v1515
  %vm1517 = vweird.f32 %v1511
  %vm1518 = vweird.f32 %v1512
  %vm1519 = vmor %vm1517, %vm1518
  %v1520 = vsel %vm1519, %v1512, %v1516
  %v1521 = vand.u32 2147483647, %v1511
  %vm1522 = vcmp.eq.f32.partialorder %v1521, 8.507059e+37
  %v1523 = vand.u32 %v1511, 2147483648
  %v1524 = vor.u32 1.1754944e-38, %v1523
  %v1525 = vsel %vm1522, %v1524, %v1520
  %v1526 = vmul.f32 1.0, %v1525
  %v1527 = vadd.f32 %v1505, %v1319
  %v1528 = vxor.u32 %v1527, 2147483648
  %v1529 = vmul.f32 %v1528, 1.442695
  %v1530 = vpow.pop %v1529
  %v1531 = vadd.f32 %v1530, 1.0
  %v1532 = vrcp.pop %v1531
  %v1533 = vmul.f32 %v1531, %v1532
  %v1534 = vsub.f32 1.0, %v1533
  %v1535 = vmul.f32 %v1532, %v1534
  %v1536 = vadd.f32 %v1532, %v1535
  %vm1537 = vweird.f32 %v1531
  %vm1538 = vweird.f32 %v1532
  %vm1539 = vmor %vm1537, %vm1538
  %v1540 = vsel %vm1539, %v1532, %v1536
  %v1541 = vand.u32 2147483647, %v1531
  %vm1542 = vcmp.eq.f32.partialorder %v1541, 8.507059e+37
  %v1543 = vand.u32 %v1531, 2147483648
  %v1544 = vor.u32 1.1754944e-38, %v1543
  %v1545 = vsel %vm1542, %v1544, %v1540
  %v1546 = vmul.f32 1.0, %v1545
  %v1547 = vadd.f32 %v1345, %v221
  %v1548 = vmul.f32 %v1526, %v1547
  %v1549 = vadd.f32 %v1506, %v1548
  %v1550 = vtanh.pop %v1549
  %v1551 = vsub.f32 1.0, %v1546
  %v1552 = vmul.f32 %v1551, %v1550
  %v1553 = vmul.f32 %v1546, %v788
  %v1554 = vadd.f32 %v1552, %v1553
  %v1555 = vadd.f32 %v1449, %v229
  %v1556 = vadd.f32 %v1475, %v230
  %v1557 = vadd.f32 %v1501, %v231
  %v1558 = vadd.f32 %v1555, %v1371
  %v1559 = vxor.u32 %v1558, 2147483648
  %v1560 = vmul.f32 %v1559, 1.442695
  %v1561 = vpow.pop %v1560
  %v1562 = vadd.f32 %v1561, 1.0
  %v1563 = vrcp.pop %v1562
  %v1564 = vmul.f32 %v1562, %v1563
  %v1565 = vsub.f32 1.0, %v1564
  %v1566 = vmul.f32 %v1563, %v1565
  %v1567 = vadd.f32 %v1563, %v1566
  %vm1568 = vweird.f32 %v1562
  %vm1569 = vweird.f32 %v1563
  %vm1570 = vmor %vm1568, %vm1569
  %v1571 = vsel %vm1570, %v1563, %v1567
  %v1572 = vand.u32 2147483647, %v1562
  %vm1573 = vcmp.eq.f32.partialorder %v1572, 8.507059e+37
  %v1574 = vand.u32 %v1562, 2147483648
  %v1575 = vor.u32 1.1754944e-38, %v1574
  %v1576 = vsel %vm1573, %v1575, %v1571
  %v1577 = vmul.f32 1.0, %v1576
  %v1578 = vadd.f32 %v1556, %v1397
  %v1579 = vxor.u32 %v1578, 2147483648
  %v1580 = vmul.f32 %v1579, 1.442695
  %v1581 = vpow.pop %v1580
  %v1582 = vadd.f32 %v1581, 1.0
  %v1583 = vrcp.pop %v1582
  %v1584 = vmul.f32 %v1582, %v1583
  %v1585 = vsub.f32 1.0, %v1584
  %v1586 = vmul.f32 %v1583, %v1585
  %v1587 = vadd.f32 %v1583, %v1586
  %vm1588 = vweird.f32 %v1582
  %vm1589 = vweird.f32 %v1583
  %vm1590 = vmor %vm1588, %vm1589
  %v1591 = vsel %vm1590, %v1583, %v1587
  %v1592 = vand.u32 2147483647, %v1582
  %vm1593 = vcmp.eq.f32.partialorder %v1592, 8.507059e+37
  %v1594 = vand.u32 %v1582, 2147483648
  %v1595 = vor.u32 1.1754944e-38, %v1594
  %v1596 = vsel %vm1593, %v1595, %v1591
  %v1597 = vmul.f32 1.0, %v1596
  %v1598 = vadd.f32 %v1423, %v225
  %v1599 = vmul.f32 %v1577, %v1598
  %v1600 = vadd.f32 %v1557, %v1599
  %v1601 = vtanh.pop %v1600
  %v1602 = vsub.f32 1.0, %v1597
  %v1603 = vmul.f32 %v1602, %v1601
  %v1604 = vmul.f32 %v1597, %v241
  %v1605 = vadd.f32 %v1603, %v1604
  %v1606 = vpack.c.bf16 %v1554, %v1554
  %v1607 = vpack.c.bf16 %v1605, %v1605
  %v1608 = vunpack.c.h.b16 %v248
  %v1609 = vunpack.c.h.b16 %v253
  %v1610 = vunpack.c.h.b16 %v258
  %v1611 = vunpack.c.h.b16 %v263
  %v1612 = vunpack.c.h.b16 %v268
  %v1613 = vunpack.c.h.b16 %v273
  %v1614 = vunpack.c.h.b16 %v278
  %v1615 = vunpack.c.h.b16 %v283
  %v1616 = vunpack.c.h.b16 %v288
  %v1617 = vunpack.c.h.b16 %v293
  %v1618 = vunpack.c.h.b16 %v298
  %v1619 = vunpack.c.h.b16 %v303
  %v1620 = vunpack.c.h.b16 %v308
  %v1621 = vunpack.c.h.b16 %v313
  %v1622 = vunpack.c.h.b16 %v318
  %v1623 = vunpack.c.h.b16 %v323
  %v1624 = vunpack.c.h.b16 %v328
  %v1625 = vunpack.c.h.b16 %v333
  %v1626 = vunpack.c.h.b16 %v338
  %v1627 = vunpack.c.h.b16 %v343
  %v1628 = vunpack.c.h.b16 %v348
  %v1629 = vunpack.c.h.b16 %v353
  %v1630 = vunpack.c.h.b16 %v358
  %v1631 = vunpack.c.h.b16 %v363
  %v1632 = vunpack.c.h.b16 %v368
  %v1633 = vunpack.c.h.b16 %v373
  %v1634 = vunpack.c.h.b16 %v378
  %v1635 = vunpack.c.h.b16 %v383
  %v1636 = vunpack.c.h.b16 %v388
  %v1637 = vunpack.c.h.b16 %v393
  %v1638 = vunpack.c.h.b16 %v398
  %v1639 = vunpack.c.h.b16 %v403
  %v1640 = vpack.c.b16 %v1609, %v1608
  %v1641 = vpack.c.b16 %v1611, %v1610
  %v1642 = vpack.c.b16 %v1613, %v1612
  %v1643 = vpack.c.b16 %v1615, %v1614
  %v1644 = vpack.c.b16 %v1617, %v1616
  %v1645 = vpack.c.b16 %v1619, %v1618
  %v1646 = vpack.c.b16 %v1621, %v1620
  %v1647 = vpack.c.b16 %v1623, %v1622
  %v1648 = vpack.c.b16 %v1625, %v1624
  %v1649 = vpack.c.b16 %v1627, %v1626
  %v1650 = vpack.c.b16 %v1629, %v1628
  %v1651 = vpack.c.b16 %v1631, %v1630
  %v1652 = vpack.c.b16 %v1633, %v1632
  %v1653 = vpack.c.b16 %v1635, %v1634
  %v1654 = vpack.c.b16 %v1637, %v1636
  %v1655 = vpack.c.b16 %v1639, %v1638
  %1672 = vmatpush.bf16.msra.mxu0 %v585
  %1673 = vmatpush.bf16.msra.mxu0 %v582
  %1674 = vmatpush.bf16.msra.mxu0 %v579
  %1675 = vmatpush.bf16.msra.mxu0 %v576
  %1676 = vmatpush.bf16.msra.mxu0 %v573
  %1677 = vmatpush.bf16.msra.mxu0 %v570
  %1678 = vmatpush.bf16.msra.mxu0 %v567
  %1679 = vmatpush.bf16.msra.mxu0 %v564
  %1680 = vmatmul.bf16.gmra.mxu0 %v1606
  %v1681 = vpop.f32.mrf.mxu0
  %v1682 = vadd.f32 0.0, %v1681
  %v1683 = vpop.f32.mrf.mxu0
  %1684 = vdwg.mxu0
  %1685 = vmatpush.bf16.msra.mxu0 %v609
  %1686 = vmatpush.bf16.msra.mxu0 %v606
  %1687 = vmatpush.bf16.msra.mxu0 %v603
  %1688 = vmatpush.bf16.msra.mxu0 %v600
  %1689 = vmatpush.bf16.msra.mxu0 %v597
  %1690 = vmatpush.bf16.msra.mxu0 %v594
  %1691 = vmatpush.bf16.msra.mxu0 %v591
  %1692 = vmatpush.bf16.msra.mxu0 %v588
  %1693 = vmatmul.bf16.gmra.mxu0 %v1607
  %v1694 = vpop.f32.mrf.mxu0
  %v1695 = vadd.f32 %v1682, %v1694
  %v1696 = vpop.f32.mrf.mxu0
  %1697 = vdwg.mxu0
  %1698 = vmatpush.bf16.msra.mxu0 %v586
  %1699 = vmatpush.bf16.msra.mxu0 %v583
  %1700 = vmatpush.bf16.msra.mxu0 %v580
  %1701 = vmatpush.bf16.msra.mxu0 %v577
  %1702 = vmatpush.bf16.msra.mxu0 %v574
  %1703 = vmatpush.bf16.msra.mxu0 %v571
  %1704 = vmatpush.bf16.msra.mxu0 %v568
  %1705 = vmatpush.bf16.msra.mxu0 %v565
  %1706 = vmatmul.bf16.gmra.mxu0 %v1606
  %v1707 = vpop.f32.mrf.mxu0
  %v1708 = vadd.f32 0.0, %v1707
  %v1709 = vpop.f32.mrf.mxu0
  %1710 = vdwg.mxu0
  %1711 = vmatpush.bf16.msra.mxu0 %v610
  %1712 = vmatpush.bf16.msra.mxu0 %v607
  %1713 = vmatpush.bf16.msra.mxu0 %v604
  %1714 = vmatpush.bf16.msra.mxu0 %v601
  %1715 = vmatpush.bf16.msra.mxu0 %v598
  %1716 = vmatpush.bf16.msra.mxu0 %v595
  %1717 = vmatpush.bf16.msra.mxu0 %v592
  %1718 = vmatpush.bf16.msra.mxu0 %v589
  %1719 = vmatmul.bf16.gmra.mxu0 %v1607
  %v1720 = vpop.f32.mrf.mxu0
  %v1721 = vadd.f32 %v1708, %v1720
  %v1722 = vpop.f32.mrf.mxu0
  %1723 = vdwg.mxu0
  %1724 = vmatpush.bf16.msra.mxu0 %v587
  %1725 = vmatpush.bf16.msra.mxu0 %v584
  %1726 = vmatpush.bf16.msra.mxu0 %v581
  %1727 = vmatpush.bf16.msra.mxu0 %v578
  %1728 = vmatpush.bf16.msra.mxu0 %v575
  %1729 = vmatpush.bf16.msra.mxu0 %v572
  %1730 = vmatpush.bf16.msra.mxu0 %v569
  %1731 = vmatpush.bf16.msra.mxu0 %v566
  %1732 = vmatmul.bf16.gmra.mxu0 %v1606
  %v1733 = vpop.f32.mrf.mxu0
  %v1734 = vadd.f32 0.0, %v1733
  %v1735 = vpop.f32.mrf.mxu0
  %1736 = vdwg.mxu0
  %1737 = vmatpush.bf16.msra.mxu0 %v611
  %1738 = vmatpush.bf16.msra.mxu0 %v608
  %1739 = vmatpush.bf16.msra.mxu0 %v605
  %1740 = vmatpush.bf16.msra.mxu0 %v602
  %1741 = vmatpush.bf16.msra.mxu0 %v599
  %1742 = vmatpush.bf16.msra.mxu0 %v596
  %1743 = vmatpush.bf16.msra.mxu0 %v593
  %1744 = vmatpush.bf16.msra.mxu0 %v590
  %1745 = vmatmul.bf16.gmra.mxu0 %v1607
  %v1746 = vpop.f32.mrf.mxu0
  %v1747 = vadd.f32 %v1734, %v1746
  %v1748 = vpop.f32.mrf.mxu0
  %1749 = vdwg.mxu0
  %1750 = vmatpush.bf16.msra.mxu0 %v1120
  %1751 = vmatpush.bf16.msra.mxu0 %v1114
  %1752 = vmatpush.bf16.msra.mxu0 %v1108
  %1753 = vmatpush.bf16.msra.mxu0 %v1102
  %1754 = vmatpush.bf16.msra.mxu0 %v1096
  %1755 = vmatpush.bf16.msra.mxu0 %v1090
  %1756 = vmatpush.bf16.msra.mxu0 %v1084
  %1757 = vmatpush.bf16.msra.mxu0 %v1078
  %1758 = vmatmul.bf16.gmra.mxu0 %v1606
  %v1759 = vpop.f32.mrf.mxu0
  %v1760 = vadd.f32 0.0, %v1759
  %v1761 = vpop.f32.mrf.mxu0
  %1762 = vdwg.mxu0
  %1763 = vmatpush.bf16.msra.mxu0 %v1168
  %1764 = vmatpush.bf16.msra.mxu0 %v1162
  %1765 = vmatpush.bf16.msra.mxu0 %v1156
  %1766 = vmatpush.bf16.msra.mxu0 %v1150
  %1767 = vmatpush.bf16.msra.mxu0 %v1144
  %1768 = vmatpush.bf16.msra.mxu0 %v1138
  %1769 = vmatpush.bf16.msra.mxu0 %v1132
  %1770 = vmatpush.bf16.msra.mxu0 %v1126
  %1771 = vmatmul.bf16.gmra.mxu0 %v1607
  %v1772 = vpop.f32.mrf.mxu0
  %v1773 = vadd.f32 %v1760, %v1772
  %v1774 = vpop.f32.mrf.mxu0
  %1775 = vdwg.mxu0
  %1776 = vmatpush.bf16.msra.mxu0 %v1121
  %1777 = vmatpush.bf16.msra.mxu0 %v1115
  %1778 = vmatpush.bf16.msra.mxu0 %v1109
  %1779 = vmatpush.bf16.msra.mxu0 %v1103
  %1780 = vmatpush.bf16.msra.mxu0 %v1097
  %1781 = vmatpush.bf16.msra.mxu0 %v1091
  %1782 = vmatpush.bf16.msra.mxu0 %v1085
  %1783 = vmatpush.bf16.msra.mxu0 %v1079
  %1784 = vmatmul.bf16.gmra.mxu0 %v1606
  %v1785 = vpop.f32.mrf.mxu0
  %v1786 = vadd.f32 0.0, %v1785
  %v1787 = vpop.f32.mrf.mxu0
  %1788 = vdwg.mxu0
  %1789 = vmatpush.bf16.msra.mxu0 %v1169
  %1790 = vmatpush.bf16.msra.mxu0 %v1163
  %1791 = vmatpush.bf16.msra.mxu0 %v1157
  %1792 = vmatpush.bf16.msra.mxu0 %v1151
  %1793 = vmatpush.bf16.msra.mxu0 %v1145
  %1794 = vmatpush.bf16.msra.mxu0 %v1139
  %1795 = vmatpush.bf16.msra.mxu0 %v1133
  %1796 = vmatpush.bf16.msra.mxu0 %v1127
  %1797 = vmatmul.bf16.gmra.mxu0 %v1607
  %v1798 = vpop.f32.mrf.mxu0
  %v1799 = vadd.f32 %v1786, %v1798
  %v1800 = vpop.f32.mrf.mxu0
  %1801 = vdwg.mxu0
  %1802 = vmatpush.bf16.msra.mxu0 %v1122
  %1803 = vmatpush.bf16.msra.mxu0 %v1116
  %1804 = vmatpush.bf16.msra.mxu0 %v1110
  %1805 = vmatpush.bf16.msra.mxu0 %v1104
  %1806 = vmatpush.bf16.msra.mxu0 %v1098
  %1807 = vmatpush.bf16.msra.mxu0 %v1092
  %1808 = vmatpush.bf16.msra.mxu0 %v1086
  %1809 = vmatpush.bf16.msra.mxu0 %v1080
  %1810 = vmatmul.bf16.gmra.mxu0 %v1606
  %v1811 = vpop.f32.mrf.mxu0
  %v1812 = vadd.f32 0.0, %v1811
  %v1813 = vpop.f32.mrf.mxu0
  %1814 = vdwg.mxu0
  %1815 = vmatpush.bf16.msra.mxu0 %v1170
  %1816 = vmatpush.bf16.msra.mxu0 %v1164
  %1817 = vmatpush.bf16.msra.mxu0 %v1158
  %1818 = vmatpush.bf16.msra.mxu0 %v1152
  %1819 = vmatpush.bf16.msra.mxu0 %v1146
  %1820 = vmatpush.bf16.msra.mxu0 %v1140
  %1821 = vmatpush.bf16.msra.mxu0 %v1134
  %1822 = vmatpush.bf16.msra.mxu0 %v1128
  %1823 = vmatmul.bf16.gmra.mxu0 %v1607
  %v1824 = vpop.f32.mrf.mxu0
  %v1825 = vadd.f32 %v1812, %v1824
  %v1826 = vpop.f32.mrf.mxu0
  %1827 = vdwg.mxu0
  %1828 = vmatpush.bf16.msra.mxu0 %v1123
  %1829 = vmatpush.bf16.msra.mxu0 %v1117
  %1830 = vmatpush.bf16.msra.mxu0 %v1111
  %1831 = vmatpush.bf16.msra.mxu0 %v1105
  %1832 = vmatpush.bf16.msra.mxu0 %v1099
  %1833 = vmatpush.bf16.msra.mxu0 %v1093
  %1834 = vmatpush.bf16.msra.mxu0 %v1087
  %1835 = vmatpush.bf16.msra.mxu0 %v1081
  %1836 = vmatmul.bf16.gmra.mxu0 %v1606
  %v1837 = vpop.f32.mrf.mxu0
  %v1838 = vadd.f32 0.0, %v1837
  %v1839 = vpop.f32.mrf.mxu0
  %1840 = vdwg.mxu0
  %1841 = vmatpush.bf16.msra.mxu0 %v1171
  %1842 = vmatpush.bf16.msra.mxu0 %v1165
  %1843 = vmatpush.bf16.msra.mxu0 %v1159
  %1844 = vmatpush.bf16.msra.mxu0 %v1153
  %1845 = vmatpush.bf16.msra.mxu0 %v1147
  %1846 = vmatpush.bf16.msra.mxu0 %v1141
  %1847 = vmatpush.bf16.msra.mxu0 %v1135
  %1848 = vmatpush.bf16.msra.mxu0 %v1129
  %1849 = vmatmul.bf16.gmra.mxu0 %v1607
  %v1850 = vpop.f32.mrf.mxu0
  %v1851 = vadd.f32 %v1838, %v1850
  %v1852 = vpop.f32.mrf.mxu0
  %1853 = vdwg.mxu0
  %1854 = vmatpush.bf16.msra.mxu0 %v1124
  %1855 = vmatpush.bf16.msra.mxu0 %v1118
  %1856 = vmatpush.bf16.msra.mxu0 %v1112
  %1857 = vmatpush.bf16.msra.mxu0 %v1106
  %1858 = vmatpush.bf16.msra.mxu0 %v1100
  %1859 = vmatpush.bf16.msra.mxu0 %v1094
  %1860 = vmatpush.bf16.msra.mxu0 %v1088
  %1861 = vmatpush.bf16.msra.mxu0 %v1082
  %1862 = vmatmul.bf16.gmra.mxu0 %v1606
  %v1863 = vpop.f32.mrf.mxu0
  %v1864 = vadd.f32 0.0, %v1863
  %v1865 = vpop.f32.mrf.mxu0
  %1866 = vdwg.mxu0
  %1867 = vmatpush.bf16.msra.mxu0 %v1172
  %1868 = vmatpush.bf16.msra.mxu0 %v1166
  %1869 = vmatpush.bf16.msra.mxu0 %v1160
  %1870 = vmatpush.bf16.msra.mxu0 %v1154
  %1871 = vmatpush.bf16.msra.mxu0 %v1148
  %1872 = vmatpush.bf16.msra.mxu0 %v1142
  %1873 = vmatpush.bf16.msra.mxu0 %v1136
  %1874 = vmatpush.bf16.msra.mxu0 %v1130
  %1875 = vmatmul.bf16.gmra.mxu0 %v1607
  %v1876 = vpop.f32.mrf.mxu0
  %v1877 = vadd.f32 %v1864, %v1876
  %v1878 = vpop.f32.mrf.mxu0
  %1879 = vdwg.mxu0
  %1880 = vmatpush.bf16.msra.mxu0 %v1125
  %1881 = vmatpush.bf16.msra.mxu0 %v1119
  %1882 = vmatpush.bf16.msra.mxu0 %v1113
  %1883 = vmatpush.bf16.msra.mxu0 %v1107
  %1884 = vmatpush.bf16.msra.mxu0 %v1101
  %1885 = vmatpush.bf16.msra.mxu0 %v1095
  %1886 = vmatpush.bf16.msra.mxu0 %v1089
  %1887 = vmatpush.bf16.msra.mxu0 %v1083
  %1888 = vmatmul.bf16.gmra.mxu0 %v1606
  %v1889 = vpop.f32.mrf.mxu0
  %v1890 = vadd.f32 0.0, %v1889
  %v1891 = vpop.f32.mrf.mxu0
  %1892 = vdwg.mxu0
  %1893 = vmatpush.bf16.msra.mxu0 %v1173
  %1894 = vmatpush.bf16.msra.mxu0 %v1167
  %1895 = vmatpush.bf16.msra.mxu0 %v1161
  %1896 = vmatpush.bf16.msra.mxu0 %v1155
  %1897 = vmatpush.bf16.msra.mxu0 %v1149
  %1898 = vmatpush.bf16.msra.mxu0 %v1143
  %1899 = vmatpush.bf16.msra.mxu0 %v1137
  %1900 = vmatpush.bf16.msra.mxu0 %v1131
  %1901 = vmatmul.bf16.gmra.mxu0 %v1607
  %v1902 = vpop.f32.mrf.mxu0
  %v1903 = vadd.f32 %v1890, %v1902
  %v1904 = vpop.f32.mrf.mxu0
  %1905 = vdwg.mxu0
  %1906 = vmatpush.bf16.msra.mxu0 %v1647
  %1907 = vmatpush.bf16.msra.mxu0 %v1646
  %1908 = vmatpush.bf16.msra.mxu0 %v1645
  %1909 = vmatpush.bf16.msra.mxu0 %v1644
  %1910 = vmatpush.bf16.msra.mxu0 %v1643
  %1911 = vmatpush.bf16.msra.mxu0 %v1642
  %1912 = vmatpush.bf16.msra.mxu0 %v1641
  %1913 = vmatpush.bf16.msra.mxu0 %v1640
  %1914 = vmatmul.bf16.gmra.mxu0 %v1606
  %v1915 = vpop.f32.mrf.mxu0
  %v1916 = vadd.f32 0.0, %v1915
  %v1917 = vpop.f32.mrf.mxu0
  %1918 = vdwg.mxu0
  %1919 = vmatpush.bf16.msra.mxu0 %v1655
  %1920 = vmatpush.bf16.msra.mxu0 %v1654
  %1921 = vmatpush.bf16.msra.mxu0 %v1653
  %1922 = vmatpush.bf16.msra.mxu0 %v1652
  %1923 = vmatpush.bf16.msra.mxu0 %v1651
  %1924 = vmatpush.bf16.msra.mxu0 %v1650
  %1925 = vmatpush.bf16.msra.mxu0 %v1649
  %1926 = vmatpush.bf16.msra.mxu0 %v1648
  %1927 = vmatmul.bf16.gmra.mxu0 %v1607
  %v1928 = vpop.f32.mrf.mxu0
  %v1929 = vadd.f32 %v1916, %v1928
  %v1930 = vpop.f32.mrf.mxu0
  %1931 = vdwg.mxu0
  %v1932 = vadd.f32 %v1929, %v237
  %1933 = vst [vmem:[%s9] sm:$0xff] %v1932
  %v1934 = vld [vmem:[#allocation2 + $0x30] sm:$0xff]
  %v1935 = vld [vmem:[#allocation2 + $0x38] sm:$0xff]
  %v1936 = vld [vmem:[#allocation2 + $0x40] sm:$0xff]
  %v1937 = vadd.f32 %v1934, %v1695
  %v1938 = vxor.u32 %v1937, 2147483648
  %v1939 = vmul.f32 %v1938, 1.442695
  %v1940 = vpow.pop %v1939
  %v1941 = vadd.f32 %v1940, 1.0
  %v1942 = vrcp.pop %v1941
  %v1943 = vmul.f32 %v1941, %v1942
  %v1944 = vsub.f32 1.0, %v1943
  %v1945 = vmul.f32 %v1942, %v1944
  %v1946 = vadd.f32 %v1942, %v1945
  %vm1947 = vweird.f32 %v1941
  %vm1948 = vweird.f32 %v1942
  %vm1949 = vmor %vm1947, %vm1948
  %v1950 = vsel %vm1949, %v1942, %v1946
  %v1951 = vand.u32 2147483647, %v1941
  %vm1952 = vcmp.eq.f32.partialorder %v1951, 8.507059e+37
  %v1953 = vand.u32 %v1941, 2147483648
  %v1954 = vor.u32 1.1754944e-38, %v1953
  %v1955 = vsel %vm1952, %v1954, %v1950
  %v1956 = vmul.f32 1.0, %v1955
  %v1957 = vadd.f32 %v1935, %v1721
  %v1958 = vxor.u32 %v1957, 2147483648
  %v1959 = vmul.f32 %v1958, 1.442695
  %v1960 = vpow.pop %v1959
  %v1961 = vadd.f32 %v1960, 1.0
  %v1962 = vrcp.pop %v1961
  %v1963 = vmul.f32 %v1961, %v1962
  %v1964 = vsub.f32 1.0, %v1963
  %v1965 = vmul.f32 %v1962, %v1964
  %v1966 = vadd.f32 %v1962, %v1965
  %vm1967 = vweird.f32 %v1961
  %vm1968 = vweird.f32 %v1962
  %vm1969 = vmor %vm1967, %vm1968
  %v1970 = vsel %vm1969, %v1962, %v1966
  %v1971 = vand.u32 2147483647, %v1961
  %vm1972 = vcmp.eq.f32.partialorder %v1971, 8.507059e+37
  %v1973 = vand.u32 %v1961, 2147483648
  %v1974 = vor.u32 1.1754944e-38, %v1973
  %v1975 = vsel %vm1972, %v1974, %v1970
  %v1976 = vmul.f32 1.0, %v1975
  %v1977 = vadd.f32 %v1747, %v221
  %v1978 = vmul.f32 %v1956, %v1977
  %v1979 = vadd.f32 %v1936, %v1978
  %v1980 = vtanh.pop %v1979
  %v1981 = vsub.f32 1.0, %v1976
  %v1982 = vmul.f32 %v1981, %v1980
  %v1983 = vmul.f32 %v1976, %v1554
  %v1984 = vadd.f32 %v1982, %v1983
  %v1985 = vadd.f32 %v1851, %v229
  %v1986 = vadd.f32 %v1877, %v230
  %v1987 = vadd.f32 %v1903, %v231
  %v1988 = vadd.f32 %v1985, %v1773
  %v1989 = vxor.u32 %v1988, 2147483648
  %v1990 = vmul.f32 %v1989, 1.442695
  %v1991 = vpow.pop %v1990
  %v1992 = vadd.f32 %v1991, 1.0
  %v1993 = vrcp.pop %v1992
  %v1994 = vmul.f32 %v1992, %v1993
  %v1995 = vsub.f32 1.0, %v1994
  %v1996 = vmul.f32 %v1993, %v1995
  %v1997 = vadd.f32 %v1993, %v1996
  %vm1998 = vweird.f32 %v1992
  %vm1999 = vweird.f32 %v1993
  %vm2000 = vmor %vm1998, %vm1999
  %v2001 = vsel %vm2000, %v1993, %v1997
  %v2002 = vand.u32 2147483647, %v1992
  %vm2003 = vcmp.eq.f32.partialorder %v2002, 8.507059e+37
  %v2004 = vand.u32 %v1992, 2147483648
  %v2005 = vor.u32 1.1754944e-38, %v2004
  %v2006 = vsel %vm2003, %v2005, %v2001
  %v2007 = vmul.f32 1.0, %v2006
  %v2008 = vadd.f32 %v1986, %v1799
  %v2009 = vxor.u32 %v2008, 2147483648
  %v2010 = vmul.f32 %v2009, 1.442695
  %v2011 = vpow.pop %v2010
  %v2012 = vadd.f32 %v2011, 1.0
  %v2013 = vrcp.pop %v2012
  %v2014 = vmul.f32 %v2012, %v2013
  %v2015 = vsub.f32 1.0, %v2014
  %v2016 = vmul.f32 %v2013, %v2015
  %v2017 = vadd.f32 %v2013, %v2016
  %vm2018 = vweird.f32 %v2012
  %vm2019 = vweird.f32 %v2013
  %vm2020 = vmor %vm2018, %vm2019
  %v2021 = vsel %vm2020, %v2013, %v2017
  %v2022 = vand.u32 2147483647, %v2012
  %vm2023 = vcmp.eq.f32.partialorder %v2022, 8.507059e+37
  %v2024 = vand.u32 %v2012, 2147483648
  %v2025 = vor.u32 1.1754944e-38, %v2024
  %v2026 = vsel %vm2023, %v2025, %v2021
  %v2027 = vmul.f32 1.0, %v2026
  %v2028 = vadd.f32 %v1825, %v225
  %v2029 = vmul.f32 %v2007, %v2028
  %v2030 = vadd.f32 %v1987, %v2029
  %v2031 = vtanh.pop %v2030
  %v2032 = vsub.f32 1.0, %v2027
  %v2033 = vmul.f32 %v2032, %v2031
  %v2034 = vmul.f32 %v2027, %v1605
  %v2035 = vadd.f32 %v2033, %v2034
  %v2036 = vpack.c.bf16 %v1984, %v1984
  %v2037 = vpack.c.bf16 %v2035, %v2035
  %v2038 = vld [vmem:[%s3] sm:$0xff]
  %v2039 = vld [vmem:[%s3 + $0x8] sm:$0xff]
  %v2040 = vld [vmem:[%s3 + $0x10] sm:$0xff]
  %v2041 = vld [vmem:[%s3 + $0x18] sm:$0xff]
  %v2042 = vld [vmem:[%s3 + $0x20] sm:$0xff]
  %v2043 = vld [vmem:[%s3 + $0x28] sm:$0xff]
  %v2044 = vld [vmem:[%s3 + $0x30] sm:$0xff]
  %v2045 = vld [vmem:[%s3 + $0x38] sm:$0xff]
  %v2046 = vld [vmem:[%s3 + $0x40] sm:$0xff]
  %v2047 = vld [vmem:[%s3 + $0x48] sm:$0xff]
  %v2048 = vld [vmem:[%s3 + $0x50] sm:$0xff]
  %v2049 = vld [vmem:[%s3 + $0x58] sm:$0xff]
  %v2050 = vld [vmem:[%s3 + $0x60] sm:$0xff]
  %v2051 = vld [vmem:[%s3 + $0x68] sm:$0xff]
  %v2052 = vld [vmem:[%s3 + $0x70] sm:$0xff]
  %v2053 = vld [vmem:[%s3 + $0x78] sm:$0xff]
  %v2054 = vld [vmem:[%s3 + $0x80] sm:$0xff]
  %v2055 = vld [vmem:[%s3 + $0x88] sm:$0xff]
  %v2056 = vld [vmem:[%s3 + $0x90] sm:$0xff]
  %v2057 = vld [vmem:[%s3 + $0x98] sm:$0xff]
  %v2058 = vld [vmem:[%s3 + $0xa0] sm:$0xff]
  %v2059 = vld [vmem:[%s3 + $0xa8] sm:$0xff]
  %v2060 = vld [vmem:[%s3 + $0xb0] sm:$0xff]
  %v2061 = vld [vmem:[%s3 + $0xb8] sm:$0xff]
  %v2062 = vld [vmem:[%s3 + $0xc0] sm:$0xff]
  %v2063 = vld [vmem:[%s3 + $0xc8] sm:$0xff]
  %v2064 = vld [vmem:[%s3 + $0xd0] sm:$0xff]
  %v2065 = vld [vmem:[%s3 + $0xd8] sm:$0xff]
  %v2066 = vld [vmem:[%s3 + $0xe0] sm:$0xff]
  %v2067 = vld [vmem:[%s3 + $0xe8] sm:$0xff]
  %v2068 = vld [vmem:[%s3 + $0xf0] sm:$0xff]
  %v2069 = vld [vmem:[%s3 + $0xf8] sm:$0xff]
  %v2070 = vld [vmem:[%s3 + $0x100] sm:$0xff]
  %v2071 = vld [vmem:[%s3 + $0x108] sm:$0xff]
  %v2072 = vld [vmem:[%s3 + $0x110] sm:$0xff]
  %v2073 = vld [vmem:[%s3 + $0x118] sm:$0xff]
  %v2074 = vld [vmem:[%s3 + $0x120] sm:$0xff]
  %v2075 = vld [vmem:[%s3 + $0x128] sm:$0xff]
  %v2076 = vld [vmem:[%s3 + $0x130] sm:$0xff]
  %v2077 = vld [vmem:[%s3 + $0x138] sm:$0xff]
  %v2078 = vld [vmem:[%s3 + $0x140] sm:$0xff]
  %v2079 = vld [vmem:[%s3 + $0x148] sm:$0xff]
  %v2080 = vld [vmem:[%s3 + $0x150] sm:$0xff]
  %v2081 = vld [vmem:[%s3 + $0x158] sm:$0xff]
  %v2082 = vld [vmem:[%s3 + $0x160] sm:$0xff]
  %v2083 = vld [vmem:[%s3 + $0x168] sm:$0xff]
  %v2084 = vld [vmem:[%s3 + $0x170] sm:$0xff]
  %v2085 = vld [vmem:[%s3 + $0x178] sm:$0xff]
  %v2086 = vld [vmem:[%s3 + $0x180] sm:$0xff]
  %v2087 = vld [vmem:[%s3 + $0x188] sm:$0xff]
  %v2088 = vld [vmem:[%s3 + $0x190] sm:$0xff]
  %v2089 = vld [vmem:[%s3 + $0x198] sm:$0xff]
  %v2090 = vld [vmem:[%s3 + $0x1a0] sm:$0xff]
  %v2091 = vld [vmem:[%s3 + $0x1a8] sm:$0xff]
  %v2092 = vld [vmem:[%s3 + $0x1b0] sm:$0xff]
  %v2093 = vld [vmem:[%s3 + $0x1b8] sm:$0xff]
  %v2094 = vld [vmem:[%s3 + $0x1c0] sm:$0xff]
  %v2095 = vld [vmem:[%s3 + $0x1c8] sm:$0xff]
  %v2096 = vld [vmem:[%s3 + $0x1d0] sm:$0xff]
  %v2097 = vld [vmem:[%s3 + $0x1d8] sm:$0xff]
  %v2098 = vld [vmem:[%s3 + $0x1e0] sm:$0xff]
  %v2099 = vld [vmem:[%s3 + $0x1e8] sm:$0xff]
  %v2100 = vld [vmem:[%s3 + $0x1f0] sm:$0xff]
  %v2101 = vld [vmem:[%s3 + $0x1f8] sm:$0xff]
  %v2102 = vld [vmem:[%s3 + $0x200] sm:$0xff]
  %v2103 = vld [vmem:[%s3 + $0x208] sm:$0xff]
  %v2104 = vld [vmem:[%s3 + $0x210] sm:$0xff]
  %v2105 = vld [vmem:[%s3 + $0x218] sm:$0xff]
  %v2106 = vld [vmem:[%s3 + $0x220] sm:$0xff]
  %v2107 = vld [vmem:[%s3 + $0x228] sm:$0xff]
  %v2108 = vld [vmem:[%s3 + $0x230] sm:$0xff]
  %v2109 = vld [vmem:[%s3 + $0x238] sm:$0xff]
  %v2110 = vld [vmem:[%s3 + $0x240] sm:$0xff]
  %v2111 = vld [vmem:[%s3 + $0x248] sm:$0xff]
  %v2112 = vld [vmem:[%s3 + $0x250] sm:$0xff]
  %v2113 = vld [vmem:[%s3 + $0x258] sm:$0xff]
  %v2114 = vld [vmem:[%s3 + $0x260] sm:$0xff]
  %v2115 = vld [vmem:[%s3 + $0x268] sm:$0xff]
  %v2116 = vld [vmem:[%s3 + $0x270] sm:$0xff]
  %v2117 = vld [vmem:[%s3 + $0x278] sm:$0xff]
  %v2118 = vld [vmem:[%s3 + $0x280] sm:$0xff]
  %v2119 = vld [vmem:[%s3 + $0x288] sm:$0xff]
  %v2120 = vld [vmem:[%s3 + $0x290] sm:$0xff]
  %v2121 = vld [vmem:[%s3 + $0x298] sm:$0xff]
  %v2122 = vld [vmem:[%s3 + $0x2a0] sm:$0xff]
  %v2123 = vld [vmem:[%s3 + $0x2a8] sm:$0xff]
  %v2124 = vld [vmem:[%s3 + $0x2b0] sm:$0xff]
  %v2125 = vld [vmem:[%s3 + $0x2b8] sm:$0xff]
  %v2126 = vld [vmem:[%s3 + $0x2c0] sm:$0xff]
  %v2127 = vld [vmem:[%s3 + $0x2c8] sm:$0xff]
  %v2128 = vld [vmem:[%s3 + $0x2d0] sm:$0xff]
  %v2129 = vld [vmem:[%s3 + $0x2d8] sm:$0xff]
  %v2130 = vld [vmem:[%s3 + $0x2e0] sm:$0xff]
  %v2131 = vld [vmem:[%s3 + $0x2e8] sm:$0xff]
  %v2132 = vld [vmem:[%s3 + $0x2f0] sm:$0xff]
  %v2133 = vld [vmem:[%s3 + $0x2f8] sm:$0xff]
  %v2134 = vld [vmem:[%s3 + $0x300] sm:$0xff]
  %v2135 = vld [vmem:[%s3 + $0x308] sm:$0xff]
  %v2136 = vld [vmem:[%s3 + $0x310] sm:$0xff]
  %v2137 = vld [vmem:[%s3 + $0x318] sm:$0xff]
  %v2138 = vld [vmem:[%s3 + $0x320] sm:$0xff]
  %v2139 = vld [vmem:[%s3 + $0x328] sm:$0xff]
  %v2140 = vld [vmem:[%s3 + $0x330] sm:$0xff]
  %v2141 = vld [vmem:[%s3 + $0x338] sm:$0xff]
  %v2142 = vld [vmem:[%s3 + $0x340] sm:$0xff]
  %v2143 = vld [vmem:[%s3 + $0x348] sm:$0xff]
  %v2144 = vld [vmem:[%s3 + $0x350] sm:$0xff]
  %v2145 = vld [vmem:[%s3 + $0x358] sm:$0xff]
  %v2146 = vld [vmem:[%s3 + $0x360] sm:$0xff]
  %v2147 = vld [vmem:[%s3 + $0x368] sm:$0xff]
  %v2148 = vld [vmem:[%s3 + $0x370] sm:$0xff]
  %v2149 = vld [vmem:[%s3 + $0x378] sm:$0xff]
  %v2150 = vld [vmem:[%s3 + $0x380] sm:$0xff]
  %v2151 = vld [vmem:[%s3 + $0x388] sm:$0xff]
  %v2152 = vld [vmem:[%s3 + $0x390] sm:$0xff]
  %v2153 = vld [vmem:[%s3 + $0x398] sm:$0xff]
  %v2154 = vld [vmem:[%s3 + $0x3a0] sm:$0xff]
  %v2155 = vld [vmem:[%s3 + $0x3a8] sm:$0xff]
  %v2156 = vld [vmem:[%s3 + $0x3b0] sm:$0xff]
  %v2157 = vld [vmem:[%s3 + $0x3b8] sm:$0xff]
  %v2158 = vld [vmem:[%s3 + $0x3c0] sm:$0xff]
  %v2159 = vld [vmem:[%s3 + $0x3c8] sm:$0xff]
  %v2160 = vld [vmem:[%s3 + $0x3d0] sm:$0xff]
  %v2161 = vld [vmem:[%s3 + $0x3d8] sm:$0xff]
  %v2162 = vld [vmem:[%s3 + $0x3e0] sm:$0xff]
  %v2163 = vld [vmem:[%s3 + $0x3e8] sm:$0xff]
  %v2164 = vld [vmem:[%s3 + $0x3f0] sm:$0xff]
  %v2165 = vld [vmem:[%s3 + $0x3f8] sm:$0xff]
  %v2166 = vld [vmem:[%s3 + $0x400] sm:$0xff]
  %v2167 = vld [vmem:[%s3 + $0x408] sm:$0xff]
  %v2168 = vld [vmem:[%s3 + $0x410] sm:$0xff]
  %v2169 = vld [vmem:[%s3 + $0x418] sm:$0xff]
  %v2170 = vld [vmem:[%s3 + $0x420] sm:$0xff]
  %v2171 = vld [vmem:[%s3 + $0x428] sm:$0xff]
  %v2172 = vld [vmem:[%s3 + $0x430] sm:$0xff]
  %v2173 = vld [vmem:[%s3 + $0x438] sm:$0xff]
  %v2174 = vld [vmem:[%s3 + $0x440] sm:$0xff]
  %v2175 = vld [vmem:[%s3 + $0x448] sm:$0xff]
  %v2176 = vld [vmem:[%s3 + $0x450] sm:$0xff]
  %v2177 = vld [vmem:[%s3 + $0x458] sm:$0xff]
  %v2178 = vld [vmem:[%s3 + $0x460] sm:$0xff]
  %v2179 = vld [vmem:[%s3 + $0x468] sm:$0xff]
  %v2180 = vld [vmem:[%s3 + $0x470] sm:$0xff]
  %v2181 = vld [vmem:[%s3 + $0x478] sm:$0xff]
  %v2182 = vld [vmem:[%s3 + $0x480] sm:$0xff]
  %v2183 = vld [vmem:[%s3 + $0x488] sm:$0xff]
  %v2184 = vld [vmem:[%s3 + $0x490] sm:$0xff]
  %v2185 = vld [vmem:[%s3 + $0x498] sm:$0xff]
  %v2186 = vld [vmem:[%s3 + $0x4a0] sm:$0xff]
  %v2187 = vld [vmem:[%s3 + $0x4a8] sm:$0xff]
  %v2188 = vld [vmem:[%s3 + $0x4b0] sm:$0xff]
  %v2189 = vld [vmem:[%s3 + $0x4b8] sm:$0xff]
  %v2190 = vld [vmem:[%s3 + $0x4c0] sm:$0xff]
  %v2191 = vld [vmem:[%s3 + $0x4c8] sm:$0xff]
  %v2192 = vld [vmem:[%s3 + $0x4d0] sm:$0xff]
  %v2193 = vld [vmem:[%s3 + $0x4d8] sm:$0xff]
  %v2194 = vld [vmem:[%s3 + $0x4e0] sm:$0xff]
  %v2195 = vld [vmem:[%s3 + $0x4e8] sm:$0xff]
  %v2196 = vld [vmem:[%s3 + $0x4f0] sm:$0xff]
  %v2197 = vld [vmem:[%s3 + $0x4f8] sm:$0xff]
  %v2358 = vunpack.c.l.b16 %v2038
  %v2359 = vunpack.c.h.b16 %v2038
  %v2360 = vunpack.c.l.b16 %v2039
  %v2361 = vunpack.c.h.b16 %v2039
  %v2362 = vunpack.c.l.b16 %v2040
  %v2363 = vunpack.c.h.b16 %v2040
  %v2364 = vunpack.c.l.b16 %v2041
  %v2365 = vunpack.c.h.b16 %v2041
  %v2366 = vunpack.c.l.b16 %v2042
  %v2367 = vunpack.c.h.b16 %v2042
  %v2368 = vunpack.c.l.b16 %v2043
  %v2369 = vunpack.c.h.b16 %v2043
  %v2370 = vunpack.c.l.b16 %v2044
  %v2371 = vunpack.c.h.b16 %v2044
  %v2372 = vunpack.c.l.b16 %v2045
  %v2373 = vunpack.c.h.b16 %v2045
  %v2374 = vunpack.c.l.b16 %v2046
  %v2375 = vunpack.c.h.b16 %v2046
  %v2376 = vunpack.c.l.b16 %v2047
  %v2377 = vunpack.c.h.b16 %v2047
  %v2378 = vunpack.c.l.b16 %v2048
  %v2379 = vunpack.c.h.b16 %v2048
  %v2380 = vunpack.c.l.b16 %v2049
  %v2381 = vunpack.c.h.b16 %v2049
  %v2382 = vunpack.c.l.b16 %v2050
  %v2383 = vunpack.c.h.b16 %v2050
  %v2384 = vunpack.c.l.b16 %v2051
  %v2385 = vunpack.c.h.b16 %v2051
  %v2386 = vunpack.c.l.b16 %v2052
  %v2387 = vunpack.c.h.b16 %v2052
  %v2388 = vunpack.c.l.b16 %v2053
  %v2389 = vunpack.c.h.b16 %v2053
  %v2390 = vunpack.c.l.b16 %v2054
  %v2391 = vunpack.c.h.b16 %v2054
  %v2392 = vunpack.c.l.b16 %v2055
  %v2393 = vunpack.c.h.b16 %v2055
  %v2394 = vunpack.c.l.b16 %v2056
  %v2395 = vunpack.c.h.b16 %v2056
  %v2396 = vunpack.c.l.b16 %v2057
  %v2397 = vunpack.c.h.b16 %v2057
  %v2398 = vunpack.c.l.b16 %v2058
  %v2399 = vunpack.c.h.b16 %v2058
  %v2400 = vunpack.c.l.b16 %v2059
  %v2401 = vunpack.c.h.b16 %v2059
  %v2402 = vunpack.c.l.b16 %v2060
  %v2403 = vunpack.c.h.b16 %v2060
  %v2404 = vunpack.c.l.b16 %v2061
  %v2405 = vunpack.c.h.b16 %v2061
  %v2406 = vunpack.c.l.b16 %v2062
  %v2407 = vunpack.c.h.b16 %v2062
  %v2408 = vunpack.c.l.b16 %v2063
  %v2409 = vunpack.c.h.b16 %v2063
  %v2410 = vunpack.c.l.b16 %v2064
  %v2411 = vunpack.c.h.b16 %v2064
  %v2412 = vunpack.c.l.b16 %v2065
  %v2413 = vunpack.c.h.b16 %v2065
  %v2414 = vunpack.c.l.b16 %v2066
  %v2415 = vunpack.c.h.b16 %v2066
  %v2416 = vunpack.c.l.b16 %v2067
  %v2417 = vunpack.c.h.b16 %v2067
  %v2418 = vunpack.c.l.b16 %v2068
  %v2419 = vunpack.c.h.b16 %v2068
  %v2420 = vunpack.c.l.b16 %v2069
  %v2421 = vunpack.c.h.b16 %v2069
  %v2422 = vunpack.c.l.b16 %v2070
  %v2423 = vunpack.c.h.b16 %v2070
  %v2424 = vunpack.c.l.b16 %v2071
  %v2425 = vunpack.c.h.b16 %v2071
  %v2426 = vunpack.c.l.b16 %v2072
  %v2427 = vunpack.c.h.b16 %v2072
  %v2428 = vunpack.c.l.b16 %v2073
  %v2429 = vunpack.c.h.b16 %v2073
  %v2430 = vunpack.c.l.b16 %v2074
  %v2431 = vunpack.c.h.b16 %v2074
  %v2432 = vunpack.c.l.b16 %v2075
  %v2433 = vunpack.c.h.b16 %v2075
  %v2434 = vunpack.c.l.b16 %v2076
  %v2435 = vunpack.c.h.b16 %v2076
  %v2436 = vunpack.c.l.b16 %v2077
  %v2437 = vunpack.c.h.b16 %v2077
  %v2438 = vunpack.c.l.b16 %v2078
  %v2439 = vunpack.c.h.b16 %v2078
  %v2440 = vunpack.c.l.b16 %v2079
  %v2441 = vunpack.c.h.b16 %v2079
  %v2442 = vunpack.c.l.b16 %v2080
  %v2443 = vunpack.c.h.b16 %v2080
  %v2444 = vunpack.c.l.b16 %v2081
  %v2445 = vunpack.c.h.b16 %v2081
  %v2446 = vunpack.c.l.b16 %v2082
  %v2447 = vunpack.c.h.b16 %v2082
  %v2448 = vunpack.c.l.b16 %v2083
  %v2449 = vunpack.c.h.b16 %v2083
  %v2450 = vunpack.c.l.b16 %v2084
  %v2451 = vunpack.c.h.b16 %v2084
  %v2452 = vunpack.c.l.b16 %v2085
  %v2453 = vunpack.c.h.b16 %v2085
  %v2454 = vunpack.c.l.b16 %v2086
  %v2455 = vunpack.c.h.b16 %v2086
  %v2456 = vunpack.c.l.b16 %v2087
  %v2457 = vunpack.c.h.b16 %v2087
  %v2458 = vunpack.c.l.b16 %v2088
  %v2459 = vunpack.c.h.b16 %v2088
  %v2460 = vunpack.c.l.b16 %v2089
  %v2461 = vunpack.c.h.b16 %v2089
  %v2462 = vunpack.c.l.b16 %v2090
  %v2463 = vunpack.c.h.b16 %v2090
  %v2464 = vunpack.c.l.b16 %v2091
  %v2465 = vunpack.c.h.b16 %v2091
  %v2466 = vunpack.c.l.b16 %v2092
  %v2467 = vunpack.c.h.b16 %v2092
  %v2468 = vunpack.c.l.b16 %v2093
  %v2469 = vunpack.c.h.b16 %v2093
  %v2470 = vunpack.c.l.b16 %v2094
  %v2471 = vunpack.c.h.b16 %v2094
  %v2472 = vunpack.c.l.b16 %v2095
  %v2473 = vunpack.c.h.b16 %v2095
  %v2474 = vunpack.c.l.b16 %v2096
  %v2475 = vunpack.c.h.b16 %v2096
  %v2476 = vunpack.c.l.b16 %v2097
  %v2477 = vunpack.c.h.b16 %v2097
  %v2478 = vunpack.c.l.b16 %v2098
  %v2479 = vunpack.c.h.b16 %v2098
  %v2480 = vunpack.c.l.b16 %v2099
  %v2481 = vunpack.c.h.b16 %v2099
  %v2482 = vunpack.c.l.b16 %v2100
  %v2483 = vunpack.c.h.b16 %v2100
  %v2484 = vunpack.c.l.b16 %v2101
  %v2485 = vunpack.c.h.b16 %v2101
  %v2486 = vunpack.c.l.b16 %v2102
  %v2487 = vunpack.c.h.b16 %v2102
  %v2488 = vunpack.c.l.b16 %v2103
  %v2489 = vunpack.c.h.b16 %v2103
  %v2490 = vunpack.c.l.b16 %v2104
  %v2491 = vunpack.c.h.b16 %v2104
  %v2492 = vunpack.c.l.b16 %v2105
  %v2493 = vunpack.c.h.b16 %v2105
  %v2494 = vunpack.c.l.b16 %v2106
  %v2495 = vunpack.c.h.b16 %v2106
  %v2496 = vunpack.c.l.b16 %v2107
  %v2497 = vunpack.c.h.b16 %v2107
  %v2498 = vunpack.c.l.b16 %v2108
  %v2499 = vunpack.c.h.b16 %v2108
  %v2500 = vunpack.c.l.b16 %v2109
  %v2501 = vunpack.c.h.b16 %v2109
  %v2502 = vunpack.c.l.b16 %v2110
  %v2503 = vunpack.c.h.b16 %v2110
  %v2504 = vunpack.c.l.b16 %v2111
  %v2505 = vunpack.c.h.b16 %v2111
  %v2506 = vunpack.c.l.b16 %v2112
  %v2507 = vunpack.c.h.b16 %v2112
  %v2508 = vunpack.c.l.b16 %v2113
  %v2509 = vunpack.c.h.b16 %v2113
  %v2510 = vunpack.c.l.b16 %v2114
  %v2511 = vunpack.c.h.b16 %v2114
  %v2512 = vunpack.c.l.b16 %v2115
  %v2513 = vunpack.c.h.b16 %v2115
  %v2514 = vunpack.c.l.b16 %v2116
  %v2515 = vunpack.c.h.b16 %v2116
  %v2516 = vunpack.c.l.b16 %v2117
  %v2517 = vunpack.c.h.b16 %v2117
  %v2518 = vunpack.c.l.b16 %v2118
  %v2519 = vunpack.c.h.b16 %v2118
  %v2520 = vunpack.c.l.b16 %v2119
  %v2521 = vunpack.c.h.b16 %v2119
  %v2522 = vunpack.c.l.b16 %v2120
  %v2523 = vunpack.c.h.b16 %v2120
  %v2524 = vunpack.c.l.b16 %v2121
  %v2525 = vunpack.c.h.b16 %v2121
  %v2526 = vunpack.c.l.b16 %v2122
  %v2527 = vunpack.c.h.b16 %v2122
  %v2528 = vunpack.c.l.b16 %v2123
  %v2529 = vunpack.c.h.b16 %v2123
  %v2530 = vunpack.c.l.b16 %v2124
  %v2531 = vunpack.c.h.b16 %v2124
  %v2532 = vunpack.c.l.b16 %v2125
  %v2533 = vunpack.c.h.b16 %v2125
  %v2534 = vunpack.c.l.b16 %v2126
  %v2535 = vunpack.c.h.b16 %v2126
  %v2536 = vunpack.c.l.b16 %v2127
  %v2537 = vunpack.c.h.b16 %v2127
  %v2538 = vunpack.c.l.b16 %v2128
  %v2539 = vunpack.c.h.b16 %v2128
  %v2540 = vunpack.c.l.b16 %v2129
  %v2541 = vunpack.c.h.b16 %v2129
  %v2542 = vunpack.c.l.b16 %v2130
  %v2543 = vunpack.c.h.b16 %v2130
  %v2544 = vunpack.c.l.b16 %v2131
  %v2545 = vunpack.c.h.b16 %v2131
  %v2546 = vunpack.c.l.b16 %v2132
  %v2547 = vunpack.c.h.b16 %v2132
  %v2548 = vunpack.c.l.b16 %v2133
  %v2549 = vunpack.c.h.b16 %v2133
  %v2550 = vunpack.c.l.b16 %v2134
  %v2551 = vunpack.c.h.b16 %v2134
  %v2552 = vunpack.c.l.b16 %v2135
  %v2553 = vunpack.c.h.b16 %v2135
  %v2554 = vunpack.c.l.b16 %v2136
  %v2555 = vunpack.c.h.b16 %v2136
  %v2556 = vunpack.c.l.b16 %v2137
  %v2557 = vunpack.c.h.b16 %v2137
  %v2558 = vunpack.c.l.b16 %v2138
  %v2559 = vunpack.c.h.b16 %v2138
  %v2560 = vunpack.c.l.b16 %v2139
  %v2561 = vunpack.c.h.b16 %v2139
  %v2562 = vunpack.c.l.b16 %v2140
  %v2563 = vunpack.c.h.b16 %v2140
  %v2564 = vunpack.c.l.b16 %v2141
  %v2565 = vunpack.c.h.b16 %v2141
  %v2566 = vunpack.c.l.b16 %v2142
  %v2567 = vunpack.c.h.b16 %v2142
  %v2568 = vunpack.c.l.b16 %v2143
  %v2569 = vunpack.c.h.b16 %v2143
  %v2570 = vunpack.c.l.b16 %v2144
  %v2571 = vunpack.c.h.b16 %v2144
  %v2572 = vunpack.c.l.b16 %v2145
  %v2573 = vunpack.c.h.b16 %v2145
  %v2574 = vunpack.c.l.b16 %v2146
  %v2575 = vunpack.c.h.b16 %v2146
  %v2576 = vunpack.c.l.b16 %v2147
  %v2577 = vunpack.c.h.b16 %v2147
  %v2578 = vunpack.c.l.b16 %v2148
  %v2579 = vunpack.c.h.b16 %v2148
  %v2580 = vunpack.c.l.b16 %v2149
  %v2581 = vunpack.c.h.b16 %v2149
  %v2582 = vunpack.c.l.b16 %v2150
  %v2583 = vunpack.c.h.b16 %v2150
  %v2584 = vunpack.c.l.b16 %v2151
  %v2585 = vunpack.c.h.b16 %v2151
  %v2586 = vunpack.c.l.b16 %v2152
  %v2587 = vunpack.c.h.b16 %v2152
  %v2588 = vunpack.c.l.b16 %v2153
  %v2589 = vunpack.c.h.b16 %v2153
  %v2590 = vunpack.c.l.b16 %v2154
  %v2591 = vunpack.c.h.b16 %v2154
  %v2592 = vunpack.c.l.b16 %v2155
  %v2593 = vunpack.c.h.b16 %v2155
  %v2594 = vunpack.c.l.b16 %v2156
  %v2595 = vunpack.c.h.b16 %v2156
  %v2596 = vunpack.c.l.b16 %v2157
  %v2597 = vunpack.c.h.b16 %v2157
  %v2598 = vunpack.c.l.b16 %v2158
  %v2599 = vunpack.c.h.b16 %v2158
  %v2600 = vunpack.c.l.b16 %v2159
  %v2601 = vunpack.c.h.b16 %v2159
  %v2602 = vunpack.c.l.b16 %v2160
  %v2603 = vunpack.c.h.b16 %v2160
  %v2604 = vunpack.c.l.b16 %v2161
  %v2605 = vunpack.c.h.b16 %v2161
  %v2606 = vunpack.c.l.b16 %v2162
  %v2607 = vunpack.c.h.b16 %v2162
  %v2608 = vunpack.c.l.b16 %v2163
  %v2609 = vunpack.c.h.b16 %v2163
  %v2610 = vunpack.c.l.b16 %v2164
  %v2611 = vunpack.c.h.b16 %v2164
  %v2612 = vunpack.c.l.b16 %v2165
  %v2613 = vunpack.c.h.b16 %v2165
  %v2614 = vunpack.c.l.b16 %v2166
  %v2615 = vunpack.c.h.b16 %v2166
  %v2616 = vunpack.c.l.b16 %v2167
  %v2617 = vunpack.c.h.b16 %v2167
  %v2618 = vunpack.c.l.b16 %v2168
  %v2619 = vunpack.c.h.b16 %v2168
  %v2620 = vunpack.c.l.b16 %v2169
  %v2621 = vunpack.c.h.b16 %v2169
  %v2622 = vunpack.c.l.b16 %v2170
  %v2623 = vunpack.c.h.b16 %v2170
  %v2624 = vunpack.c.l.b16 %v2171
  %v2625 = vunpack.c.h.b16 %v2171
  %v2626 = vunpack.c.l.b16 %v2172
  %v2627 = vunpack.c.h.b16 %v2172
  %v2628 = vunpack.c.l.b16 %v2173
  %v2629 = vunpack.c.h.b16 %v2173
  %v2630 = vunpack.c.l.b16 %v2174
  %v2631 = vunpack.c.h.b16 %v2174
  %v2632 = vunpack.c.l.b16 %v2175
  %v2633 = vunpack.c.h.b16 %v2175
  %v2634 = vunpack.c.l.b16 %v2176
  %v2635 = vunpack.c.h.b16 %v2176
  %v2636 = vunpack.c.l.b16 %v2177
  %v2637 = vunpack.c.h.b16 %v2177
  %v2638 = vunpack.c.l.b16 %v2178
  %v2639 = vunpack.c.h.b16 %v2178
  %v2640 = vunpack.c.l.b16 %v2179
  %v2641 = vunpack.c.h.b16 %v2179
  %v2642 = vunpack.c.l.b16 %v2180
  %v2643 = vunpack.c.h.b16 %v2180
  %v2644 = vunpack.c.l.b16 %v2181
  %v2645 = vunpack.c.h.b16 %v2181
  %v2646 = vunpack.c.l.b16 %v2182
  %v2647 = vunpack.c.h.b16 %v2182
  %v2648 = vunpack.c.l.b16 %v2183
  %v2649 = vunpack.c.h.b16 %v2183
  %v2650 = vunpack.c.l.b16 %v2184
  %v2651 = vunpack.c.h.b16 %v2184
  %v2652 = vunpack.c.l.b16 %v2185
  %v2653 = vunpack.c.h.b16 %v2185
  %v2654 = vunpack.c.l.b16 %v2186
  %v2655 = vunpack.c.h.b16 %v2186
  %v2656 = vunpack.c.l.b16 %v2187
  %v2657 = vunpack.c.h.b16 %v2187
  %v2658 = vunpack.c.l.b16 %v2188
  %v2659 = vunpack.c.h.b16 %v2188
  %v2660 = vunpack.c.l.b16 %v2189
  %v2661 = vunpack.c.h.b16 %v2189
  %v2662 = vunpack.c.l.b16 %v2190
  %v2663 = vunpack.c.h.b16 %v2190
  %v2664 = vunpack.c.l.b16 %v2191
  %v2665 = vunpack.c.h.b16 %v2191
  %v2666 = vunpack.c.l.b16 %v2192
  %v2667 = vunpack.c.h.b16 %v2192
  %v2668 = vunpack.c.l.b16 %v2193
  %v2669 = vunpack.c.h.b16 %v2193
  %v2670 = vunpack.c.l.b16 %v2194
  %v2671 = vunpack.c.h.b16 %v2194
  %v2672 = vunpack.c.l.b16 %v2195
  %v2673 = vunpack.c.h.b16 %v2195
  %v2674 = vunpack.c.l.b16 %v2196
  %v2675 = vunpack.c.h.b16 %v2196
  %v2676 = vunpack.c.l.b16 %v2197
  %v2677 = vunpack.c.h.b16 %v2197
  %v2678 = vpack.c.b16 %v2368, %v2358
  %v2679 = vpack.c.b16 %v2369, %v2359
  %v2680 = vpack.c.b16 %v2370, %v2360
  %v2681 = vpack.c.b16 %v2371, %v2361
  %v2682 = vpack.c.b16 %v2372, %v2362
  %v2683 = vpack.c.b16 %v2373, %v2363
  %v2684 = vpack.c.b16 %v2374, %v2364
  %v2685 = vpack.c.b16 %v2375, %v2365
  %v2686 = vpack.c.b16 %v2376, %v2366
  %v2687 = vpack.c.b16 %v2377, %v2367
  %v2688 = vpack.c.b16 %v2388, %v2378
  %v2689 = vpack.c.b16 %v2389, %v2379
  %v2690 = vpack.c.b16 %v2390, %v2380
  %v2691 = vpack.c.b16 %v2391, %v2381
  %v2692 = vpack.c.b16 %v2392, %v2382
  %v2693 = vpack.c.b16 %v2393, %v2383
  %v2694 = vpack.c.b16 %v2394, %v2384
  %v2695 = vpack.c.b16 %v2395, %v2385
  %v2696 = vpack.c.b16 %v2396, %v2386
  %v2697 = vpack.c.b16 %v2397, %v2387
  %v2698 = vpack.c.b16 %v2408, %v2398
  %v2699 = vpack.c.b16 %v2409, %v2399
  %v2700 = vpack.c.b16 %v2410, %v2400
  %v2701 = vpack.c.b16 %v2411, %v2401
  %v2702 = vpack.c.b16 %v2412, %v2402
  %v2703 = vpack.c.b16 %v2413, %v2403
  %v2704 = vpack.c.b16 %v2414, %v2404
  %v2705 = vpack.c.b16 %v2415, %v2405
  %v2706 = vpack.c.b16 %v2416, %v2406
  %v2707 = vpack.c.b16 %v2417, %v2407
  %v2708 = vpack.c.b16 %v2428, %v2418
  %v2709 = vpack.c.b16 %v2429, %v2419
  %v2710 = vpack.c.b16 %v2430, %v2420
  %v2711 = vpack.c.b16 %v2431, %v2421
  %v2712 = vpack.c.b16 %v2432, %v2422
  %v2713 = vpack.c.b16 %v2433, %v2423
  %v2714 = vpack.c.b16 %v2434, %v2424
  %v2715 = vpack.c.b16 %v2435, %v2425
  %v2716 = vpack.c.b16 %v2436, %v2426
  %v2717 = vpack.c.b16 %v2437, %v2427
  %v2718 = vpack.c.b16 %v2448, %v2438
  %v2719 = vpack.c.b16 %v2449, %v2439
  %v2720 = vpack.c.b16 %v2450, %v2440
  %v2721 = vpack.c.b16 %v2451, %v2441
  %v2722 = vpack.c.b16 %v2452, %v2442
  %v2723 = vpack.c.b16 %v2453, %v2443
  %v2724 = vpack.c.b16 %v2454, %v2444
  %v2725 = vpack.c.b16 %v2455, %v2445
  %v2726 = vpack.c.b16 %v2456, %v2446
  %v2727 = vpack.c.b16 %v2457, %v2447
  %v2728 = vpack.c.b16 %v2468, %v2458
  %v2729 = vpack.c.b16 %v2469, %v2459
  %v2730 = vpack.c.b16 %v2470, %v2460
  %v2731 = vpack.c.b16 %v2471, %v2461
  %v2732 = vpack.c.b16 %v2472, %v2462
  %v2733 = vpack.c.b16 %v2473, %v2463
  %v2734 = vpack.c.b16 %v2474, %v2464
  %v2735 = vpack.c.b16 %v2475, %v2465
  %v2736 = vpack.c.b16 %v2476, %v2466
  %v2737 = vpack.c.b16 %v2477, %v2467
  %v2738 = vpack.c.b16 %v2488, %v2478
  %v2739 = vpack.c.b16 %v2489, %v2479
  %v2740 = vpack.c.b16 %v2490, %v2480
  %v2741 = vpack.c.b16 %v2491, %v2481
  %v2742 = vpack.c.b16 %v2492, %v2482
  %v2743 = vpack.c.b16 %v2493, %v2483
  %v2744 = vpack.c.b16 %v2494, %v2484
  %v2745 = vpack.c.b16 %v2495, %v2485
  %v2746 = vpack.c.b16 %v2496, %v2486
  %v2747 = vpack.c.b16 %v2497, %v2487
  %v2748 = vpack.c.b16 %v2508, %v2498
  %v2749 = vpack.c.b16 %v2509, %v2499
  %v2750 = vpack.c.b16 %v2510, %v2500
  %v2751 = vpack.c.b16 %v2511, %v2501
  %v2752 = vpack.c.b16 %v2512, %v2502
  %v2753 = vpack.c.b16 %v2513, %v2503
  %v2754 = vpack.c.b16 %v2514, %v2504
  %v2755 = vpack.c.b16 %v2515, %v2505
  %v2756 = vpack.c.b16 %v2516, %v2506
  %v2757 = vpack.c.b16 %v2517, %v2507
  %v2758 = vpack.c.b16 %v2528, %v2518
  %v2759 = vpack.c.b16 %v2529, %v2519
  %v2760 = vpack.c.b16 %v2530, %v2520
  %v2761 = vpack.c.b16 %v2531, %v2521
  %v2762 = vpack.c.b16 %v2532, %v2522
  %v2763 = vpack.c.b16 %v2533, %v2523
  %v2764 = vpack.c.b16 %v2534, %v2524
  %v2765 = vpack.c.b16 %v2535, %v2525
  %v2766 = vpack.c.b16 %v2536, %v2526
  %v2767 = vpack.c.b16 %v2537, %v2527
  %v2768 = vpack.c.b16 %v2548, %v2538
  %v2769 = vpack.c.b16 %v2549, %v2539
  %v2770 = vpack.c.b16 %v2550, %v2540
  %v2771 = vpack.c.b16 %v2551, %v2541
  %v2772 = vpack.c.b16 %v2552, %v2542
  %v2773 = vpack.c.b16 %v2553, %v2543
  %v2774 = vpack.c.b16 %v2554, %v2544
  %v2775 = vpack.c.b16 %v2555, %v2545
  %v2776 = vpack.c.b16 %v2556, %v2546
  %v2777 = vpack.c.b16 %v2557, %v2547
  %v2778 = vpack.c.b16 %v2568, %v2558
  %v2779 = vpack.c.b16 %v2569, %v2559
  %v2780 = vpack.c.b16 %v2570, %v2560
  %v2781 = vpack.c.b16 %v2571, %v2561
  %v2782 = vpack.c.b16 %v2572, %v2562
  %v2783 = vpack.c.b16 %v2573, %v2563
  %v2784 = vpack.c.b16 %v2574, %v2564
  %v2785 = vpack.c.b16 %v2575, %v2565
  %v2786 = vpack.c.b16 %v2576, %v2566
  %v2787 = vpack.c.b16 %v2577, %v2567
  %v2788 = vpack.c.b16 %v2588, %v2578
  %v2789 = vpack.c.b16 %v2589, %v2579
  %v2790 = vpack.c.b16 %v2590, %v2580
  %v2791 = vpack.c.b16 %v2591, %v2581
  %v2792 = vpack.c.b16 %v2592, %v2582
  %v2793 = vpack.c.b16 %v2593, %v2583
  %v2794 = vpack.c.b16 %v2594, %v2584
  %v2795 = vpack.c.b16 %v2595, %v2585
  %v2796 = vpack.c.b16 %v2596, %v2586
  %v2797 = vpack.c.b16 %v2597, %v2587
  %v2798 = vpack.c.b16 %v2608, %v2598
  %v2799 = vpack.c.b16 %v2609, %v2599
  %v2800 = vpack.c.b16 %v2610, %v2600
  %v2801 = vpack.c.b16 %v2611, %v2601
  %v2802 = vpack.c.b16 %v2612, %v2602
  %v2803 = vpack.c.b16 %v2613, %v2603
  %v2804 = vpack.c.b16 %v2614, %v2604
  %v2805 = vpack.c.b16 %v2615, %v2605
  %v2806 = vpack.c.b16 %v2616, %v2606
  %v2807 = vpack.c.b16 %v2617, %v2607
  %v2808 = vpack.c.b16 %v2628, %v2618
  %v2809 = vpack.c.b16 %v2629, %v2619
  %v2810 = vpack.c.b16 %v2630, %v2620
  %v2811 = vpack.c.b16 %v2631, %v2621
  %v2812 = vpack.c.b16 %v2632, %v2622
  %v2813 = vpack.c.b16 %v2633, %v2623
  %v2814 = vpack.c.b16 %v2634, %v2624
  %v2815 = vpack.c.b16 %v2635, %v2625
  %v2816 = vpack.c.b16 %v2636, %v2626
  %v2817 = vpack.c.b16 %v2637, %v2627
  %v2818 = vpack.c.b16 %v2648, %v2638
  %v2819 = vpack.c.b16 %v2649, %v2639
  %v2820 = vpack.c.b16 %v2650, %v2640
  %v2821 = vpack.c.b16 %v2651, %v2641
  %v2822 = vpack.c.b16 %v2652, %v2642
  %v2823 = vpack.c.b16 %v2653, %v2643
  %v2824 = vpack.c.b16 %v2654, %v2644
  %v2825 = vpack.c.b16 %v2655, %v2645
  %v2826 = vpack.c.b16 %v2656, %v2646
  %v2827 = vpack.c.b16 %v2657, %v2647
  %v2828 = vpack.c.b16 %v2668, %v2658
  %v2829 = vpack.c.b16 %v2669, %v2659
  %v2830 = vpack.c.b16 %v2670, %v2660
  %v2831 = vpack.c.b16 %v2671, %v2661
  %v2832 = vpack.c.b16 %v2672, %v2662
  %v2833 = vpack.c.b16 %v2673, %v2663
  %v2834 = vpack.c.b16 %v2674, %v2664
  %v2835 = vpack.c.b16 %v2675, %v2665
  %v2836 = vpack.c.b16 %v2676, %v2666
  %v2837 = vpack.c.b16 %v2677, %v2667
  %2998 = vmatpush.bf16.msra.mxu0 %v2748
  %2999 = vmatpush.bf16.msra.mxu0 %v2738
  %3000 = vmatpush.bf16.msra.mxu0 %v2728
  %3001 = vmatpush.bf16.msra.mxu0 %v2718
  %3002 = vmatpush.bf16.msra.mxu0 %v2708
  %3003 = vmatpush.bf16.msra.mxu0 %v2698
  %3004 = vmatpush.bf16.msra.mxu0 %v2688
  %3005 = vmatpush.bf16.msra.mxu0 %v2678
  %3006 = vmatmul.bf16.gmra.mxu0 %v2036
  %v3007 = vpop.f32.mrf.mxu0
  %v3008 = vadd.f32 0.0, %v3007
  %v3009 = vpop.f32.mrf.mxu0
  %3010 = vdwg.mxu0
  %3011 = vmatpush.bf16.msra.mxu0 %v2828
  %3012 = vmatpush.bf16.msra.mxu0 %v2818
  %3013 = vmatpush.bf16.msra.mxu0 %v2808
  %3014 = vmatpush.bf16.msra.mxu0 %v2798
  %3015 = vmatpush.bf16.msra.mxu0 %v2788
  %3016 = vmatpush.bf16.msra.mxu0 %v2778
  %3017 = vmatpush.bf16.msra.mxu0 %v2768
  %3018 = vmatpush.bf16.msra.mxu0 %v2758
  %3019 = vmatmul.bf16.gmra.mxu0 %v2037
  %v3020 = vpop.f32.mrf.mxu0
  %v3021 = vadd.f32 %v3008, %v3020
  %v3022 = vpop.f32.mrf.mxu0
  %3023 = vdwg.mxu0
  %3024 = vmatpush.bf16.msra.mxu0 %v2749
  %3025 = vmatpush.bf16.msra.mxu0 %v2739
  %3026 = vmatpush.bf16.msra.mxu0 %v2729
  %3027 = vmatpush.bf16.msra.mxu0 %v2719
  %3028 = vmatpush.bf16.msra.mxu0 %v2709
  %3029 = vmatpush.bf16.msra.mxu0 %v2699
  %3030 = vmatpush.bf16.msra.mxu0 %v2689
  %3031 = vmatpush.bf16.msra.mxu0 %v2679
  %3032 = vmatmul.bf16.gmra.mxu0 %v2036
  %v3033 = vpop.f32.mrf.mxu0
  %v3034 = vadd.f32 0.0, %v3033
  %v3035 = vpop.f32.mrf.mxu0
  %3036 = vdwg.mxu0
  %3037 = vmatpush.bf16.msra.mxu0 %v2829
  %3038 = vmatpush.bf16.msra.mxu0 %v2819
  %3039 = vmatpush.bf16.msra.mxu0 %v2809
  %3040 = vmatpush.bf16.msra.mxu0 %v2799
  %3041 = vmatpush.bf16.msra.mxu0 %v2789
  %3042 = vmatpush.bf16.msra.mxu0 %v2779
  %3043 = vmatpush.bf16.msra.mxu0 %v2769
  %3044 = vmatpush.bf16.msra.mxu0 %v2759
  %3045 = vmatmul.bf16.gmra.mxu0 %v2037
  %v3046 = vpop.f32.mrf.mxu0
  %v3047 = vadd.f32 %v3034, %v3046
  %v3048 = vpop.f32.mrf.mxu0
  %3049 = vdwg.mxu0
  %3050 = vmatpush.bf16.msra.mxu0 %v2750
  %3051 = vmatpush.bf16.msra.mxu0 %v2740
  %3052 = vmatpush.bf16.msra.mxu0 %v2730
  %3053 = vmatpush.bf16.msra.mxu0 %v2720
  %3054 = vmatpush.bf16.msra.mxu0 %v2710
  %3055 = vmatpush.bf16.msra.mxu0 %v2700
  %3056 = vmatpush.bf16.msra.mxu0 %v2690
  %3057 = vmatpush.bf16.msra.mxu0 %v2680
  %3058 = vmatmul.bf16.gmra.mxu0 %v2036
  %v3059 = vpop.f32.mrf.mxu0
  %v3060 = vadd.f32 0.0, %v3059
  %v3061 = vpop.f32.mrf.mxu0
  %3062 = vdwg.mxu0
  %3063 = vmatpush.bf16.msra.mxu0 %v2830
  %3064 = vmatpush.bf16.msra.mxu0 %v2820
  %3065 = vmatpush.bf16.msra.mxu0 %v2810
  %3066 = vmatpush.bf16.msra.mxu0 %v2800
  %3067 = vmatpush.bf16.msra.mxu0 %v2790
  %3068 = vmatpush.bf16.msra.mxu0 %v2780
  %3069 = vmatpush.bf16.msra.mxu0 %v2770
  %3070 = vmatpush.bf16.msra.mxu0 %v2760
  %3071 = vmatmul.bf16.gmra.mxu0 %v2037
  %v3072 = vpop.f32.mrf.mxu0
  %v3073 = vadd.f32 %v3060, %v3072
  %v3074 = vpop.f32.mrf.mxu0
  %3075 = vdwg.mxu0
  %3076 = vmatpush.bf16.msra.mxu0 %v2751
  %3077 = vmatpush.bf16.msra.mxu0 %v2741
  %3078 = vmatpush.bf16.msra.mxu0 %v2731
  %3079 = vmatpush.bf16.msra.mxu0 %v2721
  %3080 = vmatpush.bf16.msra.mxu0 %v2711
  %3081 = vmatpush.bf16.msra.mxu0 %v2701
  %3082 = vmatpush.bf16.msra.mxu0 %v2691
  %3083 = vmatpush.bf16.msra.mxu0 %v2681
  %3084 = vmatmul.bf16.gmra.mxu0 %v2036
  %v3085 = vpop.f32.mrf.mxu0
  %v3086 = vadd.f32 0.0, %v3085
  %v3087 = vpop.f32.mrf.mxu0
  %3088 = vdwg.mxu0
  %3089 = vmatpush.bf16.msra.mxu0 %v2831
  %3090 = vmatpush.bf16.msra.mxu0 %v2821
  %3091 = vmatpush.bf16.msra.mxu0 %v2811
  %3092 = vmatpush.bf16.msra.mxu0 %v2801
  %3093 = vmatpush.bf16.msra.mxu0 %v2791
  %3094 = vmatpush.bf16.msra.mxu0 %v2781
  %3095 = vmatpush.bf16.msra.mxu0 %v2771
  %3096 = vmatpush.bf16.msra.mxu0 %v2761
  %3097 = vmatmul.bf16.gmra.mxu0 %v2037
  %v3098 = vpop.f32.mrf.mxu0
  %v3099 = vadd.f32 %v3086, %v3098
  %v3100 = vpop.f32.mrf.mxu0
  %3101 = vdwg.mxu0
  %3102 = vmatpush.bf16.msra.mxu0 %v2752
  %3103 = vmatpush.bf16.msra.mxu0 %v2742
  %3104 = vmatpush.bf16.msra.mxu0 %v2732
  %3105 = vmatpush.bf16.msra.mxu0 %v2722
  %3106 = vmatpush.bf16.msra.mxu0 %v2712
  %3107 = vmatpush.bf16.msra.mxu0 %v2702
  %3108 = vmatpush.bf16.msra.mxu0 %v2692
  %3109 = vmatpush.bf16.msra.mxu0 %v2682
  %3110 = vmatmul.bf16.gmra.mxu0 %v2036
  %v3111 = vpop.f32.mrf.mxu0
  %v3112 = vadd.f32 0.0, %v3111
  %v3113 = vpop.f32.mrf.mxu0
  %3114 = vdwg.mxu0
  %3115 = vmatpush.bf16.msra.mxu0 %v2832
  %3116 = vmatpush.bf16.msra.mxu0 %v2822
  %3117 = vmatpush.bf16.msra.mxu0 %v2812
  %3118 = vmatpush.bf16.msra.mxu0 %v2802
  %3119 = vmatpush.bf16.msra.mxu0 %v2792
  %3120 = vmatpush.bf16.msra.mxu0 %v2782
  %3121 = vmatpush.bf16.msra.mxu0 %v2772
  %3122 = vmatpush.bf16.msra.mxu0 %v2762
  %3123 = vmatmul.bf16.gmra.mxu0 %v2037
  %v3124 = vpop.f32.mrf.mxu0
  %v3125 = vadd.f32 %v3112, %v3124
  %v3126 = vpop.f32.mrf.mxu0
  %3127 = vdwg.mxu0
  %3128 = vmatpush.bf16.msra.mxu0 %v2753
  %3129 = vmatpush.bf16.msra.mxu0 %v2743
  %3130 = vmatpush.bf16.msra.mxu0 %v2733
  %3131 = vmatpush.bf16.msra.mxu0 %v2723
  %3132 = vmatpush.bf16.msra.mxu0 %v2713
  %3133 = vmatpush.bf16.msra.mxu0 %v2703
  %3134 = vmatpush.bf16.msra.mxu0 %v2693
  %3135 = vmatpush.bf16.msra.mxu0 %v2683
  %3136 = vmatmul.bf16.gmra.mxu0 %v2036
  %v3137 = vpop.f32.mrf.mxu0
  %v3138 = vadd.f32 0.0, %v3137
  %v3139 = vpop.f32.mrf.mxu0
  %3140 = vdwg.mxu0
  %3141 = vmatpush.bf16.msra.mxu0 %v2833
  %3142 = vmatpush.bf16.msra.mxu0 %v2823
  %3143 = vmatpush.bf16.msra.mxu0 %v2813
  %3144 = vmatpush.bf16.msra.mxu0 %v2803
  %3145 = vmatpush.bf16.msra.mxu0 %v2793
  %3146 = vmatpush.bf16.msra.mxu0 %v2783
  %3147 = vmatpush.bf16.msra.mxu0 %v2773
  %3148 = vmatpush.bf16.msra.mxu0 %v2763
  %3149 = vmatmul.bf16.gmra.mxu0 %v2037
  %v3150 = vpop.f32.mrf.mxu0
  %v3151 = vadd.f32 %v3138, %v3150
  %v3152 = vpop.f32.mrf.mxu0
  %3153 = vdwg.mxu0
  %3154 = vmatpush.bf16.msra.mxu0 %v2754
  %3155 = vmatpush.bf16.msra.mxu0 %v2744
  %3156 = vmatpush.bf16.msra.mxu0 %v2734
  %3157 = vmatpush.bf16.msra.mxu0 %v2724
  %3158 = vmatpush.bf16.msra.mxu0 %v2714
  %3159 = vmatpush.bf16.msra.mxu0 %v2704
  %3160 = vmatpush.bf16.msra.mxu0 %v2694
  %3161 = vmatpush.bf16.msra.mxu0 %v2684
  %3162 = vmatmul.bf16.gmra.mxu0 %v2036
  %v3163 = vpop.f32.mrf.mxu0
  %v3164 = vadd.f32 0.0, %v3163
  %v3165 = vpop.f32.mrf.mxu0
  %3166 = vdwg.mxu0
  %3167 = vmatpush.bf16.msra.mxu0 %v2834
  %3168 = vmatpush.bf16.msra.mxu0 %v2824
  %3169 = vmatpush.bf16.msra.mxu0 %v2814
  %3170 = vmatpush.bf16.msra.mxu0 %v2804
  %3171 = vmatpush.bf16.msra.mxu0 %v2794
  %3172 = vmatpush.bf16.msra.mxu0 %v2784
  %3173 = vmatpush.bf16.msra.mxu0 %v2774
  %3174 = vmatpush.bf16.msra.mxu0 %v2764
  %3175 = vmatmul.bf16.gmra.mxu0 %v2037
  %v3176 = vpop.f32.mrf.mxu0
  %v3177 = vadd.f32 %v3164, %v3176
  %v3178 = vpop.f32.mrf.mxu0
  %3179 = vdwg.mxu0
  %3180 = vmatpush.bf16.msra.mxu0 %v2755
  %3181 = vmatpush.bf16.msra.mxu0 %v2745
  %3182 = vmatpush.bf16.msra.mxu0 %v2735
  %3183 = vmatpush.bf16.msra.mxu0 %v2725
  %3184 = vmatpush.bf16.msra.mxu0 %v2715
  %3185 = vmatpush.bf16.msra.mxu0 %v2705
  %3186 = vmatpush.bf16.msra.mxu0 %v2695
  %3187 = vmatpush.bf16.msra.mxu0 %v2685
  %3188 = vmatmul.bf16.gmra.mxu0 %v2036
  %v3189 = vpop.f32.mrf.mxu0
  %v3190 = vadd.f32 0.0, %v3189
  %v3191 = vpop.f32.mrf.mxu0
  %3192 = vdwg.mxu0
  %3193 = vmatpush.bf16.msra.mxu0 %v2835
  %3194 = vmatpush.bf16.msra.mxu0 %v2825
  %3195 = vmatpush.bf16.msra.mxu0 %v2815
  %3196 = vmatpush.bf16.msra.mxu0 %v2805
  %3197 = vmatpush.bf16.msra.mxu0 %v2795
  %3198 = vmatpush.bf16.msra.mxu0 %v2785
  %3199 = vmatpush.bf16.msra.mxu0 %v2775
  %3200 = vmatpush.bf16.msra.mxu0 %v2765
  %3201 = vmatmul.bf16.gmra.mxu0 %v2037
  %v3202 = vpop.f32.mrf.mxu0
  %v3203 = vadd.f32 %v3190, %v3202
  %v3204 = vpop.f32.mrf.mxu0
  %3205 = vdwg.mxu0
  %3206 = vmatpush.bf16.msra.mxu0 %v2756
  %3207 = vmatpush.bf16.msra.mxu0 %v2746
  %3208 = vmatpush.bf16.msra.mxu0 %v2736
  %3209 = vmatpush.bf16.msra.mxu0 %v2726
  %3210 = vmatpush.bf16.msra.mxu0 %v2716
  %3211 = vmatpush.bf16.msra.mxu0 %v2706
  %3212 = vmatpush.bf16.msra.mxu0 %v2696
  %3213 = vmatpush.bf16.msra.mxu0 %v2686
  %3214 = vmatmul.bf16.gmra.mxu0 %v2036
  %v3215 = vpop.f32.mrf.mxu0
  %v3216 = vadd.f32 0.0, %v3215
  %v3217 = vpop.f32.mrf.mxu0
  %3218 = vdwg.mxu0
  %3219 = vmatpush.bf16.msra.mxu0 %v2836
  %3220 = vmatpush.bf16.msra.mxu0 %v2826
  %3221 = vmatpush.bf16.msra.mxu0 %v2816
  %3222 = vmatpush.bf16.msra.mxu0 %v2806
  %3223 = vmatpush.bf16.msra.mxu0 %v2796
  %3224 = vmatpush.bf16.msra.mxu0 %v2786
  %3225 = vmatpush.bf16.msra.mxu0 %v2776
  %3226 = vmatpush.bf16.msra.mxu0 %v2766
  %3227 = vmatmul.bf16.gmra.mxu0 %v2037
  %v3228 = vpop.f32.mrf.mxu0
  %v3229 = vadd.f32 %v3216, %v3228
  %v3230 = vpop.f32.mrf.mxu0
  %3231 = vdwg.mxu0
  %3232 = vmatpush.bf16.msra.mxu0 %v2757
  %3233 = vmatpush.bf16.msra.mxu0 %v2747
  %3234 = vmatpush.bf16.msra.mxu0 %v2737
  %3235 = vmatpush.bf16.msra.mxu0 %v2727
  %3236 = vmatpush.bf16.msra.mxu0 %v2717
  %3237 = vmatpush.bf16.msra.mxu0 %v2707
  %3238 = vmatpush.bf16.msra.mxu0 %v2697
  %3239 = vmatpush.bf16.msra.mxu0 %v2687
  %3240 = vmatmul.bf16.gmra.mxu0 %v2036
  %v3241 = vpop.f32.mrf.mxu0
  %v3242 = vadd.f32 0.0, %v3241
  %v3243 = vpop.f32.mrf.mxu0
  %3244 = vdwg.mxu0
  %3245 = vmatpush.bf16.msra.mxu0 %v2837
  %3246 = vmatpush.bf16.msra.mxu0 %v2827
  %3247 = vmatpush.bf16.msra.mxu0 %v2817
  %3248 = vmatpush.bf16.msra.mxu0 %v2807
  %3249 = vmatpush.bf16.msra.mxu0 %v2797
  %3250 = vmatpush.bf16.msra.mxu0 %v2787
  %3251 = vmatpush.bf16.msra.mxu0 %v2777
  %3252 = vmatpush.bf16.msra.mxu0 %v2767
  %3253 = vmatmul.bf16.gmra.mxu0 %v2037
  %v3254 = vpop.f32.mrf.mxu0
  %v3255 = vadd.f32 %v3242, %v3254
  %v3256 = vpop.f32.mrf.mxu0
  %3257 = vdwg.mxu0
  %v3258 = vadd.f32 %v3255, %v237
  %3259 = vst [vmem:[%s9 + $0x8] sm:$0xff] %v3258
  %v3260 = vld [vmem:[#allocation2 + $0x48] sm:$0xff]
  %v3261 = vld [vmem:[#allocation2 + $0x50] sm:$0xff]
  %v3262 = vld [vmem:[#allocation2 + $0x58] sm:$0xff]
  %v3263 = vadd.f32 %v3260, %v3021
  %v3264 = vxor.u32 %v3263, 2147483648
  %v3265 = vmul.f32 %v3264, 1.442695
  %v3266 = vpow.pop %v3265
  %v3267 = vadd.f32 %v3266, 1.0
  %v3268 = vrcp.pop %v3267
  %v3269 = vmul.f32 %v3267, %v3268
  %v3270 = vsub.f32 1.0, %v3269
  %v3271 = vmul.f32 %v3268, %v3270
  %v3272 = vadd.f32 %v3268, %v3271
  %vm3273 = vweird.f32 %v3267
  %vm3274 = vweird.f32 %v3268
  %vm3275 = vmor %vm3273, %vm3274
  %v3276 = vsel %vm3275, %v3268, %v3272
  %v3277 = vand.u32 2147483647, %v3267
  %vm3278 = vcmp.eq.f32.partialorder %v3277, 8.507059e+37
  %v3279 = vand.u32 %v3267, 2147483648
  %v3280 = vor.u32 1.1754944e-38, %v3279
  %v3281 = vsel %vm3278, %v3280, %v3276
  %v3282 = vmul.f32 1.0, %v3281
  %v3283 = vadd.f32 %v3261, %v3047
  %v3284 = vxor.u32 %v3283, 2147483648
  %v3285 = vmul.f32 %v3284, 1.442695
  %v3286 = vpow.pop %v3285
  %v3287 = vadd.f32 %v3286, 1.0
  %v3288 = vrcp.pop %v3287
  %v3289 = vmul.f32 %v3287, %v3288
  %v3290 = vsub.f32 1.0, %v3289
  %v3291 = vmul.f32 %v3288, %v3290
  %v3292 = vadd.f32 %v3288, %v3291
  %vm3293 = vweird.f32 %v3287
  %vm3294 = vweird.f32 %v3288
  %vm3295 = vmor %vm3293, %vm3294
  %v3296 = vsel %vm3295, %v3288, %v3292
  %v3297 = vand.u32 2147483647, %v3287
  %vm3298 = vcmp.eq.f32.partialorder %v3297, 8.507059e+37
  %v3299 = vand.u32 %v3287, 2147483648
  %v3300 = vor.u32 1.1754944e-38, %v3299
  %v3301 = vsel %vm3298, %v3300, %v3296
  %v3302 = vmul.f32 1.0, %v3301
  %v3303 = vadd.f32 %v3073, %v221
  %v3304 = vmul.f32 %v3282, %v3303
  %v3305 = vadd.f32 %v3262, %v3304
  %v3306 = vtanh.pop %v3305
  %v3307 = vsub.f32 1.0, %v3302
  %v3308 = vmul.f32 %v3307, %v3306
  %v3309 = vmul.f32 %v3302, %v1984
  %v3310 = vadd.f32 %v3308, %v3309
  %v3311 = vadd.f32 %v3177, %v229
  %v3312 = vadd.f32 %v3203, %v230
  %v3313 = vadd.f32 %v3229, %v231
  %v3314 = vadd.f32 %v3311, %v3099
  %v3315 = vxor.u32 %v3314, 2147483648
  %v3316 = vmul.f32 %v3315, 1.442695
  %v3317 = vpow.pop %v3316
  %v3318 = vadd.f32 %v3317, 1.0
  %v3319 = vrcp.pop %v3318
  %v3320 = vmul.f32 %v3318, %v3319
  %v3321 = vsub.f32 1.0, %v3320
  %v3322 = vmul.f32 %v3319, %v3321
  %v3323 = vadd.f32 %v3319, %v3322
  %vm3324 = vweird.f32 %v3318
  %vm3325 = vweird.f32 %v3319
  %vm3326 = vmor %vm3324, %vm3325
  %v3327 = vsel %vm3326, %v3319, %v3323
  %v3328 = vand.u32 2147483647, %v3318
  %vm3329 = vcmp.eq.f32.partialorder %v3328, 8.507059e+37
  %v3330 = vand.u32 %v3318, 2147483648
  %v3331 = vor.u32 1.1754944e-38, %v3330
  %v3332 = vsel %vm3329, %v3331, %v3327
  %v3333 = vmul.f32 1.0, %v3332
  %v3334 = vadd.f32 %v3312, %v3125
  %v3335 = vxor.u32 %v3334, 2147483648
  %v3336 = vmul.f32 %v3335, 1.442695
  %v3337 = vpow.pop %v3336
  %v3338 = vadd.f32 %v3337, 1.0
  %v3339 = vrcp.pop %v3338
  %v3340 = vmul.f32 %v3338, %v3339
  %v3341 = vsub.f32 1.0, %v3340
  %v3342 = vmul.f32 %v3339, %v3341
  %v3343 = vadd.f32 %v3339, %v3342
  %vm3344 = vweird.f32 %v3338
  %vm3345 = vweird.f32 %v3339
  %vm3346 = vmor %vm3344, %vm3345
  %v3347 = vsel %vm3346, %v3339, %v3343
  %v3348 = vand.u32 2147483647, %v3338
  %vm3349 = vcmp.eq.f32.partialorder %v3348, 8.507059e+37
  %v3350 = vand.u32 %v3338, 2147483648
  %v3351 = vor.u32 1.1754944e-38, %v3350
  %v3352 = vsel %vm3349, %v3351, %v3347
  %v3353 = vmul.f32 1.0, %v3352
  %v3354 = vadd.f32 %v3151, %v225
  %v3355 = vmul.f32 %v3333, %v3354
  %v3356 = vadd.f32 %v3313, %v3355
  %v3357 = vtanh.pop %v3356
  %v3358 = vsub.f32 1.0, %v3353
  %v3359 = vmul.f32 %v3358, %v3357
  %v3360 = vmul.f32 %v3353, %v2035
  %v3361 = vadd.f32 %v3359, %v3360
  %v3362 = vpack.c.bf16 %v3310, %v3310
  %v3363 = vpack.c.bf16 %v3361, %v3361
  %v3364 = vld [vmem:[%s3] sm:$0xff]
  %v3365 = vld [vmem:[%s3 + $0x8] sm:$0xff]
  %v3366 = vld [vmem:[%s3 + $0x10] sm:$0xff]
  %v3367 = vld [vmem:[%s3 + $0x18] sm:$0xff]
  %v3368 = vld [vmem:[%s3 + $0x20] sm:$0xff]
  %v3369 = vld [vmem:[%s3 + $0x28] sm:$0xff]
  %v3370 = vld [vmem:[%s3 + $0x30] sm:$0xff]
  %v3371 = vld [vmem:[%s3 + $0x38] sm:$0xff]
  %v3372 = vld [vmem:[%s3 + $0x40] sm:$0xff]
  %v3373 = vld [vmem:[%s3 + $0x48] sm:$0xff]
  %v3374 = vld [vmem:[%s3 + $0x50] sm:$0xff]
  %v3375 = vld [vmem:[%s3 + $0x58] sm:$0xff]
  %v3376 = vld [vmem:[%s3 + $0x60] sm:$0xff]
  %v3377 = vld [vmem:[%s3 + $0x68] sm:$0xff]
  %v3378 = vld [vmem:[%s3 + $0x70] sm:$0xff]
  %v3379 = vld [vmem:[%s3 + $0x78] sm:$0xff]
  %v3380 = vld [vmem:[%s3 + $0x80] sm:$0xff]
  %v3381 = vld [vmem:[%s3 + $0x88] sm:$0xff]
  %v3382 = vld [vmem:[%s3 + $0x90] sm:$0xff]
  %v3383 = vld [vmem:[%s3 + $0x98] sm:$0xff]
  %v3384 = vld [vmem:[%s3 + $0xa0] sm:$0xff]
  %v3385 = vld [vmem:[%s3 + $0xa8] sm:$0xff]
  %v3386 = vld [vmem:[%s3 + $0xb0] sm:$0xff]
  %v3387 = vld [vmem:[%s3 + $0xb8] sm:$0xff]
  %v3388 = vld [vmem:[%s3 + $0xc0] sm:$0xff]
  %v3389 = vld [vmem:[%s3 + $0xc8] sm:$0xff]
  %v3390 = vld [vmem:[%s3 + $0xd0] sm:$0xff]
  %v3391 = vld [vmem:[%s3 + $0xd8] sm:$0xff]
  %v3392 = vld [vmem:[%s3 + $0xe0] sm:$0xff]
  %v3393 = vld [vmem:[%s3 + $0xe8] sm:$0xff]
  %v3394 = vld [vmem:[%s3 + $0xf0] sm:$0xff]
  %v3395 = vld [vmem:[%s3 + $0xf8] sm:$0xff]
  %v3396 = vld [vmem:[%s3 + $0x100] sm:$0xff]
  %v3397 = vld [vmem:[%s3 + $0x108] sm:$0xff]
  %v3398 = vld [vmem:[%s3 + $0x110] sm:$0xff]
  %v3399 = vld [vmem:[%s3 + $0x118] sm:$0xff]
  %v3400 = vld [vmem:[%s3 + $0x120] sm:$0xff]
  %v3401 = vld [vmem:[%s3 + $0x128] sm:$0xff]
  %v3402 = vld [vmem:[%s3 + $0x130] sm:$0xff]
  %v3403 = vld [vmem:[%s3 + $0x138] sm:$0xff]
  %v3404 = vld [vmem:[%s3 + $0x140] sm:$0xff]
  %v3405 = vld [vmem:[%s3 + $0x148] sm:$0xff]
  %v3406 = vld [vmem:[%s3 + $0x150] sm:$0xff]
  %v3407 = vld [vmem:[%s3 + $0x158] sm:$0xff]
  %v3408 = vld [vmem:[%s3 + $0x160] sm:$0xff]
  %v3409 = vld [vmem:[%s3 + $0x168] sm:$0xff]
  %v3410 = vld [vmem:[%s3 + $0x170] sm:$0xff]
  %v3411 = vld [vmem:[%s3 + $0x178] sm:$0xff]
  %v3412 = vld [vmem:[%s3 + $0x180] sm:$0xff]
  %v3413 = vld [vmem:[%s3 + $0x188] sm:$0xff]
  %v3414 = vld [vmem:[%s3 + $0x190] sm:$0xff]
  %v3415 = vld [vmem:[%s3 + $0x198] sm:$0xff]
  %v3416 = vld [vmem:[%s3 + $0x1a0] sm:$0xff]
  %v3417 = vld [vmem:[%s3 + $0x1a8] sm:$0xff]
  %v3418 = vld [vmem:[%s3 + $0x1b0] sm:$0xff]
  %v3419 = vld [vmem:[%s3 + $0x1b8] sm:$0xff]
  %v3420 = vld [vmem:[%s3 + $0x1c0] sm:$0xff]
  %v3421 = vld [vmem:[%s3 + $0x1c8] sm:$0xff]
  %v3422 = vld [vmem:[%s3 + $0x1d0] sm:$0xff]
  %v3423 = vld [vmem:[%s3 + $0x1d8] sm:$0xff]
  %v3424 = vld [vmem:[%s3 + $0x1e0] sm:$0xff]
  %v3425 = vld [vmem:[%s3 + $0x1e8] sm:$0xff]
  %v3426 = vld [vmem:[%s3 + $0x1f0] sm:$0xff]
  %v3427 = vld [vmem:[%s3 + $0x1f8] sm:$0xff]
  %v3428 = vld [vmem:[%s3 + $0x200] sm:$0xff]
  %v3429 = vld [vmem:[%s3 + $0x208] sm:$0xff]
  %v3430 = vld [vmem:[%s3 + $0x210] sm:$0xff]
  %v3431 = vld [vmem:[%s3 + $0x218] sm:$0xff]
  %v3432 = vld [vmem:[%s3 + $0x220] sm:$0xff]
  %v3433 = vld [vmem:[%s3 + $0x228] sm:$0xff]
  %v3434 = vld [vmem:[%s3 + $0x230] sm:$0xff]
  %v3435 = vld [vmem:[%s3 + $0x238] sm:$0xff]
  %v3436 = vld [vmem:[%s3 + $0x240] sm:$0xff]
  %v3437 = vld [vmem:[%s3 + $0x248] sm:$0xff]
  %v3438 = vld [vmem:[%s3 + $0x250] sm:$0xff]
  %v3439 = vld [vmem:[%s3 + $0x258] sm:$0xff]
  %v3440 = vld [vmem:[%s3 + $0x260] sm:$0xff]
  %v3441 = vld [vmem:[%s3 + $0x268] sm:$0xff]
  %v3442 = vld [vmem:[%s3 + $0x270] sm:$0xff]
  %v3443 = vld [vmem:[%s3 + $0x278] sm:$0xff]
  %v3444 = vld [vmem:[%s3 + $0x280] sm:$0xff]
  %v3445 = vld [vmem:[%s3 + $0x288] sm:$0xff]
  %v3446 = vld [vmem:[%s3 + $0x290] sm:$0xff]
  %v3447 = vld [vmem:[%s3 + $0x298] sm:$0xff]
  %v3448 = vld [vmem:[%s3 + $0x2a0] sm:$0xff]
  %v3449 = vld [vmem:[%s3 + $0x2a8] sm:$0xff]
  %v3450 = vld [vmem:[%s3 + $0x2b0] sm:$0xff]
  %v3451 = vld [vmem:[%s3 + $0x2b8] sm:$0xff]
  %v3452 = vld [vmem:[%s3 + $0x2c0] sm:$0xff]
  %v3453 = vld [vmem:[%s3 + $0x2c8] sm:$0xff]
  %v3454 = vld [vmem:[%s3 + $0x2d0] sm:$0xff]
  %v3455 = vld [vmem:[%s3 + $0x2d8] sm:$0xff]
  %v3456 = vld [vmem:[%s3 + $0x2e0] sm:$0xff]
  %v3457 = vld [vmem:[%s3 + $0x2e8] sm:$0xff]
  %v3458 = vld [vmem:[%s3 + $0x2f0] sm:$0xff]
  %v3459 = vld [vmem:[%s3 + $0x2f8] sm:$0xff]
  %v3460 = vld [vmem:[%s3 + $0x300] sm:$0xff]
  %v3461 = vld [vmem:[%s3 + $0x308] sm:$0xff]
  %v3462 = vld [vmem:[%s3 + $0x310] sm:$0xff]
  %v3463 = vld [vmem:[%s3 + $0x318] sm:$0xff]
  %v3464 = vld [vmem:[%s3 + $0x320] sm:$0xff]
  %v3465 = vld [vmem:[%s3 + $0x328] sm:$0xff]
  %v3466 = vld [vmem:[%s3 + $0x330] sm:$0xff]
  %v3467 = vld [vmem:[%s3 + $0x338] sm:$0xff]
  %v3468 = vld [vmem:[%s3 + $0x340] sm:$0xff]
  %v3469 = vld [vmem:[%s3 + $0x348] sm:$0xff]
  %v3470 = vld [vmem:[%s3 + $0x350] sm:$0xff]
  %v3471 = vld [vmem:[%s3 + $0x358] sm:$0xff]
  %v3472 = vld [vmem:[%s3 + $0x360] sm:$0xff]
  %v3473 = vld [vmem:[%s3 + $0x368] sm:$0xff]
  %v3474 = vld [vmem:[%s3 + $0x370] sm:$0xff]
  %v3475 = vld [vmem:[%s3 + $0x378] sm:$0xff]
  %v3476 = vld [vmem:[%s3 + $0x380] sm:$0xff]
  %v3477 = vld [vmem:[%s3 + $0x388] sm:$0xff]
  %v3478 = vld [vmem:[%s3 + $0x390] sm:$0xff]
  %v3479 = vld [vmem:[%s3 + $0x398] sm:$0xff]
  %v3480 = vld [vmem:[%s3 + $0x3a0] sm:$0xff]
  %v3481 = vld [vmem:[%s3 + $0x3a8] sm:$0xff]
  %v3482 = vld [vmem:[%s3 + $0x3b0] sm:$0xff]
  %v3483 = vld [vmem:[%s3 + $0x3b8] sm:$0xff]
  %v3484 = vld [vmem:[%s3 + $0x3c0] sm:$0xff]
  %v3485 = vld [vmem:[%s3 + $0x3c8] sm:$0xff]
  %v3486 = vld [vmem:[%s3 + $0x3d0] sm:$0xff]
  %v3487 = vld [vmem:[%s3 + $0x3d8] sm:$0xff]
  %v3488 = vld [vmem:[%s3 + $0x3e0] sm:$0xff]
  %v3489 = vld [vmem:[%s3 + $0x3e8] sm:$0xff]
  %v3490 = vld [vmem:[%s3 + $0x3f0] sm:$0xff]
  %v3491 = vld [vmem:[%s3 + $0x3f8] sm:$0xff]
  %v3492 = vld [vmem:[%s3 + $0x400] sm:$0xff]
  %v3493 = vld [vmem:[%s3 + $0x408] sm:$0xff]
  %v3494 = vld [vmem:[%s3 + $0x410] sm:$0xff]
  %v3495 = vld [vmem:[%s3 + $0x418] sm:$0xff]
  %v3496 = vld [vmem:[%s3 + $0x420] sm:$0xff]
  %v3497 = vld [vmem:[%s3 + $0x428] sm:$0xff]
  %v3498 = vld [vmem:[%s3 + $0x430] sm:$0xff]
  %v3499 = vld [vmem:[%s3 + $0x438] sm:$0xff]
  %v3500 = vld [vmem:[%s3 + $0x440] sm:$0xff]
  %v3501 = vld [vmem:[%s3 + $0x448] sm:$0xff]
  %v3502 = vld [vmem:[%s3 + $0x450] sm:$0xff]
  %v3503 = vld [vmem:[%s3 + $0x458] sm:$0xff]
  %v3504 = vld [vmem:[%s3 + $0x460] sm:$0xff]
  %v3505 = vld [vmem:[%s3 + $0x468] sm:$0xff]
  %v3506 = vld [vmem:[%s3 + $0x470] sm:$0xff]
  %v3507 = vld [vmem:[%s3 + $0x478] sm:$0xff]
  %v3508 = vld [vmem:[%s3 + $0x480] sm:$0xff]
  %v3509 = vld [vmem:[%s3 + $0x488] sm:$0xff]
  %v3510 = vld [vmem:[%s3 + $0x490] sm:$0xff]
  %v3511 = vld [vmem:[%s3 + $0x498] sm:$0xff]
  %v3512 = vld [vmem:[%s3 + $0x4a0] sm:$0xff]
  %v3513 = vld [vmem:[%s3 + $0x4a8] sm:$0xff]
  %v3514 = vld [vmem:[%s3 + $0x4b0] sm:$0xff]
  %v3515 = vld [vmem:[%s3 + $0x4b8] sm:$0xff]
  %v3516 = vld [vmem:[%s3 + $0x4c0] sm:$0xff]
  %v3517 = vld [vmem:[%s3 + $0x4c8] sm:$0xff]
  %v3518 = vld [vmem:[%s3 + $0x4d0] sm:$0xff]
  %v3519 = vld [vmem:[%s3 + $0x4d8] sm:$0xff]
  %v3520 = vld [vmem:[%s3 + $0x4e0] sm:$0xff]
  %v3521 = vld [vmem:[%s3 + $0x4e8] sm:$0xff]
  %v3522 = vld [vmem:[%s3 + $0x4f0] sm:$0xff]
  %v3523 = vld [vmem:[%s3 + $0x4f8] sm:$0xff]
  %v3684 = vunpack.c.l.b16 %v3364
  %v3685 = vunpack.c.h.b16 %v3364
  %v3686 = vunpack.c.l.b16 %v3365
  %v3687 = vunpack.c.h.b16 %v3365
  %v3688 = vunpack.c.l.b16 %v3366
  %v3689 = vunpack.c.h.b16 %v3366
  %v3690 = vunpack.c.l.b16 %v3367
  %v3691 = vunpack.c.h.b16 %v3367
  %v3692 = vunpack.c.l.b16 %v3368
  %v3693 = vunpack.c.h.b16 %v3368
  %v3694 = vunpack.c.l.b16 %v3369
  %v3695 = vunpack.c.h.b16 %v3369
  %v3696 = vunpack.c.l.b16 %v3370
  %v3697 = vunpack.c.h.b16 %v3370
  %v3698 = vunpack.c.l.b16 %v3371
  %v3699 = vunpack.c.h.b16 %v3371
  %v3700 = vunpack.c.l.b16 %v3372
  %v3701 = vunpack.c.h.b16 %v3372
  %v3702 = vunpack.c.l.b16 %v3373
  %v3703 = vunpack.c.h.b16 %v3373
  %v3704 = vunpack.c.l.b16 %v3374
  %v3705 = vunpack.c.h.b16 %v3374
  %v3706 = vunpack.c.l.b16 %v3375
  %v3707 = vunpack.c.h.b16 %v3375
  %v3708 = vunpack.c.l.b16 %v3376
  %v3709 = vunpack.c.h.b16 %v3376
  %v3710 = vunpack.c.l.b16 %v3377
  %v3711 = vunpack.c.h.b16 %v3377
  %v3712 = vunpack.c.l.b16 %v3378
  %v3713 = vunpack.c.h.b16 %v3378
  %v3714 = vunpack.c.l.b16 %v3379
  %v3715 = vunpack.c.h.b16 %v3379
  %v3716 = vunpack.c.l.b16 %v3380
  %v3717 = vunpack.c.h.b16 %v3380
  %v3718 = vunpack.c.l.b16 %v3381
  %v3719 = vunpack.c.h.b16 %v3381
  %v3720 = vunpack.c.l.b16 %v3382
  %v3721 = vunpack.c.h.b16 %v3382
  %v3722 = vunpack.c.l.b16 %v3383
  %v3723 = vunpack.c.h.b16 %v3383
  %v3724 = vunpack.c.l.b16 %v3384
  %v3725 = vunpack.c.h.b16 %v3384
  %v3726 = vunpack.c.l.b16 %v3385
  %v3727 = vunpack.c.h.b16 %v3385
  %v3728 = vunpack.c.l.b16 %v3386
  %v3729 = vunpack.c.h.b16 %v3386
  %v3730 = vunpack.c.l.b16 %v3387
  %v3731 = vunpack.c.h.b16 %v3387
  %v3732 = vunpack.c.l.b16 %v3388
  %v3733 = vunpack.c.h.b16 %v3388
  %v3734 = vunpack.c.l.b16 %v3389
  %v3735 = vunpack.c.h.b16 %v3389
  %v3736 = vunpack.c.l.b16 %v3390
  %v3737 = vunpack.c.h.b16 %v3390
  %v3738 = vunpack.c.l.b16 %v3391
  %v3739 = vunpack.c.h.b16 %v3391
  %v3740 = vunpack.c.l.b16 %v3392
  %v3741 = vunpack.c.h.b16 %v3392
  %v3742 = vunpack.c.l.b16 %v3393
  %v3743 = vunpack.c.h.b16 %v3393
  %v3744 = vunpack.c.l.b16 %v3394
  %v3745 = vunpack.c.h.b16 %v3394
  %v3746 = vunpack.c.l.b16 %v3395
  %v3747 = vunpack.c.h.b16 %v3395
  %v3748 = vunpack.c.l.b16 %v3396
  %v3749 = vunpack.c.h.b16 %v3396
  %v3750 = vunpack.c.l.b16 %v3397
  %v3751 = vunpack.c.h.b16 %v3397
  %v3752 = vunpack.c.l.b16 %v3398
  %v3753 = vunpack.c.h.b16 %v3398
  %v3754 = vunpack.c.l.b16 %v3399
  %v3755 = vunpack.c.h.b16 %v3399
  %v3756 = vunpack.c.l.b16 %v3400
  %v3757 = vunpack.c.h.b16 %v3400
  %v3758 = vunpack.c.l.b16 %v3401
  %v3759 = vunpack.c.h.b16 %v3401
  %v3760 = vunpack.c.l.b16 %v3402
  %v3761 = vunpack.c.h.b16 %v3402
  %v3762 = vunpack.c.l.b16 %v3403
  %v3763 = vunpack.c.h.b16 %v3403
  %v3764 = vunpack.c.l.b16 %v3404
  %v3765 = vunpack.c.h.b16 %v3404
  %v3766 = vunpack.c.l.b16 %v3405
  %v3767 = vunpack.c.h.b16 %v3405
  %v3768 = vunpack.c.l.b16 %v3406
  %v3769 = vunpack.c.h.b16 %v3406
  %v3770 = vunpack.c.l.b16 %v3407
  %v3771 = vunpack.c.h.b16 %v3407
  %v3772 = vunpack.c.l.b16 %v3408
  %v3773 = vunpack.c.h.b16 %v3408
  %v3774 = vunpack.c.l.b16 %v3409
  %v3775 = vunpack.c.h.b16 %v3409
  %v3776 = vunpack.c.l.b16 %v3410
  %v3777 = vunpack.c.h.b16 %v3410
  %v3778 = vunpack.c.l.b16 %v3411
  %v3779 = vunpack.c.h.b16 %v3411
  %v3780 = vunpack.c.l.b16 %v3412
  %v3781 = vunpack.c.h.b16 %v3412
  %v3782 = vunpack.c.l.b16 %v3413
  %v3783 = vunpack.c.h.b16 %v3413
  %v3784 = vunpack.c.l.b16 %v3414
  %v3785 = vunpack.c.h.b16 %v3414
  %v3786 = vunpack.c.l.b16 %v3415
  %v3787 = vunpack.c.h.b16 %v3415
  %v3788 = vunpack.c.l.b16 %v3416
  %v3789 = vunpack.c.h.b16 %v3416
  %v3790 = vunpack.c.l.b16 %v3417
  %v3791 = vunpack.c.h.b16 %v3417
  %v3792 = vunpack.c.l.b16 %v3418
  %v3793 = vunpack.c.h.b16 %v3418
  %v3794 = vunpack.c.l.b16 %v3419
  %v3795 = vunpack.c.h.b16 %v3419
  %v3796 = vunpack.c.l.b16 %v3420
  %v3797 = vunpack.c.h.b16 %v3420
  %v3798 = vunpack.c.l.b16 %v3421
  %v3799 = vunpack.c.h.b16 %v3421
  %v3800 = vunpack.c.l.b16 %v3422
  %v3801 = vunpack.c.h.b16 %v3422
  %v3802 = vunpack.c.l.b16 %v3423
  %v3803 = vunpack.c.h.b16 %v3423
  %v3804 = vunpack.c.l.b16 %v3424
  %v3805 = vunpack.c.h.b16 %v3424
  %v3806 = vunpack.c.l.b16 %v3425
  %v3807 = vunpack.c.h.b16 %v3425
  %v3808 = vunpack.c.l.b16 %v3426
  %v3809 = vunpack.c.h.b16 %v3426
  %v3810 = vunpack.c.l.b16 %v3427
  %v3811 = vunpack.c.h.b16 %v3427
  %v3812 = vunpack.c.l.b16 %v3428
  %v3813 = vunpack.c.h.b16 %v3428
  %v3814 = vunpack.c.l.b16 %v3429
  %v3815 = vunpack.c.h.b16 %v3429
  %v3816 = vunpack.c.l.b16 %v3430
  %v3817 = vunpack.c.h.b16 %v3430
  %v3818 = vunpack.c.l.b16 %v3431
  %v3819 = vunpack.c.h.b16 %v3431
  %v3820 = vunpack.c.l.b16 %v3432
  %v3821 = vunpack.c.h.b16 %v3432
  %v3822 = vunpack.c.l.b16 %v3433
  %v3823 = vunpack.c.h.b16 %v3433
  %v3824 = vunpack.c.l.b16 %v3434
  %v3825 = vunpack.c.h.b16 %v3434
  %v3826 = vunpack.c.l.b16 %v3435
  %v3827 = vunpack.c.h.b16 %v3435
  %v3828 = vunpack.c.l.b16 %v3436
  %v3829 = vunpack.c.h.b16 %v3436
  %v3830 = vunpack.c.l.b16 %v3437
  %v3831 = vunpack.c.h.b16 %v3437
  %v3832 = vunpack.c.l.b16 %v3438
  %v3833 = vunpack.c.h.b16 %v3438
  %v3834 = vunpack.c.l.b16 %v3439
  %v3835 = vunpack.c.h.b16 %v3439
  %v3836 = vunpack.c.l.b16 %v3440
  %v3837 = vunpack.c.h.b16 %v3440
  %v3838 = vunpack.c.l.b16 %v3441
  %v3839 = vunpack.c.h.b16 %v3441
  %v3840 = vunpack.c.l.b16 %v3442
  %v3841 = vunpack.c.h.b16 %v3442
  %v3842 = vunpack.c.l.b16 %v3443
  %v3843 = vunpack.c.h.b16 %v3443
  %v3844 = vunpack.c.l.b16 %v3444
  %v3845 = vunpack.c.h.b16 %v3444
  %v3846 = vunpack.c.l.b16 %v3445
  %v3847 = vunpack.c.h.b16 %v3445
  %v3848 = vunpack.c.l.b16 %v3446
  %v3849 = vunpack.c.h.b16 %v3446
  %v3850 = vunpack.c.l.b16 %v3447
  %v3851 = vunpack.c.h.b16 %v3447
  %v3852 = vunpack.c.l.b16 %v3448
  %v3853 = vunpack.c.h.b16 %v3448
  %v3854 = vunpack.c.l.b16 %v3449
  %v3855 = vunpack.c.h.b16 %v3449
  %v3856 = vunpack.c.l.b16 %v3450
  %v3857 = vunpack.c.h.b16 %v3450
  %v3858 = vunpack.c.l.b16 %v3451
  %v3859 = vunpack.c.h.b16 %v3451
  %v3860 = vunpack.c.l.b16 %v3452
  %v3861 = vunpack.c.h.b16 %v3452
  %v3862 = vunpack.c.l.b16 %v3453
  %v3863 = vunpack.c.h.b16 %v3453
  %v3864 = vunpack.c.l.b16 %v3454
  %v3865 = vunpack.c.h.b16 %v3454
  %v3866 = vunpack.c.l.b16 %v3455
  %v3867 = vunpack.c.h.b16 %v3455
  %v3868 = vunpack.c.l.b16 %v3456
  %v3869 = vunpack.c.h.b16 %v3456
  %v3870 = vunpack.c.l.b16 %v3457
  %v3871 = vunpack.c.h.b16 %v3457
  %v3872 = vunpack.c.l.b16 %v3458
  %v3873 = vunpack.c.h.b16 %v3458
  %v3874 = vunpack.c.l.b16 %v3459
  %v3875 = vunpack.c.h.b16 %v3459
  %v3876 = vunpack.c.l.b16 %v3460
  %v3877 = vunpack.c.h.b16 %v3460
  %v3878 = vunpack.c.l.b16 %v3461
  %v3879 = vunpack.c.h.b16 %v3461
  %v3880 = vunpack.c.l.b16 %v3462
  %v3881 = vunpack.c.h.b16 %v3462
  %v3882 = vunpack.c.l.b16 %v3463
  %v3883 = vunpack.c.h.b16 %v3463
  %v3884 = vunpack.c.l.b16 %v3464
  %v3885 = vunpack.c.h.b16 %v3464
  %v3886 = vunpack.c.l.b16 %v3465
  %v3887 = vunpack.c.h.b16 %v3465
  %v3888 = vunpack.c.l.b16 %v3466
  %v3889 = vunpack.c.h.b16 %v3466
  %v3890 = vunpack.c.l.b16 %v3467
  %v3891 = vunpack.c.h.b16 %v3467
  %v3892 = vunpack.c.l.b16 %v3468
  %v3893 = vunpack.c.h.b16 %v3468
  %v3894 = vunpack.c.l.b16 %v3469
  %v3895 = vunpack.c.h.b16 %v3469
  %v3896 = vunpack.c.l.b16 %v3470
  %v3897 = vunpack.c.h.b16 %v3470
  %v3898 = vunpack.c.l.b16 %v3471
  %v3899 = vunpack.c.h.b16 %v3471
  %v3900 = vunpack.c.l.b16 %v3472
  %v3901 = vunpack.c.h.b16 %v3472
  %v3902 = vunpack.c.l.b16 %v3473
  %v3903 = vunpack.c.h.b16 %v3473
  %v3904 = vunpack.c.l.b16 %v3474
  %v3905 = vunpack.c.h.b16 %v3474
  %v3906 = vunpack.c.l.b16 %v3475
  %v3907 = vunpack.c.h.b16 %v3475
  %v3908 = vunpack.c.l.b16 %v3476
  %v3909 = vunpack.c.h.b16 %v3476
  %v3910 = vunpack.c.l.b16 %v3477
  %v3911 = vunpack.c.h.b16 %v3477
  %v3912 = vunpack.c.l.b16 %v3478
  %v3913 = vunpack.c.h.b16 %v3478
  %v3914 = vunpack.c.l.b16 %v3479
  %v3915 = vunpack.c.h.b16 %v3479
  %v3916 = vunpack.c.l.b16 %v3480
  %v3917 = vunpack.c.h.b16 %v3480
  %v3918 = vunpack.c.l.b16 %v3481
  %v3919 = vunpack.c.h.b16 %v3481
  %v3920 = vunpack.c.l.b16 %v3482
  %v3921 = vunpack.c.h.b16 %v3482
  %v3922 = vunpack.c.l.b16 %v3483
  %v3923 = vunpack.c.h.b16 %v3483
  %v3924 = vunpack.c.l.b16 %v3484
  %v3925 = vunpack.c.h.b16 %v3484
  %v3926 = vunpack.c.l.b16 %v3485
  %v3927 = vunpack.c.h.b16 %v3485
  %v3928 = vunpack.c.l.b16 %v3486
  %v3929 = vunpack.c.h.b16 %v3486
  %v3930 = vunpack.c.l.b16 %v3487
  %v3931 = vunpack.c.h.b16 %v3487
  %v3932 = vunpack.c.l.b16 %v3488
  %v3933 = vunpack.c.h.b16 %v3488
  %v3934 = vunpack.c.l.b16 %v3489
  %v3935 = vunpack.c.h.b16 %v3489
  %v3936 = vunpack.c.l.b16 %v3490
  %v3937 = vunpack.c.h.b16 %v3490
  %v3938 = vunpack.c.l.b16 %v3491
  %v3939 = vunpack.c.h.b16 %v3491
  %v3940 = vunpack.c.l.b16 %v3492
  %v3941 = vunpack.c.h.b16 %v3492
  %v3942 = vunpack.c.l.b16 %v3493
  %v3943 = vunpack.c.h.b16 %v3493
  %v3944 = vunpack.c.l.b16 %v3494
  %v3945 = vunpack.c.h.b16 %v3494
  %v3946 = vunpack.c.l.b16 %v3495
  %v3947 = vunpack.c.h.b16 %v3495
  %v3948 = vunpack.c.l.b16 %v3496
  %v3949 = vunpack.c.h.b16 %v3496
  %v3950 = vunpack.c.l.b16 %v3497
  %v3951 = vunpack.c.h.b16 %v3497
  %v3952 = vunpack.c.l.b16 %v3498
  %v3953 = vunpack.c.h.b16 %v3498
  %v3954 = vunpack.c.l.b16 %v3499
  %v3955 = vunpack.c.h.b16 %v3499
  %v3956 = vunpack.c.l.b16 %v3500
  %v3957 = vunpack.c.h.b16 %v3500
  %v3958 = vunpack.c.l.b16 %v3501
  %v3959 = vunpack.c.h.b16 %v3501
  %v3960 = vunpack.c.l.b16 %v3502
  %v3961 = vunpack.c.h.b16 %v3502
  %v3962 = vunpack.c.l.b16 %v3503
  %v3963 = vunpack.c.h.b16 %v3503
  %v3964 = vunpack.c.l.b16 %v3504
  %v3965 = vunpack.c.h.b16 %v3504
  %v3966 = vunpack.c.l.b16 %v3505
  %v3967 = vunpack.c.h.b16 %v3505
  %v3968 = vunpack.c.l.b16 %v3506
  %v3969 = vunpack.c.h.b16 %v3506
  %v3970 = vunpack.c.l.b16 %v3507
  %v3971 = vunpack.c.h.b16 %v3507
  %v3972 = vunpack.c.l.b16 %v3508
  %v3973 = vunpack.c.h.b16 %v3508
  %v3974 = vunpack.c.l.b16 %v3509
  %v3975 = vunpack.c.h.b16 %v3509
  %v3976 = vunpack.c.l.b16 %v3510
  %v3977 = vunpack.c.h.b16 %v3510
  %v3978 = vunpack.c.l.b16 %v3511
  %v3979 = vunpack.c.h.b16 %v3511
  %v3980 = vunpack.c.l.b16 %v3512
  %v3981 = vunpack.c.h.b16 %v3512
  %v3982 = vunpack.c.l.b16 %v3513
  %v3983 = vunpack.c.h.b16 %v3513
  %v3984 = vunpack.c.l.b16 %v3514
  %v3985 = vunpack.c.h.b16 %v3514
  %v3986 = vunpack.c.l.b16 %v3515
  %v3987 = vunpack.c.h.b16 %v3515
  %v3988 = vunpack.c.l.b16 %v3516
  %v3989 = vunpack.c.h.b16 %v3516
  %v3990 = vunpack.c.l.b16 %v3517
  %v3991 = vunpack.c.h.b16 %v3517
  %v3992 = vunpack.c.l.b16 %v3518
  %v3993 = vunpack.c.h.b16 %v3518
  %v3994 = vunpack.c.l.b16 %v3519
  %v3995 = vunpack.c.h.b16 %v3519
  %v3996 = vunpack.c.l.b16 %v3520
  %v3997 = vunpack.c.h.b16 %v3520
  %v3998 = vunpack.c.l.b16 %v3521
  %v3999 = vunpack.c.h.b16 %v3521
  %v4000 = vunpack.c.l.b16 %v3522
  %v4001 = vunpack.c.h.b16 %v3522
  %v4002 = vunpack.c.l.b16 %v3523
  %v4003 = vunpack.c.h.b16 %v3523
  %v4004 = vpack.c.b16 %v3694, %v3684
  %v4005 = vpack.c.b16 %v3695, %v3685
  %v4006 = vpack.c.b16 %v3696, %v3686
  %v4007 = vpack.c.b16 %v3697, %v3687
  %v4008 = vpack.c.b16 %v3698, %v3688
  %v4009 = vpack.c.b16 %v3699, %v3689
  %v4010 = vpack.c.b16 %v3700, %v3690
  %v4011 = vpack.c.b16 %v3701, %v3691
  %v4012 = vpack.c.b16 %v3702, %v3692
  %v4013 = vpack.c.b16 %v3703, %v3693
  %v4014 = vpack.c.b16 %v3714, %v3704
  %v4015 = vpack.c.b16 %v3715, %v3705
  %v4016 = vpack.c.b16 %v3716, %v3706
  %v4017 = vpack.c.b16 %v3717, %v3707
  %v4018 = vpack.c.b16 %v3718, %v3708
  %v4019 = vpack.c.b16 %v3719, %v3709
  %v4020 = vpack.c.b16 %v3720, %v3710
  %v4021 = vpack.c.b16 %v3721, %v3711
  %v4022 = vpack.c.b16 %v3722, %v3712
  %v4023 = vpack.c.b16 %v3723, %v3713
  %v4024 = vpack.c.b16 %v3734, %v3724
  %v4025 = vpack.c.b16 %v3735, %v3725
  %v4026 = vpack.c.b16 %v3736, %v3726
  %v4027 = vpack.c.b16 %v3737, %v3727
  %v4028 = vpack.c.b16 %v3738, %v3728
  %v4029 = vpack.c.b16 %v3739, %v3729
  %v4030 = vpack.c.b16 %v3740, %v3730
  %v4031 = vpack.c.b16 %v3741, %v3731
  %v4032 = vpack.c.b16 %v3742, %v3732
  %v4033 = vpack.c.b16 %v3743, %v3733
  %v4034 = vpack.c.b16 %v3754, %v3744
  %v4035 = vpack.c.b16 %v3755, %v3745
  %v4036 = vpack.c.b16 %v3756, %v3746
  %v4037 = vpack.c.b16 %v3757, %v3747
  %v4038 = vpack.c.b16 %v3758, %v3748
  %v4039 = vpack.c.b16 %v3759, %v3749
  %v4040 = vpack.c.b16 %v3760, %v3750
  %v4041 = vpack.c.b16 %v3761, %v3751
  %v4042 = vpack.c.b16 %v3762, %v3752
  %v4043 = vpack.c.b16 %v3763, %v3753
  %v4044 = vpack.c.b16 %v3774, %v3764
  %v4045 = vpack.c.b16 %v3775, %v3765
  %v4046 = vpack.c.b16 %v3776, %v3766
  %v4047 = vpack.c.b16 %v3777, %v3767
  %v4048 = vpack.c.b16 %v3778, %v3768
  %v4049 = vpack.c.b16 %v3779, %v3769
  %v4050 = vpack.c.b16 %v3780, %v3770
  %v4051 = vpack.c.b16 %v3781, %v3771
  %v4052 = vpack.c.b16 %v3782, %v3772
  %v4053 = vpack.c.b16 %v3783, %v3773
  %v4054 = vpack.c.b16 %v3794, %v3784
  %v4055 = vpack.c.b16 %v3795, %v3785
  %v4056 = vpack.c.b16 %v3796, %v3786
  %v4057 = vpack.c.b16 %v3797, %v3787
  %v4058 = vpack.c.b16 %v3798, %v3788
  %v4059 = vpack.c.b16 %v3799, %v3789
  %v4060 = vpack.c.b16 %v3800, %v3790
  %v4061 = vpack.c.b16 %v3801, %v3791
  %v4062 = vpack.c.b16 %v3802, %v3792
  %v4063 = vpack.c.b16 %v3803, %v3793
  %v4064 = vpack.c.b16 %v3814, %v3804
  %v4065 = vpack.c.b16 %v3815, %v3805
  %v4066 = vpack.c.b16 %v3816, %v3806
  %v4067 = vpack.c.b16 %v3817, %v3807
  %v4068 = vpack.c.b16 %v3818, %v3808
  %v4069 = vpack.c.b16 %v3819, %v3809
  %v4070 = vpack.c.b16 %v3820, %v3810
  %v4071 = vpack.c.b16 %v3821, %v3811
  %v4072 = vpack.c.b16 %v3822, %v3812
  %v4073 = vpack.c.b16 %v3823, %v3813
  %v4074 = vpack.c.b16 %v3834, %v3824
  %v4075 = vpack.c.b16 %v3835, %v3825
  %v4076 = vpack.c.b16 %v3836, %v3826
  %v4077 = vpack.c.b16 %v3837, %v3827
  %v4078 = vpack.c.b16 %v3838, %v3828
  %v4079 = vpack.c.b16 %v3839, %v3829
  %v4080 = vpack.c.b16 %v3840, %v3830
  %v4081 = vpack.c.b16 %v3841, %v3831
  %v4082 = vpack.c.b16 %v3842, %v3832
  %v4083 = vpack.c.b16 %v3843, %v3833
  %v4084 = vpack.c.b16 %v3854, %v3844
  %v4085 = vpack.c.b16 %v3855, %v3845
  %v4086 = vpack.c.b16 %v3856, %v3846
  %v4087 = vpack.c.b16 %v3857, %v3847
  %v4088 = vpack.c.b16 %v3858, %v3848
  %v4089 = vpack.c.b16 %v3859, %v3849
  %v4090 = vpack.c.b16 %v3860, %v3850
  %v4091 = vpack.c.b16 %v3861, %v3851
  %v4092 = vpack.c.b16 %v3862, %v3852
  %v4093 = vpack.c.b16 %v3863, %v3853
  %v4094 = vpack.c.b16 %v3874, %v3864
  %v4095 = vpack.c.b16 %v3875, %v3865
  %v4096 = vpack.c.b16 %v3876, %v3866
  %v4097 = vpack.c.b16 %v3877, %v3867
  %v4098 = vpack.c.b16 %v3878, %v3868
  %v4099 = vpack.c.b16 %v3879, %v3869
  %v4100 = vpack.c.b16 %v3880, %v3870
  %v4101 = vpack.c.b16 %v3881, %v3871
  %v4102 = vpack.c.b16 %v3882, %v3872
  %v4103 = vpack.c.b16 %v3883, %v3873
  %v4104 = vpack.c.b16 %v3894, %v3884
  %v4105 = vpack.c.b16 %v3895, %v3885
  %v4106 = vpack.c.b16 %v3896, %v3886
  %v4107 = vpack.c.b16 %v3897, %v3887
  %v4108 = vpack.c.b16 %v3898, %v3888
  %v4109 = vpack.c.b16 %v3899, %v3889
  %v4110 = vpack.c.b16 %v3900, %v3890
  %v4111 = vpack.c.b16 %v3901, %v3891
  %v4112 = vpack.c.b16 %v3902, %v3892
  %v4113 = vpack.c.b16 %v3903, %v3893
  %v4114 = vpack.c.b16 %v3914, %v3904
  %v4115 = vpack.c.b16 %v3915, %v3905
  %v4116 = vpack.c.b16 %v3916, %v3906
  %v4117 = vpack.c.b16 %v3917, %v3907
  %v4118 = vpack.c.b16 %v3918, %v3908
  %v4119 = vpack.c.b16 %v3919, %v3909
  %v4120 = vpack.c.b16 %v3920, %v3910
  %v4121 = vpack.c.b16 %v3921, %v3911
  %v4122 = vpack.c.b16 %v3922, %v3912
  %v4123 = vpack.c.b16 %v3923, %v3913
  %v4124 = vpack.c.b16 %v3934, %v3924
  %v4125 = vpack.c.b16 %v3935, %v3925
  %v4126 = vpack.c.b16 %v3936, %v3926
  %v4127 = vpack.c.b16 %v3937, %v3927
  %v4128 = vpack.c.b16 %v3938, %v3928
  %v4129 = vpack.c.b16 %v3939, %v3929
  %v4130 = vpack.c.b16 %v3940, %v3930
  %v4131 = vpack.c.b16 %v3941, %v3931
  %v4132 = vpack.c.b16 %v3942, %v3932
  %v4133 = vpack.c.b16 %v3943, %v3933
  %v4134 = vpack.c.b16 %v3954, %v3944
  %v4135 = vpack.c.b16 %v3955, %v3945
  %v4136 = vpack.c.b16 %v3956, %v3946
  %v4137 = vpack.c.b16 %v3957, %v3947
  %v4138 = vpack.c.b16 %v3958, %v3948
  %v4139 = vpack.c.b16 %v3959, %v3949
  %v4140 = vpack.c.b16 %v3960, %v3950
  %v4141 = vpack.c.b16 %v3961, %v3951
  %v4142 = vpack.c.b16 %v3962, %v3952
  %v4143 = vpack.c.b16 %v3963, %v3953
  %v4144 = vpack.c.b16 %v3974, %v3964
  %v4145 = vpack.c.b16 %v3975, %v3965
  %v4146 = vpack.c.b16 %v3976, %v3966
  %v4147 = vpack.c.b16 %v3977, %v3967
  %v4148 = vpack.c.b16 %v3978, %v3968
  %v4149 = vpack.c.b16 %v3979, %v3969
  %v4150 = vpack.c.b16 %v3980, %v3970
  %v4151 = vpack.c.b16 %v3981, %v3971
  %v4152 = vpack.c.b16 %v3982, %v3972
  %v4153 = vpack.c.b16 %v3983, %v3973
  %v4154 = vpack.c.b16 %v3994, %v3984
  %v4155 = vpack.c.b16 %v3995, %v3985
  %v4156 = vpack.c.b16 %v3996, %v3986
  %v4157 = vpack.c.b16 %v3997, %v3987
  %v4158 = vpack.c.b16 %v3998, %v3988
  %v4159 = vpack.c.b16 %v3999, %v3989
  %v4160 = vpack.c.b16 %v4000, %v3990
  %v4161 = vpack.c.b16 %v4001, %v3991
  %v4162 = vpack.c.b16 %v4002, %v3992
  %v4163 = vpack.c.b16 %v4003, %v3993
  %4324 = vmatpush.bf16.msra.mxu0 %v4074
  %4325 = vmatpush.bf16.msra.mxu0 %v4064
  %4326 = vmatpush.bf16.msra.mxu0 %v4054
  %4327 = vmatpush.bf16.msra.mxu0 %v4044
  %4328 = vmatpush.bf16.msra.mxu0 %v4034
  %4329 = vmatpush.bf16.msra.mxu0 %v4024
  %4330 = vmatpush.bf16.msra.mxu0 %v4014
  %4331 = vmatpush.bf16.msra.mxu0 %v4004
  %4332 = vmatmul.bf16.gmra.mxu0 %v3362
  %v4333 = vpop.f32.mrf.mxu0
  %v4334 = vadd.f32 0.0, %v4333
  %v4335 = vpop.f32.mrf.mxu0
  %4336 = vdwg.mxu0
  %4337 = vmatpush.bf16.msra.mxu0 %v4154
  %4338 = vmatpush.bf16.msra.mxu0 %v4144
  %4339 = vmatpush.bf16.msra.mxu0 %v4134
  %4340 = vmatpush.bf16.msra.mxu0 %v4124
  %4341 = vmatpush.bf16.msra.mxu0 %v4114
  %4342 = vmatpush.bf16.msra.mxu0 %v4104
  %4343 = vmatpush.bf16.msra.mxu0 %v4094
  %4344 = vmatpush.bf16.msra.mxu0 %v4084
  %4345 = vmatmul.bf16.gmra.mxu0 %v3363
  %v4346 = vpop.f32.mrf.mxu0
  %v4347 = vadd.f32 %v4334, %v4346
  %v4348 = vpop.f32.mrf.mxu0
  %4349 = vdwg.mxu0
  %4350 = vmatpush.bf16.msra.mxu0 %v4075
  %4351 = vmatpush.bf16.msra.mxu0 %v4065
  %4352 = vmatpush.bf16.msra.mxu0 %v4055
  %4353 = vmatpush.bf16.msra.mxu0 %v4045
  %4354 = vmatpush.bf16.msra.mxu0 %v4035
  %4355 = vmatpush.bf16.msra.mxu0 %v4025
  %4356 = vmatpush.bf16.msra.mxu0 %v4015
  %4357 = vmatpush.bf16.msra.mxu0 %v4005
  %4358 = vmatmul.bf16.gmra.mxu0 %v3362
  %v4359 = vpop.f32.mrf.mxu0
  %v4360 = vadd.f32 0.0, %v4359
  %v4361 = vpop.f32.mrf.mxu0
  %4362 = vdwg.mxu0
  %4363 = vmatpush.bf16.msra.mxu0 %v4155
  %4364 = vmatpush.bf16.msra.mxu0 %v4145
  %4365 = vmatpush.bf16.msra.mxu0 %v4135
  %4366 = vmatpush.bf16.msra.mxu0 %v4125
  %4367 = vmatpush.bf16.msra.mxu0 %v4115
  %4368 = vmatpush.bf16.msra.mxu0 %v4105
  %4369 = vmatpush.bf16.msra.mxu0 %v4095
  %4370 = vmatpush.bf16.msra.mxu0 %v4085
  %4371 = vmatmul.bf16.gmra.mxu0 %v3363
  %v4372 = vpop.f32.mrf.mxu0
  %v4373 = vadd.f32 %v4360, %v4372
  %v4374 = vpop.f32.mrf.mxu0
  %4375 = vdwg.mxu0
  %4376 = vmatpush.bf16.msra.mxu0 %v4076
  %4377 = vmatpush.bf16.msra.mxu0 %v4066
  %4378 = vmatpush.bf16.msra.mxu0 %v4056
  %4379 = vmatpush.bf16.msra.mxu0 %v4046
  %4380 = vmatpush.bf16.msra.mxu0 %v4036
  %4381 = vmatpush.bf16.msra.mxu0 %v4026
  %4382 = vmatpush.bf16.msra.mxu0 %v4016
  %4383 = vmatpush.bf16.msra.mxu0 %v4006
  %4384 = vmatmul.bf16.gmra.mxu0 %v3362
  %v4385 = vpop.f32.mrf.mxu0
  %v4386 = vadd.f32 0.0, %v4385
  %v4387 = vpop.f32.mrf.mxu0
  %4388 = vdwg.mxu0
  %4389 = vmatpush.bf16.msra.mxu0 %v4156
  %4390 = vmatpush.bf16.msra.mxu0 %v4146
  %4391 = vmatpush.bf16.msra.mxu0 %v4136
  %4392 = vmatpush.bf16.msra.mxu0 %v4126
  %4393 = vmatpush.bf16.msra.mxu0 %v4116
  %4394 = vmatpush.bf16.msra.mxu0 %v4106
  %4395 = vmatpush.bf16.msra.mxu0 %v4096
  %4396 = vmatpush.bf16.msra.mxu0 %v4086
  %4397 = vmatmul.bf16.gmra.mxu0 %v3363
  %v4398 = vpop.f32.mrf.mxu0
  %v4399 = vadd.f32 %v4386, %v4398
  %v4400 = vpop.f32.mrf.mxu0
  %4401 = vdwg.mxu0
  %4402 = vmatpush.bf16.msra.mxu0 %v4077
  %4403 = vmatpush.bf16.msra.mxu0 %v4067
  %4404 = vmatpush.bf16.msra.mxu0 %v4057
  %4405 = vmatpush.bf16.msra.mxu0 %v4047
  %4406 = vmatpush.bf16.msra.mxu0 %v4037
  %4407 = vmatpush.bf16.msra.mxu0 %v4027
  %4408 = vmatpush.bf16.msra.mxu0 %v4017
  %4409 = vmatpush.bf16.msra.mxu0 %v4007
  %4410 = vmatmul.bf16.gmra.mxu0 %v3362
  %v4411 = vpop.f32.mrf.mxu0
  %v4412 = vadd.f32 0.0, %v4411
  %v4413 = vpop.f32.mrf.mxu0
  %4414 = vdwg.mxu0
  %4415 = vmatpush.bf16.msra.mxu0 %v4157
  %4416 = vmatpush.bf16.msra.mxu0 %v4147
  %4417 = vmatpush.bf16.msra.mxu0 %v4137
  %4418 = vmatpush.bf16.msra.mxu0 %v4127
  %4419 = vmatpush.bf16.msra.mxu0 %v4117
  %4420 = vmatpush.bf16.msra.mxu0 %v4107
  %4421 = vmatpush.bf16.msra.mxu0 %v4097
  %4422 = vmatpush.bf16.msra.mxu0 %v4087
  %4423 = vmatmul.bf16.gmra.mxu0 %v3363
  %v4424 = vpop.f32.mrf.mxu0
  %v4425 = vadd.f32 %v4412, %v4424
  %v4426 = vpop.f32.mrf.mxu0
  %4427 = vdwg.mxu0
  %4428 = vmatpush.bf16.msra.mxu0 %v4078
  %4429 = vmatpush.bf16.msra.mxu0 %v4068
  %4430 = vmatpush.bf16.msra.mxu0 %v4058
  %4431 = vmatpush.bf16.msra.mxu0 %v4048
  %4432 = vmatpush.bf16.msra.mxu0 %v4038
  %4433 = vmatpush.bf16.msra.mxu0 %v4028
  %4434 = vmatpush.bf16.msra.mxu0 %v4018
  %4435 = vmatpush.bf16.msra.mxu0 %v4008
  %4436 = vmatmul.bf16.gmra.mxu0 %v3362
  %v4437 = vpop.f32.mrf.mxu0
  %v4438 = vadd.f32 0.0, %v4437
  %v4439 = vpop.f32.mrf.mxu0
  %4440 = vdwg.mxu0
  %4441 = vmatpush.bf16.msra.mxu0 %v4158
  %4442 = vmatpush.bf16.msra.mxu0 %v4148
  %4443 = vmatpush.bf16.msra.mxu0 %v4138
  %4444 = vmatpush.bf16.msra.mxu0 %v4128
  %4445 = vmatpush.bf16.msra.mxu0 %v4118
  %4446 = vmatpush.bf16.msra.mxu0 %v4108
  %4447 = vmatpush.bf16.msra.mxu0 %v4098
  %4448 = vmatpush.bf16.msra.mxu0 %v4088
  %4449 = vmatmul.bf16.gmra.mxu0 %v3363
  %v4450 = vpop.f32.mrf.mxu0
  %v4451 = vadd.f32 %v4438, %v4450
  %v4452 = vpop.f32.mrf.mxu0
  %4453 = vdwg.mxu0
  %4454 = vmatpush.bf16.msra.mxu0 %v4079
  %4455 = vmatpush.bf16.msra.mxu0 %v4069
  %4456 = vmatpush.bf16.msra.mxu0 %v4059
  %4457 = vmatpush.bf16.msra.mxu0 %v4049
  %4458 = vmatpush.bf16.msra.mxu0 %v4039
  %4459 = vmatpush.bf16.msra.mxu0 %v4029
  %4460 = vmatpush.bf16.msra.mxu0 %v4019
  %4461 = vmatpush.bf16.msra.mxu0 %v4009
  %4462 = vmatmul.bf16.gmra.mxu0 %v3362
  %v4463 = vpop.f32.mrf.mxu0
  %v4464 = vadd.f32 0.0, %v4463
  %v4465 = vpop.f32.mrf.mxu0
  %4466 = vdwg.mxu0
  %4467 = vmatpush.bf16.msra.mxu0 %v4159
  %4468 = vmatpush.bf16.msra.mxu0 %v4149
  %4469 = vmatpush.bf16.msra.mxu0 %v4139
  %4470 = vmatpush.bf16.msra.mxu0 %v4129
  %4471 = vmatpush.bf16.msra.mxu0 %v4119
  %4472 = vmatpush.bf16.msra.mxu0 %v4109
  %4473 = vmatpush.bf16.msra.mxu0 %v4099
  %4474 = vmatpush.bf16.msra.mxu0 %v4089
  %4475 = vmatmul.bf16.gmra.mxu0 %v3363
  %v4476 = vpop.f32.mrf.mxu0
  %v4477 = vadd.f32 %v4464, %v4476
  %v4478 = vpop.f32.mrf.mxu0
  %4479 = vdwg.mxu0
  %4480 = vmatpush.bf16.msra.mxu0 %v4080
  %4481 = vmatpush.bf16.msra.mxu0 %v4070
  %4482 = vmatpush.bf16.msra.mxu0 %v4060
  %4483 = vmatpush.bf16.msra.mxu0 %v4050
  %4484 = vmatpush.bf16.msra.mxu0 %v4040
  %4485 = vmatpush.bf16.msra.mxu0 %v4030
  %4486 = vmatpush.bf16.msra.mxu0 %v4020
  %4487 = vmatpush.bf16.msra.mxu0 %v4010
  %4488 = vmatmul.bf16.gmra.mxu0 %v3362
  %v4489 = vpop.f32.mrf.mxu0
  %v4490 = vadd.f32 0.0, %v4489
  %v4491 = vpop.f32.mrf.mxu0
  %4492 = vdwg.mxu0
  %4493 = vmatpush.bf16.msra.mxu0 %v4160
  %4494 = vmatpush.bf16.msra.mxu0 %v4150
  %4495 = vmatpush.bf16.msra.mxu0 %v4140
  %4496 = vmatpush.bf16.msra.mxu0 %v4130
  %4497 = vmatpush.bf16.msra.mxu0 %v4120
  %4498 = vmatpush.bf16.msra.mxu0 %v4110
  %4499 = vmatpush.bf16.msra.mxu0 %v4100
  %4500 = vmatpush.bf16.msra.mxu0 %v4090
  %4501 = vmatmul.bf16.gmra.mxu0 %v3363
  %v4502 = vpop.f32.mrf.mxu0
  %v4503 = vadd.f32 %v4490, %v4502
  %v4504 = vpop.f32.mrf.mxu0
  %4505 = vdwg.mxu0
  %4506 = vmatpush.bf16.msra.mxu0 %v4081
  %4507 = vmatpush.bf16.msra.mxu0 %v4071
  %4508 = vmatpush.bf16.msra.mxu0 %v4061
  %4509 = vmatpush.bf16.msra.mxu0 %v4051
  %4510 = vmatpush.bf16.msra.mxu0 %v4041
  %4511 = vmatpush.bf16.msra.mxu0 %v4031
  %4512 = vmatpush.bf16.msra.mxu0 %v4021
  %4513 = vmatpush.bf16.msra.mxu0 %v4011
  %4514 = vmatmul.bf16.gmra.mxu0 %v3362
  %v4515 = vpop.f32.mrf.mxu0
  %v4516 = vadd.f32 0.0, %v4515
  %v4517 = vpop.f32.mrf.mxu0
  %4518 = vdwg.mxu0
  %4519 = vmatpush.bf16.msra.mxu0 %v4161
  %4520 = vmatpush.bf16.msra.mxu0 %v4151
  %4521 = vmatpush.bf16.msra.mxu0 %v4141
  %4522 = vmatpush.bf16.msra.mxu0 %v4131
  %4523 = vmatpush.bf16.msra.mxu0 %v4121
  %4524 = vmatpush.bf16.msra.mxu0 %v4111
  %4525 = vmatpush.bf16.msra.mxu0 %v4101
  %4526 = vmatpush.bf16.msra.mxu0 %v4091
  %4527 = vmatmul.bf16.gmra.mxu0 %v3363
  %v4528 = vpop.f32.mrf.mxu0
  %v4529 = vadd.f32 %v4516, %v4528
  %v4530 = vpop.f32.mrf.mxu0
  %4531 = vdwg.mxu0
  %4532 = vmatpush.bf16.msra.mxu0 %v4082
  %4533 = vmatpush.bf16.msra.mxu0 %v4072
  %4534 = vmatpush.bf16.msra.mxu0 %v4062
  %4535 = vmatpush.bf16.msra.mxu0 %v4052
  %4536 = vmatpush.bf16.msra.mxu0 %v4042
  %4537 = vmatpush.bf16.msra.mxu0 %v4032
  %4538 = vmatpush.bf16.msra.mxu0 %v4022
  %4539 = vmatpush.bf16.msra.mxu0 %v4012
  %4540 = vmatmul.bf16.gmra.mxu0 %v3362
  %v4541 = vpop.f32.mrf.mxu0
  %v4542 = vadd.f32 0.0, %v4541
  %v4543 = vpop.f32.mrf.mxu0
  %4544 = vdwg.mxu0
  %4545 = vmatpush.bf16.msra.mxu0 %v4162
  %4546 = vmatpush.bf16.msra.mxu0 %v4152
  %4547 = vmatpush.bf16.msra.mxu0 %v4142
  %4548 = vmatpush.bf16.msra.mxu0 %v4132
  %4549 = vmatpush.bf16.msra.mxu0 %v4122
  %4550 = vmatpush.bf16.msra.mxu0 %v4112
  %4551 = vmatpush.bf16.msra.mxu0 %v4102
  %4552 = vmatpush.bf16.msra.mxu0 %v4092
  %4553 = vmatmul.bf16.gmra.mxu0 %v3363
  %v4554 = vpop.f32.mrf.mxu0
  %v4555 = vadd.f32 %v4542, %v4554
  %v4556 = vpop.f32.mrf.mxu0
  %4557 = vdwg.mxu0
  %4558 = vmatpush.bf16.msra.mxu0 %v4083
  %4559 = vmatpush.bf16.msra.mxu0 %v4073
  %4560 = vmatpush.bf16.msra.mxu0 %v4063
  %4561 = vmatpush.bf16.msra.mxu0 %v4053
  %4562 = vmatpush.bf16.msra.mxu0 %v4043
  %4563 = vmatpush.bf16.msra.mxu0 %v4033
  %4564 = vmatpush.bf16.msra.mxu0 %v4023
  %4565 = vmatpush.bf16.msra.mxu0 %v4013
  %4566 = vmatmul.bf16.gmra.mxu0 %v3362
  %v4567 = vpop.f32.mrf.mxu0
  %v4568 = vadd.f32 0.0, %v4567
  %v4569 = vpop.f32.mrf.mxu0
  %4570 = vdwg.mxu0
  %4571 = vmatpush.bf16.msra.mxu0 %v4163
  %4572 = vmatpush.bf16.msra.mxu0 %v4153
  %4573 = vmatpush.bf16.msra.mxu0 %v4143
  %4574 = vmatpush.bf16.msra.mxu0 %v4133
  %4575 = vmatpush.bf16.msra.mxu0 %v4123
  %4576 = vmatpush.bf16.msra.mxu0 %v4113
  %4577 = vmatpush.bf16.msra.mxu0 %v4103
  %4578 = vmatpush.bf16.msra.mxu0 %v4093
  %4579 = vmatmul.bf16.gmra.mxu0 %v3363
  %v4580 = vpop.f32.mrf.mxu0
  %v4581 = vadd.f32 %v4568, %v4580
  %v4582 = vpop.f32.mrf.mxu0
  %4583 = vdwg.mxu0
  %v4584 = vadd.f32 %v4581, %v237
  %4585 = vst [vmem:[%s9 + $0x10] sm:$0xff] %v4584
  %v4586 = vld [vmem:[#allocation2 + $0x60] sm:$0xff]
  %v4587 = vld [vmem:[#allocation2 + $0x68] sm:$0xff]
  %v4588 = vld [vmem:[#allocation2 + $0x70] sm:$0xff]
  %v4589 = vadd.f32 %v4586, %v4347
  %v4590 = vxor.u32 %v4589, 2147483648
  %v4591 = vmul.f32 %v4590, 1.442695
  %v4592 = vpow.pop %v4591
  %v4593 = vadd.f32 %v4592, 1.0
  %v4594 = vrcp.pop %v4593
  %v4595 = vmul.f32 %v4593, %v4594
  %v4596 = vsub.f32 1.0, %v4595
  %v4597 = vmul.f32 %v4594, %v4596
  %v4598 = vadd.f32 %v4594, %v4597
  %vm4599 = vweird.f32 %v4593
  %vm4600 = vweird.f32 %v4594
  %vm4601 = vmor %vm4599, %vm4600
  %v4602 = vsel %vm4601, %v4594, %v4598
  %v4603 = vand.u32 2147483647, %v4593
  %vm4604 = vcmp.eq.f32.partialorder %v4603, 8.507059e+37
  %v4605 = vand.u32 %v4593, 2147483648
  %v4606 = vor.u32 1.1754944e-38, %v4605
  %v4607 = vsel %vm4604, %v4606, %v4602
  %v4608 = vmul.f32 1.0, %v4607
  %v4609 = vadd.f32 %v4587, %v4373
  %v4610 = vxor.u32 %v4609, 2147483648
  %v4611 = vmul.f32 %v4610, 1.442695
  %v4612 = vpow.pop %v4611
  %v4613 = vadd.f32 %v4612, 1.0
  %v4614 = vrcp.pop %v4613
  %v4615 = vmul.f32 %v4613, %v4614
  %v4616 = vsub.f32 1.0, %v4615
  %v4617 = vmul.f32 %v4614, %v4616
  %v4618 = vadd.f32 %v4614, %v4617
  %vm4619 = vweird.f32 %v4613
  %vm4620 = vweird.f32 %v4614
  %vm4621 = vmor %vm4619, %vm4620
  %v4622 = vsel %vm4621, %v4614, %v4618
  %v4623 = vand.u32 2147483647, %v4613
  %vm4624 = vcmp.eq.f32.partialorder %v4623, 8.507059e+37
  %v4625 = vand.u32 %v4613, 2147483648
  %v4626 = vor.u32 1.1754944e-38, %v4625
  %v4627 = vsel %vm4624, %v4626, %v4622
  %v4628 = vmul.f32 1.0, %v4627
  %v4629 = vadd.f32 %v4399, %v221
  %v4630 = vmul.f32 %v4608, %v4629
  %v4631 = vadd.f32 %v4588, %v4630
  %v4632 = vtanh.pop %v4631
  %v4633 = vsub.f32 1.0, %v4628
  %v4634 = vmul.f32 %v4633, %v4632
  %v4635 = vmul.f32 %v4628, %v3310
  %v4636 = vadd.f32 %v4634, %v4635
  %v4637 = vadd.f32 %v4503, %v229
  %v4638 = vadd.f32 %v4529, %v230
  %v4639 = vadd.f32 %v4555, %v231
  %v4640 = vadd.f32 %v4637, %v4425
  %v4641 = vxor.u32 %v4640, 2147483648
  %v4642 = vmul.f32 %v4641, 1.442695
  %v4643 = vpow.pop %v4642
  %v4644 = vadd.f32 %v4643, 1.0
  %v4645 = vrcp.pop %v4644
  %v4646 = vmul.f32 %v4644, %v4645
  %v4647 = vsub.f32 1.0, %v4646
  %v4648 = vmul.f32 %v4645, %v4647
  %v4649 = vadd.f32 %v4645, %v4648
  %vm4650 = vweird.f32 %v4644
  %vm4651 = vweird.f32 %v4645
  %vm4652 = vmor %vm4650, %vm4651
  %v4653 = vsel %vm4652, %v4645, %v4649
  %v4654 = vand.u32 2147483647, %v4644
  %vm4655 = vcmp.eq.f32.partialorder %v4654, 8.507059e+37
  %v4656 = vand.u32 %v4644, 2147483648
  %v4657 = vor.u32 1.1754944e-38, %v4656
  %v4658 = vsel %vm4655, %v4657, %v4653
  %v4659 = vmul.f32 1.0, %v4658
  %v4660 = vadd.f32 %v4638, %v4451
  %v4661 = vxor.u32 %v4660, 2147483648
  %v4662 = vmul.f32 %v4661, 1.442695
  %v4663 = vpow.pop %v4662
  %v4664 = vadd.f32 %v4663, 1.0
  %v4665 = vrcp.pop %v4664
  %v4666 = vmul.f32 %v4664, %v4665
  %v4667 = vsub.f32 1.0, %v4666
  %v4668 = vmul.f32 %v4665, %v4667
  %v4669 = vadd.f32 %v4665, %v4668
  %vm4670 = vweird.f32 %v4664
  %vm4671 = vweird.f32 %v4665
  %vm4672 = vmor %vm4670, %vm4671
  %v4673 = vsel %vm4672, %v4665, %v4669
  %v4674 = vand.u32 2147483647, %v4664
  %vm4675 = vcmp.eq.f32.partialorder %v4674, 8.507059e+37
  %v4676 = vand.u32 %v4664, 2147483648
  %v4677 = vor.u32 1.1754944e-38, %v4676
  %v4678 = vsel %vm4675, %v4677, %v4673
  %v4679 = vmul.f32 1.0, %v4678
  %v4680 = vadd.f32 %v4477, %v225
  %v4681 = vmul.f32 %v4659, %v4680
  %v4682 = vadd.f32 %v4639, %v4681
  %v4683 = vtanh.pop %v4682
  %v4684 = vsub.f32 1.0, %v4679
  %v4685 = vmul.f32 %v4684, %v4683
  %v4686 = vmul.f32 %v4679, %v3361
  %v4687 = vadd.f32 %v4685, %v4686
  %v4688 = vpack.c.bf16 %v4636, %v4636
  %v4689 = vpack.c.bf16 %v4687, %v4687
  %v4690 = vld [vmem:[%s3] sm:$0xff]
  %v4691 = vld [vmem:[%s3 + $0x8] sm:$0xff]
  %v4692 = vld [vmem:[%s3 + $0x10] sm:$0xff]
  %v4693 = vld [vmem:[%s3 + $0x18] sm:$0xff]
  %v4694 = vld [vmem:[%s3 + $0x20] sm:$0xff]
  %v4695 = vld [vmem:[%s3 + $0x28] sm:$0xff]
  %v4696 = vld [vmem:[%s3 + $0x30] sm:$0xff]
  %v4697 = vld [vmem:[%s3 + $0x38] sm:$0xff]
  %v4698 = vld [vmem:[%s3 + $0x40] sm:$0xff]
  %v4699 = vld [vmem:[%s3 + $0x48] sm:$0xff]
  %v4700 = vld [vmem:[%s3 + $0x50] sm:$0xff]
  %v4701 = vld [vmem:[%s3 + $0x58] sm:$0xff]
  %v4702 = vld [vmem:[%s3 + $0x60] sm:$0xff]
  %v4703 = vld [vmem:[%s3 + $0x68] sm:$0xff]
  %v4704 = vld [vmem:[%s3 + $0x70] sm:$0xff]
  %v4705 = vld [vmem:[%s3 + $0x78] sm:$0xff]
  %v4706 = vld [vmem:[%s3 + $0x80] sm:$0xff]
  %v4707 = vld [vmem:[%s3 + $0x88] sm:$0xff]
  %v4708 = vld [vmem:[%s3 + $0x90] sm:$0xff]
  %v4709 = vld [vmem:[%s3 + $0x98] sm:$0xff]
  %v4710 = vld [vmem:[%s3 + $0xa0] sm:$0xff]
  %v4711 = vld [vmem:[%s3 + $0xa8] sm:$0xff]
  %v4712 = vld [vmem:[%s3 + $0xb0] sm:$0xff]
  %v4713 = vld [vmem:[%s3 + $0xb8] sm:$0xff]
  %v4714 = vld [vmem:[%s3 + $0xc0] sm:$0xff]
  %v4715 = vld [vmem:[%s3 + $0xc8] sm:$0xff]
  %v4716 = vld [vmem:[%s3 + $0xd0] sm:$0xff]
  %v4717 = vld [vmem:[%s3 + $0xd8] sm:$0xff]
  %v4718 = vld [vmem:[%s3 + $0xe0] sm:$0xff]
  %v4719 = vld [vmem:[%s3 + $0xe8] sm:$0xff]
  %v4720 = vld [vmem:[%s3 + $0xf0] sm:$0xff]
  %v4721 = vld [vmem:[%s3 + $0xf8] sm:$0xff]
  %v4722 = vld [vmem:[%s3 + $0x100] sm:$0xff]
  %v4723 = vld [vmem:[%s3 + $0x108] sm:$0xff]
  %v4724 = vld [vmem:[%s3 + $0x110] sm:$0xff]
  %v4725 = vld [vmem:[%s3 + $0x118] sm:$0xff]
  %v4726 = vld [vmem:[%s3 + $0x120] sm:$0xff]
  %v4727 = vld [vmem:[%s3 + $0x128] sm:$0xff]
  %v4728 = vld [vmem:[%s3 + $0x130] sm:$0xff]
  %v4729 = vld [vmem:[%s3 + $0x138] sm:$0xff]
  %v4730 = vld [vmem:[%s3 + $0x140] sm:$0xff]
  %v4731 = vld [vmem:[%s3 + $0x148] sm:$0xff]
  %v4732 = vld [vmem:[%s3 + $0x150] sm:$0xff]
  %v4733 = vld [vmem:[%s3 + $0x158] sm:$0xff]
  %v4734 = vld [vmem:[%s3 + $0x160] sm:$0xff]
  %v4735 = vld [vmem:[%s3 + $0x168] sm:$0xff]
  %v4736 = vld [vmem:[%s3 + $0x170] sm:$0xff]
  %v4737 = vld [vmem:[%s3 + $0x178] sm:$0xff]
  %v4738 = vld [vmem:[%s3 + $0x180] sm:$0xff]
  %v4739 = vld [vmem:[%s3 + $0x188] sm:$0xff]
  %v4740 = vld [vmem:[%s3 + $0x190] sm:$0xff]
  %v4741 = vld [vmem:[%s3 + $0x198] sm:$0xff]
  %v4742 = vld [vmem:[%s3 + $0x1a0] sm:$0xff]
  %v4743 = vld [vmem:[%s3 + $0x1a8] sm:$0xff]
  %v4744 = vld [vmem:[%s3 + $0x1b0] sm:$0xff]
  %v4745 = vld [vmem:[%s3 + $0x1b8] sm:$0xff]
  %v4746 = vld [vmem:[%s3 + $0x1c0] sm:$0xff]
  %v4747 = vld [vmem:[%s3 + $0x1c8] sm:$0xff]
  %v4748 = vld [vmem:[%s3 + $0x1d0] sm:$0xff]
  %v4749 = vld [vmem:[%s3 + $0x1d8] sm:$0xff]
  %v4750 = vld [vmem:[%s3 + $0x1e0] sm:$0xff]
  %v4751 = vld [vmem:[%s3 + $0x1e8] sm:$0xff]
  %v4752 = vld [vmem:[%s3 + $0x1f0] sm:$0xff]
  %v4753 = vld [vmem:[%s3 + $0x1f8] sm:$0xff]
  %v4754 = vld [vmem:[%s3 + $0x200] sm:$0xff]
  %v4755 = vld [vmem:[%s3 + $0x208] sm:$0xff]
  %v4756 = vld [vmem:[%s3 + $0x210] sm:$0xff]
  %v4757 = vld [vmem:[%s3 + $0x218] sm:$0xff]
  %v4758 = vld [vmem:[%s3 + $0x220] sm:$0xff]
  %v4759 = vld [vmem:[%s3 + $0x228] sm:$0xff]
  %v4760 = vld [vmem:[%s3 + $0x230] sm:$0xff]
  %v4761 = vld [vmem:[%s3 + $0x238] sm:$0xff]
  %v4762 = vld [vmem:[%s3 + $0x240] sm:$0xff]
  %v4763 = vld [vmem:[%s3 + $0x248] sm:$0xff]
  %v4764 = vld [vmem:[%s3 + $0x250] sm:$0xff]
  %v4765 = vld [vmem:[%s3 + $0x258] sm:$0xff]
  %v4766 = vld [vmem:[%s3 + $0x260] sm:$0xff]
  %v4767 = vld [vmem:[%s3 + $0x268] sm:$0xff]
  %v4768 = vld [vmem:[%s3 + $0x270] sm:$0xff]
  %v4769 = vld [vmem:[%s3 + $0x278] sm:$0xff]
  %v4770 = vld [vmem:[%s3 + $0x280] sm:$0xff]
  %v4771 = vld [vmem:[%s3 + $0x288] sm:$0xff]
  %v4772 = vld [vmem:[%s3 + $0x290] sm:$0xff]
  %v4773 = vld [vmem:[%s3 + $0x298] sm:$0xff]
  %v4774 = vld [vmem:[%s3 + $0x2a0] sm:$0xff]
  %v4775 = vld [vmem:[%s3 + $0x2a8] sm:$0xff]
  %v4776 = vld [vmem:[%s3 + $0x2b0] sm:$0xff]
  %v4777 = vld [vmem:[%s3 + $0x2b8] sm:$0xff]
  %v4778 = vld [vmem:[%s3 + $0x2c0] sm:$0xff]
  %v4779 = vld [vmem:[%s3 + $0x2c8] sm:$0xff]
  %v4780 = vld [vmem:[%s3 + $0x2d0] sm:$0xff]
  %v4781 = vld [vmem:[%s3 + $0x2d8] sm:$0xff]
  %v4782 = vld [vmem:[%s3 + $0x2e0] sm:$0xff]
  %v4783 = vld [vmem:[%s3 + $0x2e8] sm:$0xff]
  %v4784 = vld [vmem:[%s3 + $0x2f0] sm:$0xff]
  %v4785 = vld [vmem:[%s3 + $0x2f8] sm:$0xff]
  %v4786 = vld [vmem:[%s3 + $0x300] sm:$0xff]
  %v4787 = vld [vmem:[%s3 + $0x308] sm:$0xff]
  %v4788 = vld [vmem:[%s3 + $0x310] sm:$0xff]
  %v4789 = vld [vmem:[%s3 + $0x318] sm:$0xff]
  %v4790 = vld [vmem:[%s3 + $0x320] sm:$0xff]
  %v4791 = vld [vmem:[%s3 + $0x328] sm:$0xff]
  %v4792 = vld [vmem:[%s3 + $0x330] sm:$0xff]
  %v4793 = vld [vmem:[%s3 + $0x338] sm:$0xff]
  %v4794 = vld [vmem:[%s3 + $0x340] sm:$0xff]
  %v4795 = vld [vmem:[%s3 + $0x348] sm:$0xff]
  %v4796 = vld [vmem:[%s3 + $0x350] sm:$0xff]
  %v4797 = vld [vmem:[%s3 + $0x358] sm:$0xff]
  %v4798 = vld [vmem:[%s3 + $0x360] sm:$0xff]
  %v4799 = vld [vmem:[%s3 + $0x368] sm:$0xff]
  %v4800 = vld [vmem:[%s3 + $0x370] sm:$0xff]
  %v4801 = vld [vmem:[%s3 + $0x378] sm:$0xff]
  %v4802 = vld [vmem:[%s3 + $0x380] sm:$0xff]
  %v4803 = vld [vmem:[%s3 + $0x388] sm:$0xff]
  %v4804 = vld [vmem:[%s3 + $0x390] sm:$0xff]
  %v4805 = vld [vmem:[%s3 + $0x398] sm:$0xff]
  %v4806 = vld [vmem:[%s3 + $0x3a0] sm:$0xff]
  %v4807 = vld [vmem:[%s3 + $0x3a8] sm:$0xff]
  %v4808 = vld [vmem:[%s3 + $0x3b0] sm:$0xff]
  %v4809 = vld [vmem:[%s3 + $0x3b8] sm:$0xff]
  %v4810 = vld [vmem:[%s3 + $0x3c0] sm:$0xff]
  %v4811 = vld [vmem:[%s3 + $0x3c8] sm:$0xff]
  %v4812 = vld [vmem:[%s3 + $0x3d0] sm:$0xff]
  %v4813 = vld [vmem:[%s3 + $0x3d8] sm:$0xff]
  %v4814 = vld [vmem:[%s3 + $0x3e0] sm:$0xff]
  %v4815 = vld [vmem:[%s3 + $0x3e8] sm:$0xff]
  %v4816 = vld [vmem:[%s3 + $0x3f0] sm:$0xff]
  %v4817 = vld [vmem:[%s3 + $0x3f8] sm:$0xff]
  %v4818 = vld [vmem:[%s3 + $0x400] sm:$0xff]
  %v4819 = vld [vmem:[%s3 + $0x408] sm:$0xff]
  %v4820 = vld [vmem:[%s3 + $0x410] sm:$0xff]
  %v4821 = vld [vmem:[%s3 + $0x418] sm:$0xff]
  %v4822 = vld [vmem:[%s3 + $0x420] sm:$0xff]
  %v4823 = vld [vmem:[%s3 + $0x428] sm:$0xff]
  %v4824 = vld [vmem:[%s3 + $0x430] sm:$0xff]
  %v4825 = vld [vmem:[%s3 + $0x438] sm:$0xff]
  %v4826 = vld [vmem:[%s3 + $0x440] sm:$0xff]
  %v4827 = vld [vmem:[%s3 + $0x448] sm:$0xff]
  %v4828 = vld [vmem:[%s3 + $0x450] sm:$0xff]
  %v4829 = vld [vmem:[%s3 + $0x458] sm:$0xff]
  %v4830 = vld [vmem:[%s3 + $0x460] sm:$0xff]
  %v4831 = vld [vmem:[%s3 + $0x468] sm:$0xff]
  %v4832 = vld [vmem:[%s3 + $0x470] sm:$0xff]
  %v4833 = vld [vmem:[%s3 + $0x478] sm:$0xff]
  %v4834 = vld [vmem:[%s3 + $0x480] sm:$0xff]
  %v4835 = vld [vmem:[%s3 + $0x488] sm:$0xff]
  %v4836 = vld [vmem:[%s3 + $0x490] sm:$0xff]
  %v4837 = vld [vmem:[%s3 + $0x498] sm:$0xff]
  %v4838 = vld [vmem:[%s3 + $0x4a0] sm:$0xff]
  %v4839 = vld [vmem:[%s3 + $0x4a8] sm:$0xff]
  %v4840 = vld [vmem:[%s3 + $0x4b0] sm:$0xff]
  %v4841 = vld [vmem:[%s3 + $0x4b8] sm:$0xff]
  %v4842 = vld [vmem:[%s3 + $0x4c0] sm:$0xff]
  %v4843 = vld [vmem:[%s3 + $0x4c8] sm:$0xff]
  %v4844 = vld [vmem:[%s3 + $0x4d0] sm:$0xff]
  %v4845 = vld [vmem:[%s3 + $0x4d8] sm:$0xff]
  %v4846 = vld [vmem:[%s3 + $0x4e0] sm:$0xff]
  %v4847 = vld [vmem:[%s3 + $0x4e8] sm:$0xff]
  %v4848 = vld [vmem:[%s3 + $0x4f0] sm:$0xff]
  %v4849 = vld [vmem:[%s3 + $0x4f8] sm:$0xff]
  %v5010 = vunpack.c.l.b16 %v4690
  %v5011 = vunpack.c.h.b16 %v4690
  %v5012 = vunpack.c.l.b16 %v4691
  %v5013 = vunpack.c.h.b16 %v4691
  %v5014 = vunpack.c.l.b16 %v4692
  %v5015 = vunpack.c.h.b16 %v4692
  %v5016 = vunpack.c.l.b16 %v4693
  %v5017 = vunpack.c.h.b16 %v4693
  %v5018 = vunpack.c.l.b16 %v4694
  %v5019 = vunpack.c.h.b16 %v4694
  %v5020 = vunpack.c.l.b16 %v4695
  %v5021 = vunpack.c.h.b16 %v4695
  %v5022 = vunpack.c.l.b16 %v4696
  %v5023 = vunpack.c.h.b16 %v4696
  %v5024 = vunpack.c.l.b16 %v4697
  %v5025 = vunpack.c.h.b16 %v4697
  %v5026 = vunpack.c.l.b16 %v4698
  %v5027 = vunpack.c.h.b16 %v4698
  %v5028 = vunpack.c.l.b16 %v4699
  %v5029 = vunpack.c.h.b16 %v4699
  %v5030 = vunpack.c.l.b16 %v4700
  %v5031 = vunpack.c.h.b16 %v4700
  %v5032 = vunpack.c.l.b16 %v4701
  %v5033 = vunpack.c.h.b16 %v4701
  %v5034 = vunpack.c.l.b16 %v4702
  %v5035 = vunpack.c.h.b16 %v4702
  %v5036 = vunpack.c.l.b16 %v4703
  %v5037 = vunpack.c.h.b16 %v4703
  %v5038 = vunpack.c.l.b16 %v4704
  %v5039 = vunpack.c.h.b16 %v4704
  %v5040 = vunpack.c.l.b16 %v4705
  %v5041 = vunpack.c.h.b16 %v4705
  %v5042 = vunpack.c.l.b16 %v4706
  %v5043 = vunpack.c.h.b16 %v4706
  %v5044 = vunpack.c.l.b16 %v4707
  %v5045 = vunpack.c.h.b16 %v4707
  %v5046 = vunpack.c.l.b16 %v4708
  %v5047 = vunpack.c.h.b16 %v4708
  %v5048 = vunpack.c.l.b16 %v4709
  %v5049 = vunpack.c.h.b16 %v4709
  %v5050 = vunpack.c.l.b16 %v4710
  %v5051 = vunpack.c.h.b16 %v4710
  %v5052 = vunpack.c.l.b16 %v4711
  %v5053 = vunpack.c.h.b16 %v4711
  %v5054 = vunpack.c.l.b16 %v4712
  %v5055 = vunpack.c.h.b16 %v4712
  %v5056 = vunpack.c.l.b16 %v4713
  %v5057 = vunpack.c.h.b16 %v4713
  %v5058 = vunpack.c.l.b16 %v4714
  %v5059 = vunpack.c.h.b16 %v4714
  %v5060 = vunpack.c.l.b16 %v4715
  %v5061 = vunpack.c.h.b16 %v4715
  %v5062 = vunpack.c.l.b16 %v4716
  %v5063 = vunpack.c.h.b16 %v4716
  %v5064 = vunpack.c.l.b16 %v4717
  %v5065 = vunpack.c.h.b16 %v4717
  %v5066 = vunpack.c.l.b16 %v4718
  %v5067 = vunpack.c.h.b16 %v4718
  %v5068 = vunpack.c.l.b16 %v4719
  %v5069 = vunpack.c.h.b16 %v4719
  %v5070 = vunpack.c.l.b16 %v4720
  %v5071 = vunpack.c.h.b16 %v4720
  %v5072 = vunpack.c.l.b16 %v4721
  %v5073 = vunpack.c.h.b16 %v4721
  %v5074 = vunpack.c.l.b16 %v4722
  %v5075 = vunpack.c.h.b16 %v4722
  %v5076 = vunpack.c.l.b16 %v4723
  %v5077 = vunpack.c.h.b16 %v4723
  %v5078 = vunpack.c.l.b16 %v4724
  %v5079 = vunpack.c.h.b16 %v4724
  %v5080 = vunpack.c.l.b16 %v4725
  %v5081 = vunpack.c.h.b16 %v4725
  %v5082 = vunpack.c.l.b16 %v4726
  %v5083 = vunpack.c.h.b16 %v4726
  %v5084 = vunpack.c.l.b16 %v4727
  %v5085 = vunpack.c.h.b16 %v4727
  %v5086 = vunpack.c.l.b16 %v4728
  %v5087 = vunpack.c.h.b16 %v4728
  %v5088 = vunpack.c.l.b16 %v4729
  %v5089 = vunpack.c.h.b16 %v4729
  %v5090 = vunpack.c.l.b16 %v4730
  %v5091 = vunpack.c.h.b16 %v4730
  %v5092 = vunpack.c.l.b16 %v4731
  %v5093 = vunpack.c.h.b16 %v4731
  %v5094 = vunpack.c.l.b16 %v4732
  %v5095 = vunpack.c.h.b16 %v4732
  %v5096 = vunpack.c.l.b16 %v4733
  %v5097 = vunpack.c.h.b16 %v4733
  %v5098 = vunpack.c.l.b16 %v4734
  %v5099 = vunpack.c.h.b16 %v4734
  %v5100 = vunpack.c.l.b16 %v4735
  %v5101 = vunpack.c.h.b16 %v4735
  %v5102 = vunpack.c.l.b16 %v4736
  %v5103 = vunpack.c.h.b16 %v4736
  %v5104 = vunpack.c.l.b16 %v4737
  %v5105 = vunpack.c.h.b16 %v4737
  %v5106 = vunpack.c.l.b16 %v4738
  %v5107 = vunpack.c.h.b16 %v4738
  %v5108 = vunpack.c.l.b16 %v4739
  %v5109 = vunpack.c.h.b16 %v4739
  %v5110 = vunpack.c.l.b16 %v4740
  %v5111 = vunpack.c.h.b16 %v4740
  %v5112 = vunpack.c.l.b16 %v4741
  %v5113 = vunpack.c.h.b16 %v4741
  %v5114 = vunpack.c.l.b16 %v4742
  %v5115 = vunpack.c.h.b16 %v4742
  %v5116 = vunpack.c.l.b16 %v4743
  %v5117 = vunpack.c.h.b16 %v4743
  %v5118 = vunpack.c.l.b16 %v4744
  %v5119 = vunpack.c.h.b16 %v4744
  %v5120 = vunpack.c.l.b16 %v4745
  %v5121 = vunpack.c.h.b16 %v4745
  %v5122 = vunpack.c.l.b16 %v4746
  %v5123 = vunpack.c.h.b16 %v4746
  %v5124 = vunpack.c.l.b16 %v4747
  %v5125 = vunpack.c.h.b16 %v4747
  %v5126 = vunpack.c.l.b16 %v4748
  %v5127 = vunpack.c.h.b16 %v4748
  %v5128 = vunpack.c.l.b16 %v4749
  %v5129 = vunpack.c.h.b16 %v4749
  %v5130 = vunpack.c.l.b16 %v4750
  %v5131 = vunpack.c.h.b16 %v4750
  %v5132 = vunpack.c.l.b16 %v4751
  %v5133 = vunpack.c.h.b16 %v4751
  %v5134 = vunpack.c.l.b16 %v4752
  %v5135 = vunpack.c.h.b16 %v4752
  %v5136 = vunpack.c.l.b16 %v4753
  %v5137 = vunpack.c.h.b16 %v4753
  %v5138 = vunpack.c.l.b16 %v4754
  %v5139 = vunpack.c.h.b16 %v4754
  %v5140 = vunpack.c.l.b16 %v4755
  %v5141 = vunpack.c.h.b16 %v4755
  %v5142 = vunpack.c.l.b16 %v4756
  %v5143 = vunpack.c.h.b16 %v4756
  %v5144 = vunpack.c.l.b16 %v4757
  %v5145 = vunpack.c.h.b16 %v4757
  %v5146 = vunpack.c.l.b16 %v4758
  %v5147 = vunpack.c.h.b16 %v4758
  %v5148 = vunpack.c.l.b16 %v4759
  %v5149 = vunpack.c.h.b16 %v4759
  %v5150 = vunpack.c.l.b16 %v4760
  %v5151 = vunpack.c.h.b16 %v4760
  %v5152 = vunpack.c.l.b16 %v4761
  %v5153 = vunpack.c.h.b16 %v4761
  %v5154 = vunpack.c.l.b16 %v4762
  %v5155 = vunpack.c.h.b16 %v4762
  %v5156 = vunpack.c.l.b16 %v4763
  %v5157 = vunpack.c.h.b16 %v4763
  %v5158 = vunpack.c.l.b16 %v4764
  %v5159 = vunpack.c.h.b16 %v4764
  %v5160 = vunpack.c.l.b16 %v4765
  %v5161 = vunpack.c.h.b16 %v4765
  %v5162 = vunpack.c.l.b16 %v4766
  %v5163 = vunpack.c.h.b16 %v4766
  %v5164 = vunpack.c.l.b16 %v4767
  %v5165 = vunpack.c.h.b16 %v4767
  %v5166 = vunpack.c.l.b16 %v4768
  %v5167 = vunpack.c.h.b16 %v4768
  %v5168 = vunpack.c.l.b16 %v4769
  %v5169 = vunpack.c.h.b16 %v4769
  %v5170 = vunpack.c.l.b16 %v4770
  %v5171 = vunpack.c.h.b16 %v4770
  %v5172 = vunpack.c.l.b16 %v4771
  %v5173 = vunpack.c.h.b16 %v4771
  %v5174 = vunpack.c.l.b16 %v4772
  %v5175 = vunpack.c.h.b16 %v4772
  %v5176 = vunpack.c.l.b16 %v4773
  %v5177 = vunpack.c.h.b16 %v4773
  %v5178 = vunpack.c.l.b16 %v4774
  %v5179 = vunpack.c.h.b16 %v4774
  %v5180 = vunpack.c.l.b16 %v4775
  %v5181 = vunpack.c.h.b16 %v4775
  %v5182 = vunpack.c.l.b16 %v4776
  %v5183 = vunpack.c.h.b16 %v4776
  %v5184 = vunpack.c.l.b16 %v4777
  %v5185 = vunpack.c.h.b16 %v4777
  %v5186 = vunpack.c.l.b16 %v4778
  %v5187 = vunpack.c.h.b16 %v4778
  %v5188 = vunpack.c.l.b16 %v4779
  %v5189 = vunpack.c.h.b16 %v4779
  %v5190 = vunpack.c.l.b16 %v4780
  %v5191 = vunpack.c.h.b16 %v4780
  %v5192 = vunpack.c.l.b16 %v4781
  %v5193 = vunpack.c.h.b16 %v4781
  %v5194 = vunpack.c.l.b16 %v4782
  %v5195 = vunpack.c.h.b16 %v4782
  %v5196 = vunpack.c.l.b16 %v4783
  %v5197 = vunpack.c.h.b16 %v4783
  %v5198 = vunpack.c.l.b16 %v4784
  %v5199 = vunpack.c.h.b16 %v4784
  %v5200 = vunpack.c.l.b16 %v4785
  %v5201 = vunpack.c.h.b16 %v4785
  %v5202 = vunpack.c.l.b16 %v4786
  %v5203 = vunpack.c.h.b16 %v4786
  %v5204 = vunpack.c.l.b16 %v4787
  %v5205 = vunpack.c.h.b16 %v4787
  %v5206 = vunpack.c.l.b16 %v4788
  %v5207 = vunpack.c.h.b16 %v4788
  %v5208 = vunpack.c.l.b16 %v4789
  %v5209 = vunpack.c.h.b16 %v4789
  %v5210 = vunpack.c.l.b16 %v4790
  %v5211 = vunpack.c.h.b16 %v4790
  %v5212 = vunpack.c.l.b16 %v4791
  %v5213 = vunpack.c.h.b16 %v4791
  %v5214 = vunpack.c.l.b16 %v4792
  %v5215 = vunpack.c.h.b16 %v4792
  %v5216 = vunpack.c.l.b16 %v4793
  %v5217 = vunpack.c.h.b16 %v4793
  %v5218 = vunpack.c.l.b16 %v4794
  %v5219 = vunpack.c.h.b16 %v4794
  %v5220 = vunpack.c.l.b16 %v4795
  %v5221 = vunpack.c.h.b16 %v4795
  %v5222 = vunpack.c.l.b16 %v4796
  %v5223 = vunpack.c.h.b16 %v4796
  %v5224 = vunpack.c.l.b16 %v4797
  %v5225 = vunpack.c.h.b16 %v4797
  %v5226 = vunpack.c.l.b16 %v4798
  %v5227 = vunpack.c.h.b16 %v4798
  %v5228 = vunpack.c.l.b16 %v4799
  %v5229 = vunpack.c.h.b16 %v4799
  %v5230 = vunpack.c.l.b16 %v4800
  %v5231 = vunpack.c.h.b16 %v4800
  %v5232 = vunpack.c.l.b16 %v4801
  %v5233 = vunpack.c.h.b16 %v4801
  %v5234 = vunpack.c.l.b16 %v4802
  %v5235 = vunpack.c.h.b16 %v4802
  %v5236 = vunpack.c.l.b16 %v4803
  %v5237 = vunpack.c.h.b16 %v4803
  %v5238 = vunpack.c.l.b16 %v4804
  %v5239 = vunpack.c.h.b16 %v4804
  %v5240 = vunpack.c.l.b16 %v4805
  %v5241 = vunpack.c.h.b16 %v4805
  %v5242 = vunpack.c.l.b16 %v4806
  %v5243 = vunpack.c.h.b16 %v4806
  %v5244 = vunpack.c.l.b16 %v4807
  %v5245 = vunpack.c.h.b16 %v4807
  %v5246 = vunpack.c.l.b16 %v4808
  %v5247 = vunpack.c.h.b16 %v4808
  %v5248 = vunpack.c.l.b16 %v4809
  %v5249 = vunpack.c.h.b16 %v4809
  %v5250 = vunpack.c.l.b16 %v4810
  %v5251 = vunpack.c.h.b16 %v4810
  %v5252 = vunpack.c.l.b16 %v4811
  %v5253 = vunpack.c.h.b16 %v4811
  %v5254 = vunpack.c.l.b16 %v4812
  %v5255 = vunpack.c.h.b16 %v4812
  %v5256 = vunpack.c.l.b16 %v4813
  %v5257 = vunpack.c.h.b16 %v4813
  %v5258 = vunpack.c.l.b16 %v4814
  %v5259 = vunpack.c.h.b16 %v4814
  %v5260 = vunpack.c.l.b16 %v4815
  %v5261 = vunpack.c.h.b16 %v4815
  %v5262 = vunpack.c.l.b16 %v4816
  %v5263 = vunpack.c.h.b16 %v4816
  %v5264 = vunpack.c.l.b16 %v4817
  %v5265 = vunpack.c.h.b16 %v4817
  %v5266 = vunpack.c.l.b16 %v4818
  %v5267 = vunpack.c.h.b16 %v4818
  %v5268 = vunpack.c.l.b16 %v4819
  %v5269 = vunpack.c.h.b16 %v4819
  %v5270 = vunpack.c.l.b16 %v4820
  %v5271 = vunpack.c.h.b16 %v4820
  %v5272 = vunpack.c.l.b16 %v4821
  %v5273 = vunpack.c.h.b16 %v4821
  %v5274 = vunpack.c.l.b16 %v4822
  %v5275 = vunpack.c.h.b16 %v4822
  %v5276 = vunpack.c.l.b16 %v4823
  %v5277 = vunpack.c.h.b16 %v4823
  %v5278 = vunpack.c.l.b16 %v4824
  %v5279 = vunpack.c.h.b16 %v4824
  %v5280 = vunpack.c.l.b16 %v4825
  %v5281 = vunpack.c.h.b16 %v4825
  %v5282 = vunpack.c.l.b16 %v4826
  %v5283 = vunpack.c.h.b16 %v4826
  %v5284 = vunpack.c.l.b16 %v4827
  %v5285 = vunpack.c.h.b16 %v4827
  %v5286 = vunpack.c.l.b16 %v4828
  %v5287 = vunpack.c.h.b16 %v4828
  %v5288 = vunpack.c.l.b16 %v4829
  %v5289 = vunpack.c.h.b16 %v4829
  %v5290 = vunpack.c.l.b16 %v4830
  %v5291 = vunpack.c.h.b16 %v4830
  %v5292 = vunpack.c.l.b16 %v4831
  %v5293 = vunpack.c.h.b16 %v4831
  %v5294 = vunpack.c.l.b16 %v4832
  %v5295 = vunpack.c.h.b16 %v4832
  %v5296 = vunpack.c.l.b16 %v4833
  %v5297 = vunpack.c.h.b16 %v4833
  %v5298 = vunpack.c.l.b16 %v4834
  %v5299 = vunpack.c.h.b16 %v4834
  %v5300 = vunpack.c.l.b16 %v4835
  %v5301 = vunpack.c.h.b16 %v4835
  %v5302 = vunpack.c.l.b16 %v4836
  %v5303 = vunpack.c.h.b16 %v4836
  %v5304 = vunpack.c.l.b16 %v4837
  %v5305 = vunpack.c.h.b16 %v4837
  %v5306 = vunpack.c.l.b16 %v4838
  %v5307 = vunpack.c.h.b16 %v4838
  %v5308 = vunpack.c.l.b16 %v4839
  %v5309 = vunpack.c.h.b16 %v4839
  %v5310 = vunpack.c.l.b16 %v4840
  %v5311 = vunpack.c.h.b16 %v4840
  %v5312 = vunpack.c.l.b16 %v4841
  %v5313 = vunpack.c.h.b16 %v4841
  %v5314 = vunpack.c.l.b16 %v4842
  %v5315 = vunpack.c.h.b16 %v4842
  %v5316 = vunpack.c.l.b16 %v4843
  %v5317 = vunpack.c.h.b16 %v4843
  %v5318 = vunpack.c.l.b16 %v4844
  %v5319 = vunpack.c.h.b16 %v4844
  %v5320 = vunpack.c.l.b16 %v4845
  %v5321 = vunpack.c.h.b16 %v4845
  %v5322 = vunpack.c.l.b16 %v4846
  %v5323 = vunpack.c.h.b16 %v4846
  %v5324 = vunpack.c.l.b16 %v4847
  %v5325 = vunpack.c.h.b16 %v4847
  %v5326 = vunpack.c.l.b16 %v4848
  %v5327 = vunpack.c.h.b16 %v4848
  %v5328 = vunpack.c.l.b16 %v4849
  %v5329 = vunpack.c.h.b16 %v4849
  %v5330 = vpack.c.b16 %v5020, %v5010
  %v5331 = vpack.c.b16 %v5021, %v5011
  %v5332 = vpack.c.b16 %v5022, %v5012
  %v5333 = vpack.c.b16 %v5023, %v5013
  %v5334 = vpack.c.b16 %v5024, %v5014
  %v5335 = vpack.c.b16 %v5025, %v5015
  %v5336 = vpack.c.b16 %v5026, %v5016
  %v5337 = vpack.c.b16 %v5027, %v5017
  %v5338 = vpack.c.b16 %v5028, %v5018
  %v5339 = vpack.c.b16 %v5029, %v5019
  %v5340 = vpack.c.b16 %v5040, %v5030
  %v5341 = vpack.c.b16 %v5041, %v5031
  %v5342 = vpack.c.b16 %v5042, %v5032
  %v5343 = vpack.c.b16 %v5043, %v5033
  %v5344 = vpack.c.b16 %v5044, %v5034
  %v5345 = vpack.c.b16 %v5045, %v5035
  %v5346 = vpack.c.b16 %v5046, %v5036
  %v5347 = vpack.c.b16 %v5047, %v5037
  %v5348 = vpack.c.b16 %v5048, %v5038
  %v5349 = vpack.c.b16 %v5049, %v5039
  %v5350 = vpack.c.b16 %v5060, %v5050
  %v5351 = vpack.c.b16 %v5061, %v5051
  %v5352 = vpack.c.b16 %v5062, %v5052
  %v5353 = vpack.c.b16 %v5063, %v5053
  %v5354 = vpack.c.b16 %v5064, %v5054
  %v5355 = vpack.c.b16 %v5065, %v5055
  %v5356 = vpack.c.b16 %v5066, %v5056
  %v5357 = vpack.c.b16 %v5067, %v5057
  %v5358 = vpack.c.b16 %v5068, %v5058
  %v5359 = vpack.c.b16 %v5069, %v5059
  %v5360 = vpack.c.b16 %v5080, %v5070
  %v5361 = vpack.c.b16 %v5081, %v5071
  %v5362 = vpack.c.b16 %v5082, %v5072
  %v5363 = vpack.c.b16 %v5083, %v5073
  %v5364 = vpack.c.b16 %v5084, %v5074
  %v5365 = vpack.c.b16 %v5085, %v5075
  %v5366 = vpack.c.b16 %v5086, %v5076
  %v5367 = vpack.c.b16 %v5087, %v5077
  %v5368 = vpack.c.b16 %v5088, %v5078
  %v5369 = vpack.c.b16 %v5089, %v5079
  %v5370 = vpack.c.b16 %v5100, %v5090
  %v5371 = vpack.c.b16 %v5101, %v5091
  %v5372 = vpack.c.b16 %v5102, %v5092
  %v5373 = vpack.c.b16 %v5103, %v5093
  %v5374 = vpack.c.b16 %v5104, %v5094
  %v5375 = vpack.c.b16 %v5105, %v5095
  %v5376 = vpack.c.b16 %v5106, %v5096
  %v5377 = vpack.c.b16 %v5107, %v5097
  %v5378 = vpack.c.b16 %v5108, %v5098
  %v5379 = vpack.c.b16 %v5109, %v5099
  %v5380 = vpack.c.b16 %v5120, %v5110
  %v5381 = vpack.c.b16 %v5121, %v5111
  %v5382 = vpack.c.b16 %v5122, %v5112
  %v5383 = vpack.c.b16 %v5123, %v5113
  %v5384 = vpack.c.b16 %v5124, %v5114
  %v5385 = vpack.c.b16 %v5125, %v5115
  %v5386 = vpack.c.b16 %v5126, %v5116
  %v5387 = vpack.c.b16 %v5127, %v5117
  %v5388 = vpack.c.b16 %v5128, %v5118
  %v5389 = vpack.c.b16 %v5129, %v5119
  %v5390 = vpack.c.b16 %v5140, %v5130
  %v5391 = vpack.c.b16 %v5141, %v5131
  %v5392 = vpack.c.b16 %v5142, %v5132
  %v5393 = vpack.c.b16 %v5143, %v5133
  %v5394 = vpack.c.b16 %v5144, %v5134
  %v5395 = vpack.c.b16 %v5145, %v5135
  %v5396 = vpack.c.b16 %v5146, %v5136
  %v5397 = vpack.c.b16 %v5147, %v5137
  %v5398 = vpack.c.b16 %v5148, %v5138
  %v5399 = vpack.c.b16 %v5149, %v5139
  %v5400 = vpack.c.b16 %v5160, %v5150
  %v5401 = vpack.c.b16 %v5161, %v5151
  %v5402 = vpack.c.b16 %v5162, %v5152
  %v5403 = vpack.c.b16 %v5163, %v5153
  %v5404 = vpack.c.b16 %v5164, %v5154
  %v5405 = vpack.c.b16 %v5165, %v5155
  %v5406 = vpack.c.b16 %v5166, %v5156
  %v5407 = vpack.c.b16 %v5167, %v5157
  %v5408 = vpack.c.b16 %v5168, %v5158
  %v5409 = vpack.c.b16 %v5169, %v5159
  %v5410 = vpack.c.b16 %v5180, %v5170
  %v5411 = vpack.c.b16 %v5181, %v5171
  %v5412 = vpack.c.b16 %v5182, %v5172
  %v5413 = vpack.c.b16 %v5183, %v5173
  %v5414 = vpack.c.b16 %v5184, %v5174
  %v5415 = vpack.c.b16 %v5185, %v5175
  %v5416 = vpack.c.b16 %v5186, %v5176
  %v5417 = vpack.c.b16 %v5187, %v5177
  %v5418 = vpack.c.b16 %v5188, %v5178
  %v5419 = vpack.c.b16 %v5189, %v5179
  %v5420 = vpack.c.b16 %v5200, %v5190
  %v5421 = vpack.c.b16 %v5201, %v5191
  %v5422 = vpack.c.b16 %v5202, %v5192
  %v5423 = vpack.c.b16 %v5203, %v5193
  %v5424 = vpack.c.b16 %v5204, %v5194
  %v5425 = vpack.c.b16 %v5205, %v5195
  %v5426 = vpack.c.b16 %v5206, %v5196
  %v5427 = vpack.c.b16 %v5207, %v5197
  %v5428 = vpack.c.b16 %v5208, %v5198
  %v5429 = vpack.c.b16 %v5209, %v5199
  %v5430 = vpack.c.b16 %v5220, %v5210
  %v5431 = vpack.c.b16 %v5221, %v5211
  %v5432 = vpack.c.b16 %v5222, %v5212
  %v5433 = vpack.c.b16 %v5223, %v5213
  %v5434 = vpack.c.b16 %v5224, %v5214
  %v5435 = vpack.c.b16 %v5225, %v5215
  %v5436 = vpack.c.b16 %v5226, %v5216
  %v5437 = vpack.c.b16 %v5227, %v5217
  %v5438 = vpack.c.b16 %v5228, %v5218
  %v5439 = vpack.c.b16 %v5229, %v5219
  %v5440 = vpack.c.b16 %v5240, %v5230
  %v5441 = vpack.c.b16 %v5241, %v5231
  %v5442 = vpack.c.b16 %v5242, %v5232
  %v5443 = vpack.c.b16 %v5243, %v5233
  %v5444 = vpack.c.b16 %v5244, %v5234
  %v5445 = vpack.c.b16 %v5245, %v5235
  %v5446 = vpack.c.b16 %v5246, %v5236
  %v5447 = vpack.c.b16 %v5247, %v5237
  %v5448 = vpack.c.b16 %v5248, %v5238
  %v5449 = vpack.c.b16 %v5249, %v5239
  %v5450 = vpack.c.b16 %v5260, %v5250
  %v5451 = vpack.c.b16 %v5261, %v5251
  %v5452 = vpack.c.b16 %v5262, %v5252
  %v5453 = vpack.c.b16 %v5263, %v5253
  %v5454 = vpack.c.b16 %v5264, %v5254
  %v5455 = vpack.c.b16 %v5265, %v5255
  %v5456 = vpack.c.b16 %v5266, %v5256
  %v5457 = vpack.c.b16 %v5267, %v5257
  %v5458 = vpack.c.b16 %v5268, %v5258
  %v5459 = vpack.c.b16 %v5269, %v5259
  %v5460 = vpack.c.b16 %v5280, %v5270
  %v5461 = vpack.c.b16 %v5281, %v5271
  %v5462 = vpack.c.b16 %v5282, %v5272
  %v5463 = vpack.c.b16 %v5283, %v5273
  %v5464 = vpack.c.b16 %v5284, %v5274
  %v5465 = vpack.c.b16 %v5285, %v5275
  %v5466 = vpack.c.b16 %v5286, %v5276
  %v5467 = vpack.c.b16 %v5287, %v5277
  %v5468 = vpack.c.b16 %v5288, %v5278
  %v5469 = vpack.c.b16 %v5289, %v5279
  %v5470 = vpack.c.b16 %v5300, %v5290
  %v5471 = vpack.c.b16 %v5301, %v5291
  %v5472 = vpack.c.b16 %v5302, %v5292
  %v5473 = vpack.c.b16 %v5303, %v5293
  %v5474 = vpack.c.b16 %v5304, %v5294
  %v5475 = vpack.c.b16 %v5305, %v5295
  %v5476 = vpack.c.b16 %v5306, %v5296
  %v5477 = vpack.c.b16 %v5307, %v5297
  %v5478 = vpack.c.b16 %v5308, %v5298
  %v5479 = vpack.c.b16 %v5309, %v5299
  %v5480 = vpack.c.b16 %v5320, %v5310
  %v5481 = vpack.c.b16 %v5321, %v5311
  %v5482 = vpack.c.b16 %v5322, %v5312
  %v5483 = vpack.c.b16 %v5323, %v5313
  %v5484 = vpack.c.b16 %v5324, %v5314
  %v5485 = vpack.c.b16 %v5325, %v5315
  %v5486 = vpack.c.b16 %v5326, %v5316
  %v5487 = vpack.c.b16 %v5327, %v5317
  %v5488 = vpack.c.b16 %v5328, %v5318
  %v5489 = vpack.c.b16 %v5329, %v5319
  %5650 = vmatpush.bf16.msra.mxu0 %v5400
  %5651 = vmatpush.bf16.msra.mxu0 %v5390
  %5652 = vmatpush.bf16.msra.mxu0 %v5380
  %5653 = vmatpush.bf16.msra.mxu0 %v5370
  %5654 = vmatpush.bf16.msra.mxu0 %v5360
  %5655 = vmatpush.bf16.msra.mxu0 %v5350
  %5656 = vmatpush.bf16.msra.mxu0 %v5340
  %5657 = vmatpush.bf16.msra.mxu0 %v5330
  %5658 = vmatmul.bf16.gmra.mxu0 %v4688
  %v5659 = vpop.f32.mrf.mxu0
  %v5660 = vadd.f32 0.0, %v5659
  %v5661 = vpop.f32.mrf.mxu0
  %5662 = vdwg.mxu0
  %5663 = vmatpush.bf16.msra.mxu0 %v5480
  %5664 = vmatpush.bf16.msra.mxu0 %v5470
  %5665 = vmatpush.bf16.msra.mxu0 %v5460
  %5666 = vmatpush.bf16.msra.mxu0 %v5450
  %5667 = vmatpush.bf16.msra.mxu0 %v5440
  %5668 = vmatpush.bf16.msra.mxu0 %v5430
  %5669 = vmatpush.bf16.msra.mxu0 %v5420
  %5670 = vmatpush.bf16.msra.mxu0 %v5410
  %5671 = vmatmul.bf16.gmra.mxu0 %v4689
  %v5672 = vpop.f32.mrf.mxu0
  %v5673 = vadd.f32 %v5660, %v5672
  %v5674 = vpop.f32.mrf.mxu0
  %5675 = vdwg.mxu0
  %5676 = vmatpush.bf16.msra.mxu0 %v5401
  %5677 = vmatpush.bf16.msra.mxu0 %v5391
  %5678 = vmatpush.bf16.msra.mxu0 %v5381
  %5679 = vmatpush.bf16.msra.mxu0 %v5371
  %5680 = vmatpush.bf16.msra.mxu0 %v5361
  %5681 = vmatpush.bf16.msra.mxu0 %v5351
  %5682 = vmatpush.bf16.msra.mxu0 %v5341
  %5683 = vmatpush.bf16.msra.mxu0 %v5331
  %5684 = vmatmul.bf16.gmra.mxu0 %v4688
  %v5685 = vpop.f32.mrf.mxu0
  %v5686 = vadd.f32 0.0, %v5685
  %v5687 = vpop.f32.mrf.mxu0
  %5688 = vdwg.mxu0
  %5689 = vmatpush.bf16.msra.mxu0 %v5481
  %5690 = vmatpush.bf16.msra.mxu0 %v5471
  %5691 = vmatpush.bf16.msra.mxu0 %v5461
  %5692 = vmatpush.bf16.msra.mxu0 %v5451
  %5693 = vmatpush.bf16.msra.mxu0 %v5441
  %5694 = vmatpush.bf16.msra.mxu0 %v5431
  %5695 = vmatpush.bf16.msra.mxu0 %v5421
  %5696 = vmatpush.bf16.msra.mxu0 %v5411
  %5697 = vmatmul.bf16.gmra.mxu0 %v4689
  %v5698 = vpop.f32.mrf.mxu0
  %v5699 = vadd.f32 %v5686, %v5698
  %v5700 = vpop.f32.mrf.mxu0
  %5701 = vdwg.mxu0
  %5702 = vmatpush.bf16.msra.mxu0 %v5402
  %5703 = vmatpush.bf16.msra.mxu0 %v5392
  %5704 = vmatpush.bf16.msra.mxu0 %v5382
  %5705 = vmatpush.bf16.msra.mxu0 %v5372
  %5706 = vmatpush.bf16.msra.mxu0 %v5362
  %5707 = vmatpush.bf16.msra.mxu0 %v5352
  %5708 = vmatpush.bf16.msra.mxu0 %v5342
  %5709 = vmatpush.bf16.msra.mxu0 %v5332
  %5710 = vmatmul.bf16.gmra.mxu0 %v4688
  %v5711 = vpop.f32.mrf.mxu0
  %v5712 = vadd.f32 0.0, %v5711
  %v5713 = vpop.f32.mrf.mxu0
  %5714 = vdwg.mxu0
  %5715 = vmatpush.bf16.msra.mxu0 %v5482
  %5716 = vmatpush.bf16.msra.mxu0 %v5472
  %5717 = vmatpush.bf16.msra.mxu0 %v5462
  %5718 = vmatpush.bf16.msra.mxu0 %v5452
  %5719 = vmatpush.bf16.msra.mxu0 %v5442
  %5720 = vmatpush.bf16.msra.mxu0 %v5432
  %5721 = vmatpush.bf16.msra.mxu0 %v5422
  %5722 = vmatpush.bf16.msra.mxu0 %v5412
  %5723 = vmatmul.bf16.gmra.mxu0 %v4689
  %v5724 = vpop.f32.mrf.mxu0
  %v5725 = vadd.f32 %v5712, %v5724
  %v5726 = vpop.f32.mrf.mxu0
  %5727 = vdwg.mxu0
  %5728 = vmatpush.bf16.msra.mxu0 %v5403
  %5729 = vmatpush.bf16.msra.mxu0 %v5393
  %5730 = vmatpush.bf16.msra.mxu0 %v5383
  %5731 = vmatpush.bf16.msra.mxu0 %v5373
  %5732 = vmatpush.bf16.msra.mxu0 %v5363
  %5733 = vmatpush.bf16.msra.mxu0 %v5353
  %5734 = vmatpush.bf16.msra.mxu0 %v5343
  %5735 = vmatpush.bf16.msra.mxu0 %v5333
  %5736 = vmatmul.bf16.gmra.mxu0 %v4688
  %v5737 = vpop.f32.mrf.mxu0
  %v5738 = vadd.f32 0.0, %v5737
  %v5739 = vpop.f32.mrf.mxu0
  %5740 = vdwg.mxu0
  %5741 = vmatpush.bf16.msra.mxu0 %v5483
  %5742 = vmatpush.bf16.msra.mxu0 %v5473
  %5743 = vmatpush.bf16.msra.mxu0 %v5463
  %5744 = vmatpush.bf16.msra.mxu0 %v5453
  %5745 = vmatpush.bf16.msra.mxu0 %v5443
  %5746 = vmatpush.bf16.msra.mxu0 %v5433
  %5747 = vmatpush.bf16.msra.mxu0 %v5423
  %5748 = vmatpush.bf16.msra.mxu0 %v5413
  %5749 = vmatmul.bf16.gmra.mxu0 %v4689
  %v5750 = vpop.f32.mrf.mxu0
  %v5751 = vadd.f32 %v5738, %v5750
  %v5752 = vpop.f32.mrf.mxu0
  %5753 = vdwg.mxu0
  %5754 = vmatpush.bf16.msra.mxu0 %v5404
  %5755 = vmatpush.bf16.msra.mxu0 %v5394
  %5756 = vmatpush.bf16.msra.mxu0 %v5384
  %5757 = vmatpush.bf16.msra.mxu0 %v5374
  %5758 = vmatpush.bf16.msra.mxu0 %v5364
  %5759 = vmatpush.bf16.msra.mxu0 %v5354
  %5760 = vmatpush.bf16.msra.mxu0 %v5344
  %5761 = vmatpush.bf16.msra.mxu0 %v5334
  %5762 = vmatmul.bf16.gmra.mxu0 %v4688
  %v5763 = vpop.f32.mrf.mxu0
  %v5764 = vadd.f32 0.0, %v5763
  %v5765 = vpop.f32.mrf.mxu0
  %5766 = vdwg.mxu0
  %5767 = vmatpush.bf16.msra.mxu0 %v5484
  %5768 = vmatpush.bf16.msra.mxu0 %v5474
  %5769 = vmatpush.bf16.msra.mxu0 %v5464
  %5770 = vmatpush.bf16.msra.mxu0 %v5454
  %5771 = vmatpush.bf16.msra.mxu0 %v5444
  %5772 = vmatpush.bf16.msra.mxu0 %v5434
  %5773 = vmatpush.bf16.msra.mxu0 %v5424
  %5774 = vmatpush.bf16.msra.mxu0 %v5414
  %5775 = vmatmul.bf16.gmra.mxu0 %v4689
  %v5776 = vpop.f32.mrf.mxu0
  %v5777 = vadd.f32 %v5764, %v5776
  %v5778 = vpop.f32.mrf.mxu0
  %5779 = vdwg.mxu0
  %5780 = vmatpush.bf16.msra.mxu0 %v5405
  %5781 = vmatpush.bf16.msra.mxu0 %v5395
  %5782 = vmatpush.bf16.msra.mxu0 %v5385
  %5783 = vmatpush.bf16.msra.mxu0 %v5375
  %5784 = vmatpush.bf16.msra.mxu0 %v5365
  %5785 = vmatpush.bf16.msra.mxu0 %v5355
  %5786 = vmatpush.bf16.msra.mxu0 %v5345
  %5787 = vmatpush.bf16.msra.mxu0 %v5335
  %5788 = vmatmul.bf16.gmra.mxu0 %v4688
  %v5789 = vpop.f32.mrf.mxu0
  %v5790 = vadd.f32 0.0, %v5789
  %v5791 = vpop.f32.mrf.mxu0
  %5792 = vdwg.mxu0
  %5793 = vmatpush.bf16.msra.mxu0 %v5485
  %5794 = vmatpush.bf16.msra.mxu0 %v5475
  %5795 = vmatpush.bf16.msra.mxu0 %v5465
  %5796 = vmatpush.bf16.msra.mxu0 %v5455
  %5797 = vmatpush.bf16.msra.mxu0 %v5445
  %5798 = vmatpush.bf16.msra.mxu0 %v5435
  %5799 = vmatpush.bf16.msra.mxu0 %v5425
  %5800 = vmatpush.bf16.msra.mxu0 %v5415
  %5801 = vmatmul.bf16.gmra.mxu0 %v4689
  %v5802 = vpop.f32.mrf.mxu0
  %v5803 = vadd.f32 %v5790, %v5802
  %v5804 = vpop.f32.mrf.mxu0
  %5805 = vdwg.mxu0
  %5806 = vmatpush.bf16.msra.mxu0 %v5406
  %5807 = vmatpush.bf16.msra.mxu0 %v5396
  %5808 = vmatpush.bf16.msra.mxu0 %v5386
  %5809 = vmatpush.bf16.msra.mxu0 %v5376
  %5810 = vmatpush.bf16.msra.mxu0 %v5366
  %5811 = vmatpush.bf16.msra.mxu0 %v5356
  %5812 = vmatpush.bf16.msra.mxu0 %v5346
  %5813 = vmatpush.bf16.msra.mxu0 %v5336
  %5814 = vmatmul.bf16.gmra.mxu0 %v4688
  %v5815 = vpop.f32.mrf.mxu0
  %v5816 = vadd.f32 0.0, %v5815
  %v5817 = vpop.f32.mrf.mxu0
  %5818 = vdwg.mxu0
  %5819 = vmatpush.bf16.msra.mxu0 %v5486
  %5820 = vmatpush.bf16.msra.mxu0 %v5476
  %5821 = vmatpush.bf16.msra.mxu0 %v5466
  %5822 = vmatpush.bf16.msra.mxu0 %v5456
  %5823 = vmatpush.bf16.msra.mxu0 %v5446
  %5824 = vmatpush.bf16.msra.mxu0 %v5436
  %5825 = vmatpush.bf16.msra.mxu0 %v5426
  %5826 = vmatpush.bf16.msra.mxu0 %v5416
  %5827 = vmatmul.bf16.gmra.mxu0 %v4689
  %v5828 = vpop.f32.mrf.mxu0
  %v5829 = vadd.f32 %v5816, %v5828
  %v5830 = vpop.f32.mrf.mxu0
  %5831 = vdwg.mxu0
  %5832 = vmatpush.bf16.msra.mxu0 %v5407
  %5833 = vmatpush.bf16.msra.mxu0 %v5397
  %5834 = vmatpush.bf16.msra.mxu0 %v5387
  %5835 = vmatpush.bf16.msra.mxu0 %v5377
  %5836 = vmatpush.bf16.msra.mxu0 %v5367
  %5837 = vmatpush.bf16.msra.mxu0 %v5357
  %5838 = vmatpush.bf16.msra.mxu0 %v5347
  %5839 = vmatpush.bf16.msra.mxu0 %v5337
  %5840 = vmatmul.bf16.gmra.mxu0 %v4688
  %v5841 = vpop.f32.mrf.mxu0
  %v5842 = vadd.f32 0.0, %v5841
  %v5843 = vpop.f32.mrf.mxu0
  %5844 = vdwg.mxu0
  %5845 = vmatpush.bf16.msra.mxu0 %v5487
  %5846 = vmatpush.bf16.msra.mxu0 %v5477
  %5847 = vmatpush.bf16.msra.mxu0 %v5467
  %5848 = vmatpush.bf16.msra.mxu0 %v5457
  %5849 = vmatpush.bf16.msra.mxu0 %v5447
  %5850 = vmatpush.bf16.msra.mxu0 %v5437
  %5851 = vmatpush.bf16.msra.mxu0 %v5427
  %5852 = vmatpush.bf16.msra.mxu0 %v5417
  %5853 = vmatmul.bf16.gmra.mxu0 %v4689
  %v5854 = vpop.f32.mrf.mxu0
  %v5855 = vadd.f32 %v5842, %v5854
  %v5856 = vpop.f32.mrf.mxu0
  %5857 = vdwg.mxu0
  %5858 = vmatpush.bf16.msra.mxu0 %v5408
  %5859 = vmatpush.bf16.msra.mxu0 %v5398
  %5860 = vmatpush.bf16.msra.mxu0 %v5388
  %5861 = vmatpush.bf16.msra.mxu0 %v5378
  %5862 = vmatpush.bf16.msra.mxu0 %v5368
  %5863 = vmatpush.bf16.msra.mxu0 %v5358
  %5864 = vmatpush.bf16.msra.mxu0 %v5348
  %5865 = vmatpush.bf16.msra.mxu0 %v5338
  %5866 = vmatmul.bf16.gmra.mxu0 %v4688
  %v5867 = vpop.f32.mrf.mxu0
  %v5868 = vadd.f32 0.0, %v5867
  %v5869 = vpop.f32.mrf.mxu0
  %5870 = vdwg.mxu0
  %5871 = vmatpush.bf16.msra.mxu0 %v5488
  %5872 = vmatpush.bf16.msra.mxu0 %v5478
  %5873 = vmatpush.bf16.msra.mxu0 %v5468
  %5874 = vmatpush.bf16.msra.mxu0 %v5458
  %5875 = vmatpush.bf16.msra.mxu0 %v5448
  %5876 = vmatpush.bf16.msra.mxu0 %v5438
  %5877 = vmatpush.bf16.msra.mxu0 %v5428
  %5878 = vmatpush.bf16.msra.mxu0 %v5418
  %5879 = vmatmul.bf16.gmra.mxu0 %v4689
  %v5880 = vpop.f32.mrf.mxu0
  %v5881 = vadd.f32 %v5868, %v5880
  %v5882 = vpop.f32.mrf.mxu0
  %5883 = vdwg.mxu0
  %5884 = vmatpush.bf16.msra.mxu0 %v5409
  %5885 = vmatpush.bf16.msra.mxu0 %v5399
  %5886 = vmatpush.bf16.msra.mxu0 %v5389
  %5887 = vmatpush.bf16.msra.mxu0 %v5379
  %5888 = vmatpush.bf16.msra.mxu0 %v5369
  %5889 = vmatpush.bf16.msra.mxu0 %v5359
  %5890 = vmatpush.bf16.msra.mxu0 %v5349
  %5891 = vmatpush.bf16.msra.mxu0 %v5339
  %5892 = vmatmul.bf16.gmra.mxu0 %v4688
  %v5893 = vpop.f32.mrf.mxu0
  %v5894 = vadd.f32 0.0, %v5893
  %v5895 = vpop.f32.mrf.mxu0
  %5896 = vdwg.mxu0
  %5897 = vmatpush.bf16.msra.mxu0 %v5489
  %5898 = vmatpush.bf16.msra.mxu0 %v5479
  %5899 = vmatpush.bf16.msra.mxu0 %v5469
  %5900 = vmatpush.bf16.msra.mxu0 %v5459
  %5901 = vmatpush.bf16.msra.mxu0 %v5449
  %5902 = vmatpush.bf16.msra.mxu0 %v5439
  %5903 = vmatpush.bf16.msra.mxu0 %v5429
  %5904 = vmatpush.bf16.msra.mxu0 %v5419
  %5905 = vmatmul.bf16.gmra.mxu0 %v4689
  %v5906 = vpop.f32.mrf.mxu0
  %v5907 = vadd.f32 %v5894, %v5906
  %v5908 = vpop.f32.mrf.mxu0
  %5909 = vdwg.mxu0
  %v5910 = vadd.f32 %v5907, %v237
  %5911 = vst [vmem:[%s9 + $0x18] sm:$0xff] %v5910
  %v5912 = vld [vmem:[#allocation2 + $0x78] sm:$0xff]
  %v5913 = vld [vmem:[#allocation2 + $0x80] sm:$0xff]
  %v5914 = vld [vmem:[#allocation2 + $0x88] sm:$0xff]
  %v5915 = vadd.f32 %v5912, %v5673
  %v5916 = vxor.u32 %v5915, 2147483648
  %v5917 = vmul.f32 %v5916, 1.442695
  %v5918 = vpow.pop %v5917
  %v5919 = vadd.f32 %v5918, 1.0
  %v5920 = vrcp.pop %v5919
  %v5921 = vmul.f32 %v5919, %v5920
  %v5922 = vsub.f32 1.0, %v5921
  %v5923 = vmul.f32 %v5920, %v5922
  %v5924 = vadd.f32 %v5920, %v5923
  %vm5925 = vweird.f32 %v5919
  %vm5926 = vweird.f32 %v5920
  %vm5927 = vmor %vm5925, %vm5926
  %v5928 = vsel %vm5927, %v5920, %v5924
  %v5929 = vand.u32 2147483647, %v5919
  %vm5930 = vcmp.eq.f32.partialorder %v5929, 8.507059e+37
  %v5931 = vand.u32 %v5919, 2147483648
  %v5932 = vor.u32 1.1754944e-38, %v5931
  %v5933 = vsel %vm5930, %v5932, %v5928
  %v5934 = vmul.f32 1.0, %v5933
  %v5935 = vadd.f32 %v5913, %v5699
  %v5936 = vxor.u32 %v5935, 2147483648
  %v5937 = vmul.f32 %v5936, 1.442695
  %v5938 = vpow.pop %v5937
  %v5939 = vadd.f32 %v5938, 1.0
  %v5940 = vrcp.pop %v5939
  %v5941 = vmul.f32 %v5939, %v5940
  %v5942 = vsub.f32 1.0, %v5941
  %v5943 = vmul.f32 %v5940, %v5942
  %v5944 = vadd.f32 %v5940, %v5943
  %vm5945 = vweird.f32 %v5939
  %vm5946 = vweird.f32 %v5940
  %vm5947 = vmor %vm5945, %vm5946
  %v5948 = vsel %vm5947, %v5940, %v5944
  %v5949 = vand.u32 2147483647, %v5939
  %vm5950 = vcmp.eq.f32.partialorder %v5949, 8.507059e+37
  %v5951 = vand.u32 %v5939, 2147483648
  %v5952 = vor.u32 1.1754944e-38, %v5951
  %v5953 = vsel %vm5950, %v5952, %v5948
  %v5954 = vmul.f32 1.0, %v5953
  %v5955 = vadd.f32 %v5725, %v221
  %v5956 = vmul.f32 %v5934, %v5955
  %v5957 = vadd.f32 %v5914, %v5956
  %v5958 = vtanh.pop %v5957
  %v5959 = vsub.f32 1.0, %v5954
  %v5960 = vmul.f32 %v5959, %v5958
  %v5961 = vmul.f32 %v5954, %v4636
  %v5962 = vadd.f32 %v5960, %v5961
  %v5963 = vadd.f32 %v5829, %v229
  %v5964 = vadd.f32 %v5855, %v230
  %v5965 = vadd.f32 %v5881, %v231
  %v5966 = vadd.f32 %v5963, %v5751
  %v5967 = vxor.u32 %v5966, 2147483648
  %v5968 = vmul.f32 %v5967, 1.442695
  %v5969 = vpow.pop %v5968
  %v5970 = vadd.f32 %v5969, 1.0
  %v5971 = vrcp.pop %v5970
  %v5972 = vmul.f32 %v5970, %v5971
  %v5973 = vsub.f32 1.0, %v5972
  %v5974 = vmul.f32 %v5971, %v5973
  %v5975 = vadd.f32 %v5971, %v5974
  %vm5976 = vweird.f32 %v5970
  %vm5977 = vweird.f32 %v5971
  %vm5978 = vmor %vm5976, %vm5977
  %v5979 = vsel %vm5978, %v5971, %v5975
  %v5980 = vand.u32 2147483647, %v5970
  %vm5981 = vcmp.eq.f32.partialorder %v5980, 8.507059e+37
  %v5982 = vand.u32 %v5970, 2147483648
  %v5983 = vor.u32 1.1754944e-38, %v5982
  %v5984 = vsel %vm5981, %v5983, %v5979
  %v5985 = vmul.f32 1.0, %v5984
  %v5986 = vadd.f32 %v5964, %v5777
  %v5987 = vxor.u32 %v5986, 2147483648
  %v5988 = vmul.f32 %v5987, 1.442695
  %v5989 = vpow.pop %v5988
  %v5990 = vadd.f32 %v5989, 1.0
  %v5991 = vrcp.pop %v5990
  %v5992 = vmul.f32 %v5990, %v5991
  %v5993 = vsub.f32 1.0, %v5992
  %v5994 = vmul.f32 %v5991, %v5993
  %v5995 = vadd.f32 %v5991, %v5994
  %vm5996 = vweird.f32 %v5990
  %vm5997 = vweird.f32 %v5991
  %vm5998 = vmor %vm5996, %vm5997
  %v5999 = vsel %vm5998, %v5991, %v5995
  %v6000 = vand.u32 2147483647, %v5990
  %vm6001 = vcmp.eq.f32.partialorder %v6000, 8.507059e+37
  %v6002 = vand.u32 %v5990, 2147483648
  %v6003 = vor.u32 1.1754944e-38, %v6002
  %v6004 = vsel %vm6001, %v6003, %v5999
  %v6005 = vmul.f32 1.0, %v6004
  %v6006 = vadd.f32 %v5803, %v225
  %v6007 = vmul.f32 %v5985, %v6006
  %v6008 = vadd.f32 %v5965, %v6007
  %v6009 = vtanh.pop %v6008
  %v6010 = vsub.f32 1.0, %v6005
  %v6011 = vmul.f32 %v6010, %v6009
  %v6012 = vmul.f32 %v6005, %v4687
  %v6013 = vadd.f32 %v6011, %v6012
  %v6014 = vpack.c.bf16 %v5962, %v5962
  %v6015 = vpack.c.bf16 %v6013, %v6013
  %v6016 = vld [vmem:[%s3] sm:$0xff]
  %v6017 = vld [vmem:[%s3 + $0x8] sm:$0xff]
  %v6018 = vld [vmem:[%s3 + $0x10] sm:$0xff]
  %v6019 = vld [vmem:[%s3 + $0x18] sm:$0xff]
  %v6020 = vld [vmem:[%s3 + $0x20] sm:$0xff]
  %v6021 = vld [vmem:[%s3 + $0x28] sm:$0xff]
  %v6022 = vld [vmem:[%s3 + $0x30] sm:$0xff]
  %v6023 = vld [vmem:[%s3 + $0x38] sm:$0xff]
  %v6024 = vld [vmem:[%s3 + $0x40] sm:$0xff]
  %v6025 = vld [vmem:[%s3 + $0x48] sm:$0xff]
  %v6026 = vld [vmem:[%s3 + $0x50] sm:$0xff]
  %v6027 = vld [vmem:[%s3 + $0x58] sm:$0xff]
  %v6028 = vld [vmem:[%s3 + $0x60] sm:$0xff]
  %v6029 = vld [vmem:[%s3 + $0x68] sm:$0xff]
  %v6030 = vld [vmem:[%s3 + $0x70] sm:$0xff]
  %v6031 = vld [vmem:[%s3 + $0x78] sm:$0xff]
  %v6032 = vld [vmem:[%s3 + $0x80] sm:$0xff]
  %v6033 = vld [vmem:[%s3 + $0x88] sm:$0xff]
  %v6034 = vld [vmem:[%s3 + $0x90] sm:$0xff]
  %v6035 = vld [vmem:[%s3 + $0x98] sm:$0xff]
  %v6036 = vld [vmem:[%s3 + $0xa0] sm:$0xff]
  %v6037 = vld [vmem:[%s3 + $0xa8] sm:$0xff]
  %v6038 = vld [vmem:[%s3 + $0xb0] sm:$0xff]
  %v6039 = vld [vmem:[%s3 + $0xb8] sm:$0xff]
  %v6040 = vld [vmem:[%s3 + $0xc0] sm:$0xff]
  %v6041 = vld [vmem:[%s3 + $0xc8] sm:$0xff]
  %v6042 = vld [vmem:[%s3 + $0xd0] sm:$0xff]
  %v6043 = vld [vmem:[%s3 + $0xd8] sm:$0xff]
  %v6044 = vld [vmem:[%s3 + $0xe0] sm:$0xff]
  %v6045 = vld [vmem:[%s3 + $0xe8] sm:$0xff]
  %v6046 = vld [vmem:[%s3 + $0xf0] sm:$0xff]
  %v6047 = vld [vmem:[%s3 + $0xf8] sm:$0xff]
  %v6048 = vld [vmem:[%s3 + $0x100] sm:$0xff]
  %v6049 = vld [vmem:[%s3 + $0x108] sm:$0xff]
  %v6050 = vld [vmem:[%s3 + $0x110] sm:$0xff]
  %v6051 = vld [vmem:[%s3 + $0x118] sm:$0xff]
  %v6052 = vld [vmem:[%s3 + $0x120] sm:$0xff]
  %v6053 = vld [vmem:[%s3 + $0x128] sm:$0xff]
  %v6054 = vld [vmem:[%s3 + $0x130] sm:$0xff]
  %v6055 = vld [vmem:[%s3 + $0x138] sm:$0xff]
  %v6056 = vld [vmem:[%s3 + $0x140] sm:$0xff]
  %v6057 = vld [vmem:[%s3 + $0x148] sm:$0xff]
  %v6058 = vld [vmem:[%s3 + $0x150] sm:$0xff]
  %v6059 = vld [vmem:[%s3 + $0x158] sm:$0xff]
  %v6060 = vld [vmem:[%s3 + $0x160] sm:$0xff]
  %v6061 = vld [vmem:[%s3 + $0x168] sm:$0xff]
  %v6062 = vld [vmem:[%s3 + $0x170] sm:$0xff]
  %v6063 = vld [vmem:[%s3 + $0x178] sm:$0xff]
  %v6064 = vld [vmem:[%s3 + $0x180] sm:$0xff]
  %v6065 = vld [vmem:[%s3 + $0x188] sm:$0xff]
  %v6066 = vld [vmem:[%s3 + $0x190] sm:$0xff]
  %v6067 = vld [vmem:[%s3 + $0x198] sm:$0xff]
  %v6068 = vld [vmem:[%s3 + $0x1a0] sm:$0xff]
  %v6069 = vld [vmem:[%s3 + $0x1a8] sm:$0xff]
  %v6070 = vld [vmem:[%s3 + $0x1b0] sm:$0xff]
  %v6071 = vld [vmem:[%s3 + $0x1b8] sm:$0xff]
  %v6072 = vld [vmem:[%s3 + $0x1c0] sm:$0xff]
  %v6073 = vld [vmem:[%s3 + $0x1c8] sm:$0xff]
  %v6074 = vld [vmem:[%s3 + $0x1d0] sm:$0xff]
  %v6075 = vld [vmem:[%s3 + $0x1d8] sm:$0xff]
  %v6076 = vld [vmem:[%s3 + $0x1e0] sm:$0xff]
  %v6077 = vld [vmem:[%s3 + $0x1e8] sm:$0xff]
  %v6078 = vld [vmem:[%s3 + $0x1f0] sm:$0xff]
  %v6079 = vld [vmem:[%s3 + $0x1f8] sm:$0xff]
  %v6080 = vld [vmem:[%s3 + $0x200] sm:$0xff]
  %v6081 = vld [vmem:[%s3 + $0x208] sm:$0xff]
  %v6082 = vld [vmem:[%s3 + $0x210] sm:$0xff]
  %v6083 = vld [vmem:[%s3 + $0x218] sm:$0xff]
  %v6084 = vld [vmem:[%s3 + $0x220] sm:$0xff]
  %v6085 = vld [vmem:[%s3 + $0x228] sm:$0xff]
  %v6086 = vld [vmem:[%s3 + $0x230] sm:$0xff]
  %v6087 = vld [vmem:[%s3 + $0x238] sm:$0xff]
  %v6088 = vld [vmem:[%s3 + $0x240] sm:$0xff]
  %v6089 = vld [vmem:[%s3 + $0x248] sm:$0xff]
  %v6090 = vld [vmem:[%s3 + $0x250] sm:$0xff]
  %v6091 = vld [vmem:[%s3 + $0x258] sm:$0xff]
  %v6092 = vld [vmem:[%s3 + $0x260] sm:$0xff]
  %v6093 = vld [vmem:[%s3 + $0x268] sm:$0xff]
  %v6094 = vld [vmem:[%s3 + $0x270] sm:$0xff]
  %v6095 = vld [vmem:[%s3 + $0x278] sm:$0xff]
  %v6096 = vld [vmem:[%s3 + $0x280] sm:$0xff]
  %v6097 = vld [vmem:[%s3 + $0x288] sm:$0xff]
  %v6098 = vld [vmem:[%s3 + $0x290] sm:$0xff]
  %v6099 = vld [vmem:[%s3 + $0x298] sm:$0xff]
  %v6100 = vld [vmem:[%s3 + $0x2a0] sm:$0xff]
  %v6101 = vld [vmem:[%s3 + $0x2a8] sm:$0xff]
  %v6102 = vld [vmem:[%s3 + $0x2b0] sm:$0xff]
  %v6103 = vld [vmem:[%s3 + $0x2b8] sm:$0xff]
  %v6104 = vld [vmem:[%s3 + $0x2c0] sm:$0xff]
  %v6105 = vld [vmem:[%s3 + $0x2c8] sm:$0xff]
  %v6106 = vld [vmem:[%s3 + $0x2d0] sm:$0xff]
  %v6107 = vld [vmem:[%s3 + $0x2d8] sm:$0xff]
  %v6108 = vld [vmem:[%s3 + $0x2e0] sm:$0xff]
  %v6109 = vld [vmem:[%s3 + $0x2e8] sm:$0xff]
  %v6110 = vld [vmem:[%s3 + $0x2f0] sm:$0xff]
  %v6111 = vld [vmem:[%s3 + $0x2f8] sm:$0xff]
  %v6112 = vld [vmem:[%s3 + $0x300] sm:$0xff]
  %v6113 = vld [vmem:[%s3 + $0x308] sm:$0xff]
  %v6114 = vld [vmem:[%s3 + $0x310] sm:$0xff]
  %v6115 = vld [vmem:[%s3 + $0x318] sm:$0xff]
  %v6116 = vld [vmem:[%s3 + $0x320] sm:$0xff]
  %v6117 = vld [vmem:[%s3 + $0x328] sm:$0xff]
  %v6118 = vld [vmem:[%s3 + $0x330] sm:$0xff]
  %v6119 = vld [vmem:[%s3 + $0x338] sm:$0xff]
  %v6120 = vld [vmem:[%s3 + $0x340] sm:$0xff]
  %v6121 = vld [vmem:[%s3 + $0x348] sm:$0xff]
  %v6122 = vld [vmem:[%s3 + $0x350] sm:$0xff]
  %v6123 = vld [vmem:[%s3 + $0x358] sm:$0xff]
  %v6124 = vld [vmem:[%s3 + $0x360] sm:$0xff]
  %v6125 = vld [vmem:[%s3 + $0x368] sm:$0xff]
  %v6126 = vld [vmem:[%s3 + $0x370] sm:$0xff]
  %v6127 = vld [vmem:[%s3 + $0x378] sm:$0xff]
  %v6128 = vld [vmem:[%s3 + $0x380] sm:$0xff]
  %v6129 = vld [vmem:[%s3 + $0x388] sm:$0xff]
  %v6130 = vld [vmem:[%s3 + $0x390] sm:$0xff]
  %v6131 = vld [vmem:[%s3 + $0x398] sm:$0xff]
  %v6132 = vld [vmem:[%s3 + $0x3a0] sm:$0xff]
  %v6133 = vld [vmem:[%s3 + $0x3a8] sm:$0xff]
  %v6134 = vld [vmem:[%s3 + $0x3b0] sm:$0xff]
  %v6135 = vld [vmem:[%s3 + $0x3b8] sm:$0xff]
  %v6136 = vld [vmem:[%s3 + $0x3c0] sm:$0xff]
  %v6137 = vld [vmem:[%s3 + $0x3c8] sm:$0xff]
  %v6138 = vld [vmem:[%s3 + $0x3d0] sm:$0xff]
  %v6139 = vld [vmem:[%s3 + $0x3d8] sm:$0xff]
  %v6140 = vld [vmem:[%s3 + $0x3e0] sm:$0xff]
  %v6141 = vld [vmem:[%s3 + $0x3e8] sm:$0xff]
  %v6142 = vld [vmem:[%s3 + $0x3f0] sm:$0xff]
  %v6143 = vld [vmem:[%s3 + $0x3f8] sm:$0xff]
  %v6144 = vld [vmem:[%s3 + $0x400] sm:$0xff]
  %v6145 = vld [vmem:[%s3 + $0x408] sm:$0xff]
  %v6146 = vld [vmem:[%s3 + $0x410] sm:$0xff]
  %v6147 = vld [vmem:[%s3 + $0x418] sm:$0xff]
  %v6148 = vld [vmem:[%s3 + $0x420] sm:$0xff]
  %v6149 = vld [vmem:[%s3 + $0x428] sm:$0xff]
  %v6150 = vld [vmem:[%s3 + $0x430] sm:$0xff]
  %v6151 = vld [vmem:[%s3 + $0x438] sm:$0xff]
  %v6152 = vld [vmem:[%s3 + $0x440] sm:$0xff]
  %v6153 = vld [vmem:[%s3 + $0x448] sm:$0xff]
  %v6154 = vld [vmem:[%s3 + $0x450] sm:$0xff]
  %v6155 = vld [vmem:[%s3 + $0x458] sm:$0xff]
  %v6156 = vld [vmem:[%s3 + $0x460] sm:$0xff]
  %v6157 = vld [vmem:[%s3 + $0x468] sm:$0xff]
  %v6158 = vld [vmem:[%s3 + $0x470] sm:$0xff]
  %v6159 = vld [vmem:[%s3 + $0x478] sm:$0xff]
  %v6160 = vld [vmem:[%s3 + $0x480] sm:$0xff]
  %v6161 = vld [vmem:[%s3 + $0x488] sm:$0xff]
  %v6162 = vld [vmem:[%s3 + $0x490] sm:$0xff]
  %v6163 = vld [vmem:[%s3 + $0x498] sm:$0xff]
  %v6164 = vld [vmem:[%s3 + $0x4a0] sm:$0xff]
  %v6165 = vld [vmem:[%s3 + $0x4a8] sm:$0xff]
  %v6166 = vld [vmem:[%s3 + $0x4b0] sm:$0xff]
  %v6167 = vld [vmem:[%s3 + $0x4b8] sm:$0xff]
  %v6168 = vld [vmem:[%s3 + $0x4c0] sm:$0xff]
  %v6169 = vld [vmem:[%s3 + $0x4c8] sm:$0xff]
  %v6170 = vld [vmem:[%s3 + $0x4d0] sm:$0xff]
  %v6171 = vld [vmem:[%s3 + $0x4d8] sm:$0xff]
  %v6172 = vld [vmem:[%s3 + $0x4e0] sm:$0xff]
  %v6173 = vld [vmem:[%s3 + $0x4e8] sm:$0xff]
  %v6174 = vld [vmem:[%s3 + $0x4f0] sm:$0xff]
  %v6175 = vld [vmem:[%s3 + $0x4f8] sm:$0xff]
  %v6336 = vunpack.c.l.b16 %v6016
  %v6337 = vunpack.c.h.b16 %v6016
  %v6338 = vunpack.c.l.b16 %v6017
  %v6339 = vunpack.c.h.b16 %v6017
  %v6340 = vunpack.c.l.b16 %v6018
  %v6341 = vunpack.c.h.b16 %v6018
  %v6342 = vunpack.c.l.b16 %v6019
  %v6343 = vunpack.c.h.b16 %v6019
  %v6344 = vunpack.c.l.b16 %v6020
  %v6345 = vunpack.c.h.b16 %v6020
  %v6346 = vunpack.c.l.b16 %v6021
  %v6347 = vunpack.c.h.b16 %v6021
  %v6348 = vunpack.c.l.b16 %v6022
  %v6349 = vunpack.c.h.b16 %v6022
  %v6350 = vunpack.c.l.b16 %v6023
  %v6351 = vunpack.c.h.b16 %v6023
  %v6352 = vunpack.c.l.b16 %v6024
  %v6353 = vunpack.c.h.b16 %v6024
  %v6354 = vunpack.c.l.b16 %v6025
  %v6355 = vunpack.c.h.b16 %v6025
  %v6356 = vunpack.c.l.b16 %v6026
  %v6357 = vunpack.c.h.b16 %v6026
  %v6358 = vunpack.c.l.b16 %v6027
  %v6359 = vunpack.c.h.b16 %v6027
  %v6360 = vunpack.c.l.b16 %v6028
  %v6361 = vunpack.c.h.b16 %v6028
  %v6362 = vunpack.c.l.b16 %v6029
  %v6363 = vunpack.c.h.b16 %v6029
  %v6364 = vunpack.c.l.b16 %v6030
  %v6365 = vunpack.c.h.b16 %v6030
  %v6366 = vunpack.c.l.b16 %v6031
  %v6367 = vunpack.c.h.b16 %v6031
  %v6368 = vunpack.c.l.b16 %v6032
  %v6369 = vunpack.c.h.b16 %v6032
  %v6370 = vunpack.c.l.b16 %v6033
  %v6371 = vunpack.c.h.b16 %v6033
  %v6372 = vunpack.c.l.b16 %v6034
  %v6373 = vunpack.c.h.b16 %v6034
  %v6374 = vunpack.c.l.b16 %v6035
  %v6375 = vunpack.c.h.b16 %v6035
  %v6376 = vunpack.c.l.b16 %v6036
  %v6377 = vunpack.c.h.b16 %v6036
  %v6378 = vunpack.c.l.b16 %v6037
  %v6379 = vunpack.c.h.b16 %v6037
  %v6380 = vunpack.c.l.b16 %v6038
  %v6381 = vunpack.c.h.b16 %v6038
  %v6382 = vunpack.c.l.b16 %v6039
  %v6383 = vunpack.c.h.b16 %v6039
  %v6384 = vunpack.c.l.b16 %v6040
  %v6385 = vunpack.c.h.b16 %v6040
  %v6386 = vunpack.c.l.b16 %v6041
  %v6387 = vunpack.c.h.b16 %v6041
  %v6388 = vunpack.c.l.b16 %v6042
  %v6389 = vunpack.c.h.b16 %v6042
  %v6390 = vunpack.c.l.b16 %v6043
  %v6391 = vunpack.c.h.b16 %v6043
  %v6392 = vunpack.c.l.b16 %v6044
  %v6393 = vunpack.c.h.b16 %v6044
  %v6394 = vunpack.c.l.b16 %v6045
  %v6395 = vunpack.c.h.b16 %v6045
  %v6396 = vunpack.c.l.b16 %v6046
  %v6397 = vunpack.c.h.b16 %v6046
  %v6398 = vunpack.c.l.b16 %v6047
  %v6399 = vunpack.c.h.b16 %v6047
  %v6400 = vunpack.c.l.b16 %v6048
  %v6401 = vunpack.c.h.b16 %v6048
  %v6402 = vunpack.c.l.b16 %v6049
  %v6403 = vunpack.c.h.b16 %v6049
  %v6404 = vunpack.c.l.b16 %v6050
  %v6405 = vunpack.c.h.b16 %v6050
  %v6406 = vunpack.c.l.b16 %v6051
  %v6407 = vunpack.c.h.b16 %v6051
  %v6408 = vunpack.c.l.b16 %v6052
  %v6409 = vunpack.c.h.b16 %v6052
  %v6410 = vunpack.c.l.b16 %v6053
  %v6411 = vunpack.c.h.b16 %v6053
  %v6412 = vunpack.c.l.b16 %v6054
  %v6413 = vunpack.c.h.b16 %v6054
  %v6414 = vunpack.c.l.b16 %v6055
  %v6415 = vunpack.c.h.b16 %v6055
  %v6416 = vunpack.c.l.b16 %v6056
  %v6417 = vunpack.c.h.b16 %v6056
  %v6418 = vunpack.c.l.b16 %v6057
  %v6419 = vunpack.c.h.b16 %v6057
  %v6420 = vunpack.c.l.b16 %v6058
  %v6421 = vunpack.c.h.b16 %v6058
  %v6422 = vunpack.c.l.b16 %v6059
  %v6423 = vunpack.c.h.b16 %v6059
  %v6424 = vunpack.c.l.b16 %v6060
  %v6425 = vunpack.c.h.b16 %v6060
  %v6426 = vunpack.c.l.b16 %v6061
  %v6427 = vunpack.c.h.b16 %v6061
  %v6428 = vunpack.c.l.b16 %v6062
  %v6429 = vunpack.c.h.b16 %v6062
  %v6430 = vunpack.c.l.b16 %v6063
  %v6431 = vunpack.c.h.b16 %v6063
  %v6432 = vunpack.c.l.b16 %v6064
  %v6433 = vunpack.c.h.b16 %v6064
  %v6434 = vunpack.c.l.b16 %v6065
  %v6435 = vunpack.c.h.b16 %v6065
  %v6436 = vunpack.c.l.b16 %v6066
  %v6437 = vunpack.c.h.b16 %v6066
  %v6438 = vunpack.c.l.b16 %v6067
  %v6439 = vunpack.c.h.b16 %v6067
  %v6440 = vunpack.c.l.b16 %v6068
  %v6441 = vunpack.c.h.b16 %v6068
  %v6442 = vunpack.c.l.b16 %v6069
  %v6443 = vunpack.c.h.b16 %v6069
  %v6444 = vunpack.c.l.b16 %v6070
  %v6445 = vunpack.c.h.b16 %v6070
  %v6446 = vunpack.c.l.b16 %v6071
  %v6447 = vunpack.c.h.b16 %v6071
  %v6448 = vunpack.c.l.b16 %v6072
  %v6449 = vunpack.c.h.b16 %v6072
  %v6450 = vunpack.c.l.b16 %v6073
  %v6451 = vunpack.c.h.b16 %v6073
  %v6452 = vunpack.c.l.b16 %v6074
  %v6453 = vunpack.c.h.b16 %v6074
  %v6454 = vunpack.c.l.b16 %v6075
  %v6455 = vunpack.c.h.b16 %v6075
  %v6456 = vunpack.c.l.b16 %v6076
  %v6457 = vunpack.c.h.b16 %v6076
  %v6458 = vunpack.c.l.b16 %v6077
  %v6459 = vunpack.c.h.b16 %v6077
  %v6460 = vunpack.c.l.b16 %v6078
  %v6461 = vunpack.c.h.b16 %v6078
  %v6462 = vunpack.c.l.b16 %v6079
  %v6463 = vunpack.c.h.b16 %v6079
  %v6464 = vunpack.c.l.b16 %v6080
  %v6465 = vunpack.c.h.b16 %v6080
  %v6466 = vunpack.c.l.b16 %v6081
  %v6467 = vunpack.c.h.b16 %v6081
  %v6468 = vunpack.c.l.b16 %v6082
  %v6469 = vunpack.c.h.b16 %v6082
  %v6470 = vunpack.c.l.b16 %v6083
  %v6471 = vunpack.c.h.b16 %v6083
  %v6472 = vunpack.c.l.b16 %v6084
  %v6473 = vunpack.c.h.b16 %v6084
  %v6474 = vunpack.c.l.b16 %v6085
  %v6475 = vunpack.c.h.b16 %v6085
  %v6476 = vunpack.c.l.b16 %v6086
  %v6477 = vunpack.c.h.b16 %v6086
  %v6478 = vunpack.c.l.b16 %v6087
  %v6479 = vunpack.c.h.b16 %v6087
  %v6480 = vunpack.c.l.b16 %v6088
  %v6481 = vunpack.c.h.b16 %v6088
  %v6482 = vunpack.c.l.b16 %v6089
  %v6483 = vunpack.c.h.b16 %v6089
  %v6484 = vunpack.c.l.b16 %v6090
  %v6485 = vunpack.c.h.b16 %v6090
  %v6486 = vunpack.c.l.b16 %v6091
  %v6487 = vunpack.c.h.b16 %v6091
  %v6488 = vunpack.c.l.b16 %v6092
  %v6489 = vunpack.c.h.b16 %v6092
  %v6490 = vunpack.c.l.b16 %v6093
  %v6491 = vunpack.c.h.b16 %v6093
  %v6492 = vunpack.c.l.b16 %v6094
  %v6493 = vunpack.c.h.b16 %v6094
  %v6494 = vunpack.c.l.b16 %v6095
  %v6495 = vunpack.c.h.b16 %v6095
  %v6496 = vunpack.c.l.b16 %v6096
  %v6497 = vunpack.c.h.b16 %v6096
  %v6498 = vunpack.c.l.b16 %v6097
  %v6499 = vunpack.c.h.b16 %v6097
  %v6500 = vunpack.c.l.b16 %v6098
  %v6501 = vunpack.c.h.b16 %v6098
  %v6502 = vunpack.c.l.b16 %v6099
  %v6503 = vunpack.c.h.b16 %v6099
  %v6504 = vunpack.c.l.b16 %v6100
  %v6505 = vunpack.c.h.b16 %v6100
  %v6506 = vunpack.c.l.b16 %v6101
  %v6507 = vunpack.c.h.b16 %v6101
  %v6508 = vunpack.c.l.b16 %v6102
  %v6509 = vunpack.c.h.b16 %v6102
  %v6510 = vunpack.c.l.b16 %v6103
  %v6511 = vunpack.c.h.b16 %v6103
  %v6512 = vunpack.c.l.b16 %v6104
  %v6513 = vunpack.c.h.b16 %v6104
  %v6514 = vunpack.c.l.b16 %v6105
  %v6515 = vunpack.c.h.b16 %v6105
  %v6516 = vunpack.c.l.b16 %v6106
  %v6517 = vunpack.c.h.b16 %v6106
  %v6518 = vunpack.c.l.b16 %v6107
  %v6519 = vunpack.c.h.b16 %v6107
  %v6520 = vunpack.c.l.b16 %v6108
  %v6521 = vunpack.c.h.b16 %v6108
  %v6522 = vunpack.c.l.b16 %v6109
  %v6523 = vunpack.c.h.b16 %v6109
  %v6524 = vunpack.c.l.b16 %v6110
  %v6525 = vunpack.c.h.b16 %v6110
  %v6526 = vunpack.c.l.b16 %v6111
  %v6527 = vunpack.c.h.b16 %v6111
  %v6528 = vunpack.c.l.b16 %v6112
  %v6529 = vunpack.c.h.b16 %v6112
  %v6530 = vunpack.c.l.b16 %v6113
  %v6531 = vunpack.c.h.b16 %v6113
  %v6532 = vunpack.c.l.b16 %v6114
  %v6533 = vunpack.c.h.b16 %v6114
  %v6534 = vunpack.c.l.b16 %v6115
  %v6535 = vunpack.c.h.b16 %v6115
  %v6536 = vunpack.c.l.b16 %v6116
  %v6537 = vunpack.c.h.b16 %v6116
  %v6538 = vunpack.c.l.b16 %v6117
  %v6539 = vunpack.c.h.b16 %v6117
  %v6540 = vunpack.c.l.b16 %v6118
  %v6541 = vunpack.c.h.b16 %v6118
  %v6542 = vunpack.c.l.b16 %v6119
  %v6543 = vunpack.c.h.b16 %v6119
  %v6544 = vunpack.c.l.b16 %v6120
  %v6545 = vunpack.c.h.b16 %v6120
  %v6546 = vunpack.c.l.b16 %v6121
  %v6547 = vunpack.c.h.b16 %v6121
  %v6548 = vunpack.c.l.b16 %v6122
  %v6549 = vunpack.c.h.b16 %v6122
  %v6550 = vunpack.c.l.b16 %v6123
  %v6551 = vunpack.c.h.b16 %v6123
  %v6552 = vunpack.c.l.b16 %v6124
  %v6553 = vunpack.c.h.b16 %v6124
  %v6554 = vunpack.c.l.b16 %v6125
  %v6555 = vunpack.c.h.b16 %v6125
  %v6556 = vunpack.c.l.b16 %v6126
  %v6557 = vunpack.c.h.b16 %v6126
  %v6558 = vunpack.c.l.b16 %v6127
  %v6559 = vunpack.c.h.b16 %v6127
  %v6560 = vunpack.c.l.b16 %v6128
  %v6561 = vunpack.c.h.b16 %v6128
  %v6562 = vunpack.c.l.b16 %v6129
  %v6563 = vunpack.c.h.b16 %v6129
  %v6564 = vunpack.c.l.b16 %v6130
  %v6565 = vunpack.c.h.b16 %v6130
  %v6566 = vunpack.c.l.b16 %v6131
  %v6567 = vunpack.c.h.b16 %v6131
  %v6568 = vunpack.c.l.b16 %v6132
  %v6569 = vunpack.c.h.b16 %v6132
  %v6570 = vunpack.c.l.b16 %v6133
  %v6571 = vunpack.c.h.b16 %v6133
  %v6572 = vunpack.c.l.b16 %v6134
  %v6573 = vunpack.c.h.b16 %v6134
  %v6574 = vunpack.c.l.b16 %v6135
  %v6575 = vunpack.c.h.b16 %v6135
  %v6576 = vunpack.c.l.b16 %v6136
  %v6577 = vunpack.c.h.b16 %v6136
  %v6578 = vunpack.c.l.b16 %v6137
  %v6579 = vunpack.c.h.b16 %v6137
  %v6580 = vunpack.c.l.b16 %v6138
  %v6581 = vunpack.c.h.b16 %v6138
  %v6582 = vunpack.c.l.b16 %v6139
  %v6583 = vunpack.c.h.b16 %v6139
  %v6584 = vunpack.c.l.b16 %v6140
  %v6585 = vunpack.c.h.b16 %v6140
  %v6586 = vunpack.c.l.b16 %v6141
  %v6587 = vunpack.c.h.b16 %v6141
  %v6588 = vunpack.c.l.b16 %v6142
  %v6589 = vunpack.c.h.b16 %v6142
  %v6590 = vunpack.c.l.b16 %v6143
  %v6591 = vunpack.c.h.b16 %v6143
  %v6592 = vunpack.c.l.b16 %v6144
  %v6593 = vunpack.c.h.b16 %v6144
  %v6594 = vunpack.c.l.b16 %v6145
  %v6595 = vunpack.c.h.b16 %v6145
  %v6596 = vunpack.c.l.b16 %v6146
  %v6597 = vunpack.c.h.b16 %v6146
  %v6598 = vunpack.c.l.b16 %v6147
  %v6599 = vunpack.c.h.b16 %v6147
  %v6600 = vunpack.c.l.b16 %v6148
  %v6601 = vunpack.c.h.b16 %v6148
  %v6602 = vunpack.c.l.b16 %v6149
  %v6603 = vunpack.c.h.b16 %v6149
  %v6604 = vunpack.c.l.b16 %v6150
  %v6605 = vunpack.c.h.b16 %v6150
  %v6606 = vunpack.c.l.b16 %v6151
  %v6607 = vunpack.c.h.b16 %v6151
  %v6608 = vunpack.c.l.b16 %v6152
  %v6609 = vunpack.c.h.b16 %v6152
  %v6610 = vunpack.c.l.b16 %v6153
  %v6611 = vunpack.c.h.b16 %v6153
  %v6612 = vunpack.c.l.b16 %v6154
  %v6613 = vunpack.c.h.b16 %v6154
  %v6614 = vunpack.c.l.b16 %v6155
  %v6615 = vunpack.c.h.b16 %v6155
  %v6616 = vunpack.c.l.b16 %v6156
  %v6617 = vunpack.c.h.b16 %v6156
  %v6618 = vunpack.c.l.b16 %v6157
  %v6619 = vunpack.c.h.b16 %v6157
  %v6620 = vunpack.c.l.b16 %v6158
  %v6621 = vunpack.c.h.b16 %v6158
  %v6622 = vunpack.c.l.b16 %v6159
  %v6623 = vunpack.c.h.b16 %v6159
  %v6624 = vunpack.c.l.b16 %v6160
  %v6625 = vunpack.c.h.b16 %v6160
  %v6626 = vunpack.c.l.b16 %v6161
  %v6627 = vunpack.c.h.b16 %v6161
  %v6628 = vunpack.c.l.b16 %v6162
  %v6629 = vunpack.c.h.b16 %v6162
  %v6630 = vunpack.c.l.b16 %v6163
  %v6631 = vunpack.c.h.b16 %v6163
  %v6632 = vunpack.c.l.b16 %v6164
  %v6633 = vunpack.c.h.b16 %v6164
  %v6634 = vunpack.c.l.b16 %v6165
  %v6635 = vunpack.c.h.b16 %v6165
  %v6636 = vunpack.c.l.b16 %v6166
  %v6637 = vunpack.c.h.b16 %v6166
  %v6638 = vunpack.c.l.b16 %v6167
  %v6639 = vunpack.c.h.b16 %v6167
  %v6640 = vunpack.c.l.b16 %v6168
  %v6641 = vunpack.c.h.b16 %v6168
  %v6642 = vunpack.c.l.b16 %v6169
  %v6643 = vunpack.c.h.b16 %v6169
  %v6644 = vunpack.c.l.b16 %v6170
  %v6645 = vunpack.c.h.b16 %v6170
  %v6646 = vunpack.c.l.b16 %v6171
  %v6647 = vunpack.c.h.b16 %v6171
  %v6648 = vunpack.c.l.b16 %v6172
  %v6649 = vunpack.c.h.b16 %v6172
  %v6650 = vunpack.c.l.b16 %v6173
  %v6651 = vunpack.c.h.b16 %v6173
  %v6652 = vunpack.c.l.b16 %v6174
  %v6653 = vunpack.c.h.b16 %v6174
  %v6654 = vunpack.c.l.b16 %v6175
  %v6655 = vunpack.c.h.b16 %v6175
  %v6656 = vpack.c.b16 %v6346, %v6336
  %v6657 = vpack.c.b16 %v6347, %v6337
  %v6658 = vpack.c.b16 %v6348, %v6338
  %v6659 = vpack.c.b16 %v6349, %v6339
  %v6660 = vpack.c.b16 %v6350, %v6340
  %v6661 = vpack.c.b16 %v6351, %v6341
  %v6662 = vpack.c.b16 %v6352, %v6342
  %v6663 = vpack.c.b16 %v6353, %v6343
  %v6664 = vpack.c.b16 %v6354, %v6344
  %v6665 = vpack.c.b16 %v6355, %v6345
  %v6666 = vpack.c.b16 %v6366, %v6356
  %v6667 = vpack.c.b16 %v6367, %v6357
  %v6668 = vpack.c.b16 %v6368, %v6358
  %v6669 = vpack.c.b16 %v6369, %v6359
  %v6670 = vpack.c.b16 %v6370, %v6360
  %v6671 = vpack.c.b16 %v6371, %v6361
  %v6672 = vpack.c.b16 %v6372, %v6362
  %v6673 = vpack.c.b16 %v6373, %v6363
  %v6674 = vpack.c.b16 %v6374, %v6364
  %v6675 = vpack.c.b16 %v6375, %v6365
  %v6676 = vpack.c.b16 %v6386, %v6376
  %v6677 = vpack.c.b16 %v6387, %v6377
  %v6678 = vpack.c.b16 %v6388, %v6378
  %v6679 = vpack.c.b16 %v6389, %v6379
  %v6680 = vpack.c.b16 %v6390, %v6380
  %v6681 = vpack.c.b16 %v6391, %v6381
  %v6682 = vpack.c.b16 %v6392, %v6382
  %v6683 = vpack.c.b16 %v6393, %v6383
  %v6684 = vpack.c.b16 %v6394, %v6384
  %v6685 = vpack.c.b16 %v6395, %v6385
  %v6686 = vpack.c.b16 %v6406, %v6396
  %v6687 = vpack.c.b16 %v6407, %v6397
  %v6688 = vpack.c.b16 %v6408, %v6398
  %v6689 = vpack.c.b16 %v6409, %v6399
  %v6690 = vpack.c.b16 %v6410, %v6400
  %v6691 = vpack.c.b16 %v6411, %v6401
  %v6692 = vpack.c.b16 %v6412, %v6402
  %v6693 = vpack.c.b16 %v6413, %v6403
  %v6694 = vpack.c.b16 %v6414, %v6404
  %v6695 = vpack.c.b16 %v6415, %v6405
  %v6696 = vpack.c.b16 %v6426, %v6416
  %v6697 = vpack.c.b16 %v6427, %v6417
  %v6698 = vpack.c.b16 %v6428, %v6418
  %v6699 = vpack.c.b16 %v6429, %v6419
  %v6700 = vpack.c.b16 %v6430, %v6420
  %v6701 = vpack.c.b16 %v6431, %v6421
  %v6702 = vpack.c.b16 %v6432, %v6422
  %v6703 = vpack.c.b16 %v6433, %v6423
  %v6704 = vpack.c.b16 %v6434, %v6424
  %v6705 = vpack.c.b16 %v6435, %v6425
  %v6706 = vpack.c.b16 %v6446, %v6436
  %v6707 = vpack.c.b16 %v6447, %v6437
  %v6708 = vpack.c.b16 %v6448, %v6438
  %v6709 = vpack.c.b16 %v6449, %v6439
  %v6710 = vpack.c.b16 %v6450, %v6440
  %v6711 = vpack.c.b16 %v6451, %v6441
  %v6712 = vpack.c.b16 %v6452, %v6442
  %v6713 = vpack.c.b16 %v6453, %v6443
  %v6714 = vpack.c.b16 %v6454, %v6444
  %v6715 = vpack.c.b16 %v6455, %v6445
  %v6716 = vpack.c.b16 %v6466, %v6456
  %v6717 = vpack.c.b16 %v6467, %v6457
  %v6718 = vpack.c.b16 %v6468, %v6458
  %v6719 = vpack.c.b16 %v6469, %v6459
  %v6720 = vpack.c.b16 %v6470, %v6460
  %v6721 = vpack.c.b16 %v6471, %v6461
  %v6722 = vpack.c.b16 %v6472, %v6462
  %v6723 = vpack.c.b16 %v6473, %v6463
  %v6724 = vpack.c.b16 %v6474, %v6464
  %v6725 = vpack.c.b16 %v6475, %v6465
  %v6726 = vpack.c.b16 %v6486, %v6476
  %v6727 = vpack.c.b16 %v6487, %v6477
  %v6728 = vpack.c.b16 %v6488, %v6478
  %v6729 = vpack.c.b16 %v6489, %v6479
  %v6730 = vpack.c.b16 %v6490, %v6480
  %v6731 = vpack.c.b16 %v6491, %v6481
  %v6732 = vpack.c.b16 %v6492, %v6482
  %v6733 = vpack.c.b16 %v6493, %v6483
  %v6734 = vpack.c.b16 %v6494, %v6484
  %v6735 = vpack.c.b16 %v6495, %v6485
  %v6736 = vpack.c.b16 %v6506, %v6496
  %v6737 = vpack.c.b16 %v6507, %v6497
  %v6738 = vpack.c.b16 %v6508, %v6498
  %v6739 = vpack.c.b16 %v6509, %v6499
  %v6740 = vpack.c.b16 %v6510, %v6500
  %v6741 = vpack.c.b16 %v6511, %v6501
  %v6742 = vpack.c.b16 %v6512, %v6502
  %v6743 = vpack.c.b16 %v6513, %v6503
  %v6744 = vpack.c.b16 %v6514, %v6504
  %v6745 = vpack.c.b16 %v6515, %v6505
  %v6746 = vpack.c.b16 %v6526, %v6516
  %v6747 = vpack.c.b16 %v6527, %v6517
  %v6748 = vpack.c.b16 %v6528, %v6518
  %v6749 = vpack.c.b16 %v6529, %v6519
  %v6750 = vpack.c.b16 %v6530, %v6520
  %v6751 = vpack.c.b16 %v6531, %v6521
  %v6752 = vpack.c.b16 %v6532, %v6522
  %v6753 = vpack.c.b16 %v6533, %v6523
  %v6754 = vpack.c.b16 %v6534, %v6524
  %v6755 = vpack.c.b16 %v6535, %v6525
  %v6756 = vpack.c.b16 %v6546, %v6536
  %v6757 = vpack.c.b16 %v6547, %v6537
  %v6758 = vpack.c.b16 %v6548, %v6538
  %v6759 = vpack.c.b16 %v6549, %v6539
  %v6760 = vpack.c.b16 %v6550, %v6540
  %v6761 = vpack.c.b16 %v6551, %v6541
  %v6762 = vpack.c.b16 %v6552, %v6542
  %v6763 = vpack.c.b16 %v6553, %v6543
  %v6764 = vpack.c.b16 %v6554, %v6544
  %v6765 = vpack.c.b16 %v6555, %v6545
  %v6766 = vpack.c.b16 %v6566, %v6556
  %v6767 = vpack.c.b16 %v6567, %v6557
  %v6768 = vpack.c.b16 %v6568, %v6558
  %v6769 = vpack.c.b16 %v6569, %v6559
  %v6770 = vpack.c.b16 %v6570, %v6560
  %v6771 = vpack.c.b16 %v6571, %v6561
  %v6772 = vpack.c.b16 %v6572, %v6562
  %v6773 = vpack.c.b16 %v6573, %v6563
  %v6774 = vpack.c.b16 %v6574, %v6564
  %v6775 = vpack.c.b16 %v6575, %v6565
  %v6776 = vpack.c.b16 %v6586, %v6576
  %v6777 = vpack.c.b16 %v6587, %v6577
  %v6778 = vpack.c.b16 %v6588, %v6578
  %v6779 = vpack.c.b16 %v6589, %v6579
  %v6780 = vpack.c.b16 %v6590, %v6580
  %v6781 = vpack.c.b16 %v6591, %v6581
  %v6782 = vpack.c.b16 %v6592, %v6582
  %v6783 = vpack.c.b16 %v6593, %v6583
  %v6784 = vpack.c.b16 %v6594, %v6584
  %v6785 = vpack.c.b16 %v6595, %v6585
  %v6786 = vpack.c.b16 %v6606, %v6596
  %v6787 = vpack.c.b16 %v6607, %v6597
  %v6788 = vpack.c.b16 %v6608, %v6598
  %v6789 = vpack.c.b16 %v6609, %v6599
  %v6790 = vpack.c.b16 %v6610, %v6600
  %v6791 = vpack.c.b16 %v6611, %v6601
  %v6792 = vpack.c.b16 %v6612, %v6602
  %v6793 = vpack.c.b16 %v6613, %v6603
  %v6794 = vpack.c.b16 %v6614, %v6604
  %v6795 = vpack.c.b16 %v6615, %v6605
  %v6796 = vpack.c.b16 %v6626, %v6616
  %v6797 = vpack.c.b16 %v6627, %v6617
  %v6798 = vpack.c.b16 %v6628, %v6618
  %v6799 = vpack.c.b16 %v6629, %v6619
  %v6800 = vpack.c.b16 %v6630, %v6620
  %v6801 = vpack.c.b16 %v6631, %v6621
  %v6802 = vpack.c.b16 %v6632, %v6622
  %v6803 = vpack.c.b16 %v6633, %v6623
  %v6804 = vpack.c.b16 %v6634, %v6624
  %v6805 = vpack.c.b16 %v6635, %v6625
  %v6806 = vpack.c.b16 %v6646, %v6636
  %v6807 = vpack.c.b16 %v6647, %v6637
  %v6808 = vpack.c.b16 %v6648, %v6638
  %v6809 = vpack.c.b16 %v6649, %v6639
  %v6810 = vpack.c.b16 %v6650, %v6640
  %v6811 = vpack.c.b16 %v6651, %v6641
  %v6812 = vpack.c.b16 %v6652, %v6642
  %v6813 = vpack.c.b16 %v6653, %v6643
  %v6814 = vpack.c.b16 %v6654, %v6644
  %v6815 = vpack.c.b16 %v6655, %v6645
  %6976 = vmatpush.bf16.msra.mxu0 %v6726
  %6977 = vmatpush.bf16.msra.mxu0 %v6716
  %6978 = vmatpush.bf16.msra.mxu0 %v6706
  %6979 = vmatpush.bf16.msra.mxu0 %v6696
  %6980 = vmatpush.bf16.msra.mxu0 %v6686
  %6981 = vmatpush.bf16.msra.mxu0 %v6676
  %6982 = vmatpush.bf16.msra.mxu0 %v6666
  %6983 = vmatpush.bf16.msra.mxu0 %v6656
  %6984 = vmatmul.bf16.gmra.mxu0 %v6014
  %v6985 = vpop.f32.mrf.mxu0
  %v6986 = vadd.f32 0.0, %v6985
  %v6987 = vpop.f32.mrf.mxu0
  %6988 = vdwg.mxu0
  %6989 = vmatpush.bf16.msra.mxu0 %v6806
  %6990 = vmatpush.bf16.msra.mxu0 %v6796
  %6991 = vmatpush.bf16.msra.mxu0 %v6786
  %6992 = vmatpush.bf16.msra.mxu0 %v6776
  %6993 = vmatpush.bf16.msra.mxu0 %v6766
  %6994 = vmatpush.bf16.msra.mxu0 %v6756
  %6995 = vmatpush.bf16.msra.mxu0 %v6746
  %6996 = vmatpush.bf16.msra.mxu0 %v6736
  %6997 = vmatmul.bf16.gmra.mxu0 %v6015
  %v6998 = vpop.f32.mrf.mxu0
  %v6999 = vadd.f32 %v6986, %v6998
  %v7000 = vpop.f32.mrf.mxu0
  %7001 = vdwg.mxu0
  %7002 = vmatpush.bf16.msra.mxu0 %v6727
  %7003 = vmatpush.bf16.msra.mxu0 %v6717
  %7004 = vmatpush.bf16.msra.mxu0 %v6707
  %7005 = vmatpush.bf16.msra.mxu0 %v6697
  %7006 = vmatpush.bf16.msra.mxu0 %v6687
  %7007 = vmatpush.bf16.msra.mxu0 %v6677
  %7008 = vmatpush.bf16.msra.mxu0 %v6667
  %7009 = vmatpush.bf16.msra.mxu0 %v6657
  %7010 = vmatmul.bf16.gmra.mxu0 %v6014
  %v7011 = vpop.f32.mrf.mxu0
  %v7012 = vadd.f32 0.0, %v7011
  %v7013 = vpop.f32.mrf.mxu0
  %7014 = vdwg.mxu0
  %7015 = vmatpush.bf16.msra.mxu0 %v6807
  %7016 = vmatpush.bf16.msra.mxu0 %v6797
  %7017 = vmatpush.bf16.msra.mxu0 %v6787
  %7018 = vmatpush.bf16.msra.mxu0 %v6777
  %7019 = vmatpush.bf16.msra.mxu0 %v6767
  %7020 = vmatpush.bf16.msra.mxu0 %v6757
  %7021 = vmatpush.bf16.msra.mxu0 %v6747
  %7022 = vmatpush.bf16.msra.mxu0 %v6737
  %7023 = vmatmul.bf16.gmra.mxu0 %v6015
  %v7024 = vpop.f32.mrf.mxu0
  %v7025 = vadd.f32 %v7012, %v7024
  %v7026 = vpop.f32.mrf.mxu0
  %7027 = vdwg.mxu0
  %7028 = vmatpush.bf16.msra.mxu0 %v6728
  %7029 = vmatpush.bf16.msra.mxu0 %v6718
  %7030 = vmatpush.bf16.msra.mxu0 %v6708
  %7031 = vmatpush.bf16.msra.mxu0 %v6698
  %7032 = vmatpush.bf16.msra.mxu0 %v6688
  %7033 = vmatpush.bf16.msra.mxu0 %v6678
  %7034 = vmatpush.bf16.msra.mxu0 %v6668
  %7035 = vmatpush.bf16.msra.mxu0 %v6658
  %7036 = vmatmul.bf16.gmra.mxu0 %v6014
  %v7037 = vpop.f32.mrf.mxu0
  %v7038 = vadd.f32 0.0, %v7037
  %v7039 = vpop.f32.mrf.mxu0
  %7040 = vdwg.mxu0
  %7041 = vmatpush.bf16.msra.mxu0 %v6808
  %7042 = vmatpush.bf16.msra.mxu0 %v6798
  %7043 = vmatpush.bf16.msra.mxu0 %v6788
  %7044 = vmatpush.bf16.msra.mxu0 %v6778
  %7045 = vmatpush.bf16.msra.mxu0 %v6768
  %7046 = vmatpush.bf16.msra.mxu0 %v6758
  %7047 = vmatpush.bf16.msra.mxu0 %v6748
  %7048 = vmatpush.bf16.msra.mxu0 %v6738
  %7049 = vmatmul.bf16.gmra.mxu0 %v6015
  %v7050 = vpop.f32.mrf.mxu0
  %v7051 = vadd.f32 %v7038, %v7050
  %v7052 = vpop.f32.mrf.mxu0
  %7053 = vdwg.mxu0
  %7054 = vmatpush.bf16.msra.mxu0 %v6729
  %7055 = vmatpush.bf16.msra.mxu0 %v6719
  %7056 = vmatpush.bf16.msra.mxu0 %v6709
  %7057 = vmatpush.bf16.msra.mxu0 %v6699
  %7058 = vmatpush.bf16.msra.mxu0 %v6689
  %7059 = vmatpush.bf16.msra.mxu0 %v6679
  %7060 = vmatpush.bf16.msra.mxu0 %v6669
  %7061 = vmatpush.bf16.msra.mxu0 %v6659
  %7062 = vmatmul.bf16.gmra.mxu0 %v6014
  %v7063 = vpop.f32.mrf.mxu0
  %v7064 = vadd.f32 0.0, %v7063
  %v7065 = vpop.f32.mrf.mxu0
  %7066 = vdwg.mxu0
  %7067 = vmatpush.bf16.msra.mxu0 %v6809
  %7068 = vmatpush.bf16.msra.mxu0 %v6799
  %7069 = vmatpush.bf16.msra.mxu0 %v6789
  %7070 = vmatpush.bf16.msra.mxu0 %v6779
  %7071 = vmatpush.bf16.msra.mxu0 %v6769
  %7072 = vmatpush.bf16.msra.mxu0 %v6759
  %7073 = vmatpush.bf16.msra.mxu0 %v6749
  %7074 = vmatpush.bf16.msra.mxu0 %v6739
  %7075 = vmatmul.bf16.gmra.mxu0 %v6015
  %v7076 = vpop.f32.mrf.mxu0
  %v7077 = vadd.f32 %v7064, %v7076
  %v7078 = vpop.f32.mrf.mxu0
  %7079 = vdwg.mxu0
  %7080 = vmatpush.bf16.msra.mxu0 %v6730
  %7081 = vmatpush.bf16.msra.mxu0 %v6720
  %7082 = vmatpush.bf16.msra.mxu0 %v6710
  %7083 = vmatpush.bf16.msra.mxu0 %v6700
  %7084 = vmatpush.bf16.msra.mxu0 %v6690
  %7085 = vmatpush.bf16.msra.mxu0 %v6680
  %7086 = vmatpush.bf16.msra.mxu0 %v6670
  %7087 = vmatpush.bf16.msra.mxu0 %v6660
  %7088 = vmatmul.bf16.gmra.mxu0 %v6014
  %v7089 = vpop.f32.mrf.mxu0
  %v7090 = vadd.f32 0.0, %v7089
  %v7091 = vpop.f32.mrf.mxu0
  %7092 = vdwg.mxu0
  %7093 = vmatpush.bf16.msra.mxu0 %v6810
  %7094 = vmatpush.bf16.msra.mxu0 %v6800
  %7095 = vmatpush.bf16.msra.mxu0 %v6790
  %7096 = vmatpush.bf16.msra.mxu0 %v6780
  %7097 = vmatpush.bf16.msra.mxu0 %v6770
  %7098 = vmatpush.bf16.msra.mxu0 %v6760
  %7099 = vmatpush.bf16.msra.mxu0 %v6750
  %7100 = vmatpush.bf16.msra.mxu0 %v6740
  %7101 = vmatmul.bf16.gmra.mxu0 %v6015
  %v7102 = vpop.f32.mrf.mxu0
  %v7103 = vadd.f32 %v7090, %v7102
  %v7104 = vpop.f32.mrf.mxu0
  %7105 = vdwg.mxu0
  %7106 = vmatpush.bf16.msra.mxu0 %v6731
  %7107 = vmatpush.bf16.msra.mxu0 %v6721
  %7108 = vmatpush.bf16.msra.mxu0 %v6711
  %7109 = vmatpush.bf16.msra.mxu0 %v6701
  %7110 = vmatpush.bf16.msra.mxu0 %v6691
  %7111 = vmatpush.bf16.msra.mxu0 %v6681
  %7112 = vmatpush.bf16.msra.mxu0 %v6671
  %7113 = vmatpush.bf16.msra.mxu0 %v6661
  %7114 = vmatmul.bf16.gmra.mxu0 %v6014
  %v7115 = vpop.f32.mrf.mxu0
  %v7116 = vadd.f32 0.0, %v7115
  %v7117 = vpop.f32.mrf.mxu0
  %7118 = vdwg.mxu0
  %7119 = vmatpush.bf16.msra.mxu0 %v6811
  %7120 = vmatpush.bf16.msra.mxu0 %v6801
  %7121 = vmatpush.bf16.msra.mxu0 %v6791
  %7122 = vmatpush.bf16.msra.mxu0 %v6781
  %7123 = vmatpush.bf16.msra.mxu0 %v6771
  %7124 = vmatpush.bf16.msra.mxu0 %v6761
  %7125 = vmatpush.bf16.msra.mxu0 %v6751
  %7126 = vmatpush.bf16.msra.mxu0 %v6741
  %7127 = vmatmul.bf16.gmra.mxu0 %v6015
  %v7128 = vpop.f32.mrf.mxu0
  %v7129 = vadd.f32 %v7116, %v7128
  %v7130 = vpop.f32.mrf.mxu0
  %7131 = vdwg.mxu0
  %7132 = vmatpush.bf16.msra.mxu0 %v6732
  %7133 = vmatpush.bf16.msra.mxu0 %v6722
  %7134 = vmatpush.bf16.msra.mxu0 %v6712
  %7135 = vmatpush.bf16.msra.mxu0 %v6702
  %7136 = vmatpush.bf16.msra.mxu0 %v6692
  %7137 = vmatpush.bf16.msra.mxu0 %v6682
  %7138 = vmatpush.bf16.msra.mxu0 %v6672
  %7139 = vmatpush.bf16.msra.mxu0 %v6662
  %7140 = vmatmul.bf16.gmra.mxu0 %v6014
  %v7141 = vpop.f32.mrf.mxu0
  %v7142 = vadd.f32 0.0, %v7141
  %v7143 = vpop.f32.mrf.mxu0
  %7144 = vdwg.mxu0
  %7145 = vmatpush.bf16.msra.mxu0 %v6812
  %7146 = vmatpush.bf16.msra.mxu0 %v6802
  %7147 = vmatpush.bf16.msra.mxu0 %v6792
  %7148 = vmatpush.bf16.msra.mxu0 %v6782
  %7149 = vmatpush.bf16.msra.mxu0 %v6772
  %7150 = vmatpush.bf16.msra.mxu0 %v6762
  %7151 = vmatpush.bf16.msra.mxu0 %v6752
  %7152 = vmatpush.bf16.msra.mxu0 %v6742
  %7153 = vmatmul.bf16.gmra.mxu0 %v6015
  %v7154 = vpop.f32.mrf.mxu0
  %v7155 = vadd.f32 %v7142, %v7154
  %v7156 = vpop.f32.mrf.mxu0
  %7157 = vdwg.mxu0
  %7158 = vmatpush.bf16.msra.mxu0 %v6733
  %7159 = vmatpush.bf16.msra.mxu0 %v6723
  %7160 = vmatpush.bf16.msra.mxu0 %v6713
  %7161 = vmatpush.bf16.msra.mxu0 %v6703
  %7162 = vmatpush.bf16.msra.mxu0 %v6693
  %7163 = vmatpush.bf16.msra.mxu0 %v6683
  %7164 = vmatpush.bf16.msra.mxu0 %v6673
  %7165 = vmatpush.bf16.msra.mxu0 %v6663
  %7166 = vmatmul.bf16.gmra.mxu0 %v6014
  %v7167 = vpop.f32.mrf.mxu0
  %v7168 = vadd.f32 0.0, %v7167
  %v7169 = vpop.f32.mrf.mxu0
  %7170 = vdwg.mxu0
  %7171 = vmatpush.bf16.msra.mxu0 %v6813
  %7172 = vmatpush.bf16.msra.mxu0 %v6803
  %7173 = vmatpush.bf16.msra.mxu0 %v6793
  %7174 = vmatpush.bf16.msra.mxu0 %v6783
  %7175 = vmatpush.bf16.msra.mxu0 %v6773
  %7176 = vmatpush.bf16.msra.mxu0 %v6763
  %7177 = vmatpush.bf16.msra.mxu0 %v6753
  %7178 = vmatpush.bf16.msra.mxu0 %v6743
  %7179 = vmatmul.bf16.gmra.mxu0 %v6015
  %v7180 = vpop.f32.mrf.mxu0
  %v7181 = vadd.f32 %v7168, %v7180
  %v7182 = vpop.f32.mrf.mxu0
  %7183 = vdwg.mxu0
  %7184 = vmatpush.bf16.msra.mxu0 %v6734
  %7185 = vmatpush.bf16.msra.mxu0 %v6724
  %7186 = vmatpush.bf16.msra.mxu0 %v6714
  %7187 = vmatpush.bf16.msra.mxu0 %v6704
  %7188 = vmatpush.bf16.msra.mxu0 %v6694
  %7189 = vmatpush.bf16.msra.mxu0 %v6684
  %7190 = vmatpush.bf16.msra.mxu0 %v6674
  %7191 = vmatpush.bf16.msra.mxu0 %v6664
  %7192 = vmatmul.bf16.gmra.mxu0 %v6014
  %v7193 = vpop.f32.mrf.mxu0
  %v7194 = vadd.f32 0.0, %v7193
  %v7195 = vpop.f32.mrf.mxu0
  %7196 = vdwg.mxu0
  %7197 = vmatpush.bf16.msra.mxu0 %v6814
  %7198 = vmatpush.bf16.msra.mxu0 %v6804
  %7199 = vmatpush.bf16.msra.mxu0 %v6794
  %7200 = vmatpush.bf16.msra.mxu0 %v6784
  %7201 = vmatpush.bf16.msra.mxu0 %v6774
  %7202 = vmatpush.bf16.msra.mxu0 %v6764
  %7203 = vmatpush.bf16.msra.mxu0 %v6754
  %7204 = vmatpush.bf16.msra.mxu0 %v6744
  %7205 = vmatmul.bf16.gmra.mxu0 %v6015
  %v7206 = vpop.f32.mrf.mxu0
  %v7207 = vadd.f32 %v7194, %v7206
  %v7208 = vpop.f32.mrf.mxu0
  %7209 = vdwg.mxu0
  %7210 = vmatpush.bf16.msra.mxu0 %v6735
  %7211 = vmatpush.bf16.msra.mxu0 %v6725
  %7212 = vmatpush.bf16.msra.mxu0 %v6715
  %7213 = vmatpush.bf16.msra.mxu0 %v6705
  %7214 = vmatpush.bf16.msra.mxu0 %v6695
  %7215 = vmatpush.bf16.msra.mxu0 %v6685
  %7216 = vmatpush.bf16.msra.mxu0 %v6675
  %7217 = vmatpush.bf16.msra.mxu0 %v6665
  %7218 = vmatmul.bf16.gmra.mxu0 %v6014
  %v7219 = vpop.f32.mrf.mxu0
  %v7220 = vadd.f32 0.0, %v7219
  %v7221 = vpop.f32.mrf.mxu0
  %7222 = vdwg.mxu0
  %7223 = vmatpush.bf16.msra.mxu0 %v6815
  %7224 = vmatpush.bf16.msra.mxu0 %v6805
  %7225 = vmatpush.bf16.msra.mxu0 %v6795
  %7226 = vmatpush.bf16.msra.mxu0 %v6785
  %7227 = vmatpush.bf16.msra.mxu0 %v6775
  %7228 = vmatpush.bf16.msra.mxu0 %v6765
  %7229 = vmatpush.bf16.msra.mxu0 %v6755
  %7230 = vmatpush.bf16.msra.mxu0 %v6745
  %7231 = vmatmul.bf16.gmra.mxu0 %v6015
  %v7232 = vpop.f32.mrf.mxu0
  %v7233 = vadd.f32 %v7220, %v7232
  %v7234 = vpop.f32.mrf.mxu0
  %7235 = vdwg.mxu0
  %v7236 = vadd.f32 %v7233, %v237
  %7237 = vst [vmem:[%s9 + $0x20] sm:$0xff] %v7236
  %v7238 = vld [vmem:[#allocation2 + $0x90] sm:$0xff]
  %v7239 = vld [vmem:[#allocation2 + $0x98] sm:$0xff]
  %v7240 = vld [vmem:[#allocation2 + $0xa0] sm:$0xff]
  %v7241 = vadd.f32 %v7238, %v6999
  %v7242 = vxor.u32 %v7241, 2147483648
  %v7243 = vmul.f32 %v7242, 1.442695
  %v7244 = vpow.pop %v7243
  %v7245 = vadd.f32 %v7244, 1.0
  %v7246 = vrcp.pop %v7245
  %v7247 = vmul.f32 %v7245, %v7246
  %v7248 = vsub.f32 1.0, %v7247
  %v7249 = vmul.f32 %v7246, %v7248
  %v7250 = vadd.f32 %v7246, %v7249
  %vm7251 = vweird.f32 %v7245
  %vm7252 = vweird.f32 %v7246
  %vm7253 = vmor %vm7251, %vm7252
  %v7254 = vsel %vm7253, %v7246, %v7250
  %v7255 = vand.u32 2147483647, %v7245
  %vm7256 = vcmp.eq.f32.partialorder %v7255, 8.507059e+37
  %v7257 = vand.u32 %v7245, 2147483648
  %v7258 = vor.u32 1.1754944e-38, %v7257
  %v7259 = vsel %vm7256, %v7258, %v7254
  %v7260 = vmul.f32 1.0, %v7259
  %v7261 = vadd.f32 %v7239, %v7025
  %v7262 = vxor.u32 %v7261, 2147483648
  %v7263 = vmul.f32 %v7262, 1.442695
  %v7264 = vpow.pop %v7263
  %v7265 = vadd.f32 %v7264, 1.0
  %v7266 = vrcp.pop %v7265
  %v7267 = vmul.f32 %v7265, %v7266
  %v7268 = vsub.f32 1.0, %v7267
  %v7269 = vmul.f32 %v7266, %v7268
  %v7270 = vadd.f32 %v7266, %v7269
  %vm7271 = vweird.f32 %v7265
  %vm7272 = vweird.f32 %v7266
  %vm7273 = vmor %vm7271, %vm7272
  %v7274 = vsel %vm7273, %v7266, %v7270
  %v7275 = vand.u32 2147483647, %v7265
  %vm7276 = vcmp.eq.f32.partialorder %v7275, 8.507059e+37
  %v7277 = vand.u32 %v7265, 2147483648
  %v7278 = vor.u32 1.1754944e-38, %v7277
  %v7279 = vsel %vm7276, %v7278, %v7274
  %v7280 = vmul.f32 1.0, %v7279
  %v7281 = vadd.f32 %v7051, %v221
  %v7282 = vmul.f32 %v7260, %v7281
  %v7283 = vadd.f32 %v7240, %v7282
  %v7284 = vtanh.pop %v7283
  %v7285 = vsub.f32 1.0, %v7280
  %v7286 = vmul.f32 %v7285, %v7284
  %v7287 = vmul.f32 %v7280, %v5962
  %v7288 = vadd.f32 %v7286, %v7287
  %v7289 = vadd.f32 %v7155, %v229
  %v7290 = vadd.f32 %v7181, %v230
  %v7291 = vadd.f32 %v7207, %v231
  %v7292 = vadd.f32 %v7289, %v7077
  %v7293 = vxor.u32 %v7292, 2147483648
  %v7294 = vmul.f32 %v7293, 1.442695
  %v7295 = vpow.pop %v7294
  %v7296 = vadd.f32 %v7295, 1.0
  %v7297 = vrcp.pop %v7296
  %v7298 = vmul.f32 %v7296, %v7297
  %v7299 = vsub.f32 1.0, %v7298
  %v7300 = vmul.f32 %v7297, %v7299
  %v7301 = vadd.f32 %v7297, %v7300
  %vm7302 = vweird.f32 %v7296
  %vm7303 = vweird.f32 %v7297
  %vm7304 = vmor %vm7302, %vm7303
  %v7305 = vsel %vm7304, %v7297, %v7301
  %v7306 = vand.u32 2147483647, %v7296
  %vm7307 = vcmp.eq.f32.partialorder %v7306, 8.507059e+37
  %v7308 = vand.u32 %v7296, 2147483648
  %v7309 = vor.u32 1.1754944e-38, %v7308
  %v7310 = vsel %vm7307, %v7309, %v7305
  %v7311 = vmul.f32 1.0, %v7310
  %v7312 = vadd.f32 %v7290, %v7103
  %v7313 = vxor.u32 %v7312, 2147483648
  %v7314 = vmul.f32 %v7313, 1.442695
  %v7315 = vpow.pop %v7314
  %v7316 = vadd.f32 %v7315, 1.0
  %v7317 = vrcp.pop %v7316
  %v7318 = vmul.f32 %v7316, %v7317
  %v7319 = vsub.f32 1.0, %v7318
  %v7320 = vmul.f32 %v7317, %v7319
  %v7321 = vadd.f32 %v7317, %v7320
  %vm7322 = vweird.f32 %v7316
  %vm7323 = vweird.f32 %v7317
  %vm7324 = vmor %vm7322, %vm7323
  %v7325 = vsel %vm7324, %v7317, %v7321
  %v7326 = vand.u32 2147483647, %v7316
  %vm7327 = vcmp.eq.f32.partialorder %v7326, 8.507059e+37
  %v7328 = vand.u32 %v7316, 2147483648
  %v7329 = vor.u32 1.1754944e-38, %v7328
  %v7330 = vsel %vm7327, %v7329, %v7325
  %v7331 = vmul.f32 1.0, %v7330
  %v7332 = vadd.f32 %v7129, %v225
  %v7333 = vmul.f32 %v7311, %v7332
  %v7334 = vadd.f32 %v7291, %v7333
  %v7335 = vtanh.pop %v7334
  %v7336 = vsub.f32 1.0, %v7331
  %v7337 = vmul.f32 %v7336, %v7335
  %v7338 = vmul.f32 %v7331, %v6013
  %v7339 = vadd.f32 %v7337, %v7338
  %v7340 = vpack.c.bf16 %v7288, %v7288
  %v7341 = vpack.c.bf16 %v7339, %v7339
  %v7342 = vld [vmem:[%s3] sm:$0xff]
  %v7343 = vld [vmem:[%s3 + $0x8] sm:$0xff]
  %v7344 = vld [vmem:[%s3 + $0x10] sm:$0xff]
  %v7345 = vld [vmem:[%s3 + $0x18] sm:$0xff]
  %v7346 = vld [vmem:[%s3 + $0x20] sm:$0xff]
  %v7347 = vld [vmem:[%s3 + $0x28] sm:$0xff]
  %v7348 = vld [vmem:[%s3 + $0x30] sm:$0xff]
  %v7349 = vld [vmem:[%s3 + $0x38] sm:$0xff]
  %v7350 = vld [vmem:[%s3 + $0x40] sm:$0xff]
  %v7351 = vld [vmem:[%s3 + $0x48] sm:$0xff]
  %v7352 = vld [vmem:[%s3 + $0x50] sm:$0xff]
  %v7353 = vld [vmem:[%s3 + $0x58] sm:$0xff]
  %v7354 = vld [vmem:[%s3 + $0x60] sm:$0xff]
  %v7355 = vld [vmem:[%s3 + $0x68] sm:$0xff]
  %v7356 = vld [vmem:[%s3 + $0x70] sm:$0xff]
  %v7357 = vld [vmem:[%s3 + $0x78] sm:$0xff]
  %v7358 = vld [vmem:[%s3 + $0x80] sm:$0xff]
  %v7359 = vld [vmem:[%s3 + $0x88] sm:$0xff]
  %v7360 = vld [vmem:[%s3 + $0x90] sm:$0xff]
  %v7361 = vld [vmem:[%s3 + $0x98] sm:$0xff]
  %v7362 = vld [vmem:[%s3 + $0xa0] sm:$0xff]
  %v7363 = vld [vmem:[%s3 + $0xa8] sm:$0xff]
  %v7364 = vld [vmem:[%s3 + $0xb0] sm:$0xff]
  %v7365 = vld [vmem:[%s3 + $0xb8] sm:$0xff]
  %v7366 = vld [vmem:[%s3 + $0xc0] sm:$0xff]
  %v7367 = vld [vmem:[%s3 + $0xc8] sm:$0xff]
  %v7368 = vld [vmem:[%s3 + $0xd0] sm:$0xff]
  %v7369 = vld [vmem:[%s3 + $0xd8] sm:$0xff]
  %v7370 = vld [vmem:[%s3 + $0xe0] sm:$0xff]
  %v7371 = vld [vmem:[%s3 + $0xe8] sm:$0xff]
  %v7372 = vld [vmem:[%s3 + $0xf0] sm:$0xff]
  %v7373 = vld [vmem:[%s3 + $0xf8] sm:$0xff]
  %v7374 = vld [vmem:[%s3 + $0x100] sm:$0xff]
  %v7375 = vld [vmem:[%s3 + $0x108] sm:$0xff]
  %v7376 = vld [vmem:[%s3 + $0x110] sm:$0xff]
  %v7377 = vld [vmem:[%s3 + $0x118] sm:$0xff]
  %v7378 = vld [vmem:[%s3 + $0x120] sm:$0xff]
  %v7379 = vld [vmem:[%s3 + $0x128] sm:$0xff]
  %v7380 = vld [vmem:[%s3 + $0x130] sm:$0xff]
  %v7381 = vld [vmem:[%s3 + $0x138] sm:$0xff]
  %v7382 = vld [vmem:[%s3 + $0x140] sm:$0xff]
  %v7383 = vld [vmem:[%s3 + $0x148] sm:$0xff]
  %v7384 = vld [vmem:[%s3 + $0x150] sm:$0xff]
  %v7385 = vld [vmem:[%s3 + $0x158] sm:$0xff]
  %v7386 = vld [vmem:[%s3 + $0x160] sm:$0xff]
  %v7387 = vld [vmem:[%s3 + $0x168] sm:$0xff]
  %v7388 = vld [vmem:[%s3 + $0x170] sm:$0xff]
  %v7389 = vld [vmem:[%s3 + $0x178] sm:$0xff]
  %v7390 = vld [vmem:[%s3 + $0x180] sm:$0xff]
  %v7391 = vld [vmem:[%s3 + $0x188] sm:$0xff]
  %v7392 = vld [vmem:[%s3 + $0x190] sm:$0xff]
  %v7393 = vld [vmem:[%s3 + $0x198] sm:$0xff]
  %v7394 = vld [vmem:[%s3 + $0x1a0] sm:$0xff]
  %v7395 = vld [vmem:[%s3 + $0x1a8] sm:$0xff]
  %v7396 = vld [vmem:[%s3 + $0x1b0] sm:$0xff]
  %v7397 = vld [vmem:[%s3 + $0x1b8] sm:$0xff]
  %v7398 = vld [vmem:[%s3 + $0x1c0] sm:$0xff]
  %v7399 = vld [vmem:[%s3 + $0x1c8] sm:$0xff]
  %v7400 = vld [vmem:[%s3 + $0x1d0] sm:$0xff]
  %v7401 = vld [vmem:[%s3 + $0x1d8] sm:$0xff]
  %v7402 = vld [vmem:[%s3 + $0x1e0] sm:$0xff]
  %v7403 = vld [vmem:[%s3 + $0x1e8] sm:$0xff]
  %v7404 = vld [vmem:[%s3 + $0x1f0] sm:$0xff]
  %v7405 = vld [vmem:[%s3 + $0x1f8] sm:$0xff]
  %v7406 = vld [vmem:[%s3 + $0x200] sm:$0xff]
  %v7407 = vld [vmem:[%s3 + $0x208] sm:$0xff]
  %v7408 = vld [vmem:[%s3 + $0x210] sm:$0xff]
  %v7409 = vld [vmem:[%s3 + $0x218] sm:$0xff]
  %v7410 = vld [vmem:[%s3 + $0x220] sm:$0xff]
  %v7411 = vld [vmem:[%s3 + $0x228] sm:$0xff]
  %v7412 = vld [vmem:[%s3 + $0x230] sm:$0xff]
  %v7413 = vld [vmem:[%s3 + $0x238] sm:$0xff]
  %v7414 = vld [vmem:[%s3 + $0x240] sm:$0xff]
  %v7415 = vld [vmem:[%s3 + $0x248] sm:$0xff]
  %v7416 = vld [vmem:[%s3 + $0x250] sm:$0xff]
  %v7417 = vld [vmem:[%s3 + $0x258] sm:$0xff]
  %v7418 = vld [vmem:[%s3 + $0x260] sm:$0xff]
  %v7419 = vld [vmem:[%s3 + $0x268] sm:$0xff]
  %v7420 = vld [vmem:[%s3 + $0x270] sm:$0xff]
  %v7421 = vld [vmem:[%s3 + $0x278] sm:$0xff]
  %v7422 = vld [vmem:[%s3 + $0x280] sm:$0xff]
  %v7423 = vld [vmem:[%s3 + $0x288] sm:$0xff]
  %v7424 = vld [vmem:[%s3 + $0x290] sm:$0xff]
  %v7425 = vld [vmem:[%s3 + $0x298] sm:$0xff]
  %v7426 = vld [vmem:[%s3 + $0x2a0] sm:$0xff]
  %v7427 = vld [vmem:[%s3 + $0x2a8] sm:$0xff]
  %v7428 = vld [vmem:[%s3 + $0x2b0] sm:$0xff]
  %v7429 = vld [vmem:[%s3 + $0x2b8] sm:$0xff]
  %v7430 = vld [vmem:[%s3 + $0x2c0] sm:$0xff]
  %v7431 = vld [vmem:[%s3 + $0x2c8] sm:$0xff]
  %v7432 = vld [vmem:[%s3 + $0x2d0] sm:$0xff]
  %v7433 = vld [vmem:[%s3 + $0x2d8] sm:$0xff]
  %v7434 = vld [vmem:[%s3 + $0x2e0] sm:$0xff]
  %v7435 = vld [vmem:[%s3 + $0x2e8] sm:$0xff]
  %v7436 = vld [vmem:[%s3 + $0x2f0] sm:$0xff]
  %v7437 = vld [vmem:[%s3 + $0x2f8] sm:$0xff]
  %v7438 = vld [vmem:[%s3 + $0x300] sm:$0xff]
  %v7439 = vld [vmem:[%s3 + $0x308] sm:$0xff]
  %v7440 = vld [vmem:[%s3 + $0x310] sm:$0xff]
  %v7441 = vld [vmem:[%s3 + $0x318] sm:$0xff]
  %v7442 = vld [vmem:[%s3 + $0x320] sm:$0xff]
  %v7443 = vld [vmem:[%s3 + $0x328] sm:$0xff]
  %v7444 = vld [vmem:[%s3 + $0x330] sm:$0xff]
  %v7445 = vld [vmem:[%s3 + $0x338] sm:$0xff]
  %v7446 = vld [vmem:[%s3 + $0x340] sm:$0xff]
  %v7447 = vld [vmem:[%s3 + $0x348] sm:$0xff]
  %v7448 = vld [vmem:[%s3 + $0x350] sm:$0xff]
  %v7449 = vld [vmem:[%s3 + $0x358] sm:$0xff]
  %v7450 = vld [vmem:[%s3 + $0x360] sm:$0xff]
  %v7451 = vld [vmem:[%s3 + $0x368] sm:$0xff]
  %v7452 = vld [vmem:[%s3 + $0x370] sm:$0xff]
  %v7453 = vld [vmem:[%s3 + $0x378] sm:$0xff]
  %v7454 = vld [vmem:[%s3 + $0x380] sm:$0xff]
  %v7455 = vld [vmem:[%s3 + $0x388] sm:$0xff]
  %v7456 = vld [vmem:[%s3 + $0x390] sm:$0xff]
  %v7457 = vld [vmem:[%s3 + $0x398] sm:$0xff]
  %v7458 = vld [vmem:[%s3 + $0x3a0] sm:$0xff]
  %v7459 = vld [vmem:[%s3 + $0x3a8] sm:$0xff]
  %v7460 = vld [vmem:[%s3 + $0x3b0] sm:$0xff]
  %v7461 = vld [vmem:[%s3 + $0x3b8] sm:$0xff]
  %v7462 = vld [vmem:[%s3 + $0x3c0] sm:$0xff]
  %v7463 = vld [vmem:[%s3 + $0x3c8] sm:$0xff]
  %v7464 = vld [vmem:[%s3 + $0x3d0] sm:$0xff]
  %v7465 = vld [vmem:[%s3 + $0x3d8] sm:$0xff]
  %v7466 = vld [vmem:[%s3 + $0x3e0] sm:$0xff]
  %v7467 = vld [vmem:[%s3 + $0x3e8] sm:$0xff]
  %v7468 = vld [vmem:[%s3 + $0x3f0] sm:$0xff]
  %v7469 = vld [vmem:[%s3 + $0x3f8] sm:$0xff]
  %v7470 = vld [vmem:[%s3 + $0x400] sm:$0xff]
  %v7471 = vld [vmem:[%s3 + $0x408] sm:$0xff]
  %v7472 = vld [vmem:[%s3 + $0x410] sm:$0xff]
  %v7473 = vld [vmem:[%s3 + $0x418] sm:$0xff]
  %v7474 = vld [vmem:[%s3 + $0x420] sm:$0xff]
  %v7475 = vld [vmem:[%s3 + $0x428] sm:$0xff]
  %v7476 = vld [vmem:[%s3 + $0x430] sm:$0xff]
  %v7477 = vld [vmem:[%s3 + $0x438] sm:$0xff]
  %v7478 = vld [vmem:[%s3 + $0x440] sm:$0xff]
  %v7479 = vld [vmem:[%s3 + $0x448] sm:$0xff]
  %v7480 = vld [vmem:[%s3 + $0x450] sm:$0xff]
  %v7481 = vld [vmem:[%s3 + $0x458] sm:$0xff]
  %v7482 = vld [vmem:[%s3 + $0x460] sm:$0xff]
  %v7483 = vld [vmem:[%s3 + $0x468] sm:$0xff]
  %v7484 = vld [vmem:[%s3 + $0x470] sm:$0xff]
  %v7485 = vld [vmem:[%s3 + $0x478] sm:$0xff]
  %v7486 = vld [vmem:[%s3 + $0x480] sm:$0xff]
  %v7487 = vld [vmem:[%s3 + $0x488] sm:$0xff]
  %v7488 = vld [vmem:[%s3 + $0x490] sm:$0xff]
  %v7489 = vld [vmem:[%s3 + $0x498] sm:$0xff]
  %v7490 = vld [vmem:[%s3 + $0x4a0] sm:$0xff]
  %v7491 = vld [vmem:[%s3 + $0x4a8] sm:$0xff]
  %v7492 = vld [vmem:[%s3 + $0x4b0] sm:$0xff]
  %v7493 = vld [vmem:[%s3 + $0x4b8] sm:$0xff]
  %v7494 = vld [vmem:[%s3 + $0x4c0] sm:$0xff]
  %v7495 = vld [vmem:[%s3 + $0x4c8] sm:$0xff]
  %v7496 = vld [vmem:[%s3 + $0x4d0] sm:$0xff]
  %v7497 = vld [vmem:[%s3 + $0x4d8] sm:$0xff]
  %v7498 = vld [vmem:[%s3 + $0x4e0] sm:$0xff]
  %v7499 = vld [vmem:[%s3 + $0x4e8] sm:$0xff]
  %v7500 = vld [vmem:[%s3 + $0x4f0] sm:$0xff]
  %v7501 = vld [vmem:[%s3 + $0x4f8] sm:$0xff]
  %v7662 = vunpack.c.l.b16 %v7342
  %v7663 = vunpack.c.h.b16 %v7342
  %v7664 = vunpack.c.l.b16 %v7343
  %v7665 = vunpack.c.h.b16 %v7343
  %v7666 = vunpack.c.l.b16 %v7344
  %v7667 = vunpack.c.h.b16 %v7344
  %v7668 = vunpack.c.l.b16 %v7345
  %v7669 = vunpack.c.h.b16 %v7345
  %v7670 = vunpack.c.l.b16 %v7346
  %v7671 = vunpack.c.h.b16 %v7346
  %v7672 = vunpack.c.l.b16 %v7347
  %v7673 = vunpack.c.h.b16 %v7347
  %v7674 = vunpack.c.l.b16 %v7348
  %v7675 = vunpack.c.h.b16 %v7348
  %v7676 = vunpack.c.l.b16 %v7349
  %v7677 = vunpack.c.h.b16 %v7349
  %v7678 = vunpack.c.l.b16 %v7350
  %v7679 = vunpack.c.h.b16 %v7350
  %v7680 = vunpack.c.l.b16 %v7351
  %v7681 = vunpack.c.h.b16 %v7351
  %v7682 = vunpack.c.l.b16 %v7352
  %v7683 = vunpack.c.h.b16 %v7352
  %v7684 = vunpack.c.l.b16 %v7353
  %v7685 = vunpack.c.h.b16 %v7353
  %v7686 = vunpack.c.l.b16 %v7354
  %v7687 = vunpack.c.h.b16 %v7354
  %v7688 = vunpack.c.l.b16 %v7355
  %v7689 = vunpack.c.h.b16 %v7355
  %v7690 = vunpack.c.l.b16 %v7356
  %v7691 = vunpack.c.h.b16 %v7356
  %v7692 = vunpack.c.l.b16 %v7357
  %v7693 = vunpack.c.h.b16 %v7357
  %v7694 = vunpack.c.l.b16 %v7358
  %v7695 = vunpack.c.h.b16 %v7358
  %v7696 = vunpack.c.l.b16 %v7359
  %v7697 = vunpack.c.h.b16 %v7359
  %v7698 = vunpack.c.l.b16 %v7360
  %v7699 = vunpack.c.h.b16 %v7360
  %v7700 = vunpack.c.l.b16 %v7361
  %v7701 = vunpack.c.h.b16 %v7361
  %v7702 = vunpack.c.l.b16 %v7362
  %v7703 = vunpack.c.h.b16 %v7362
  %v7704 = vunpack.c.l.b16 %v7363
  %v7705 = vunpack.c.h.b16 %v7363
  %v7706 = vunpack.c.l.b16 %v7364
  %v7707 = vunpack.c.h.b16 %v7364
  %v7708 = vunpack.c.l.b16 %v7365
  %v7709 = vunpack.c.h.b16 %v7365
  %v7710 = vunpack.c.l.b16 %v7366
  %v7711 = vunpack.c.h.b16 %v7366
  %v7712 = vunpack.c.l.b16 %v7367
  %v7713 = vunpack.c.h.b16 %v7367
  %v7714 = vunpack.c.l.b16 %v7368
  %v7715 = vunpack.c.h.b16 %v7368
  %v7716 = vunpack.c.l.b16 %v7369
  %v7717 = vunpack.c.h.b16 %v7369
  %v7718 = vunpack.c.l.b16 %v7370
  %v7719 = vunpack.c.h.b16 %v7370
  %v7720 = vunpack.c.l.b16 %v7371
  %v7721 = vunpack.c.h.b16 %v7371
  %v7722 = vunpack.c.l.b16 %v7372
  %v7723 = vunpack.c.h.b16 %v7372
  %v7724 = vunpack.c.l.b16 %v7373
  %v7725 = vunpack.c.h.b16 %v7373
  %v7726 = vunpack.c.l.b16 %v7374
  %v7727 = vunpack.c.h.b16 %v7374
  %v7728 = vunpack.c.l.b16 %v7375
  %v7729 = vunpack.c.h.b16 %v7375
  %v7730 = vunpack.c.l.b16 %v7376
  %v7731 = vunpack.c.h.b16 %v7376
  %v7732 = vunpack.c.l.b16 %v7377
  %v7733 = vunpack.c.h.b16 %v7377
  %v7734 = vunpack.c.l.b16 %v7378
  %v7735 = vunpack.c.h.b16 %v7378
  %v7736 = vunpack.c.l.b16 %v7379
  %v7737 = vunpack.c.h.b16 %v7379
  %v7738 = vunpack.c.l.b16 %v7380
  %v7739 = vunpack.c.h.b16 %v7380
  %v7740 = vunpack.c.l.b16 %v7381
  %v7741 = vunpack.c.h.b16 %v7381
  %v7742 = vunpack.c.l.b16 %v7382
  %v7743 = vunpack.c.h.b16 %v7382
  %v7744 = vunpack.c.l.b16 %v7383
  %v7745 = vunpack.c.h.b16 %v7383
  %v7746 = vunpack.c.l.b16 %v7384
  %v7747 = vunpack.c.h.b16 %v7384
  %v7748 = vunpack.c.l.b16 %v7385
  %v7749 = vunpack.c.h.b16 %v7385
  %v7750 = vunpack.c.l.b16 %v7386
  %v7751 = vunpack.c.h.b16 %v7386
  %v7752 = vunpack.c.l.b16 %v7387
  %v7753 = vunpack.c.h.b16 %v7387
  %v7754 = vunpack.c.l.b16 %v7388
  %v7755 = vunpack.c.h.b16 %v7388
  %v7756 = vunpack.c.l.b16 %v7389
  %v7757 = vunpack.c.h.b16 %v7389
  %v7758 = vunpack.c.l.b16 %v7390
  %v7759 = vunpack.c.h.b16 %v7390
  %v7760 = vunpack.c.l.b16 %v7391
  %v7761 = vunpack.c.h.b16 %v7391
  %v7762 = vunpack.c.l.b16 %v7392
  %v7763 = vunpack.c.h.b16 %v7392
  %v7764 = vunpack.c.l.b16 %v7393
  %v7765 = vunpack.c.h.b16 %v7393
  %v7766 = vunpack.c.l.b16 %v7394
  %v7767 = vunpack.c.h.b16 %v7394
  %v7768 = vunpack.c.l.b16 %v7395
  %v7769 = vunpack.c.h.b16 %v7395
  %v7770 = vunpack.c.l.b16 %v7396
  %v7771 = vunpack.c.h.b16 %v7396
  %v7772 = vunpack.c.l.b16 %v7397
  %v7773 = vunpack.c.h.b16 %v7397
  %v7774 = vunpack.c.l.b16 %v7398
  %v7775 = vunpack.c.h.b16 %v7398
  %v7776 = vunpack.c.l.b16 %v7399
  %v7777 = vunpack.c.h.b16 %v7399
  %v7778 = vunpack.c.l.b16 %v7400
  %v7779 = vunpack.c.h.b16 %v7400
  %v7780 = vunpack.c.l.b16 %v7401
  %v7781 = vunpack.c.h.b16 %v7401
  %v7782 = vunpack.c.l.b16 %v7402
  %v7783 = vunpack.c.h.b16 %v7402
  %v7784 = vunpack.c.l.b16 %v7403
  %v7785 = vunpack.c.h.b16 %v7403
  %v7786 = vunpack.c.l.b16 %v7404
  %v7787 = vunpack.c.h.b16 %v7404
  %v7788 = vunpack.c.l.b16 %v7405
  %v7789 = vunpack.c.h.b16 %v7405
  %v7790 = vunpack.c.l.b16 %v7406
  %v7791 = vunpack.c.h.b16 %v7406
  %v7792 = vunpack.c.l.b16 %v7407
  %v7793 = vunpack.c.h.b16 %v7407
  %v7794 = vunpack.c.l.b16 %v7408
  %v7795 = vunpack.c.h.b16 %v7408
  %v7796 = vunpack.c.l.b16 %v7409
  %v7797 = vunpack.c.h.b16 %v7409
  %v7798 = vunpack.c.l.b16 %v7410
  %v7799 = vunpack.c.h.b16 %v7410
  %v7800 = vunpack.c.l.b16 %v7411
  %v7801 = vunpack.c.h.b16 %v7411
  %v7802 = vunpack.c.l.b16 %v7412
  %v7803 = vunpack.c.h.b16 %v7412
  %v7804 = vunpack.c.l.b16 %v7413
  %v7805 = vunpack.c.h.b16 %v7413
  %v7806 = vunpack.c.l.b16 %v7414
  %v7807 = vunpack.c.h.b16 %v7414
  %v7808 = vunpack.c.l.b16 %v7415
  %v7809 = vunpack.c.h.b16 %v7415
  %v7810 = vunpack.c.l.b16 %v7416
  %v7811 = vunpack.c.h.b16 %v7416
  %v7812 = vunpack.c.l.b16 %v7417
  %v7813 = vunpack.c.h.b16 %v7417
  %v7814 = vunpack.c.l.b16 %v7418
  %v7815 = vunpack.c.h.b16 %v7418
  %v7816 = vunpack.c.l.b16 %v7419
  %v7817 = vunpack.c.h.b16 %v7419
  %v7818 = vunpack.c.l.b16 %v7420
  %v7819 = vunpack.c.h.b16 %v7420
  %v7820 = vunpack.c.l.b16 %v7421
  %v7821 = vunpack.c.h.b16 %v7421
  %v7822 = vunpack.c.l.b16 %v7422
  %v7823 = vunpack.c.h.b16 %v7422
  %v7824 = vunpack.c.l.b16 %v7423
  %v7825 = vunpack.c.h.b16 %v7423
  %v7826 = vunpack.c.l.b16 %v7424
  %v7827 = vunpack.c.h.b16 %v7424
  %v7828 = vunpack.c.l.b16 %v7425
  %v7829 = vunpack.c.h.b16 %v7425
  %v7830 = vunpack.c.l.b16 %v7426
  %v7831 = vunpack.c.h.b16 %v7426
  %v7832 = vunpack.c.l.b16 %v7427
  %v7833 = vunpack.c.h.b16 %v7427
  %v7834 = vunpack.c.l.b16 %v7428
  %v7835 = vunpack.c.h.b16 %v7428
  %v7836 = vunpack.c.l.b16 %v7429
  %v7837 = vunpack.c.h.b16 %v7429
  %v7838 = vunpack.c.l.b16 %v7430
  %v7839 = vunpack.c.h.b16 %v7430
  %v7840 = vunpack.c.l.b16 %v7431
  %v7841 = vunpack.c.h.b16 %v7431
  %v7842 = vunpack.c.l.b16 %v7432
  %v7843 = vunpack.c.h.b16 %v7432
  %v7844 = vunpack.c.l.b16 %v7433
  %v7845 = vunpack.c.h.b16 %v7433
  %v7846 = vunpack.c.l.b16 %v7434
  %v7847 = vunpack.c.h.b16 %v7434
  %v7848 = vunpack.c.l.b16 %v7435
  %v7849 = vunpack.c.h.b16 %v7435
  %v7850 = vunpack.c.l.b16 %v7436
  %v7851 = vunpack.c.h.b16 %v7436
  %v7852 = vunpack.c.l.b16 %v7437
  %v7853 = vunpack.c.h.b16 %v7437
  %v7854 = vunpack.c.l.b16 %v7438
  %v7855 = vunpack.c.h.b16 %v7438
  %v7856 = vunpack.c.l.b16 %v7439
  %v7857 = vunpack.c.h.b16 %v7439
  %v7858 = vunpack.c.l.b16 %v7440
  %v7859 = vunpack.c.h.b16 %v7440
  %v7860 = vunpack.c.l.b16 %v7441
  %v7861 = vunpack.c.h.b16 %v7441
  %v7862 = vunpack.c.l.b16 %v7442
  %v7863 = vunpack.c.h.b16 %v7442
  %v7864 = vunpack.c.l.b16 %v7443
  %v7865 = vunpack.c.h.b16 %v7443
  %v7866 = vunpack.c.l.b16 %v7444
  %v7867 = vunpack.c.h.b16 %v7444
  %v7868 = vunpack.c.l.b16 %v7445
  %v7869 = vunpack.c.h.b16 %v7445
  %v7870 = vunpack.c.l.b16 %v7446
  %v7871 = vunpack.c.h.b16 %v7446
  %v7872 = vunpack.c.l.b16 %v7447
  %v7873 = vunpack.c.h.b16 %v7447
  %v7874 = vunpack.c.l.b16 %v7448
  %v7875 = vunpack.c.h.b16 %v7448
  %v7876 = vunpack.c.l.b16 %v7449
  %v7877 = vunpack.c.h.b16 %v7449
  %v7878 = vunpack.c.l.b16 %v7450
  %v7879 = vunpack.c.h.b16 %v7450
  %v7880 = vunpack.c.l.b16 %v7451
  %v7881 = vunpack.c.h.b16 %v7451
  %v7882 = vunpack.c.l.b16 %v7452
  %v7883 = vunpack.c.h.b16 %v7452
  %v7884 = vunpack.c.l.b16 %v7453
  %v7885 = vunpack.c.h.b16 %v7453
  %v7886 = vunpack.c.l.b16 %v7454
  %v7887 = vunpack.c.h.b16 %v7454
  %v7888 = vunpack.c.l.b16 %v7455
  %v7889 = vunpack.c.h.b16 %v7455
  %v7890 = vunpack.c.l.b16 %v7456
  %v7891 = vunpack.c.h.b16 %v7456
  %v7892 = vunpack.c.l.b16 %v7457
  %v7893 = vunpack.c.h.b16 %v7457
  %v7894 = vunpack.c.l.b16 %v7458
  %v7895 = vunpack.c.h.b16 %v7458
  %v7896 = vunpack.c.l.b16 %v7459
  %v7897 = vunpack.c.h.b16 %v7459
  %v7898 = vunpack.c.l.b16 %v7460
  %v7899 = vunpack.c.h.b16 %v7460
  %v7900 = vunpack.c.l.b16 %v7461
  %v7901 = vunpack.c.h.b16 %v7461
  %v7902 = vunpack.c.l.b16 %v7462
  %v7903 = vunpack.c.h.b16 %v7462
  %v7904 = vunpack.c.l.b16 %v7463
  %v7905 = vunpack.c.h.b16 %v7463
  %v7906 = vunpack.c.l.b16 %v7464
  %v7907 = vunpack.c.h.b16 %v7464
  %v7908 = vunpack.c.l.b16 %v7465
  %v7909 = vunpack.c.h.b16 %v7465
  %v7910 = vunpack.c.l.b16 %v7466
  %v7911 = vunpack.c.h.b16 %v7466
  %v7912 = vunpack.c.l.b16 %v7467
  %v7913 = vunpack.c.h.b16 %v7467
  %v7914 = vunpack.c.l.b16 %v7468
  %v7915 = vunpack.c.h.b16 %v7468
  %v7916 = vunpack.c.l.b16 %v7469
  %v7917 = vunpack.c.h.b16 %v7469
  %v7918 = vunpack.c.l.b16 %v7470
  %v7919 = vunpack.c.h.b16 %v7470
  %v7920 = vunpack.c.l.b16 %v7471
  %v7921 = vunpack.c.h.b16 %v7471
  %v7922 = vunpack.c.l.b16 %v7472
  %v7923 = vunpack.c.h.b16 %v7472
  %v7924 = vunpack.c.l.b16 %v7473
  %v7925 = vunpack.c.h.b16 %v7473
  %v7926 = vunpack.c.l.b16 %v7474
  %v7927 = vunpack.c.h.b16 %v7474
  %v7928 = vunpack.c.l.b16 %v7475
  %v7929 = vunpack.c.h.b16 %v7475
  %v7930 = vunpack.c.l.b16 %v7476
  %v7931 = vunpack.c.h.b16 %v7476
  %v7932 = vunpack.c.l.b16 %v7477
  %v7933 = vunpack.c.h.b16 %v7477
  %v7934 = vunpack.c.l.b16 %v7478
  %v7935 = vunpack.c.h.b16 %v7478
  %v7936 = vunpack.c.l.b16 %v7479
  %v7937 = vunpack.c.h.b16 %v7479
  %v7938 = vunpack.c.l.b16 %v7480
  %v7939 = vunpack.c.h.b16 %v7480
  %v7940 = vunpack.c.l.b16 %v7481
  %v7941 = vunpack.c.h.b16 %v7481
  %v7942 = vunpack.c.l.b16 %v7482
  %v7943 = vunpack.c.h.b16 %v7482
  %v7944 = vunpack.c.l.b16 %v7483
  %v7945 = vunpack.c.h.b16 %v7483
  %v7946 = vunpack.c.l.b16 %v7484
  %v7947 = vunpack.c.h.b16 %v7484
  %v7948 = vunpack.c.l.b16 %v7485
  %v7949 = vunpack.c.h.b16 %v7485
  %v7950 = vunpack.c.l.b16 %v7486
  %v7951 = vunpack.c.h.b16 %v7486
  %v7952 = vunpack.c.l.b16 %v7487
  %v7953 = vunpack.c.h.b16 %v7487
  %v7954 = vunpack.c.l.b16 %v7488
  %v7955 = vunpack.c.h.b16 %v7488
  %v7956 = vunpack.c.l.b16 %v7489
  %v7957 = vunpack.c.h.b16 %v7489
  %v7958 = vunpack.c.l.b16 %v7490
  %v7959 = vunpack.c.h.b16 %v7490
  %v7960 = vunpack.c.l.b16 %v7491
  %v7961 = vunpack.c.h.b16 %v7491
  %v7962 = vunpack.c.l.b16 %v7492
  %v7963 = vunpack.c.h.b16 %v7492
  %v7964 = vunpack.c.l.b16 %v7493
  %v7965 = vunpack.c.h.b16 %v7493
  %v7966 = vunpack.c.l.b16 %v7494
  %v7967 = vunpack.c.h.b16 %v7494
  %v7968 = vunpack.c.l.b16 %v7495
  %v7969 = vunpack.c.h.b16 %v7495
  %v7970 = vunpack.c.l.b16 %v7496
  %v7971 = vunpack.c.h.b16 %v7496
  %v7972 = vunpack.c.l.b16 %v7497
  %v7973 = vunpack.c.h.b16 %v7497
  %v7974 = vunpack.c.l.b16 %v7498
  %v7975 = vunpack.c.h.b16 %v7498
  %v7976 = vunpack.c.l.b16 %v7499
  %v7977 = vunpack.c.h.b16 %v7499
  %v7978 = vunpack.c.l.b16 %v7500
  %v7979 = vunpack.c.h.b16 %v7500
  %v7980 = vunpack.c.l.b16 %v7501
  %v7981 = vunpack.c.h.b16 %v7501
  %v7982 = vpack.c.b16 %v7672, %v7662
  %v7983 = vpack.c.b16 %v7673, %v7663
  %v7984 = vpack.c.b16 %v7674, %v7664
  %v7985 = vpack.c.b16 %v7675, %v7665
  %v7986 = vpack.c.b16 %v7676, %v7666
  %v7987 = vpack.c.b16 %v7677, %v7667
  %v7988 = vpack.c.b16 %v7678, %v7668
  %v7989 = vpack.c.b16 %v7679, %v7669
  %v7990 = vpack.c.b16 %v7680, %v7670
  %v7991 = vpack.c.b16 %v7681, %v7671
  %v7992 = vpack.c.b16 %v7692, %v7682
  %v7993 = vpack.c.b16 %v7693, %v7683
  %v7994 = vpack.c.b16 %v7694, %v7684
  %v7995 = vpack.c.b16 %v7695, %v7685
  %v7996 = vpack.c.b16 %v7696, %v7686
  %v7997 = vpack.c.b16 %v7697, %v7687
  %v7998 = vpack.c.b16 %v7698, %v7688
  %v7999 = vpack.c.b16 %v7699, %v7689
  %v8000 = vpack.c.b16 %v7700, %v7690
  %v8001 = vpack.c.b16 %v7701, %v7691
  %v8002 = vpack.c.b16 %v7712, %v7702
  %v8003 = vpack.c.b16 %v7713, %v7703
  %v8004 = vpack.c.b16 %v7714, %v7704
  %v8005 = vpack.c.b16 %v7715, %v7705
  %v8006 = vpack.c.b16 %v7716, %v7706
  %v8007 = vpack.c.b16 %v7717, %v7707
  %v8008 = vpack.c.b16 %v7718, %v7708
  %v8009 = vpack.c.b16 %v7719, %v7709
  %v8010 = vpack.c.b16 %v7720, %v7710
  %v8011 = vpack.c.b16 %v7721, %v7711
  %v8012 = vpack.c.b16 %v7732, %v7722
  %v8013 = vpack.c.b16 %v7733, %v7723
  %v8014 = vpack.c.b16 %v7734, %v7724
  %v8015 = vpack.c.b16 %v7735, %v7725
  %v8016 = vpack.c.b16 %v7736, %v7726
  %v8017 = vpack.c.b16 %v7737, %v7727
  %v8018 = vpack.c.b16 %v7738, %v7728
  %v8019 = vpack.c.b16 %v7739, %v7729
  %v8020 = vpack.c.b16 %v7740, %v7730
  %v8021 = vpack.c.b16 %v7741, %v7731
  %v8022 = vpack.c.b16 %v7752, %v7742
  %v8023 = vpack.c.b16 %v7753, %v7743
  %v8024 = vpack.c.b16 %v7754, %v7744
  %v8025 = vpack.c.b16 %v7755, %v7745
  %v8026 = vpack.c.b16 %v7756, %v7746
  %v8027 = vpack.c.b16 %v7757, %v7747
  %v8028 = vpack.c.b16 %v7758, %v7748
  %v8029 = vpack.c.b16 %v7759, %v7749
  %v8030 = vpack.c.b16 %v7760, %v7750
  %v8031 = vpack.c.b16 %v7761, %v7751
  %v8032 = vpack.c.b16 %v7772, %v7762
  %v8033 = vpack.c.b16 %v7773, %v7763
  %v8034 = vpack.c.b16 %v7774, %v7764
  %v8035 = vpack.c.b16 %v7775, %v7765
  %v8036 = vpack.c.b16 %v7776, %v7766
  %v8037 = vpack.c.b16 %v7777, %v7767
  %v8038 = vpack.c.b16 %v7778, %v7768
  %v8039 = vpack.c.b16 %v7779, %v7769
  %v8040 = vpack.c.b16 %v7780, %v7770
  %v8041 = vpack.c.b16 %v7781, %v7771
  %v8042 = vpack.c.b16 %v7792, %v7782
  %v8043 = vpack.c.b16 %v7793, %v7783
  %v8044 = vpack.c.b16 %v7794, %v7784
  %v8045 = vpack.c.b16 %v7795, %v7785
  %v8046 = vpack.c.b16 %v7796, %v7786
  %v8047 = vpack.c.b16 %v7797, %v7787
  %v8048 = vpack.c.b16 %v7798, %v7788
  %v8049 = vpack.c.b16 %v7799, %v7789
  %v8050 = vpack.c.b16 %v7800, %v7790
  %v8051 = vpack.c.b16 %v7801, %v7791
  %v8052 = vpack.c.b16 %v7812, %v7802
  %v8053 = vpack.c.b16 %v7813, %v7803
  %v8054 = vpack.c.b16 %v7814, %v7804
  %v8055 = vpack.c.b16 %v7815, %v7805
  %v8056 = vpack.c.b16 %v7816, %v7806
  %v8057 = vpack.c.b16 %v7817, %v7807
  %v8058 = vpack.c.b16 %v7818, %v7808
  %v8059 = vpack.c.b16 %v7819, %v7809
  %v8060 = vpack.c.b16 %v7820, %v7810
  %v8061 = vpack.c.b16 %v7821, %v7811
  %v8062 = vpack.c.b16 %v7832, %v7822
  %v8063 = vpack.c.b16 %v7833, %v7823
  %v8064 = vpack.c.b16 %v7834, %v7824
  %v8065 = vpack.c.b16 %v7835, %v7825
  %v8066 = vpack.c.b16 %v7836, %v7826
  %v8067 = vpack.c.b16 %v7837, %v7827
  %v8068 = vpack.c.b16 %v7838, %v7828
  %v8069 = vpack.c.b16 %v7839, %v7829
  %v8070 = vpack.c.b16 %v7840, %v7830
  %v8071 = vpack.c.b16 %v7841, %v7831
  %v8072 = vpack.c.b16 %v7852, %v7842
  %v8073 = vpack.c.b16 %v7853, %v7843
  %v8074 = vpack.c.b16 %v7854, %v7844
  %v8075 = vpack.c.b16 %v7855, %v7845
  %v8076 = vpack.c.b16 %v7856, %v7846
  %v8077 = vpack.c.b16 %v7857, %v7847
  %v8078 = vpack.c.b16 %v7858, %v7848
  %v8079 = vpack.c.b16 %v7859, %v7849
  %v8080 = vpack.c.b16 %v7860, %v7850
  %v8081 = vpack.c.b16 %v7861, %v7851
  %v8082 = vpack.c.b16 %v7872, %v7862
  %v8083 = vpack.c.b16 %v7873, %v7863
  %v8084 = vpack.c.b16 %v7874, %v7864
  %v8085 = vpack.c.b16 %v7875, %v7865
  %v8086 = vpack.c.b16 %v7876, %v7866
  %v8087 = vpack.c.b16 %v7877, %v7867
  %v8088 = vpack.c.b16 %v7878, %v7868
  %v8089 = vpack.c.b16 %v7879, %v7869
  %v8090 = vpack.c.b16 %v7880, %v7870
  %v8091 = vpack.c.b16 %v7881, %v7871
  %v8092 = vpack.c.b16 %v7892, %v7882
  %v8093 = vpack.c.b16 %v7893, %v7883
  %v8094 = vpack.c.b16 %v7894, %v7884
  %v8095 = vpack.c.b16 %v7895, %v7885
  %v8096 = vpack.c.b16 %v7896, %v7886
  %v8097 = vpack.c.b16 %v7897, %v7887
  %v8098 = vpack.c.b16 %v7898, %v7888
  %v8099 = vpack.c.b16 %v7899, %v7889
  %v8100 = vpack.c.b16 %v7900, %v7890
  %v8101 = vpack.c.b16 %v7901, %v7891
  %v8102 = vpack.c.b16 %v7912, %v7902
  %v8103 = vpack.c.b16 %v7913, %v7903
  %v8104 = vpack.c.b16 %v7914, %v7904
  %v8105 = vpack.c.b16 %v7915, %v7905
  %v8106 = vpack.c.b16 %v7916, %v7906
  %v8107 = vpack.c.b16 %v7917, %v7907
  %v8108 = vpack.c.b16 %v7918, %v7908
  %v8109 = vpack.c.b16 %v7919, %v7909
  %v8110 = vpack.c.b16 %v7920, %v7910
  %v8111 = vpack.c.b16 %v7921, %v7911
  %v8112 = vpack.c.b16 %v7932, %v7922
  %v8113 = vpack.c.b16 %v7933, %v7923
  %v8114 = vpack.c.b16 %v7934, %v7924
  %v8115 = vpack.c.b16 %v7935, %v7925
  %v8116 = vpack.c.b16 %v7936, %v7926
  %v8117 = vpack.c.b16 %v7937, %v7927
  %v8118 = vpack.c.b16 %v7938, %v7928
  %v8119 = vpack.c.b16 %v7939, %v7929
  %v8120 = vpack.c.b16 %v7940, %v7930
  %v8121 = vpack.c.b16 %v7941, %v7931
  %v8122 = vpack.c.b16 %v7952, %v7942
  %v8123 = vpack.c.b16 %v7953, %v7943
  %v8124 = vpack.c.b16 %v7954, %v7944
  %v8125 = vpack.c.b16 %v7955, %v7945
  %v8126 = vpack.c.b16 %v7956, %v7946
  %v8127 = vpack.c.b16 %v7957, %v7947
  %v8128 = vpack.c.b16 %v7958, %v7948
  %v8129 = vpack.c.b16 %v7959, %v7949
  %v8130 = vpack.c.b16 %v7960, %v7950
  %v8131 = vpack.c.b16 %v7961, %v7951
  %v8132 = vpack.c.b16 %v7972, %v7962
  %v8133 = vpack.c.b16 %v7973, %v7963
  %v8134 = vpack.c.b16 %v7974, %v7964
  %v8135 = vpack.c.b16 %v7975, %v7965
  %v8136 = vpack.c.b16 %v7976, %v7966
  %v8137 = vpack.c.b16 %v7977, %v7967
  %v8138 = vpack.c.b16 %v7978, %v7968
  %v8139 = vpack.c.b16 %v7979, %v7969
  %v8140 = vpack.c.b16 %v7980, %v7970
  %v8141 = vpack.c.b16 %v7981, %v7971
  %8302 = vmatpush.bf16.msra.mxu0 %v8052
  %8303 = vmatpush.bf16.msra.mxu0 %v8042
  %8304 = vmatpush.bf16.msra.mxu0 %v8032
  %8305 = vmatpush.bf16.msra.mxu0 %v8022
  %8306 = vmatpush.bf16.msra.mxu0 %v8012
  %8307 = vmatpush.bf16.msra.mxu0 %v8002
  %8308 = vmatpush.bf16.msra.mxu0 %v7992
  %8309 = vmatpush.bf16.msra.mxu0 %v7982
  %8310 = vmatmul.bf16.gmra.mxu0 %v7340
  %v8311 = vpop.f32.mrf.mxu0
  %v8312 = vadd.f32 0.0, %v8311
  %v8313 = vpop.f32.mrf.mxu0
  %8314 = vdwg.mxu0
  %8315 = vmatpush.bf16.msra.mxu0 %v8132
  %8316 = vmatpush.bf16.msra.mxu0 %v8122
  %8317 = vmatpush.bf16.msra.mxu0 %v8112
  %8318 = vmatpush.bf16.msra.mxu0 %v8102
  %8319 = vmatpush.bf16.msra.mxu0 %v8092
  %8320 = vmatpush.bf16.msra.mxu0 %v8082
  %8321 = vmatpush.bf16.msra.mxu0 %v8072
  %8322 = vmatpush.bf16.msra.mxu0 %v8062
  %8323 = vmatmul.bf16.gmra.mxu0 %v7341
  %v8324 = vpop.f32.mrf.mxu0
  %v8325 = vadd.f32 %v8312, %v8324
  %v8326 = vpop.f32.mrf.mxu0
  %8327 = vdwg.mxu0
  %8328 = vmatpush.bf16.msra.mxu0 %v8053
  %8329 = vmatpush.bf16.msra.mxu0 %v8043
  %8330 = vmatpush.bf16.msra.mxu0 %v8033
  %8331 = vmatpush.bf16.msra.mxu0 %v8023
  %8332 = vmatpush.bf16.msra.mxu0 %v8013
  %8333 = vmatpush.bf16.msra.mxu0 %v8003
  %8334 = vmatpush.bf16.msra.mxu0 %v7993
  %8335 = vmatpush.bf16.msra.mxu0 %v7983
  %8336 = vmatmul.bf16.gmra.mxu0 %v7340
  %v8337 = vpop.f32.mrf.mxu0
  %v8338 = vadd.f32 0.0, %v8337
  %v8339 = vpop.f32.mrf.mxu0
  %8340 = vdwg.mxu0
  %8341 = vmatpush.bf16.msra.mxu0 %v8133
  %8342 = vmatpush.bf16.msra.mxu0 %v8123
  %8343 = vmatpush.bf16.msra.mxu0 %v8113
  %8344 = vmatpush.bf16.msra.mxu0 %v8103
  %8345 = vmatpush.bf16.msra.mxu0 %v8093
  %8346 = vmatpush.bf16.msra.mxu0 %v8083
  %8347 = vmatpush.bf16.msra.mxu0 %v8073
  %8348 = vmatpush.bf16.msra.mxu0 %v8063
  %8349 = vmatmul.bf16.gmra.mxu0 %v7341
  %v8350 = vpop.f32.mrf.mxu0
  %v8351 = vadd.f32 %v8338, %v8350
  %v8352 = vpop.f32.mrf.mxu0
  %8353 = vdwg.mxu0
  %8354 = vmatpush.bf16.msra.mxu0 %v8054
  %8355 = vmatpush.bf16.msra.mxu0 %v8044
  %8356 = vmatpush.bf16.msra.mxu0 %v8034
  %8357 = vmatpush.bf16.msra.mxu0 %v8024
  %8358 = vmatpush.bf16.msra.mxu0 %v8014
  %8359 = vmatpush.bf16.msra.mxu0 %v8004
  %8360 = vmatpush.bf16.msra.mxu0 %v7994
  %8361 = vmatpush.bf16.msra.mxu0 %v7984
  %8362 = vmatmul.bf16.gmra.mxu0 %v7340
  %v8363 = vpop.f32.mrf.mxu0
  %v8364 = vadd.f32 0.0, %v8363
  %v8365 = vpop.f32.mrf.mxu0
  %8366 = vdwg.mxu0
  %8367 = vmatpush.bf16.msra.mxu0 %v8134
  %8368 = vmatpush.bf16.msra.mxu0 %v8124
  %8369 = vmatpush.bf16.msra.mxu0 %v8114
  %8370 = vmatpush.bf16.msra.mxu0 %v8104
  %8371 = vmatpush.bf16.msra.mxu0 %v8094
  %8372 = vmatpush.bf16.msra.mxu0 %v8084
  %8373 = vmatpush.bf16.msra.mxu0 %v8074
  %8374 = vmatpush.bf16.msra.mxu0 %v8064
  %8375 = vmatmul.bf16.gmra.mxu0 %v7341
  %v8376 = vpop.f32.mrf.mxu0
  %v8377 = vadd.f32 %v8364, %v8376
  %v8378 = vpop.f32.mrf.mxu0
  %8379 = vdwg.mxu0
  %8380 = vmatpush.bf16.msra.mxu0 %v8055
  %8381 = vmatpush.bf16.msra.mxu0 %v8045
  %8382 = vmatpush.bf16.msra.mxu0 %v8035
  %8383 = vmatpush.bf16.msra.mxu0 %v8025
  %8384 = vmatpush.bf16.msra.mxu0 %v8015
  %8385 = vmatpush.bf16.msra.mxu0 %v8005
  %8386 = vmatpush.bf16.msra.mxu0 %v7995
  %8387 = vmatpush.bf16.msra.mxu0 %v7985
  %8388 = vmatmul.bf16.gmra.mxu0 %v7340
  %v8389 = vpop.f32.mrf.mxu0
  %v8390 = vadd.f32 0.0, %v8389
  %v8391 = vpop.f32.mrf.mxu0
  %8392 = vdwg.mxu0
  %8393 = vmatpush.bf16.msra.mxu0 %v8135
  %8394 = vmatpush.bf16.msra.mxu0 %v8125
  %8395 = vmatpush.bf16.msra.mxu0 %v8115
  %8396 = vmatpush.bf16.msra.mxu0 %v8105
  %8397 = vmatpush.bf16.msra.mxu0 %v8095
  %8398 = vmatpush.bf16.msra.mxu0 %v8085
  %8399 = vmatpush.bf16.msra.mxu0 %v8075
  %8400 = vmatpush.bf16.msra.mxu0 %v8065
  %8401 = vmatmul.bf16.gmra.mxu0 %v7341
  %v8402 = vpop.f32.mrf.mxu0
  %v8403 = vadd.f32 %v8390, %v8402
  %v8404 = vpop.f32.mrf.mxu0
  %8405 = vdwg.mxu0
  %8406 = vmatpush.bf16.msra.mxu0 %v8056
  %8407 = vmatpush.bf16.msra.mxu0 %v8046
  %8408 = vmatpush.bf16.msra.mxu0 %v8036
  %8409 = vmatpush.bf16.msra.mxu0 %v8026
  %8410 = vmatpush.bf16.msra.mxu0 %v8016
  %8411 = vmatpush.bf16.msra.mxu0 %v8006
  %8412 = vmatpush.bf16.msra.mxu0 %v7996
  %8413 = vmatpush.bf16.msra.mxu0 %v7986
  %8414 = vmatmul.bf16.gmra.mxu0 %v7340
  %v8415 = vpop.f32.mrf.mxu0
  %v8416 = vadd.f32 0.0, %v8415
  %v8417 = vpop.f32.mrf.mxu0
  %8418 = vdwg.mxu0
  %8419 = vmatpush.bf16.msra.mxu0 %v8136
  %8420 = vmatpush.bf16.msra.mxu0 %v8126
  %8421 = vmatpush.bf16.msra.mxu0 %v8116
  %8422 = vmatpush.bf16.msra.mxu0 %v8106
  %8423 = vmatpush.bf16.msra.mxu0 %v8096
  %8424 = vmatpush.bf16.msra.mxu0 %v8086
  %8425 = vmatpush.bf16.msra.mxu0 %v8076
  %8426 = vmatpush.bf16.msra.mxu0 %v8066
  %8427 = vmatmul.bf16.gmra.mxu0 %v7341
  %v8428 = vpop.f32.mrf.mxu0
  %v8429 = vadd.f32 %v8416, %v8428
  %v8430 = vpop.f32.mrf.mxu0
  %8431 = vdwg.mxu0
  %8432 = vmatpush.bf16.msra.mxu0 %v8057
  %8433 = vmatpush.bf16.msra.mxu0 %v8047
  %8434 = vmatpush.bf16.msra.mxu0 %v8037
  %8435 = vmatpush.bf16.msra.mxu0 %v8027
  %8436 = vmatpush.bf16.msra.mxu0 %v8017
  %8437 = vmatpush.bf16.msra.mxu0 %v8007
  %8438 = vmatpush.bf16.msra.mxu0 %v7997
  %8439 = vmatpush.bf16.msra.mxu0 %v7987
  %8440 = vmatmul.bf16.gmra.mxu0 %v7340
  %v8441 = vpop.f32.mrf.mxu0
  %v8442 = vadd.f32 0.0, %v8441
  %v8443 = vpop.f32.mrf.mxu0
  %8444 = vdwg.mxu0
  %8445 = vmatpush.bf16.msra.mxu0 %v8137
  %8446 = vmatpush.bf16.msra.mxu0 %v8127
  %8447 = vmatpush.bf16.msra.mxu0 %v8117
  %8448 = vmatpush.bf16.msra.mxu0 %v8107
  %8449 = vmatpush.bf16.msra.mxu0 %v8097
  %8450 = vmatpush.bf16.msra.mxu0 %v8087
  %8451 = vmatpush.bf16.msra.mxu0 %v8077
  %8452 = vmatpush.bf16.msra.mxu0 %v8067
  %8453 = vmatmul.bf16.gmra.mxu0 %v7341
  %v8454 = vpop.f32.mrf.mxu0
  %v8455 = vadd.f32 %v8442, %v8454
  %v8456 = vpop.f32.mrf.mxu0
  %8457 = vdwg.mxu0
  %8458 = vmatpush.bf16.msra.mxu0 %v8058
  %8459 = vmatpush.bf16.msra.mxu0 %v8048
  %8460 = vmatpush.bf16.msra.mxu0 %v8038
  %8461 = vmatpush.bf16.msra.mxu0 %v8028
  %8462 = vmatpush.bf16.msra.mxu0 %v8018
  %8463 = vmatpush.bf16.msra.mxu0 %v8008
  %8464 = vmatpush.bf16.msra.mxu0 %v7998
  %8465 = vmatpush.bf16.msra.mxu0 %v7988
  %8466 = vmatmul.bf16.gmra.mxu0 %v7340
  %v8467 = vpop.f32.mrf.mxu0
  %v8468 = vadd.f32 0.0, %v8467
  %v8469 = vpop.f32.mrf.mxu0
  %8470 = vdwg.mxu0
  %8471 = vmatpush.bf16.msra.mxu0 %v8138
  %8472 = vmatpush.bf16.msra.mxu0 %v8128
  %8473 = vmatpush.bf16.msra.mxu0 %v8118
  %8474 = vmatpush.bf16.msra.mxu0 %v8108
  %8475 = vmatpush.bf16.msra.mxu0 %v8098
  %8476 = vmatpush.bf16.msra.mxu0 %v8088
  %8477 = vmatpush.bf16.msra.mxu0 %v8078
  %8478 = vmatpush.bf16.msra.mxu0 %v8068
  %8479 = vmatmul.bf16.gmra.mxu0 %v7341
  %v8480 = vpop.f32.mrf.mxu0
  %v8481 = vadd.f32 %v8468, %v8480
  %v8482 = vpop.f32.mrf.mxu0
  %8483 = vdwg.mxu0
  %8484 = vmatpush.bf16.msra.mxu0 %v8059
  %8485 = vmatpush.bf16.msra.mxu0 %v8049
  %8486 = vmatpush.bf16.msra.mxu0 %v8039
  %8487 = vmatpush.bf16.msra.mxu0 %v8029
  %8488 = vmatpush.bf16.msra.mxu0 %v8019
  %8489 = vmatpush.bf16.msra.mxu0 %v8009
  %8490 = vmatpush.bf16.msra.mxu0 %v7999
  %8491 = vmatpush.bf16.msra.mxu0 %v7989
  %8492 = vmatmul.bf16.gmra.mxu0 %v7340
  %v8493 = vpop.f32.mrf.mxu0
  %v8494 = vadd.f32 0.0, %v8493
  %v8495 = vpop.f32.mrf.mxu0
  %8496 = vdwg.mxu0
  %8497 = vmatpush.bf16.msra.mxu0 %v8139
  %8498 = vmatpush.bf16.msra.mxu0 %v8129
  %8499 = vmatpush.bf16.msra.mxu0 %v8119
  %8500 = vmatpush.bf16.msra.mxu0 %v8109
  %8501 = vmatpush.bf16.msra.mxu0 %v8099
  %8502 = vmatpush.bf16.msra.mxu0 %v8089
  %8503 = vmatpush.bf16.msra.mxu0 %v8079
  %8504 = vmatpush.bf16.msra.mxu0 %v8069
  %8505 = vmatmul.bf16.gmra.mxu0 %v7341
  %v8506 = vpop.f32.mrf.mxu0
  %v8507 = vadd.f32 %v8494, %v8506
  %v8508 = vpop.f32.mrf.mxu0
  %8509 = vdwg.mxu0
  %8510 = vmatpush.bf16.msra.mxu0 %v8060
  %8511 = vmatpush.bf16.msra.mxu0 %v8050
  %8512 = vmatpush.bf16.msra.mxu0 %v8040
  %8513 = vmatpush.bf16.msra.mxu0 %v8030
  %8514 = vmatpush.bf16.msra.mxu0 %v8020
  %8515 = vmatpush.bf16.msra.mxu0 %v8010
  %8516 = vmatpush.bf16.msra.mxu0 %v8000
  %8517 = vmatpush.bf16.msra.mxu0 %v7990
  %8518 = vmatmul.bf16.gmra.mxu0 %v7340
  %v8519 = vpop.f32.mrf.mxu0
  %v8520 = vadd.f32 0.0, %v8519
  %v8521 = vpop.f32.mrf.mxu0
  %8522 = vdwg.mxu0
  %8523 = vmatpush.bf16.msra.mxu0 %v8140
  %8524 = vmatpush.bf16.msra.mxu0 %v8130
  %8525 = vmatpush.bf16.msra.mxu0 %v8120
  %8526 = vmatpush.bf16.msra.mxu0 %v8110
  %8527 = vmatpush.bf16.msra.mxu0 %v8100
  %8528 = vmatpush.bf16.msra.mxu0 %v8090
  %8529 = vmatpush.bf16.msra.mxu0 %v8080
  %8530 = vmatpush.bf16.msra.mxu0 %v8070
  %8531 = vmatmul.bf16.gmra.mxu0 %v7341
  %v8532 = vpop.f32.mrf.mxu0
  %v8533 = vadd.f32 %v8520, %v8532
  %v8534 = vpop.f32.mrf.mxu0
  %8535 = vdwg.mxu0
  %8536 = vmatpush.bf16.msra.mxu0 %v8061
  %8537 = vmatpush.bf16.msra.mxu0 %v8051
  %8538 = vmatpush.bf16.msra.mxu0 %v8041
  %8539 = vmatpush.bf16.msra.mxu0 %v8031
  %8540 = vmatpush.bf16.msra.mxu0 %v8021
  %8541 = vmatpush.bf16.msra.mxu0 %v8011
  %8542 = vmatpush.bf16.msra.mxu0 %v8001
  %8543 = vmatpush.bf16.msra.mxu0 %v7991
  %8544 = vmatmul.bf16.gmra.mxu0 %v7340
  %v8545 = vpop.f32.mrf.mxu0
  %v8546 = vadd.f32 0.0, %v8545
  %v8547 = vpop.f32.mrf.mxu0
  %8548 = vdwg.mxu0
  %8549 = vmatpush.bf16.msra.mxu0 %v8141
  %8550 = vmatpush.bf16.msra.mxu0 %v8131
  %8551 = vmatpush.bf16.msra.mxu0 %v8121
  %8552 = vmatpush.bf16.msra.mxu0 %v8111
  %8553 = vmatpush.bf16.msra.mxu0 %v8101
  %8554 = vmatpush.bf16.msra.mxu0 %v8091
  %8555 = vmatpush.bf16.msra.mxu0 %v8081
  %8556 = vmatpush.bf16.msra.mxu0 %v8071
  %8557 = vmatmul.bf16.gmra.mxu0 %v7341
  %v8558 = vpop.f32.mrf.mxu0
  %v8559 = vadd.f32 %v8546, %v8558
  %v8560 = vpop.f32.mrf.mxu0
  %8561 = vdwg.mxu0
  %v8562 = vadd.f32 %v8559, %v237
  %8563 = vst [vmem:[%s9 + $0x28] sm:$0xff] %v8562
  %v8564 = vld [vmem:[#allocation2 + $0xa8] sm:$0xff]
  %v8565 = vld [vmem:[#allocation2 + $0xb0] sm:$0xff]
  %v8566 = vld [vmem:[#allocation2 + $0xb8] sm:$0xff]
  %v8567 = vadd.f32 %v8564, %v8325
  %v8568 = vxor.u32 %v8567, 2147483648
  %v8569 = vmul.f32 %v8568, 1.442695
  %v8570 = vpow.pop %v8569
  %v8571 = vadd.f32 %v8570, 1.0
  %v8572 = vrcp.pop %v8571
  %v8573 = vmul.f32 %v8571, %v8572
  %v8574 = vsub.f32 1.0, %v8573
  %v8575 = vmul.f32 %v8572, %v8574
  %v8576 = vadd.f32 %v8572, %v8575
  %vm8577 = vweird.f32 %v8571
  %vm8578 = vweird.f32 %v8572
  %vm8579 = vmor %vm8577, %vm8578
  %v8580 = vsel %vm8579, %v8572, %v8576
  %v8581 = vand.u32 2147483647, %v8571
  %vm8582 = vcmp.eq.f32.partialorder %v8581, 8.507059e+37
  %v8583 = vand.u32 %v8571, 2147483648
  %v8584 = vor.u32 1.1754944e-38, %v8583
  %v8585 = vsel %vm8582, %v8584, %v8580
  %v8586 = vmul.f32 1.0, %v8585
  %v8587 = vadd.f32 %v8565, %v8351
  %v8588 = vxor.u32 %v8587, 2147483648
  %v8589 = vmul.f32 %v8588, 1.442695
  %v8590 = vpow.pop %v8589
  %v8591 = vadd.f32 %v8590, 1.0
  %v8592 = vrcp.pop %v8591
  %v8593 = vmul.f32 %v8591, %v8592
  %v8594 = vsub.f32 1.0, %v8593
  %v8595 = vmul.f32 %v8592, %v8594
  %v8596 = vadd.f32 %v8592, %v8595
  %vm8597 = vweird.f32 %v8591
  %vm8598 = vweird.f32 %v8592
  %vm8599 = vmor %vm8597, %vm8598
  %v8600 = vsel %vm8599, %v8592, %v8596
  %v8601 = vand.u32 2147483647, %v8591
  %vm8602 = vcmp.eq.f32.partialorder %v8601, 8.507059e+37
  %v8603 = vand.u32 %v8591, 2147483648
  %v8604 = vor.u32 1.1754944e-38, %v8603
  %v8605 = vsel %vm8602, %v8604, %v8600
  %v8606 = vmul.f32 1.0, %v8605
  %v8607 = vadd.f32 %v8377, %v221
  %v8608 = vmul.f32 %v8586, %v8607
  %v8609 = vadd.f32 %v8566, %v8608
  %v8610 = vtanh.pop %v8609
  %v8611 = vsub.f32 1.0, %v8606
  %v8612 = vmul.f32 %v8611, %v8610
  %v8613 = vmul.f32 %v8606, %v7288
  %v8614 = vadd.f32 %v8612, %v8613
  %v8615 = vadd.f32 %v8481, %v229
  %v8616 = vadd.f32 %v8507, %v230
  %v8617 = vadd.f32 %v8533, %v231
  %v8618 = vadd.f32 %v8615, %v8403
  %v8619 = vxor.u32 %v8618, 2147483648
  %v8620 = vmul.f32 %v8619, 1.442695
  %v8621 = vpow.pop %v8620
  %v8622 = vadd.f32 %v8621, 1.0
  %v8623 = vrcp.pop %v8622
  %v8624 = vmul.f32 %v8622, %v8623
  %v8625 = vsub.f32 1.0, %v8624
  %v8626 = vmul.f32 %v8623, %v8625
  %v8627 = vadd.f32 %v8623, %v8626
  %vm8628 = vweird.f32 %v8622
  %vm8629 = vweird.f32 %v8623
  %vm8630 = vmor %vm8628, %vm8629
  %v8631 = vsel %vm8630, %v8623, %v8627
  %v8632 = vand.u32 2147483647, %v8622
  %vm8633 = vcmp.eq.f32.partialorder %v8632, 8.507059e+37
  %v8634 = vand.u32 %v8622, 2147483648
  %v8635 = vor.u32 1.1754944e-38, %v8634
  %v8636 = vsel %vm8633, %v8635, %v8631
  %v8637 = vmul.f32 1.0, %v8636
  %v8638 = vadd.f32 %v8616, %v8429
  %v8639 = vxor.u32 %v8638, 2147483648
  %v8640 = vmul.f32 %v8639, 1.442695
  %v8641 = vpow.pop %v8640
  %v8642 = vadd.f32 %v8641, 1.0
  %v8643 = vrcp.pop %v8642
  %v8644 = vmul.f32 %v8642, %v8643
  %v8645 = vsub.f32 1.0, %v8644
  %v8646 = vmul.f32 %v8643, %v8645
  %v8647 = vadd.f32 %v8643, %v8646
  %vm8648 = vweird.f32 %v8642
  %vm8649 = vweird.f32 %v8643
  %vm8650 = vmor %vm8648, %vm8649
  %v8651 = vsel %vm8650, %v8643, %v8647
  %v8652 = vand.u32 2147483647, %v8642
  %vm8653 = vcmp.eq.f32.partialorder %v8652, 8.507059e+37
  %v8654 = vand.u32 %v8642, 2147483648
  %v8655 = vor.u32 1.1754944e-38, %v8654
  %v8656 = vsel %vm8653, %v8655, %v8651
  %v8657 = vmul.f32 1.0, %v8656
  %v8658 = vadd.f32 %v8455, %v225
  %v8659 = vmul.f32 %v8637, %v8658
  %v8660 = vadd.f32 %v8617, %v8659
  %v8661 = vtanh.pop %v8660
  %v8662 = vsub.f32 1.0, %v8657
  %v8663 = vmul.f32 %v8662, %v8661
  %v8664 = vmul.f32 %v8657, %v7339
  %v8665 = vadd.f32 %v8663, %v8664
  %v8666 = vpack.c.bf16 %v8614, %v8614
  %v8667 = vpack.c.bf16 %v8665, %v8665
  %v8668 = vld [vmem:[%s3 + $0x8] sm:$0xff]
  %v8669 = vld [vmem:[%s3 + $0x10] sm:$0xff]
  %v8670 = vld [vmem:[%s3 + $0x18] sm:$0xff]
  %v8671 = vld [vmem:[%s3 + $0x20] sm:$0xff]
  %v8672 = vld [vmem:[%s3 + $0x30] sm:$0xff]
  %v8673 = vld [vmem:[%s3 + $0x38] sm:$0xff]
  %v8674 = vld [vmem:[%s3 + $0x40] sm:$0xff]
  %v8675 = vld [vmem:[%s3 + $0x48] sm:$0xff]
  %v8676 = vld [vmem:[%s3 + $0x58] sm:$0xff]
  %v8677 = vld [vmem:[%s3 + $0x60] sm:$0xff]
  %v8678 = vld [vmem:[%s3 + $0x68] sm:$0xff]
  %v8679 = vld [vmem:[%s3 + $0x70] sm:$0xff]
  %v8680 = vld [vmem:[%s3 + $0x80] sm:$0xff]
  %v8681 = vld [vmem:[%s3 + $0x88] sm:$0xff]
  %v8682 = vld [vmem:[%s3 + $0x90] sm:$0xff]
  %v8683 = vld [vmem:[%s3 + $0x98] sm:$0xff]
  %v8684 = vld [vmem:[%s3 + $0xa8] sm:$0xff]
  %v8685 = vld [vmem:[%s3 + $0xb0] sm:$0xff]
  %v8686 = vld [vmem:[%s3 + $0xb8] sm:$0xff]
  %v8687 = vld [vmem:[%s3 + $0xc0] sm:$0xff]
  %v8688 = vld [vmem:[%s3 + $0xd0] sm:$0xff]
  %v8689 = vld [vmem:[%s3 + $0xd8] sm:$0xff]
  %v8690 = vld [vmem:[%s3 + $0xe0] sm:$0xff]
  %v8691 = vld [vmem:[%s3 + $0xe8] sm:$0xff]
  %v8692 = vld [vmem:[%s3 + $0xf8] sm:$0xff]
  %v8693 = vld [vmem:[%s3 + $0x100] sm:$0xff]
  %v8694 = vld [vmem:[%s3 + $0x108] sm:$0xff]
  %v8695 = vld [vmem:[%s3 + $0x110] sm:$0xff]
  %v8696 = vld [vmem:[%s3 + $0x120] sm:$0xff]
  %v8697 = vld [vmem:[%s3 + $0x128] sm:$0xff]
  %v8698 = vld [vmem:[%s3 + $0x130] sm:$0xff]
  %v8699 = vld [vmem:[%s3 + $0x138] sm:$0xff]
  %v8700 = vld [vmem:[%s3 + $0x148] sm:$0xff]
  %v8701 = vld [vmem:[%s3 + $0x150] sm:$0xff]
  %v8702 = vld [vmem:[%s3 + $0x158] sm:$0xff]
  %v8703 = vld [vmem:[%s3 + $0x160] sm:$0xff]
  %v8704 = vld [vmem:[%s3 + $0x170] sm:$0xff]
  %v8705 = vld [vmem:[%s3 + $0x178] sm:$0xff]
  %v8706 = vld [vmem:[%s3 + $0x180] sm:$0xff]
  %v8707 = vld [vmem:[%s3 + $0x188] sm:$0xff]
  %v8708 = vld [vmem:[%s3 + $0x198] sm:$0xff]
  %v8709 = vld [vmem:[%s3 + $0x1a0] sm:$0xff]
  %v8710 = vld [vmem:[%s3 + $0x1a8] sm:$0xff]
  %v8711 = vld [vmem:[%s3 + $0x1b0] sm:$0xff]
  %v8712 = vld [vmem:[%s3 + $0x1c0] sm:$0xff]
  %v8713 = vld [vmem:[%s3 + $0x1c8] sm:$0xff]
  %v8714 = vld [vmem:[%s3 + $0x1d0] sm:$0xff]
  %v8715 = vld [vmem:[%s3 + $0x1d8] sm:$0xff]
  %v8716 = vld [vmem:[%s3 + $0x1e8] sm:$0xff]
  %v8717 = vld [vmem:[%s3 + $0x1f0] sm:$0xff]
  %v8718 = vld [vmem:[%s3 + $0x1f8] sm:$0xff]
  %v8719 = vld [vmem:[%s3 + $0x200] sm:$0xff]
  %v8720 = vld [vmem:[%s3 + $0x210] sm:$0xff]
  %v8721 = vld [vmem:[%s3 + $0x218] sm:$0xff]
  %v8722 = vld [vmem:[%s3 + $0x220] sm:$0xff]
  %v8723 = vld [vmem:[%s3 + $0x228] sm:$0xff]
  %v8724 = vld [vmem:[%s3 + $0x238] sm:$0xff]
  %v8725 = vld [vmem:[%s3 + $0x240] sm:$0xff]
  %v8726 = vld [vmem:[%s3 + $0x248] sm:$0xff]
  %v8727 = vld [vmem:[%s3 + $0x250] sm:$0xff]
  %v8728 = vld [vmem:[%s3 + $0x260] sm:$0xff]
  %v8729 = vld [vmem:[%s3 + $0x268] sm:$0xff]
  %v8730 = vld [vmem:[%s3 + $0x270] sm:$0xff]
  %v8731 = vld [vmem:[%s3 + $0x278] sm:$0xff]
  %v8732 = vld [vmem:[%s3 + $0x288] sm:$0xff]
  %v8733 = vld [vmem:[%s3 + $0x290] sm:$0xff]
  %v8734 = vld [vmem:[%s3 + $0x298] sm:$0xff]
  %v8735 = vld [vmem:[%s3 + $0x2a0] sm:$0xff]
  %v8736 = vld [vmem:[%s3 + $0x2b0] sm:$0xff]
  %v8737 = vld [vmem:[%s3 + $0x2b8] sm:$0xff]
  %v8738 = vld [vmem:[%s3 + $0x2c0] sm:$0xff]
  %v8739 = vld [vmem:[%s3 + $0x2c8] sm:$0xff]
  %v8740 = vld [vmem:[%s3 + $0x2d8] sm:$0xff]
  %v8741 = vld [vmem:[%s3 + $0x2e0] sm:$0xff]
  %v8742 = vld [vmem:[%s3 + $0x2e8] sm:$0xff]
  %v8743 = vld [vmem:[%s3 + $0x2f0] sm:$0xff]
  %v8744 = vld [vmem:[%s3 + $0x300] sm:$0xff]
  %v8745 = vld [vmem:[%s3 + $0x308] sm:$0xff]
  %v8746 = vld [vmem:[%s3 + $0x310] sm:$0xff]
  %v8747 = vld [vmem:[%s3 + $0x318] sm:$0xff]
  %v8748 = vld [vmem:[%s3 + $0x328] sm:$0xff]
  %v8749 = vld [vmem:[%s3 + $0x330] sm:$0xff]
  %v8750 = vld [vmem:[%s3 + $0x338] sm:$0xff]
  %v8751 = vld [vmem:[%s3 + $0x340] sm:$0xff]
  %v8752 = vld [vmem:[%s3 + $0x350] sm:$0xff]
  %v8753 = vld [vmem:[%s3 + $0x358] sm:$0xff]
  %v8754 = vld [vmem:[%s3 + $0x360] sm:$0xff]
  %v8755 = vld [vmem:[%s3 + $0x368] sm:$0xff]
  %v8756 = vld [vmem:[%s3 + $0x378] sm:$0xff]
  %v8757 = vld [vmem:[%s3 + $0x380] sm:$0xff]
  %v8758 = vld [vmem:[%s3 + $0x388] sm:$0xff]
  %v8759 = vld [vmem:[%s3 + $0x390] sm:$0xff]
  %v8760 = vld [vmem:[%s3 + $0x3a0] sm:$0xff]
  %v8761 = vld [vmem:[%s3 + $0x3a8] sm:$0xff]
  %v8762 = vld [vmem:[%s3 + $0x3b0] sm:$0xff]
  %v8763 = vld [vmem:[%s3 + $0x3b8] sm:$0xff]
  %v8764 = vld [vmem:[%s3 + $0x3c8] sm:$0xff]
  %v8765 = vld [vmem:[%s3 + $0x3d0] sm:$0xff]
  %v8766 = vld [vmem:[%s3 + $0x3d8] sm:$0xff]
  %v8767 = vld [vmem:[%s3 + $0x3e0] sm:$0xff]
  %v8768 = vld [vmem:[%s3 + $0x3f0] sm:$0xff]
  %v8769 = vld [vmem:[%s3 + $0x3f8] sm:$0xff]
  %v8770 = vld [vmem:[%s3 + $0x400] sm:$0xff]
  %v8771 = vld [vmem:[%s3 + $0x408] sm:$0xff]
  %v8772 = vld [vmem:[%s3 + $0x418] sm:$0xff]
  %v8773 = vld [vmem:[%s3 + $0x420] sm:$0xff]
  %v8774 = vld [vmem:[%s3 + $0x428] sm:$0xff]
  %v8775 = vld [vmem:[%s3 + $0x430] sm:$0xff]
  %v8776 = vld [vmem:[%s3 + $0x440] sm:$0xff]
  %v8777 = vld [vmem:[%s3 + $0x448] sm:$0xff]
  %v8778 = vld [vmem:[%s3 + $0x450] sm:$0xff]
  %v8779 = vld [vmem:[%s3 + $0x458] sm:$0xff]
  %v8780 = vld [vmem:[%s3 + $0x468] sm:$0xff]
  %v8781 = vld [vmem:[%s3 + $0x470] sm:$0xff]
  %v8782 = vld [vmem:[%s3 + $0x478] sm:$0xff]
  %v8783 = vld [vmem:[%s3 + $0x480] sm:$0xff]
  %v8784 = vld [vmem:[%s3 + $0x490] sm:$0xff]
  %v8785 = vld [vmem:[%s3 + $0x498] sm:$0xff]
  %v8786 = vld [vmem:[%s3 + $0x4a0] sm:$0xff]
  %v8787 = vld [vmem:[%s3 + $0x4a8] sm:$0xff]
  %v8788 = vld [vmem:[%s3 + $0x4b8] sm:$0xff]
  %v8789 = vld [vmem:[%s3 + $0x4c0] sm:$0xff]
  %v8790 = vld [vmem:[%s3 + $0x4c8] sm:$0xff]
  %v8791 = vld [vmem:[%s3 + $0x4d0] sm:$0xff]
  %v8792 = vld [vmem:[%s3 + $0x4e0] sm:$0xff]
  %v8793 = vld [vmem:[%s3 + $0x4e8] sm:$0xff]
  %v8794 = vld [vmem:[%s3 + $0x4f0] sm:$0xff]
  %v8795 = vld [vmem:[%s3 + $0x4f8] sm:$0xff]
  %v8924 = vunpack.c.h.b16 %v8668
  %v8925 = vunpack.c.l.b16 %v8669
  %v8926 = vunpack.c.h.b16 %v8669
  %v8927 = vunpack.c.l.b16 %v8670
  %v8928 = vunpack.c.h.b16 %v8670
  %v8929 = vunpack.c.l.b16 %v8671
  %v8930 = vunpack.c.h.b16 %v8671
  %v8931 = vunpack.c.h.b16 %v8672
  %v8932 = vunpack.c.l.b16 %v8673
  %v8933 = vunpack.c.h.b16 %v8673
  %v8934 = vunpack.c.l.b16 %v8674
  %v8935 = vunpack.c.h.b16 %v8674
  %v8936 = vunpack.c.l.b16 %v8675
  %v8937 = vunpack.c.h.b16 %v8675
  %v8938 = vunpack.c.h.b16 %v8676
  %v8939 = vunpack.c.l.b16 %v8677
  %v8940 = vunpack.c.h.b16 %v8677
  %v8941 = vunpack.c.l.b16 %v8678
  %v8942 = vunpack.c.h.b16 %v8678
  %v8943 = vunpack.c.l.b16 %v8679
  %v8944 = vunpack.c.h.b16 %v8679
  %v8945 = vunpack.c.h.b16 %v8680
  %v8946 = vunpack.c.l.b16 %v8681
  %v8947 = vunpack.c.h.b16 %v8681
  %v8948 = vunpack.c.l.b16 %v8682
  %v8949 = vunpack.c.h.b16 %v8682
  %v8950 = vunpack.c.l.b16 %v8683
  %v8951 = vunpack.c.h.b16 %v8683
  %v8952 = vunpack.c.h.b16 %v8684
  %v8953 = vunpack.c.l.b16 %v8685
  %v8954 = vunpack.c.h.b16 %v8685
  %v8955 = vunpack.c.l.b16 %v8686
  %v8956 = vunpack.c.h.b16 %v8686
  %v8957 = vunpack.c.l.b16 %v8687
  %v8958 = vunpack.c.h.b16 %v8687
  %v8959 = vunpack.c.h.b16 %v8688
  %v8960 = vunpack.c.l.b16 %v8689
  %v8961 = vunpack.c.h.b16 %v8689
  %v8962 = vunpack.c.l.b16 %v8690
  %v8963 = vunpack.c.h.b16 %v8690
  %v8964 = vunpack.c.l.b16 %v8691
  %v8965 = vunpack.c.h.b16 %v8691
  %v8966 = vunpack.c.h.b16 %v8692
  %v8967 = vunpack.c.l.b16 %v8693
  %v8968 = vunpack.c.h.b16 %v8693
  %v8969 = vunpack.c.l.b16 %v8694
  %v8970 = vunpack.c.h.b16 %v8694
  %v8971 = vunpack.c.l.b16 %v8695
  %v8972 = vunpack.c.h.b16 %v8695
  %v8973 = vunpack.c.h.b16 %v8696
  %v8974 = vunpack.c.l.b16 %v8697
  %v8975 = vunpack.c.h.b16 %v8697
  %v8976 = vunpack.c.l.b16 %v8698
  %v8977 = vunpack.c.h.b16 %v8698
  %v8978 = vunpack.c.l.b16 %v8699
  %v8979 = vunpack.c.h.b16 %v8699
  %v8980 = vunpack.c.h.b16 %v8700
  %v8981 = vunpack.c.l.b16 %v8701
  %v8982 = vunpack.c.h.b16 %v8701
  %v8983 = vunpack.c.l.b16 %v8702
  %v8984 = vunpack.c.h.b16 %v8702
  %v8985 = vunpack.c.l.b16 %v8703
  %v8986 = vunpack.c.h.b16 %v8703
  %v8987 = vunpack.c.h.b16 %v8704
  %v8988 = vunpack.c.l.b16 %v8705
  %v8989 = vunpack.c.h.b16 %v8705
  %v8990 = vunpack.c.l.b16 %v8706
  %v8991 = vunpack.c.h.b16 %v8706
  %v8992 = vunpack.c.l.b16 %v8707
  %v8993 = vunpack.c.h.b16 %v8707
  %v8994 = vunpack.c.h.b16 %v8708
  %v8995 = vunpack.c.l.b16 %v8709
  %v8996 = vunpack.c.h.b16 %v8709
  %v8997 = vunpack.c.l.b16 %v8710
  %v8998 = vunpack.c.h.b16 %v8710
  %v8999 = vunpack.c.l.b16 %v8711
  %v9000 = vunpack.c.h.b16 %v8711
  %v9001 = vunpack.c.h.b16 %v8712
  %v9002 = vunpack.c.l.b16 %v8713
  %v9003 = vunpack.c.h.b16 %v8713
  %v9004 = vunpack.c.l.b16 %v8714
  %v9005 = vunpack.c.h.b16 %v8714
  %v9006 = vunpack.c.l.b16 %v8715
  %v9007 = vunpack.c.h.b16 %v8715
  %v9008 = vunpack.c.h.b16 %v8716
  %v9009 = vunpack.c.l.b16 %v8717
  %v9010 = vunpack.c.h.b16 %v8717
  %v9011 = vunpack.c.l.b16 %v8718
  %v9012 = vunpack.c.h.b16 %v8718
  %v9013 = vunpack.c.l.b16 %v8719
  %v9014 = vunpack.c.h.b16 %v8719
  %v9015 = vunpack.c.h.b16 %v8720
  %v9016 = vunpack.c.l.b16 %v8721
  %v9017 = vunpack.c.h.b16 %v8721
  %v9018 = vunpack.c.l.b16 %v8722
  %v9019 = vunpack.c.h.b16 %v8722
  %v9020 = vunpack.c.l.b16 %v8723
  %v9021 = vunpack.c.h.b16 %v8723
  %v9022 = vunpack.c.h.b16 %v8724
  %v9023 = vunpack.c.l.b16 %v8725
  %v9024 = vunpack.c.h.b16 %v8725
  %v9025 = vunpack.c.l.b16 %v8726
  %v9026 = vunpack.c.h.b16 %v8726
  %v9027 = vunpack.c.l.b16 %v8727
  %v9028 = vunpack.c.h.b16 %v8727
  %v9029 = vunpack.c.h.b16 %v8728
  %v9030 = vunpack.c.l.b16 %v8729
  %v9031 = vunpack.c.h.b16 %v8729
  %v9032 = vunpack.c.l.b16 %v8730
  %v9033 = vunpack.c.h.b16 %v8730
  %v9034 = vunpack.c.l.b16 %v8731
  %v9035 = vunpack.c.h.b16 %v8731
  %v9036 = vunpack.c.h.b16 %v8732
  %v9037 = vunpack.c.l.b16 %v8733
  %v9038 = vunpack.c.h.b16 %v8733
  %v9039 = vunpack.c.l.b16 %v8734
  %v9040 = vunpack.c.h.b16 %v8734
  %v9041 = vunpack.c.l.b16 %v8735
  %v9042 = vunpack.c.h.b16 %v8735
  %v9043 = vunpack.c.h.b16 %v8736
  %v9044 = vunpack.c.l.b16 %v8737
  %v9045 = vunpack.c.h.b16 %v8737
  %v9046 = vunpack.c.l.b16 %v8738
  %v9047 = vunpack.c.h.b16 %v8738
  %v9048 = vunpack.c.l.b16 %v8739
  %v9049 = vunpack.c.h.b16 %v8739
  %v9050 = vunpack.c.h.b16 %v8740
  %v9051 = vunpack.c.l.b16 %v8741
  %v9052 = vunpack.c.h.b16 %v8741
  %v9053 = vunpack.c.l.b16 %v8742
  %v9054 = vunpack.c.h.b16 %v8742
  %v9055 = vunpack.c.l.b16 %v8743
  %v9056 = vunpack.c.h.b16 %v8743
  %v9057 = vunpack.c.h.b16 %v8744
  %v9058 = vunpack.c.l.b16 %v8745
  %v9059 = vunpack.c.h.b16 %v8745
  %v9060 = vunpack.c.l.b16 %v8746
  %v9061 = vunpack.c.h.b16 %v8746
  %v9062 = vunpack.c.l.b16 %v8747
  %v9063 = vunpack.c.h.b16 %v8747
  %v9064 = vunpack.c.h.b16 %v8748
  %v9065 = vunpack.c.l.b16 %v8749
  %v9066 = vunpack.c.h.b16 %v8749
  %v9067 = vunpack.c.l.b16 %v8750
  %v9068 = vunpack.c.h.b16 %v8750
  %v9069 = vunpack.c.l.b16 %v8751
  %v9070 = vunpack.c.h.b16 %v8751
  %v9071 = vunpack.c.h.b16 %v8752
  %v9072 = vunpack.c.l.b16 %v8753
  %v9073 = vunpack.c.h.b16 %v8753
  %v9074 = vunpack.c.l.b16 %v8754
  %v9075 = vunpack.c.h.b16 %v8754
  %v9076 = vunpack.c.l.b16 %v8755
  %v9077 = vunpack.c.h.b16 %v8755
  %v9078 = vunpack.c.h.b16 %v8756
  %v9079 = vunpack.c.l.b16 %v8757
  %v9080 = vunpack.c.h.b16 %v8757
  %v9081 = vunpack.c.l.b16 %v8758
  %v9082 = vunpack.c.h.b16 %v8758
  %v9083 = vunpack.c.l.b16 %v8759
  %v9084 = vunpack.c.h.b16 %v8759
  %v9085 = vunpack.c.h.b16 %v8760
  %v9086 = vunpack.c.l.b16 %v8761
  %v9087 = vunpack.c.h.b16 %v8761
  %v9088 = vunpack.c.l.b16 %v8762
  %v9089 = vunpack.c.h.b16 %v8762
  %v9090 = vunpack.c.l.b16 %v8763
  %v9091 = vunpack.c.h.b16 %v8763
  %v9092 = vunpack.c.h.b16 %v8764
  %v9093 = vunpack.c.l.b16 %v8765
  %v9094 = vunpack.c.h.b16 %v8765
  %v9095 = vunpack.c.l.b16 %v8766
  %v9096 = vunpack.c.h.b16 %v8766
  %v9097 = vunpack.c.l.b16 %v8767
  %v9098 = vunpack.c.h.b16 %v8767
  %v9099 = vunpack.c.h.b16 %v8768
  %v9100 = vunpack.c.l.b16 %v8769
  %v9101 = vunpack.c.h.b16 %v8769
  %v9102 = vunpack.c.l.b16 %v8770
  %v9103 = vunpack.c.h.b16 %v8770
  %v9104 = vunpack.c.l.b16 %v8771
  %v9105 = vunpack.c.h.b16 %v8771
  %v9106 = vunpack.c.h.b16 %v8772
  %v9107 = vunpack.c.l.b16 %v8773
  %v9108 = vunpack.c.h.b16 %v8773
  %v9109 = vunpack.c.l.b16 %v8774
  %v9110 = vunpack.c.h.b16 %v8774
  %v9111 = vunpack.c.l.b16 %v8775
  %v9112 = vunpack.c.h.b16 %v8775
  %v9113 = vunpack.c.h.b16 %v8776
  %v9114 = vunpack.c.l.b16 %v8777
  %v9115 = vunpack.c.h.b16 %v8777
  %v9116 = vunpack.c.l.b16 %v8778
  %v9117 = vunpack.c.h.b16 %v8778
  %v9118 = vunpack.c.l.b16 %v8779
  %v9119 = vunpack.c.h.b16 %v8779
  %v9120 = vunpack.c.h.b16 %v8780
  %v9121 = vunpack.c.l.b16 %v8781
  %v9122 = vunpack.c.h.b16 %v8781
  %v9123 = vunpack.c.l.b16 %v8782
  %v9124 = vunpack.c.h.b16 %v8782
  %v9125 = vunpack.c.l.b16 %v8783
  %v9126 = vunpack.c.h.b16 %v8783
  %v9127 = vunpack.c.h.b16 %v8784
  %v9128 = vunpack.c.l.b16 %v8785
  %v9129 = vunpack.c.h.b16 %v8785
  %v9130 = vunpack.c.l.b16 %v8786
  %v9131 = vunpack.c.h.b16 %v8786
  %v9132 = vunpack.c.l.b16 %v8787
  %v9133 = vunpack.c.h.b16 %v8787
  %v9134 = vunpack.c.h.b16 %v8788
  %v9135 = vunpack.c.l.b16 %v8789
  %v9136 = vunpack.c.h.b16 %v8789
  %v9137 = vunpack.c.l.b16 %v8790
  %v9138 = vunpack.c.h.b16 %v8790
  %v9139 = vunpack.c.l.b16 %v8791
  %v9140 = vunpack.c.h.b16 %v8791
  %v9141 = vunpack.c.h.b16 %v8792
  %v9142 = vunpack.c.l.b16 %v8793
  %v9143 = vunpack.c.h.b16 %v8793
  %v9144 = vunpack.c.l.b16 %v8794
  %v9145 = vunpack.c.h.b16 %v8794
  %v9146 = vunpack.c.l.b16 %v8795
  %v9147 = vunpack.c.h.b16 %v8795
  %v9148 = vpack.c.b16 %v8931, %v8924
  %v9149 = vpack.c.b16 %v8932, %v8925
  %v9150 = vpack.c.b16 %v8933, %v8926
  %v9151 = vpack.c.b16 %v8934, %v8927
  %v9152 = vpack.c.b16 %v8935, %v8928
  %v9153 = vpack.c.b16 %v8936, %v8929
  %v9154 = vpack.c.b16 %v8937, %v8930
  %v9155 = vpack.c.b16 %v8945, %v8938
  %v9156 = vpack.c.b16 %v8946, %v8939
  %v9157 = vpack.c.b16 %v8947, %v8940
  %v9158 = vpack.c.b16 %v8948, %v8941
  %v9159 = vpack.c.b16 %v8949, %v8942
  %v9160 = vpack.c.b16 %v8950, %v8943
  %v9161 = vpack.c.b16 %v8951, %v8944
  %v9162 = vpack.c.b16 %v8959, %v8952
  %v9163 = vpack.c.b16 %v8960, %v8953
  %v9164 = vpack.c.b16 %v8961, %v8954
  %v9165 = vpack.c.b16 %v8962, %v8955
  %v9166 = vpack.c.b16 %v8963, %v8956
  %v9167 = vpack.c.b16 %v8964, %v8957
  %v9168 = vpack.c.b16 %v8965, %v8958
  %v9169 = vpack.c.b16 %v8973, %v8966
  %v9170 = vpack.c.b16 %v8974, %v8967
  %v9171 = vpack.c.b16 %v8975, %v8968
  %v9172 = vpack.c.b16 %v8976, %v8969
  %v9173 = vpack.c.b16 %v8977, %v8970
  %v9174 = vpack.c.b16 %v8978, %v8971
  %v9175 = vpack.c.b16 %v8979, %v8972
  %v9176 = vpack.c.b16 %v8987, %v8980
  %v9177 = vpack.c.b16 %v8988, %v8981
  %v9178 = vpack.c.b16 %v8989, %v8982
  %v9179 = vpack.c.b16 %v8990, %v8983
  %v9180 = vpack.c.b16 %v8991, %v8984
  %v9181 = vpack.c.b16 %v8992, %v8985
  %v9182 = vpack.c.b16 %v8993, %v8986
  %v9183 = vpack.c.b16 %v9001, %v8994
  %v9184 = vpack.c.b16 %v9002, %v8995
  %v9185 = vpack.c.b16 %v9003, %v8996
  %v9186 = vpack.c.b16 %v9004, %v8997
  %v9187 = vpack.c.b16 %v9005, %v8998
  %v9188 = vpack.c.b16 %v9006, %v8999
  %v9189 = vpack.c.b16 %v9007, %v9000
  %v9190 = vpack.c.b16 %v9015, %v9008
  %v9191 = vpack.c.b16 %v9016, %v9009
  %v9192 = vpack.c.b16 %v9017, %v9010
  %v9193 = vpack.c.b16 %v9018, %v9011
  %v9194 = vpack.c.b16 %v9019, %v9012
  %v9195 = vpack.c.b16 %v9020, %v9013
  %v9196 = vpack.c.b16 %v9021, %v9014
  %v9197 = vpack.c.b16 %v9029, %v9022
  %v9198 = vpack.c.b16 %v9030, %v9023
  %v9199 = vpack.c.b16 %v9031, %v9024
  %v9200 = vpack.c.b16 %v9032, %v9025
  %v9201 = vpack.c.b16 %v9033, %v9026
  %v9202 = vpack.c.b16 %v9034, %v9027
  %v9203 = vpack.c.b16 %v9035, %v9028
  %v9204 = vpack.c.b16 %v9043, %v9036
  %v9205 = vpack.c.b16 %v9044, %v9037
  %v9206 = vpack.c.b16 %v9045, %v9038
  %v9207 = vpack.c.b16 %v9046, %v9039
  %v9208 = vpack.c.b16 %v9047, %v9040
  %v9209 = vpack.c.b16 %v9048, %v9041
  %v9210 = vpack.c.b16 %v9049, %v9042
  %v9211 = vpack.c.b16 %v9057, %v9050
  %v9212 = vpack.c.b16 %v9058, %v9051
  %v9213 = vpack.c.b16 %v9059, %v9052
  %v9214 = vpack.c.b16 %v9060, %v9053
  %v9215 = vpack.c.b16 %v9061, %v9054
  %v9216 = vpack.c.b16 %v9062, %v9055
  %v9217 = vpack.c.b16 %v9063, %v9056
  %v9218 = vpack.c.b16 %v9071, %v9064
  %v9219 = vpack.c.b16 %v9072, %v9065
  %v9220 = vpack.c.b16 %v9073, %v9066
  %v9221 = vpack.c.b16 %v9074, %v9067
  %v9222 = vpack.c.b16 %v9075, %v9068
  %v9223 = vpack.c.b16 %v9076, %v9069
  %v9224 = vpack.c.b16 %v9077, %v9070
  %v9225 = vpack.c.b16 %v9085, %v9078
  %v9226 = vpack.c.b16 %v9086, %v9079
  %v9227 = vpack.c.b16 %v9087, %v9080
  %v9228 = vpack.c.b16 %v9088, %v9081
  %v9229 = vpack.c.b16 %v9089, %v9082
  %v9230 = vpack.c.b16 %v9090, %v9083
  %v9231 = vpack.c.b16 %v9091, %v9084
  %v9232 = vpack.c.b16 %v9099, %v9092
  %v9233 = vpack.c.b16 %v9100, %v9093
  %v9234 = vpack.c.b16 %v9101, %v9094
  %v9235 = vpack.c.b16 %v9102, %v9095
  %v9236 = vpack.c.b16 %v9103, %v9096
  %v9237 = vpack.c.b16 %v9104, %v9097
  %v9238 = vpack.c.b16 %v9105, %v9098
  %v9239 = vpack.c.b16 %v9113, %v9106
  %v9240 = vpack.c.b16 %v9114, %v9107
  %v9241 = vpack.c.b16 %v9115, %v9108
  %v9242 = vpack.c.b16 %v9116, %v9109
  %v9243 = vpack.c.b16 %v9117, %v9110
  %v9244 = vpack.c.b16 %v9118, %v9111
  %v9245 = vpack.c.b16 %v9119, %v9112
  %v9246 = vpack.c.b16 %v9127, %v9120
  %v9247 = vpack.c.b16 %v9128, %v9121
  %v9248 = vpack.c.b16 %v9129, %v9122
  %v9249 = vpack.c.b16 %v9130, %v9123
  %v9250 = vpack.c.b16 %v9131, %v9124
  %v9251 = vpack.c.b16 %v9132, %v9125
  %v9252 = vpack.c.b16 %v9133, %v9126
  %v9253 = vpack.c.b16 %v9141, %v9134
  %v9254 = vpack.c.b16 %v9142, %v9135
  %v9255 = vpack.c.b16 %v9143, %v9136
  %v9256 = vpack.c.b16 %v9144, %v9137
  %v9257 = vpack.c.b16 %v9145, %v9138
  %v9258 = vpack.c.b16 %v9146, %v9139
  %v9259 = vpack.c.b16 %v9147, %v9140
  %9372 = vmatpush.bf16.msra.mxu0 %v9197
  %9373 = vmatpush.bf16.msra.mxu0 %v9190
  %9374 = vmatpush.bf16.msra.mxu0 %v9183
  %9375 = vmatpush.bf16.msra.mxu0 %v9176
  %9376 = vmatpush.bf16.msra.mxu0 %v9169
  %9377 = vmatpush.bf16.msra.mxu0 %v9162
  %9378 = vmatpush.bf16.msra.mxu0 %v9155
  %9379 = vmatpush.bf16.msra.mxu0 %v9148
  %9380 = vmatmul.bf16.gmra.mxu0 %v8666
  %v9381 = vpop.f32.mrf.mxu0
  %v9382 = vadd.f32 0.0, %v9381
  %v9383 = vpop.f32.mrf.mxu0
  %9384 = vdwg.mxu0
  %9385 = vmatpush.bf16.msra.mxu0 %v9253
  %9386 = vmatpush.bf16.msra.mxu0 %v9246
  %9387 = vmatpush.bf16.msra.mxu0 %v9239
  %9388 = vmatpush.bf16.msra.mxu0 %v9232
  %9389 = vmatpush.bf16.msra.mxu0 %v9225
  %9390 = vmatpush.bf16.msra.mxu0 %v9218
  %9391 = vmatpush.bf16.msra.mxu0 %v9211
  %9392 = vmatpush.bf16.msra.mxu0 %v9204
  %9393 = vmatmul.bf16.gmra.mxu0 %v8667
  %v9394 = vpop.f32.mrf.mxu0
  %v9395 = vadd.f32 %v9382, %v9394
  %v9396 = vpop.f32.mrf.mxu0
  %9397 = vdwg.mxu0
  %9398 = vmatpush.bf16.msra.mxu0 %v9198
  %9399 = vmatpush.bf16.msra.mxu0 %v9191
  %9400 = vmatpush.bf16.msra.mxu0 %v9184
  %9401 = vmatpush.bf16.msra.mxu0 %v9177
  %9402 = vmatpush.bf16.msra.mxu0 %v9170
  %9403 = vmatpush.bf16.msra.mxu0 %v9163
  %9404 = vmatpush.bf16.msra.mxu0 %v9156
  %9405 = vmatpush.bf16.msra.mxu0 %v9149
  %9406 = vmatmul.bf16.gmra.mxu0 %v8666
  %v9407 = vpop.f32.mrf.mxu0
  %v9408 = vadd.f32 0.0, %v9407
  %v9409 = vpop.f32.mrf.mxu0
  %9410 = vdwg.mxu0
  %9411 = vmatpush.bf16.msra.mxu0 %v9254
  %9412 = vmatpush.bf16.msra.mxu0 %v9247
  %9413 = vmatpush.bf16.msra.mxu0 %v9240
  %9414 = vmatpush.bf16.msra.mxu0 %v9233
  %9415 = vmatpush.bf16.msra.mxu0 %v9226
  %9416 = vmatpush.bf16.msra.mxu0 %v9219
  %9417 = vmatpush.bf16.msra.mxu0 %v9212
  %9418 = vmatpush.bf16.msra.mxu0 %v9205
  %9419 = vmatmul.bf16.gmra.mxu0 %v8667
  %v9420 = vpop.f32.mrf.mxu0
  %v9421 = vadd.f32 %v9408, %v9420
  %v9422 = vpop.f32.mrf.mxu0
  %9423 = vdwg.mxu0
  %9424 = vmatpush.bf16.msra.mxu0 %v9199
  %9425 = vmatpush.bf16.msra.mxu0 %v9192
  %9426 = vmatpush.bf16.msra.mxu0 %v9185
  %9427 = vmatpush.bf16.msra.mxu0 %v9178
  %9428 = vmatpush.bf16.msra.mxu0 %v9171
  %9429 = vmatpush.bf16.msra.mxu0 %v9164
  %9430 = vmatpush.bf16.msra.mxu0 %v9157
  %9431 = vmatpush.bf16.msra.mxu0 %v9150
  %9432 = vmatmul.bf16.gmra.mxu0 %v8666
  %v9433 = vpop.f32.mrf.mxu0
  %v9434 = vadd.f32 0.0, %v9433
  %v9435 = vpop.f32.mrf.mxu0
  %9436 = vdwg.mxu0
  %9437 = vmatpush.bf16.msra.mxu0 %v9255
  %9438 = vmatpush.bf16.msra.mxu0 %v9248
  %9439 = vmatpush.bf16.msra.mxu0 %v9241
  %9440 = vmatpush.bf16.msra.mxu0 %v9234
  %9441 = vmatpush.bf16.msra.mxu0 %v9227
  %9442 = vmatpush.bf16.msra.mxu0 %v9220
  %9443 = vmatpush.bf16.msra.mxu0 %v9213
  %9444 = vmatpush.bf16.msra.mxu0 %v9206
  %9445 = vmatmul.bf16.gmra.mxu0 %v8667
  %v9446 = vpop.f32.mrf.mxu0
  %v9447 = vadd.f32 %v9434, %v9446
  %v9448 = vpop.f32.mrf.mxu0
  %9449 = vdwg.mxu0
  %9450 = vmatpush.bf16.msra.mxu0 %v9200
  %9451 = vmatpush.bf16.msra.mxu0 %v9193
  %9452 = vmatpush.bf16.msra.mxu0 %v9186
  %9453 = vmatpush.bf16.msra.mxu0 %v9179
  %9454 = vmatpush.bf16.msra.mxu0 %v9172
  %9455 = vmatpush.bf16.msra.mxu0 %v9165
  %9456 = vmatpush.bf16.msra.mxu0 %v9158
  %9457 = vmatpush.bf16.msra.mxu0 %v9151
  %9458 = vmatmul.bf16.gmra.mxu0 %v8666
  %v9459 = vpop.f32.mrf.mxu0
  %v9460 = vadd.f32 0.0, %v9459
  %v9461 = vpop.f32.mrf.mxu0
  %9462 = vdwg.mxu0
  %9463 = vmatpush.bf16.msra.mxu0 %v9256
  %9464 = vmatpush.bf16.msra.mxu0 %v9249
  %9465 = vmatpush.bf16.msra.mxu0 %v9242
  %9466 = vmatpush.bf16.msra.mxu0 %v9235
  %9467 = vmatpush.bf16.msra.mxu0 %v9228
  %9468 = vmatpush.bf16.msra.mxu0 %v9221
  %9469 = vmatpush.bf16.msra.mxu0 %v9214
  %9470 = vmatpush.bf16.msra.mxu0 %v9207
  %9471 = vmatmul.bf16.gmra.mxu0 %v8667
  %v9472 = vpop.f32.mrf.mxu0
  %v9473 = vadd.f32 %v9460, %v9472
  %v9474 = vpop.f32.mrf.mxu0
  %9475 = vdwg.mxu0
  %9476 = vmatpush.bf16.msra.mxu0 %v9201
  %9477 = vmatpush.bf16.msra.mxu0 %v9194
  %9478 = vmatpush.bf16.msra.mxu0 %v9187
  %9479 = vmatpush.bf16.msra.mxu0 %v9180
  %9480 = vmatpush.bf16.msra.mxu0 %v9173
  %9481 = vmatpush.bf16.msra.mxu0 %v9166
  %9482 = vmatpush.bf16.msra.mxu0 %v9159
  %9483 = vmatpush.bf16.msra.mxu0 %v9152
  %9484 = vmatmul.bf16.gmra.mxu0 %v8666
  %v9485 = vpop.f32.mrf.mxu0
  %v9486 = vadd.f32 0.0, %v9485
  %v9487 = vpop.f32.mrf.mxu0
  %9488 = vdwg.mxu0
  %9489 = vmatpush.bf16.msra.mxu0 %v9257
  %9490 = vmatpush.bf16.msra.mxu0 %v9250
  %9491 = vmatpush.bf16.msra.mxu0 %v9243
  %9492 = vmatpush.bf16.msra.mxu0 %v9236
  %9493 = vmatpush.bf16.msra.mxu0 %v9229
  %9494 = vmatpush.bf16.msra.mxu0 %v9222
  %9495 = vmatpush.bf16.msra.mxu0 %v9215
  %9496 = vmatpush.bf16.msra.mxu0 %v9208
  %9497 = vmatmul.bf16.gmra.mxu0 %v8667
  %v9498 = vpop.f32.mrf.mxu0
  %v9499 = vadd.f32 %v9486, %v9498
  %v9500 = vpop.f32.mrf.mxu0
  %9501 = vdwg.mxu0
  %9502 = vmatpush.bf16.msra.mxu0 %v9202
  %9503 = vmatpush.bf16.msra.mxu0 %v9195
  %9504 = vmatpush.bf16.msra.mxu0 %v9188
  %9505 = vmatpush.bf16.msra.mxu0 %v9181
  %9506 = vmatpush.bf16.msra.mxu0 %v9174
  %9507 = vmatpush.bf16.msra.mxu0 %v9167
  %9508 = vmatpush.bf16.msra.mxu0 %v9160
  %9509 = vmatpush.bf16.msra.mxu0 %v9153
  %9510 = vmatmul.bf16.gmra.mxu0 %v8666
  %v9511 = vpop.f32.mrf.mxu0
  %v9512 = vadd.f32 0.0, %v9511
  %v9513 = vpop.f32.mrf.mxu0
  %9514 = vdwg.mxu0
  %9515 = vmatpush.bf16.msra.mxu0 %v9258
  %9516 = vmatpush.bf16.msra.mxu0 %v9251
  %9517 = vmatpush.bf16.msra.mxu0 %v9244
  %9518 = vmatpush.bf16.msra.mxu0 %v9237
  %9519 = vmatpush.bf16.msra.mxu0 %v9230
  %9520 = vmatpush.bf16.msra.mxu0 %v9223
  %9521 = vmatpush.bf16.msra.mxu0 %v9216
  %9522 = vmatpush.bf16.msra.mxu0 %v9209
  %9523 = vmatmul.bf16.gmra.mxu0 %v8667
  %v9524 = vpop.f32.mrf.mxu0
  %v9525 = vadd.f32 %v9512, %v9524
  %v9526 = vpop.f32.mrf.mxu0
  %9527 = vdwg.mxu0
  %9528 = vmatpush.bf16.msra.mxu0 %v9203
  %9529 = vmatpush.bf16.msra.mxu0 %v9196
  %9530 = vmatpush.bf16.msra.mxu0 %v9189
  %9531 = vmatpush.bf16.msra.mxu0 %v9182
  %9532 = vmatpush.bf16.msra.mxu0 %v9175
  %9533 = vmatpush.bf16.msra.mxu0 %v9168
  %9534 = vmatpush.bf16.msra.mxu0 %v9161
  %9535 = vmatpush.bf16.msra.mxu0 %v9154
  %9536 = vmatmul.bf16.gmra.mxu0 %v8666
  %v9537 = vpop.f32.mrf.mxu0
  %v9538 = vadd.f32 0.0, %v9537
  %v9539 = vpop.f32.mrf.mxu0
  %9540 = vdwg.mxu0
  %9541 = vmatpush.bf16.msra.mxu0 %v9259
  %9542 = vmatpush.bf16.msra.mxu0 %v9252
  %9543 = vmatpush.bf16.msra.mxu0 %v9245
  %9544 = vmatpush.bf16.msra.mxu0 %v9238
  %9545 = vmatpush.bf16.msra.mxu0 %v9231
  %9546 = vmatpush.bf16.msra.mxu0 %v9224
  %9547 = vmatpush.bf16.msra.mxu0 %v9217
  %9548 = vmatpush.bf16.msra.mxu0 %v9210
  %9549 = vmatmul.bf16.gmra.mxu0 %v8667
  %v9550 = vpop.f32.mrf.mxu0
  %v9551 = vadd.f32 %v9538, %v9550
  %v9552 = vpop.f32.mrf.mxu0
  %9553 = vdwg.mxu0
  %v9554 = vadd.f32 %v9551, %v237
  %9555 = vst [vmem:[%s9 + $0x30] sm:$0xff] %v9554
  %v9556 = vadd.f32 %v9473, %v229
  %v9557 = vadd.f32 %v9499, %v230
  %v9558 = vadd.f32 %v9525, %v231
  %v9559 = vadd.f32 %v9556, %v9395
  %v9560 = vxor.u32 %v9559, 2147483648
  %v9561 = vmul.f32 %v9560, 1.442695
  %v9562 = vpow.pop %v9561
  %v9563 = vadd.f32 %v9562, 1.0
  %v9564 = vrcp.pop %v9563
  %v9565 = vmul.f32 %v9563, %v9564
  %v9566 = vsub.f32 1.0, %v9565
  %v9567 = vmul.f32 %v9564, %v9566
  %v9568 = vadd.f32 %v9564, %v9567
  %vm9569 = vweird.f32 %v9563
  %vm9570 = vweird.f32 %v9564
  %vm9571 = vmor %vm9569, %vm9570
  %v9572 = vsel %vm9571, %v9564, %v9568
  %v9573 = vand.u32 2147483647, %v9563
  %vm9574 = vcmp.eq.f32.partialorder %v9573, 8.507059e+37
  %v9575 = vand.u32 %v9563, 2147483648
  %v9576 = vor.u32 1.1754944e-38, %v9575
  %v9577 = vsel %vm9574, %v9576, %v9572
  %v9578 = vmul.f32 1.0, %v9577
  %v9579 = vadd.f32 %v9557, %v9421
  %v9580 = vxor.u32 %v9579, 2147483648
  %v9581 = vmul.f32 %v9580, 1.442695
  %v9582 = vpow.pop %v9581
  %v9583 = vadd.f32 %v9582, 1.0
  %v9584 = vrcp.pop %v9583
  %v9585 = vmul.f32 %v9583, %v9584
  %v9586 = vsub.f32 1.0, %v9585
  %v9587 = vmul.f32 %v9584, %v9586
  %v9588 = vadd.f32 %v9584, %v9587
  %vm9589 = vweird.f32 %v9583
  %vm9590 = vweird.f32 %v9584
  %vm9591 = vmor %vm9589, %vm9590
  %v9592 = vsel %vm9591, %v9584, %v9588
  %v9593 = vand.u32 2147483647, %v9583
  %vm9594 = vcmp.eq.f32.partialorder %v9593, 8.507059e+37
  %v9595 = vand.u32 %v9583, 2147483648
  %v9596 = vor.u32 1.1754944e-38, %v9595
  %v9597 = vsel %vm9594, %v9596, %v9592
  %v9598 = vmul.f32 1.0, %v9597
  %v9599 = vadd.f32 %v9447, %v225
  %v9600 = vmul.f32 %v9578, %v9599
  %v9601 = vadd.f32 %v9558, %v9600
  %v9602 = vtanh.pop %v9601
  %v9603 = vsub.f32 1.0, %v9598
  %v9604 = vmul.f32 %v9603, %v9602
  %v9605 = vmul.f32 %v9598, %v8665
  %v9606 = vadd.f32 %v9604, %v9605
  %v9607 = vpack.c.bf16 %v9606, %v9606
  %v9608 = vld [vmem:[%s3 + $0x20] sm:$0xff]
  %v9609 = vld [vmem:[%s3 + $0x48] sm:$0xff]
  %v9610 = vld [vmem:[%s3 + $0x70] sm:$0xff]
  %v9611 = vld [vmem:[%s3 + $0x98] sm:$0xff]
  %v9612 = vld [vmem:[%s3 + $0xc0] sm:$0xff]
  %v9613 = vld [vmem:[%s3 + $0xe8] sm:$0xff]
  %v9614 = vld [vmem:[%s3 + $0x110] sm:$0xff]
  %v9615 = vld [vmem:[%s3 + $0x138] sm:$0xff]
  %v9616 = vld [vmem:[%s3 + $0x160] sm:$0xff]
  %v9617 = vld [vmem:[%s3 + $0x188] sm:$0xff]
  %v9618 = vld [vmem:[%s3 + $0x1b0] sm:$0xff]
  %v9619 = vld [vmem:[%s3 + $0x1d8] sm:$0xff]
  %v9620 = vld [vmem:[%s3 + $0x200] sm:$0xff]
  %v9621 = vld [vmem:[%s3 + $0x228] sm:$0xff]
  %v9622 = vld [vmem:[%s3 + $0x250] sm:$0xff]
  %v9623 = vld [vmem:[%s3 + $0x278] sm:$0xff]
  %v9624 = vld [vmem:[%s3 + $0x2a0] sm:$0xff]
  %v9625 = vld [vmem:[%s3 + $0x2c8] sm:$0xff]
  %v9626 = vld [vmem:[%s3 + $0x2f0] sm:$0xff]
  %v9627 = vld [vmem:[%s3 + $0x318] sm:$0xff]
  %v9628 = vld [vmem:[%s3 + $0x340] sm:$0xff]
  %v9629 = vld [vmem:[%s3 + $0x368] sm:$0xff]
  %v9630 = vld [vmem:[%s3 + $0x390] sm:$0xff]
  %v9631 = vld [vmem:[%s3 + $0x3b8] sm:$0xff]
  %v9632 = vld [vmem:[%s3 + $0x3e0] sm:$0xff]
  %v9633 = vld [vmem:[%s3 + $0x408] sm:$0xff]
  %v9634 = vld [vmem:[%s3 + $0x430] sm:$0xff]
  %v9635 = vld [vmem:[%s3 + $0x458] sm:$0xff]
  %v9636 = vld [vmem:[%s3 + $0x480] sm:$0xff]
  %v9637 = vld [vmem:[%s3 + $0x4a8] sm:$0xff]
  %v9638 = vld [vmem:[%s3 + $0x4d0] sm:$0xff]
  %v9639 = vld [vmem:[%s3 + $0x4f8] sm:$0xff]
  %v9672 = vunpack.c.h.b16 %v9608
  %v9673 = vunpack.c.h.b16 %v9609
  %v9674 = vunpack.c.h.b16 %v9610
  %v9675 = vunpack.c.h.b16 %v9611
  %v9676 = vunpack.c.h.b16 %v9612
  %v9677 = vunpack.c.h.b16 %v9613
  %v9678 = vunpack.c.h.b16 %v9614
  %v9679 = vunpack.c.h.b16 %v9615
  %v9680 = vunpack.c.h.b16 %v9616
  %v9681 = vunpack.c.h.b16 %v9617
  %v9682 = vunpack.c.h.b16 %v9618
  %v9683 = vunpack.c.h.b16 %v9619
  %v9684 = vunpack.c.h.b16 %v9620
  %v9685 = vunpack.c.h.b16 %v9621
  %v9686 = vunpack.c.h.b16 %v9622
  %v9687 = vunpack.c.h.b16 %v9623
  %v9688 = vunpack.c.h.b16 %v9624
  %v9689 = vunpack.c.h.b16 %v9625
  %v9690 = vunpack.c.h.b16 %v9626
  %v9691 = vunpack.c.h.b16 %v9627
  %v9692 = vunpack.c.h.b16 %v9628
  %v9693 = vunpack.c.h.b16 %v9629
  %v9694 = vunpack.c.h.b16 %v9630
  %v9695 = vunpack.c.h.b16 %v9631
  %v9696 = vunpack.c.h.b16 %v9632
  %v9697 = vunpack.c.h.b16 %v9633
  %v9698 = vunpack.c.h.b16 %v9634
  %v9699 = vunpack.c.h.b16 %v9635
  %v9700 = vunpack.c.h.b16 %v9636
  %v9701 = vunpack.c.h.b16 %v9637
  %v9702 = vunpack.c.h.b16 %v9638
  %v9703 = vunpack.c.h.b16 %v9639
  %v9704 = vpack.c.b16 %v9673, %v9672
  %v9705 = vpack.c.b16 %v9675, %v9674
  %v9706 = vpack.c.b16 %v9677, %v9676
  %v9707 = vpack.c.b16 %v9679, %v9678
  %v9708 = vpack.c.b16 %v9681, %v9680
  %v9709 = vpack.c.b16 %v9683, %v9682
  %v9710 = vpack.c.b16 %v9685, %v9684
  %v9711 = vpack.c.b16 %v9687, %v9686
  %v9712 = vpack.c.b16 %v9689, %v9688
  %v9713 = vpack.c.b16 %v9691, %v9690
  %v9714 = vpack.c.b16 %v9693, %v9692
  %v9715 = vpack.c.b16 %v9695, %v9694
  %v9716 = vpack.c.b16 %v9697, %v9696
  %v9717 = vpack.c.b16 %v9699, %v9698
  %v9718 = vpack.c.b16 %v9701, %v9700
  %v9719 = vpack.c.b16 %v9703, %v9702
  %9736 = vmatpush.bf16.msra.mxu0 %v9711
  %9737 = vmatpush.bf16.msra.mxu0 %v9710
  %9738 = vmatpush.bf16.msra.mxu0 %v9709
  %9739 = vmatpush.bf16.msra.mxu0 %v9708
  %9740 = vmatpush.bf16.msra.mxu0 %v9707
  %9741 = vmatpush.bf16.msra.mxu0 %v9706
  %9742 = vmatpush.bf16.msra.mxu0 %v9705
  %9743 = vmatpush.bf16.msra.mxu0 %v9704
  %9744 = vmatmul.bf16.gmra.mxu0 %v8666
  %v9745 = vpop.f32.mrf.mxu0
  %v9746 = vadd.f32 0.0, %v9745
  %v9747 = vpop.f32.mrf.mxu0
  %9748 = vdwg.mxu0
  %9749 = vmatpush.bf16.msra.mxu0 %v9719
  %9750 = vmatpush.bf16.msra.mxu0 %v9718
  %9751 = vmatpush.bf16.msra.mxu0 %v9717
  %9752 = vmatpush.bf16.msra.mxu0 %v9716
  %9753 = vmatpush.bf16.msra.mxu0 %v9715
  %9754 = vmatpush.bf16.msra.mxu0 %v9714
  %9755 = vmatpush.bf16.msra.mxu0 %v9713
  %9756 = vmatpush.bf16.msra.mxu0 %v9712
  %9757 = vmatmul.bf16.gmra.mxu0 %v9607
  %v9758 = vpop.f32.mrf.mxu0
  %v9759 = vadd.f32 %v9746, %v9758
  %v9760 = vpop.f32.mrf.mxu0
  %9761 = vdwg.mxu0
  %v9762 = vadd.f32 %v9759, %v237
  %9763 = vst [vmem:[%s9 + $0x38] sm:$0xff] %v9762
  %9764 = vst [vmem:[%s10] sm:$0xff] %v8614
  %s9765 = scalar_lea.vmem %s10, 8
  %9766 = vst [vmem:[%s9765] sm:$0xff] %v9606
  // Predicated region
  $region38: #{decoder_rnn_forward.1} parent=0 // pred_check
    _
  $region39: #{decoder_rnn_forward.1} parent=0 // pred_check_branch
    %9768 = sbr.rel (0) target = $region41
  $region40: #{decoder_rnn_forward.1} parent=0 // pred_region
    _
  $region41: #{decoder_rnn_forward.1} parent=0 // pred_fallthru
    _
  // Predicated region
  $region42: #{decoder_rnn_forward.1} parent=0 // pred_check
    _
  $region43: #{decoder_rnn_forward.1} parent=0 // pred_check_branch
    %9770 = sbr.rel (0) target = $region45
  $region44: #{decoder_rnn_forward.1} parent=0 // pred_region
    _
  $region45: #{decoder_rnn_forward.1} parent=0 // pred_fallthru
    _
  // Predicated region
  $region46: #{decoder_rnn_forward.1} parent=0 // pred_check
    _
  $region47: #{decoder_rnn_forward.1} parent=0 // pred_check_branch
    %9772 = sbr.rel (0) target = $region49
  $region48: #{decoder_rnn_forward.1} parent=0 // pred_region
    _
  $region49: #{decoder_rnn_forward.1} parent=0 // pred_fallthru
    _
  // Predicated region
  $region50: #{decoder_rnn_forward.1} parent=0 // pred_check
    _
  $region51: #{decoder_rnn_forward.1} parent=0 // pred_check_branch
    %9774 = sbr.rel (0) target = $region53
  $region52: #{decoder_rnn_forward.1} parent=0 // pred_region
    _
  $region53: #{decoder_rnn_forward.1} parent=0 // pred_fallthru
    _

</llo_original>
